<compile_context>
chip_gen: v7x
topology: tpu7x:2x2x1
jax: 0.10.0
libtpu: 0.0.40
codegen_flags: <defaults>
</compile_context>

<pallas_src>
import jax
import jax.numpy as jnp
from jax.experimental import pallas as pl
from jax.experimental.pallas import tpu as pltpu

_EPS = 1e-5
_LEAKY_SLOPE = 0.01


# ----------------------------- Pallas kernels -------------------------------

def _linear_bn_lrelu_kernel(z_ref, w_ref, g_ref, b_ref, o_ref):
    """Linear (bias-free: bias is cancelled by the training-mode BN1d that
    follows) + BatchNorm1d (batch stats over rows, f32) + LeakyReLU."""
    y = jnp.dot(z_ref[...].astype(jnp.bfloat16), w_ref[...],
                preferred_element_type=jnp.float32)
    mean = jnp.mean(y, axis=0, keepdims=True)
    var = jnp.mean(jnp.square(y - mean), axis=0, keepdims=True)  # biased var
    yn = (y - mean) * (g_ref[...] * jax.lax.rsqrt(var + _EPS)) + b_ref[...]
    o_ref[...] = jnp.where(yn >= 0, yn, _LEAKY_SLOPE * yn)


def linear_bn_lrelu(z, w_bf16, gamma, beta):
    M, K = z.shape
    N = w_bf16.shape[1]
    return pl.pallas_call(
        _linear_bn_lrelu_kernel,
        out_shape=jax.ShapeDtypeStruct((M, N), jnp.float32),
        grid_spec=pltpu.PrefetchScalarGridSpec(
            num_scalar_prefetch=0,
            grid=(1,),                                   # single full block
            in_specs=[
                pl.BlockSpec((M, K), lambda i: (0, 0)),
                pl.BlockSpec((K, N), lambda i: (0, 0)),
                pl.BlockSpec((1, N), lambda i: (0, 0)),
                pl.BlockSpec((1, N), lambda i: (0, 0)),
            ],
            out_specs=pl.BlockSpec((M, N), lambda i: (0, 0)),
        ),
        compiler_params=pltpu.CompilerParams(
            dimension_semantics=("arbitrary",)),
    )(z, w_bf16, gamma.reshape(1, N), beta.reshape(1, N))


def _matmul_kernel(x_ref, w_ref, o_ref):
    o_ref[...] = jnp.dot(x_ref[...].astype(jnp.bfloat16), w_ref[...],
                         preferred_element_type=jnp.float32)


def _bnact_matmul_kernel(x_ref, s_ref, t_ref, w_ref, o_ref):
    # Previous layer's BatchNorm2d apply + LeakyReLU fused as a matmul
    # prologue (scale/shift in f32; only the dot operands go bf16).
    x = x_ref[...] * s_ref[...] + t_ref[...]
    x = jnp.where(x >= 0, x, _LEAKY_SLOPE * x)
    o_ref[...] = jnp.dot(x.astype(jnp.bfloat16), w_ref[...],
                         preferred_element_type=jnp.float32)


def matmul_fused(x, w_bf16, scale=None, shift=None):
    """x: (M, K) f32 @ w: (K, N) bf16 -> (M, N) f32; single full-VMEM block."""
    M, K = x.shape
    N = w_bf16.shape[1]
    if scale is None:
        kernel = _matmul_kernel
        in_specs = [
            pl.BlockSpec((M, K), lambda i: (0, 0)),
            pl.BlockSpec((K, N), lambda i: (0, 0)),
        ]
        args = (x, w_bf16)
    else:
        kernel = _bnact_matmul_kernel
        in_specs = [
            pl.BlockSpec((M, K), lambda i: (0, 0)),
            pl.BlockSpec((1, K), lambda i: (0, 0)),
            pl.BlockSpec((1, K), lambda i: (0, 0)),
            pl.BlockSpec((K, N), lambda i: (0, 0)),
        ]
        args = (x, scale.reshape(1, K), shift.reshape(1, K), w_bf16)
    return pl.pallas_call(
        kernel,
        out_shape=jax.ShapeDtypeStruct((M, N), jnp.float32),
        grid_spec=pltpu.PrefetchScalarGridSpec(
            num_scalar_prefetch=0,
            grid=(1,),
            in_specs=in_specs,
            out_specs=pl.BlockSpec((M, N), lambda i: (0, 0)),
        ),
        compiler_params=pltpu.CompilerParams(
            dimension_semantics=("arbitrary",)),
    )(*args)


# ------------------------------- XLA glue ------------------------------------

def bn_scale_shift(y_nhwc, gamma, beta):
    """Training-mode BatchNorm2d batch stats folded into per-channel
    scale/shift (consumed by the next matmul kernel's prologue)."""
    m = jnp.mean(y_nhwc, axis=(0, 1, 2))
    v = jnp.mean(jnp.square(y_nhwc - m), axis=(0, 1, 2))   # biased variance
    scale = gamma * jax.lax.rsqrt(v + _EPS)
    return scale, beta - m * scale


def col2im_overlap_add(y, B, H, W, Cout):
    """ConvTranspose2d(k=4, s=2, p=1) overlap-add, no bias.

    y: (B*H*W, 16*Cout), columns ordered (ky, kx, cout) -> (B, 2H, 2W, Cout).
    Tiny XLA glue that fuses with the surrounding BN-stat / sigmoid ops.
    """
    Y = y.reshape(B, H, W, 4, 4, Cout)
    Yp = jnp.pad(Y, ((0, 0), (1, 1), (1, 1), (0, 0), (0, 0), (0, 0)))
    # output row parity ry: ry=0 uses taps (i=m, ky=1), (i=m-1, ky=3);
    #                       ry=1 uses taps (i=m+1, ky=0), (i=m, ky=2).
    r0 = Yp[:, 1:H + 1, :, 1] + Yp[:, 0:H, :, 3]        # (B, H, W+2, 4, Cout)
    r1 = Yp[:, 2:H + 2, :, 0] + Yp[:, 1:H + 1, :, 2]
    R = jnp.stack([r0, r1], axis=2)                     # (B, H, 2, W+2, 4, Cout)
    c0 = R[:, :, :, 1:W + 1, 1] + R[:, :, :, 0:W, 3]    # (B, H, 2, W, Cout)
    c1 = R[:, :, :, 2:W + 2, 0] + R[:, :, :, 1:W + 1, 2]
    out = jnp.stack([c0, c1], axis=4)                   # (B, H, 2, W, 2, Cout)
    return out.reshape(B, 2 * H, 2 * W, Cout)


# ------------------------------ Decoder model --------------------------------

def init_params(key):
    ks = list(jax.random.split(key, 20))
    it = iter(ks)

    def nrm(shape, s=0.05):
        return s * jax.random.normal(next(it), shape, jnp.float32)

    nf = 256 * 4 * 4  # bottleneck_channels * bottleneck_H * bottleneck_W = 4096
    p = {
        "lin_w": nrm((256, nf)),            # Linear(256 -> 4096), (in, out)
        "lin_b": nrm((nf,)),
        "bn1_g": 1.0 + nrm((nf,), 0.1),     # BatchNorm1d(4096)
        "bn1_b": nrm((nf,), 0.1),
    }
    conv_dims = [(256, 64), (64, 32), (32, 3)]  # ConvTranspose2d chain
    for li, (cin, cout) in enumerate(conv_dims):
        p[f"ct{li}_w"] = nrm((cin, cout, 4, 4))  # PyTorch ConvT weight layout
        p[f"ct{li}_b"] = nrm((cout,))
        if li < 2:
            p[f"bn{li + 2}_g"] = 1.0 + nrm((cout,), 0.1)
            p[f"bn{li + 2}_b"] = nrm((cout,), 0.1)
    return p


def prepare_params(p):
    """One-time constant weight prep (hoisted out of the traced forward)."""
    q = {}
    # Linear: drop bias (exactly cancelled by BN1d batch-mean), permute the
    # 4096 output columns from PyTorch's (c, h, w) flatten order to (h, w, c)
    # so the linear output is already NHWC-flattened, cast weight to bf16.
    w = p["lin_w"].reshape(256, 256, 4, 4)                    # (in, c, h, w)
    q["lin_w"] = (jnp.transpose(w, (0, 2, 3, 1))
                  .reshape(256, 4096).astype(jnp.bfloat16))   # (in, h*w*c)
    q["bn1_g"] = jnp.transpose(p["bn1_g"].reshape(256, 16), (1, 0)).reshape(4096)
    q["bn1_b"] = jnp.transpose(p["bn1_b"].reshape(256, 16), (1, 0)).reshape(4096)
    # ConvT weights (Cin, Cout, 4, 4) -> col2im matmul weight (Cin, 16*Cout),
    # columns ordered (ky, kx, cout); last layer's Cout zero-padded 3 -> 8 so
    # the matmul output block is a lane-dense (rows, 128) slab.
    for li in range(3):
        w = p[f"ct{li}_w"]                                    # (Cin, Cout, 4, 4)
        cin, cout = w.shape[0], w.shape[1]
        wbig = jnp.transpose(w, (0, 2, 3, 1))                 # (Cin, 4, 4, Cout)
        if li == 2:
            wbig = jnp.pad(wbig, ((0, 0), (0, 0), (0, 0), (0, 8 - cout)))
            cout = 8
        q[f"ct{li}_wbig"] = wbig.reshape(cin, 16 * cout).astype(jnp.bfloat16)
    # ct0_b / ct1_b are dropped (cancelled by the BN2d that follows them).
    q["ct2_b"] = p["ct2_b"]
    q["bn2_g"], q["bn2_b"] = p["bn2_g"], p["bn2_b"]
    q["bn3_g"], q["bn3_b"] = p["bn3_g"], p["bn3_b"]
    return q


def decoder_forward(p, z):
    B = z.shape[0]
    # Linear + BatchNorm1d + LeakyReLU, fully fused in one Pallas kernel.
    # Columns are already in (h, w, c) order -> free reshape to (B*H*W, Cin).
    x = linear_bn_lrelu(z, p["lin_w"], p["bn1_g"], p["bn1_b"])   # (B, 4096)
    x2d = x.reshape(B * 4 * 4, 256)                              # (B*16, 256)

    # ConvT(256->64): Pallas matmul; col2im + BN2d batch stats as XLA glue.
    y0 = matmul_fused(x2d, p["ct0_wbig"])                        # (B*16, 1024)
    c0 = col2im_overlap_add(y0, B, 4, 4, 64)                     # (B, 8, 8, 64)
    s0, t0 = bn_scale_shift(c0, p["bn2_g"], p["bn2_b"])

    # ConvT(64->32) with [BN(c0) + LeakyReLU] fused as the matmul prologue.
    y1 = matmul_fused(c0.reshape(B * 8 * 8, 64), p["ct1_wbig"], s0, t0)
    c1 = col2im_overlap_add(y1, B, 8, 8, 32)                     # (B, 16, 16, 32)
    s1, t1 = bn_scale_shift(c1, p["bn3_g"], p["bn3_b"])

    # ConvT(32->3) with fused prologue; Cout padded to 8 -> lane-dense output.
    y2 = matmul_fused(c1.reshape(B * 16 * 16, 32), p["ct2_wbig"], s1, t1)
    c2 = col2im_overlap_add(y2, B, 16, 16, 8)                    # (B, 32, 32, 8)

    # Epilogue: slice real channels, bias add + sigmoid fused in XLA.
    out = jax.nn.sigmoid(c2[..., :3] + p["ct2_b"].reshape(1, 1, 1, 3))
    return out.transpose(0, 3, 1, 2)                             # NCHW (B,3,32,32)


# ---------------------- independent pure-JAX reference -----------------------

def _ref_decoder_forward(p, z):
    hp = jax.lax.Precision.HIGHEST
    x = jnp.dot(z, p["lin_w"], precision=hp) + p["lin_b"]
    m = jnp.mean(x, axis=0)
    v = jnp.mean((x - m) ** 2, axis=0)
    x = (x - m) / jnp.sqrt(v + _EPS) * p["bn1_g"] + p["bn1_b"]
    x = jnp.where(x >= 0, x, _LEAKY_SLOPE * x)
    x = x.reshape(z.shape[0], 256, 4, 4).transpose(0, 2, 3, 1)

    def conv_t(xn, w_t, b):
        B, H, W, Cin = xn.shape
        Cout = w_t.shape[1]
        Ho, Wo = 2 * H, 2 * W
        xu = jnp.zeros((B, (H - 1) * 2 + 1, (W - 1) * 2 + 1, Cin), jnp.float32)
        xu = xu.at[:, ::2, ::2, :].set(xn)
        xp = jnp.pad(xu, ((0, 0), (2, 2), (2, 2), (0, 0)))
        wf = w_t[:, :, ::-1, ::-1]
        out = jnp.zeros((B, Ho, Wo, Cout), jnp.float32)
        for ky in range(4):
            for kx in range(4):
                out = out + jnp.dot(xp[:, ky:ky + Ho, kx:kx + Wo, :],
                                    wf[:, :, ky, kx], precision=hp)
        return out + b

    def bn_lrelu(y, g, bb):
        m = jnp.mean(y, axis=(0, 1, 2))
        v = jnp.mean((y - m) ** 2, axis=(0, 1, 2))
        y = (y - m) / jnp.sqrt(v + _EPS) * g + bb
        return jnp.where(y >= 0, y, _LEAKY_SLOPE * y)

    x = bn_lrelu(conv_t(x, p["ct0_w"], p["ct0_b"]), p["bn2_g"], p["bn2_b"])
    x = bn_lrelu(conv_t(x, p["ct1_w"], p["ct1_b"]), p["bn3_g"], p["bn3_b"])
    x = jax.nn.sigmoid(conv_t(x, p["ct2_w"], p["ct2_b"]))
    return x.transpose(0, 3, 1, 2)


if __name__ == "__main__":
    key = jax.random.PRNGKey(0)
    pkey, zkey = jax.random.split(key)
    params = init_params(pkey)
    # batch=4: training-mode BatchNorm needs a batch, and >=4 keeps the
    # batch-stat normalization well-conditioned for the bf16-vs-f32 check.
    z = jax.random.normal(zkey, (4, 256), jnp.float32)

    prepped = prepare_params(params)                    # one-time weight prep
    out = jax.jit(decoder_forward)(prepped, z)
    out = jax.block_until_ready(out)

    assert out.shape == (4, 3, 32, 32), out.shape
    assert bool(jnp.all(jnp.isfinite(out)))
    assert bool(jnp.all((out >= 0.0) & (out <= 1.0)))   # sigmoid output range

    ref = _ref_decoder_forward(params, z)
    max_diff = float(jnp.max(jnp.abs(out - ref)))
    # bf16 matmul operands (per perf review) vs f32 reference: small tolerance.
    assert max_diff < 2e-2, f"mismatch vs reference: {max_diff}"
    print("KERNEL_OK")
</pallas_src>

<mosaic_0001>
module attributes {stable_mosaic.version = 11 : i64} {
  func.func @_matmul_kernel(%arg0: i32, %arg1: memref<64x256xf32, #tpu.memory_space<vmem>>, %arg2: memref<256x1024xbf16, #tpu.memory_space<vmem>>, %arg3: memref<64x1024xf32, #tpu.memory_space<vmem>>) attributes {dimension_semantics = [#tpu.dimension_semantics<arbitrary>], iteration_bounds = array<i64: 1>, scalar_prefetch = 0 : i64, scratch_operands = 0 : i64, tpu.core_type = #tpu.core_type<tc>, window_params = [{pipeline_mode = #tpu.pipeline_mode<synchronous>, transform_indices = @transform_0, window_bounds = array<i64: 64, 256>}, {pipeline_mode = #tpu.pipeline_mode<synchronous>, transform_indices = @transform_1, window_bounds = array<i64: 256, 1024>}, {pipeline_mode = #tpu.pipeline_mode<synchronous>, transform_indices = @transform_2, window_bounds = array<i64: 64, 1024>}]} {
    %c0 = arith.constant 0 : index
    %c0_0 = arith.constant 0 : index
    %0 = vector.load %arg1[%c0, %c0_0] : memref<64x256xf32, #tpu.memory_space<vmem>>, vector<64x256xf32>
    %1 = arith.truncf %0 : vector<64x256xf32> to vector<64x256xbf16>
    %c0_1 = arith.constant 0 : index
    %c0_2 = arith.constant 0 : index
    %2 = vector.load %arg2[%c0_1, %c0_2] : memref<256x1024xbf16, #tpu.memory_space<vmem>>, vector<256x1024xbf16>
    %cst = arith.constant dense<0.000000e+00> : vector<64x1024xf32>
    %3 = tpu.matmul %1, %2, %cst {dimension_numbers = #tpu.dot_dimension_numbers<[1], [0], [0], [1], [0, 0, 1, 1], [], []>} : vector<64x256xbf16>, vector<256x1024xbf16>, vector<64x1024xf32> -> vector<64x1024xf32>
    %c0_3 = arith.constant 0 : index
    %c0_4 = arith.constant 0 : index
    %4 = vector.load %arg3[%c0_3, %c0_4] : memref<64x1024xf32, #tpu.memory_space<vmem>>, vector<64x1024xf32>
    tpu.vector_store %arg3[%c0_3, %c0_4], %3 {strides = array<i32>} : memref<64x1024xf32, #tpu.memory_space<vmem>>, vector<64x1024xf32>,
    return
  }
  func.func @transform_0(%arg0: i32) -> (i32, i32) {
    %c0_i32 = arith.constant 0 : i32
    %c0_i32_0 = arith.constant 0 : i32
    %c0_i32_1 = arith.constant 0 : i32
    return %c0_i32, %c0_i32_0 : i32, i32
  }
  func.func @transform_1(%arg0: i32) -> (i32, i32) {
    %c0_i32 = arith.constant 0 : i32
    %c0_i32_0 = arith.constant 0 : i32
    %c0_i32_1 = arith.constant 0 : i32
    return %c0_i32, %c0_i32_0 : i32, i32
  }
  func.func @transform_2(%arg0: i32) -> (i32, i32) {
    %c0_i32 = arith.constant 0 : i32
    %c0_i32_0 = arith.constant 0 : i32
    %c0_i32_1 = arith.constant 0 : i32
    return %c0_i32, %c0_i32_0 : i32, i32
  }
}

module attributes {stable_mosaic.version = 11 : i64} {
  func.func @_linear_bn_lrelu_kernel(%arg0: i32, %arg1: memref<4x256xf32, #tpu.memory_space<vmem>>, %arg2: memref<256x4096xbf16, #tpu.memory_space<vmem>>, %arg3: memref<1x4096xf32, #tpu.memory_space<vmem>>, %arg4: memref<1x4096xf32, #tpu.memory_space<vmem>>, %arg5: memref<4x4096xf32, #tpu.memory_space<vmem>>) attributes {dimension_semantics = [#tpu.dimension_semantics<arbitrary>], iteration_bounds = array<i64: 1>, scalar_prefetch = 0 : i64, scratch_operands = 0 : i64, tpu.core_type = #tpu.core_type<tc>, window_params = [{pipeline_mode = #tpu.pipeline_mode<synchronous>, transform_indices = @transform_0, window_bounds = array<i64: 4, 256>}, {pipeline_mode = #tpu.pipeline_mode<synchronous>, transform_indices = @transform_1, window_bounds = array<i64: 256, 4096>}, {pipeline_mode = #tpu.pipeline_mode<synchronous>, transform_indices = @transform_2, window_bounds = array<i64: 1, 4096>}, {pipeline_mode = #tpu.pipeline_mode<synchronous>, transform_indices = @transform_3, window_bounds = array<i64: 1, 4096>}, {pipeline_mode = #tpu.pipeline_mode<synchronous>, transform_indices = @transform_4, window_bounds = array<i64: 4, 4096>}]} {
    %c0 = arith.constant 0 : index
    %c0_0 = arith.constant 0 : index
    %0 = vector.load %arg1[%c0, %c0_0] : memref<4x256xf32, #tpu.memory_space<vmem>>, vector<4x256xf32>
    %1 = arith.truncf %0 : vector<4x256xf32> to vector<4x256xbf16>
    %c0_1 = arith.constant 0 : index
    %c0_2 = arith.constant 0 : index
    %2 = vector.load %arg2[%c0_1, %c0_2] : memref<256x4096xbf16, #tpu.memory_space<vmem>>, vector<256x4096xbf16>
    %cst = arith.constant dense<0.000000e+00> : vector<4x4096xf32>
    %3 = tpu.matmul %1, %2, %cst {dimension_numbers = #tpu.dot_dimension_numbers<[1], [0], [0], [1], [0, 0, 1, 1], [], []>} : vector<4x256xbf16>, vector<256x4096xbf16>, vector<4x4096xf32> -> vector<4x4096xf32>
    %cst_3 = arith.constant dense<0.000000e+00> : vector<4096xf32>
    %4 = vector.multi_reduction <add>, %3, %cst_3 [0] : vector<4x4096xf32> to vector<4096xf32>
    %5 = vector.shape_cast %4 : vector<4096xf32> to vector<1x4096xf32>
    %cst_4 = arith.constant 4.000000e+00 : f32
    %6 = vector.broadcast %cst_4 : f32 to vector<1x4096xf32>
    %7 = arith.divf %5, %6 : vector<1x4096xf32>
    %8 = vector.broadcast %7 : vector<1x4096xf32> to vector<4x4096xf32>
    %9 = arith.subf %3, %8 : vector<4x4096xf32>
    %10 = arith.mulf %9, %9 : vector<4x4096xf32>
    %cst_5 = arith.constant dense<0.000000e+00> : vector<4096xf32>
    %11 = vector.multi_reduction <add>, %10, %cst_5 [0] : vector<4x4096xf32> to vector<4096xf32>
    %12 = vector.shape_cast %11 : vector<4096xf32> to vector<1x4096xf32>
    %cst_6 = arith.constant 4.000000e+00 : f32
    %13 = vector.broadcast %cst_6 : f32 to vector<1x4096xf32>
    %14 = arith.divf %12, %13 : vector<1x4096xf32>
    %15 = vector.broadcast %7 : vector<1x4096xf32> to vector<4x4096xf32>
    %16 = arith.subf %3, %15 : vector<4x4096xf32>
    %c0_7 = arith.constant 0 : index
    %c0_8 = arith.constant 0 : index
    %17 = vector.load %arg3[%c0_7, %c0_8] : memref<1x4096xf32, #tpu.memory_space<vmem>>, vector<1x4096xf32>
    %cst_9 = arith.constant 9.99999974E-6 : f32
    %18 = vector.broadcast %cst_9 : f32 to vector<1x4096xf32>
    %19 = arith.addf %14, %18 : vector<1x4096xf32>
    %20 = math.rsqrt %19 : vector<1x4096xf32>
    %21 = arith.mulf %17, %20 : vector<1x4096xf32>
    %22 = vector.broadcast %21 : vector<1x4096xf32> to vector<4x4096xf32>
    %23 = arith.mulf %16, %22 : vector<4x4096xf32>
    %c0_10 = arith.constant 0 : index
    %c0_11 = arith.constant 0 : index
    %24 = vector.load %arg4[%c0_10, %c0_11] : memref<1x4096xf32, #tpu.memory_space<vmem>>, vector<1x4096xf32>
    %25 = vector.broadcast %24 : vector<1x4096xf32> to vector<4x4096xf32>
    %26 = arith.addf %23, %25 : vector<4x4096xf32>
    %cst_12 = arith.constant 0.000000e+00 : f32
    %27 = vector.broadcast %cst_12 : f32 to vector<4x4096xf32>
    %28 = arith.cmpf oge, %26, %27 : vector<4x4096xf32>
    %cst_13 = arith.constant 0.00999999977 : f32
    %29 = vector.broadcast %cst_13 : f32 to vector<4x4096xf32>
    %30 = arith.mulf %29, %26 : vector<4x4096xf32>
    %31 = arith.select %28, %26, %30 : vector<4x4096xi1>, vector<4x4096xf32>
    %c0_14 = arith.constant 0 : index
    %c0_15 = arith.constant 0 : index
    %32 = vector.load %arg5[%c0_14, %c0_15] : memref<4x4096xf32, #tpu.memory_space<vmem>>, vector<4x4096xf32>
    tpu.vector_store %arg5[%c0_14, %c0_15], %31 {strides = array<i32>} : memref<4x4096xf32, #tpu.memory_space<vmem>>, vector<4x4096xf32>,
    return
  }
  func.func @transform_0(%arg0: i32) -> (i32, i32) {
    %c0_i32 = arith.constant 0 : i32
    %c0_i32_0 = arith.constant 0 : i32
    %c0_i32_1 = arith.constant 0 : i32
    return %c0_i32, %c0_i32_0 : i32, i32
  }
  func.func @transform_1(%arg0: i32) -> (i32, i32) {
    %c0_i32 = arith.constant 0 : i32
    %c0_i32_0 = arith.constant 0 : i32
    %c0_i32_1 = arith.constant 0 : i32
    return %c0_i32, %c0_i32_0 : i32, i32
  }
  func.func @transform_2(%arg0: i32) -> (i32, i32) {
    %c0_i32 = arith.constant 0 : i32
    %c0_i32_0 = arith.constant 0 : i32
    %c0_i32_1 = arith.constant 0 : i32
    return %c0_i32, %c0_i32_0 : i32, i32
  }
  func.func @transform_3(%arg0: i32) -> (i32, i32) {
    %c0_i32 = arith.constant 0 : i32
    %c0_i32_0 = arith.constant 0 : i32
    %c0_i32_1 = arith.constant 0 : i32
    return %c0_i32, %c0_i32_0 : i32, i32
  }
  func.func @transform_4(%arg0: i32) -> (i32, i32) {
    %c0_i32 = arith.constant 0 : i32
    %c0_i32_0 = arith.constant 0 : i32
    %c0_i32_1 = arith.constant 0 : i32
    return %c0_i32, %c0_i32_0 : i32, i32
  }
}

module attributes {stable_mosaic.version = 11 : i64} {
  func.func @_bnact_matmul_kernel(%arg0: i32, %arg1: memref<256x64xf32, #tpu.memory_space<vmem>>, %arg2: memref<1x64xf32, #tpu.memory_space<vmem>>, %arg3: memref<1x64xf32, #tpu.memory_space<vmem>>, %arg4: memref<64x512xbf16, #tpu.memory_space<vmem>>, %arg5: memref<256x512xf32, #tpu.memory_space<vmem>>) attributes {dimension_semantics = [#tpu.dimension_semantics<arbitrary>], iteration_bounds = array<i64: 1>, scalar_prefetch = 0 : i64, scratch_operands = 0 : i64, tpu.core_type = #tpu.core_type<tc>, window_params = [{pipeline_mode = #tpu.pipeline_mode<synchronous>, transform_indices = @transform_0, window_bounds = array<i64: 256, 64>}, {pipeline_mode = #tpu.pipeline_mode<synchronous>, transform_indices = @transform_1, window_bounds = array<i64: 1, 64>}, {pipeline_mode = #tpu.pipeline_mode<synchronous>, transform_indices = @transform_2, window_bounds = array<i64: 1, 64>}, {pipeline_mode = #tpu.pipeline_mode<synchronous>, transform_indices = @transform_3, window_bounds = array<i64: 64, 512>}, {pipeline_mode = #tpu.pipeline_mode<synchronous>, transform_indices = @transform_4, window_bounds = array<i64: 256, 512>}]} {
    %c0 = arith.constant 0 : index
    %c0_0 = arith.constant 0 : index
    %0 = vector.load %arg1[%c0, %c0_0] : memref<256x64xf32, #tpu.memory_space<vmem>>, vector<256x64xf32>
    %c0_1 = arith.constant 0 : index
    %c0_2 = arith.constant 0 : index
    %1 = vector.load %arg2[%c0_1, %c0_2] : memref<1x64xf32, #tpu.memory_space<vmem>>, vector<1x64xf32>
    %2 = vector.broadcast %1 : vector<1x64xf32> to vector<256x64xf32>
    %3 = arith.mulf %0, %2 : vector<256x64xf32>
    %c0_3 = arith.constant 0 : index
    %c0_4 = arith.constant 0 : index
    %4 = vector.load %arg3[%c0_3, %c0_4] : memref<1x64xf32, #tpu.memory_space<vmem>>, vector<1x64xf32>
    %5 = vector.broadcast %4 : vector<1x64xf32> to vector<256x64xf32>
    %6 = arith.addf %3, %5 : vector<256x64xf32>
    %cst = arith.constant 0.000000e+00 : f32
    %7 = vector.broadcast %cst : f32 to vector<256x64xf32>
    %8 = arith.cmpf oge, %6, %7 : vector<256x64xf32>
    %cst_5 = arith.constant 0.00999999977 : f32
    %9 = vector.broadcast %cst_5 : f32 to vector<256x64xf32>
    %10 = arith.mulf %9, %6 : vector<256x64xf32>
    %11 = arith.select %8, %6, %10 : vector<256x64xi1>, vector<256x64xf32>
    %12 = arith.truncf %11 : vector<256x64xf32> to vector<256x64xbf16>
    %c0_6 = arith.constant 0 : index
    %c0_7 = arith.constant 0 : index
    %13 = vector.load %arg4[%c0_6, %c0_7] : memref<64x512xbf16, #tpu.memory_space<vmem>>, vector<64x512xbf16>
    %cst_8 = arith.constant dense<0.000000e+00> : vector<256x512xf32>
    %14 = tpu.matmul %12, %13, %cst_8 {dimension_numbers = #tpu.dot_dimension_numbers<[1], [0], [0], [1], [0, 0, 1, 1], [], []>} : vector<256x64xbf16>, vector<64x512xbf16>, vector<256x512xf32> -> vector<256x512xf32>
    %c0_9 = arith.constant 0 : index
    %c0_10 = arith.constant 0 : index
    %15 = vector.load %arg5[%c0_9, %c0_10] : memref<256x512xf32, #tpu.memory_space<vmem>>, vector<256x512xf32>
    tpu.vector_store %arg5[%c0_9, %c0_10], %14 {strides = array<i32>} : memref<256x512xf32, #tpu.memory_space<vmem>>, vector<256x512xf32>,
    return
  }
  func.func @transform_0(%arg0: i32) -> (i32, i32) {
    %c0_i32 = arith.constant 0 : i32
    %c0_i32_0 = arith.constant 0 : i32
    %c0_i32_1 = arith.constant 0 : i32
    return %c0_i32, %c0_i32_0 : i32, i32
  }
  func.func @transform_1(%arg0: i32) -> (i32, i32) {
    %c0_i32 = arith.constant 0 : i32
    %c0_i32_0 = arith.constant 0 : i32
    %c0_i32_1 = arith.constant 0 : i32
    return %c0_i32, %c0_i32_0 : i32, i32
  }
  func.func @transform_2(%arg0: i32) -> (i32, i32) {
    %c0_i32 = arith.constant 0 : i32
    %c0_i32_0 = arith.constant 0 : i32
    %c0_i32_1 = arith.constant 0 : i32
    return %c0_i32, %c0_i32_0 : i32, i32
  }
  func.func @transform_3(%arg0: i32) -> (i32, i32) {
    %c0_i32 = arith.constant 0 : i32
    %c0_i32_0 = arith.constant 0 : i32
    %c0_i32_1 = arith.constant 0 : i32
    return %c0_i32, %c0_i32_0 : i32, i32
  }
  func.func @transform_4(%arg0: i32) -> (i32, i32) {
    %c0_i32 = arith.constant 0 : i32
    %c0_i32_0 = arith.constant 0 : i32
    %c0_i32_1 = arith.constant 0 : i32
    return %c0_i32, %c0_i32_0 : i32, i32
  }
}

module attributes {stable_mosaic.version = 11 : i64} {
  func.func @_bnact_matmul_kernel(%arg0: i32, %arg1: memref<1024x32xf32, #tpu.memory_space<vmem>>, %arg2: memref<1x32xf32, #tpu.memory_space<vmem>>, %arg3: memref<1x32xf32, #tpu.memory_space<vmem>>, %arg4: memref<32x128xbf16, #tpu.memory_space<vmem>>, %arg5: memref<1024x128xf32, #tpu.memory_space<vmem>>) attributes {dimension_semantics = [#tpu.dimension_semantics<arbitrary>], iteration_bounds = array<i64: 1>, scalar_prefetch = 0 : i64, scratch_operands = 0 : i64, tpu.core_type = #tpu.core_type<tc>, window_params = [{pipeline_mode = #tpu.pipeline_mode<synchronous>, transform_indices = @transform_0, window_bounds = array<i64: 1024, 32>}, {pipeline_mode = #tpu.pipeline_mode<synchronous>, transform_indices = @transform_1, window_bounds = array<i64: 1, 32>}, {pipeline_mode = #tpu.pipeline_mode<synchronous>, transform_indices = @transform_2, window_bounds = array<i64: 1, 32>}, {pipeline_mode = #tpu.pipeline_mode<synchronous>, transform_indices = @transform_3, window_bounds = array<i64: 32, 128>}, {pipeline_mode = #tpu.pipeline_mode<synchronous>, transform_indices = @transform_4, window_bounds = array<i64: 1024, 128>}]} {
    %c0 = arith.constant 0 : index
    %c0_0 = arith.constant 0 : index
    %0 = vector.load %arg1[%c0, %c0_0] : memref<1024x32xf32, #tpu.memory_space<vmem>>, vector<1024x32xf32>
    %c0_1 = arith.constant 0 : index
    %c0_2 = arith.constant 0 : index
    %1 = vector.load %arg2[%c0_1, %c0_2] : memref<1x32xf32, #tpu.memory_space<vmem>>, vector<1x32xf32>
    %2 = vector.broadcast %1 : vector<1x32xf32> to vector<1024x32xf32>
    %3 = arith.mulf %0, %2 : vector<1024x32xf32>
    %c0_3 = arith.constant 0 : index
    %c0_4 = arith.constant 0 : index
    %4 = vector.load %arg3[%c0_3, %c0_4] : memref<1x32xf32, #tpu.memory_space<vmem>>, vector<1x32xf32>
    %5 = vector.broadcast %4 : vector<1x32xf32> to vector<1024x32xf32>
    %6 = arith.addf %3, %5 : vector<1024x32xf32>
    %cst = arith.constant 0.000000e+00 : f32
    %7 = vector.broadcast %cst : f32 to vector<1024x32xf32>
    %8 = arith.cmpf oge, %6, %7 : vector<1024x32xf32>
    %cst_5 = arith.constant 0.00999999977 : f32
    %9 = vector.broadcast %cst_5 : f32 to vector<1024x32xf32>
    %10 = arith.mulf %9, %6 : vector<1024x32xf32>
    %11 = arith.select %8, %6, %10 : vector<1024x32xi1>, vector<1024x32xf32>
    %12 = arith.truncf %11 : vector<1024x32xf32> to vector<1024x32xbf16>
    %c0_6 = arith.constant 0 : index
    %c0_7 = arith.constant 0 : index
    %13 = vector.load %arg4[%c0_6, %c0_7] : memref<32x128xbf16, #tpu.memory_space<vmem>>, vector<32x128xbf16>
    %cst_8 = arith.constant dense<0.000000e+00> : vector<1024x128xf32>
    %14 = tpu.matmul %12, %13, %cst_8 {dimension_numbers = #tpu.dot_dimension_numbers<[1], [0], [0], [1], [0, 0, 1, 1], [], []>} : vector<1024x32xbf16>, vector<32x128xbf16>, vector<1024x128xf32> -> vector<1024x128xf32>
    %c0_9 = arith.constant 0 : index
    %c0_10 = arith.constant 0 : index
    %15 = vector.load %arg5[%c0_9, %c0_10] : memref<1024x128xf32, #tpu.memory_space<vmem>>, vector<1024x128xf32>
    tpu.vector_store %arg5[%c0_9, %c0_10], %14 {strides = array<i32>} : memref<1024x128xf32, #tpu.memory_space<vmem>>, vector<1024x128xf32>,
    return
  }
  func.func @transform_0(%arg0: i32) -> (i32, i32) {
    %c0_i32 = arith.constant 0 : i32
    %c0_i32_0 = arith.constant 0 : i32
    %c0_i32_1 = arith.constant 0 : i32
    return %c0_i32, %c0_i32_0 : i32, i32
  }
  func.func @transform_1(%arg0: i32) -> (i32, i32) {
    %c0_i32 = arith.constant 0 : i32
    %c0_i32_0 = arith.constant 0 : i32
    %c0_i32_1 = arith.constant 0 : i32
    return %c0_i32, %c0_i32_0 : i32, i32
  }
  func.func @transform_2(%arg0: i32) -> (i32, i32) {
    %c0_i32 = arith.constant 0 : i32
    %c0_i32_0 = arith.constant 0 : i32
    %c0_i32_1 = arith.constant 0 : i32
    return %c0_i32, %c0_i32_0 : i32, i32
  }
  func.func @transform_3(%arg0: i32) -> (i32, i32) {
    %c0_i32 = arith.constant 0 : i32
    %c0_i32_0 = arith.constant 0 : i32
    %c0_i32_1 = arith.constant 0 : i32
    return %c0_i32, %c0_i32_0 : i32, i32
  }
  func.func @transform_4(%arg0: i32) -> (i32, i32) {
    %c0_i32 = arith.constant 0 : i32
    %c0_i32_0 = arith.constant 0 : i32
    %c0_i32_1 = arith.constant 0 : i32
    return %c0_i32, %c0_i32_0 : i32, i32
  }
}

</mosaic_0001>

<llo_original>
// kernel: decoder_forward.5
$region0: #{decoder_forward.5}
  #allocation0 [shape = 'u32[]', space=smem, size = 0x4, offset = 0x4, fixed_abs, tag = 'smem constant byte address 0x4 - core index']
  #allocation1 [shape = 'u32[144,128]{1,0:T(1,128)}', space=vmem, size = 0x12000, scoped, tag = 'internal scratch']
  %s0 = inlined_call_operand.vmem [shape: f32[64,256], index: 0, kind: input, shape index: {}]
  %s1 = inlined_call_operand.vmem [shape: bf16[256,1024], index: 1, kind: input, shape index: {}]
  %s2 = inlined_call_operand.vmem [shape: f32[64,1024], index: 2, kind: output, shape index: {}]
  %s3 = sld [smem:[#allocation0]]
  $region18: #{decoder_forward.5} parent=0
    _
  %s5 = ssub.s32 1, %s3
  %s6 = scalar_select 0, %s5, %s3
  // Predicated region
  $region2: #{decoder_forward.5} parent=0 // pred_check
    _
  $region3: #{decoder_forward.5} parent=0 // pred_check_branch
    %8 = sbr.rel (0) target = $region5
  $region4: #{decoder_forward.5} parent=0 // pred_region
    _
  $region5: #{decoder_forward.5} parent=0 // pred_fallthru
    _
  // Predicated region
  $region6: #{decoder_forward.5} parent=0 // pred_check
    _
  $region7: #{decoder_forward.5} parent=0 // pred_check_branch
    %10 = sbr.rel (0) target = $region9
  $region8: #{decoder_forward.5} parent=0 // pred_region
    _
  $region9: #{decoder_forward.5} parent=0 // pred_fallthru
    _
  %v11 = vld [vmem:[%s0] sm:$0xff]
  %v12 = vld [vmem:[%s0 + $0x8] sm:$0xff]
  %v13 = vld [vmem:[%s0 + $0x10] sm:$0xff]
  %v14 = vld [vmem:[%s0 + $0x18] sm:$0xff]
  %v15 = vld [vmem:[%s0 + $0x20] sm:$0xff]
  %v16 = vld [vmem:[%s0 + $0x28] sm:$0xff]
  %v17 = vld [vmem:[%s0 + $0x30] sm:$0xff]
  %v18 = vld [vmem:[%s0 + $0x38] sm:$0xff]
  %v19 = vld [vmem:[%s0 + $0x40] sm:$0xff]
  %v20 = vld [vmem:[%s0 + $0x48] sm:$0xff]
  %v21 = vld [vmem:[%s0 + $0x50] sm:$0xff]
  %v22 = vld [vmem:[%s0 + $0x58] sm:$0xff]
  %v23 = vld [vmem:[%s0 + $0x60] sm:$0xff]
  %v24 = vld [vmem:[%s0 + $0x68] sm:$0xff]
  %v25 = vld [vmem:[%s0 + $0x70] sm:$0xff]
  %v26 = vld [vmem:[%s0 + $0x78] sm:$0xff]
  %v27 = vpack.c.bf16 %v13, %v11
  %v28 = vpack.c.bf16 %v14, %v12
  %v29 = vpack.c.bf16 %v17, %v15
  %v30 = vpack.c.bf16 %v18, %v16
  %v31 = vpack.c.bf16 %v21, %v19
  %v32 = vpack.c.bf16 %v22, %v20
  %v33 = vpack.c.bf16 %v25, %v23
  %v34 = vpack.c.bf16 %v26, %v24
  %v35 = vld [vmem:[%s1] sm:$0xff]
  %v36 = vld [vmem:[%s1 + $0x8] sm:$0xff]
  %v37 = vld [vmem:[%s1 + $0x10] sm:$0xff]
  %v38 = vld [vmem:[%s1 + $0x18] sm:$0xff]
  %v39 = vld [vmem:[%s1 + $0x20] sm:$0xff]
  %v40 = vld [vmem:[%s1 + $0x28] sm:$0xff]
  %v41 = vld [vmem:[%s1 + $0x30] sm:$0xff]
  %v42 = vld [vmem:[%s1 + $0x38] sm:$0xff]
  %v43 = vld [vmem:[%s1 + $0x40] sm:$0xff]
  %v44 = vld [vmem:[%s1 + $0x48] sm:$0xff]
  %v45 = vld [vmem:[%s1 + $0x50] sm:$0xff]
  %v46 = vld [vmem:[%s1 + $0x58] sm:$0xff]
  %v47 = vld [vmem:[%s1 + $0x60] sm:$0xff]
  %v48 = vld [vmem:[%s1 + $0x68] sm:$0xff]
  %v49 = vld [vmem:[%s1 + $0x70] sm:$0xff]
  %v50 = vld [vmem:[%s1 + $0x78] sm:$0xff]
  %v51 = vld [vmem:[%s1 + $0x80] sm:$0xff]
  %v52 = vld [vmem:[%s1 + $0x88] sm:$0xff]
  %v53 = vld [vmem:[%s1 + $0x90] sm:$0xff]
  %v54 = vld [vmem:[%s1 + $0x98] sm:$0xff]
  %v55 = vld [vmem:[%s1 + $0xa0] sm:$0xff]
  %v56 = vld [vmem:[%s1 + $0xa8] sm:$0xff]
  %v57 = vld [vmem:[%s1 + $0xb0] sm:$0xff]
  %v58 = vld [vmem:[%s1 + $0xb8] sm:$0xff]
  %v59 = vld [vmem:[%s1 + $0xc0] sm:$0xff]
  %v60 = vld [vmem:[%s1 + $0xc8] sm:$0xff]
  %v61 = vld [vmem:[%s1 + $0xd0] sm:$0xff]
  %v62 = vld [vmem:[%s1 + $0xd8] sm:$0xff]
  %v63 = vld [vmem:[%s1 + $0xe0] sm:$0xff]
  %v64 = vld [vmem:[%s1 + $0xe8] sm:$0xff]
  %v65 = vld [vmem:[%s1 + $0xf0] sm:$0xff]
  %v66 = vld [vmem:[%s1 + $0xf8] sm:$0xff]
  %v67 = vld [vmem:[%s1 + $0x100] sm:$0xff]
  %v68 = vld [vmem:[%s1 + $0x108] sm:$0xff]
  %v69 = vld [vmem:[%s1 + $0x110] sm:$0xff]
  %v70 = vld [vmem:[%s1 + $0x118] sm:$0xff]
  %v71 = vld [vmem:[%s1 + $0x120] sm:$0xff]
  %v72 = vld [vmem:[%s1 + $0x128] sm:$0xff]
  %v73 = vld [vmem:[%s1 + $0x130] sm:$0xff]
  %v74 = vld [vmem:[%s1 + $0x138] sm:$0xff]
  %v75 = vld [vmem:[%s1 + $0x140] sm:$0xff]
  %v76 = vld [vmem:[%s1 + $0x148] sm:$0xff]
  %v77 = vld [vmem:[%s1 + $0x150] sm:$0xff]
  %v78 = vld [vmem:[%s1 + $0x158] sm:$0xff]
  %v79 = vld [vmem:[%s1 + $0x160] sm:$0xff]
  %v80 = vld [vmem:[%s1 + $0x168] sm:$0xff]
  %v81 = vld [vmem:[%s1 + $0x170] sm:$0xff]
  %v82 = vld [vmem:[%s1 + $0x178] sm:$0xff]
  %v83 = vld [vmem:[%s1 + $0x180] sm:$0xff]
  %v84 = vld [vmem:[%s1 + $0x188] sm:$0xff]
  %v85 = vld [vmem:[%s1 + $0x190] sm:$0xff]
  %v86 = vld [vmem:[%s1 + $0x198] sm:$0xff]
  %v87 = vld [vmem:[%s1 + $0x1a0] sm:$0xff]
  %v88 = vld [vmem:[%s1 + $0x1a8] sm:$0xff]
  %v89 = vld [vmem:[%s1 + $0x1b0] sm:$0xff]
  %v90 = vld [vmem:[%s1 + $0x1b8] sm:$0xff]
  %v91 = vld [vmem:[%s1 + $0x1c0] sm:$0xff]
  %v92 = vld [vmem:[%s1 + $0x1c8] sm:$0xff]
  %v93 = vld [vmem:[%s1 + $0x1d0] sm:$0xff]
  %v94 = vld [vmem:[%s1 + $0x1d8] sm:$0xff]
  %v95 = vld [vmem:[%s1 + $0x1e0] sm:$0xff]
  %v96 = vld [vmem:[%s1 + $0x1e8] sm:$0xff]
  %v97 = vld [vmem:[%s1 + $0x1f0] sm:$0xff]
  %v98 = vld [vmem:[%s1 + $0x1f8] sm:$0xff]
  %v99 = vld [vmem:[%s1 + $0x200] sm:$0xff]
  %v100 = vld [vmem:[%s1 + $0x208] sm:$0xff]
  %v101 = vld [vmem:[%s1 + $0x210] sm:$0xff]
  %v102 = vld [vmem:[%s1 + $0x218] sm:$0xff]
  %v103 = vld [vmem:[%s1 + $0x220] sm:$0xff]
  %v104 = vld [vmem:[%s1 + $0x228] sm:$0xff]
  %v105 = vld [vmem:[%s1 + $0x230] sm:$0xff]
  %v106 = vld [vmem:[%s1 + $0x238] sm:$0xff]
  %v107 = vld [vmem:[%s1 + $0x240] sm:$0xff]
  %v108 = vld [vmem:[%s1 + $0x248] sm:$0xff]
  %v109 = vld [vmem:[%s1 + $0x250] sm:$0xff]
  %v110 = vld [vmem:[%s1 + $0x258] sm:$0xff]
  %v111 = vld [vmem:[%s1 + $0x260] sm:$0xff]
  %v112 = vld [vmem:[%s1 + $0x268] sm:$0xff]
  %v113 = vld [vmem:[%s1 + $0x270] sm:$0xff]
  %v114 = vld [vmem:[%s1 + $0x278] sm:$0xff]
  %v115 = vld [vmem:[%s1 + $0x280] sm:$0xff]
  %v116 = vld [vmem:[%s1 + $0x288] sm:$0xff]
  %v117 = vld [vmem:[%s1 + $0x290] sm:$0xff]
  %v118 = vld [vmem:[%s1 + $0x298] sm:$0xff]
  %v119 = vld [vmem:[%s1 + $0x2a0] sm:$0xff]
  %v120 = vld [vmem:[%s1 + $0x2a8] sm:$0xff]
  %v121 = vld [vmem:[%s1 + $0x2b0] sm:$0xff]
  %v122 = vld [vmem:[%s1 + $0x2b8] sm:$0xff]
  %v123 = vld [vmem:[%s1 + $0x2c0] sm:$0xff]
  %v124 = vld [vmem:[%s1 + $0x2c8] sm:$0xff]
  %v125 = vld [vmem:[%s1 + $0x2d0] sm:$0xff]
  %v126 = vld [vmem:[%s1 + $0x2d8] sm:$0xff]
  %v127 = vld [vmem:[%s1 + $0x2e0] sm:$0xff]
  %v128 = vld [vmem:[%s1 + $0x2e8] sm:$0xff]
  %v129 = vld [vmem:[%s1 + $0x2f0] sm:$0xff]
  %v130 = vld [vmem:[%s1 + $0x2f8] sm:$0xff]
  %v131 = vld [vmem:[%s1 + $0x300] sm:$0xff]
  %v132 = vld [vmem:[%s1 + $0x308] sm:$0xff]
  %v133 = vld [vmem:[%s1 + $0x310] sm:$0xff]
  %v134 = vld [vmem:[%s1 + $0x318] sm:$0xff]
  %v135 = vld [vmem:[%s1 + $0x320] sm:$0xff]
  %v136 = vld [vmem:[%s1 + $0x328] sm:$0xff]
  %v137 = vld [vmem:[%s1 + $0x330] sm:$0xff]
  %v138 = vld [vmem:[%s1 + $0x338] sm:$0xff]
  %v139 = vld [vmem:[%s1 + $0x340] sm:$0xff]
  %v140 = vld [vmem:[%s1 + $0x348] sm:$0xff]
  %v141 = vld [vmem:[%s1 + $0x350] sm:$0xff]
  %v142 = vld [vmem:[%s1 + $0x358] sm:$0xff]
  %v143 = vld [vmem:[%s1 + $0x360] sm:$0xff]
  %v144 = vld [vmem:[%s1 + $0x368] sm:$0xff]
  %v145 = vld [vmem:[%s1 + $0x370] sm:$0xff]
  %v146 = vld [vmem:[%s1 + $0x378] sm:$0xff]
  %v147 = vld [vmem:[%s1 + $0x380] sm:$0xff]
  %v148 = vld [vmem:[%s1 + $0x388] sm:$0xff]
  %v149 = vld [vmem:[%s1 + $0x390] sm:$0xff]
  %v150 = vld [vmem:[%s1 + $0x398] sm:$0xff]
  %v151 = vld [vmem:[%s1 + $0x3a0] sm:$0xff]
  %v152 = vld [vmem:[%s1 + $0x3a8] sm:$0xff]
  %v153 = vld [vmem:[%s1 + $0x3b0] sm:$0xff]
  %v154 = vld [vmem:[%s1 + $0x3b8] sm:$0xff]
  %v155 = vld [vmem:[%s1 + $0x3c0] sm:$0xff]
  %v156 = vld [vmem:[%s1 + $0x3c8] sm:$0xff]
  %v157 = vld [vmem:[%s1 + $0x3d0] sm:$0xff]
  %v158 = vld [vmem:[%s1 + $0x3d8] sm:$0xff]
  %v159 = vld [vmem:[%s1 + $0x3e0] sm:$0xff]
  %v160 = vld [vmem:[%s1 + $0x3e8] sm:$0xff]
  %v161 = vld [vmem:[%s1 + $0x3f0] sm:$0xff]
  %v162 = vld [vmem:[%s1 + $0x3f8] sm:$0xff]
  %v291 = vunpack.c.l.b16 %v35
  %v292 = vunpack.c.h.b16 %v35
  %v293 = vunpack.c.l.b16 %v36
  %v294 = vunpack.c.h.b16 %v36
  %v295 = vunpack.c.l.b16 %v37
  %v296 = vunpack.c.h.b16 %v37
  %v297 = vunpack.c.l.b16 %v38
  %v298 = vunpack.c.h.b16 %v38
  %v299 = vunpack.c.l.b16 %v39
  %v300 = vunpack.c.h.b16 %v39
  %v301 = vunpack.c.l.b16 %v40
  %v302 = vunpack.c.h.b16 %v40
  %v303 = vunpack.c.l.b16 %v41
  %v304 = vunpack.c.h.b16 %v41
  %v305 = vunpack.c.l.b16 %v42
  %v306 = vunpack.c.h.b16 %v42
  %v307 = vunpack.c.l.b16 %v43
  %v308 = vunpack.c.h.b16 %v43
  %v309 = vunpack.c.l.b16 %v44
  %v310 = vunpack.c.h.b16 %v44
  %v311 = vunpack.c.l.b16 %v45
  %v312 = vunpack.c.h.b16 %v45
  %v313 = vunpack.c.l.b16 %v46
  %v314 = vunpack.c.h.b16 %v46
  %v315 = vunpack.c.l.b16 %v47
  %v316 = vunpack.c.h.b16 %v47
  %v317 = vunpack.c.l.b16 %v48
  %v318 = vunpack.c.h.b16 %v48
  %v319 = vunpack.c.l.b16 %v49
  %v320 = vunpack.c.h.b16 %v49
  %v321 = vunpack.c.l.b16 %v50
  %v322 = vunpack.c.h.b16 %v50
  %v323 = vunpack.c.l.b16 %v51
  %v324 = vunpack.c.h.b16 %v51
  %v325 = vunpack.c.l.b16 %v52
  %v326 = vunpack.c.h.b16 %v52
  %v327 = vunpack.c.l.b16 %v53
  %v328 = vunpack.c.h.b16 %v53
  %v329 = vunpack.c.l.b16 %v54
  %v330 = vunpack.c.h.b16 %v54
  %v331 = vunpack.c.l.b16 %v55
  %v332 = vunpack.c.h.b16 %v55
  %v333 = vunpack.c.l.b16 %v56
  %v334 = vunpack.c.h.b16 %v56
  %v335 = vunpack.c.l.b16 %v57
  %v336 = vunpack.c.h.b16 %v57
  %v337 = vunpack.c.l.b16 %v58
  %v338 = vunpack.c.h.b16 %v58
  %v339 = vunpack.c.l.b16 %v59
  %v340 = vunpack.c.h.b16 %v59
  %v341 = vunpack.c.l.b16 %v60
  %v342 = vunpack.c.h.b16 %v60
  %v343 = vunpack.c.l.b16 %v61
  %v344 = vunpack.c.h.b16 %v61
  %v345 = vunpack.c.l.b16 %v62
  %v346 = vunpack.c.h.b16 %v62
  %v347 = vunpack.c.l.b16 %v63
  %v348 = vunpack.c.h.b16 %v63
  %v349 = vunpack.c.l.b16 %v64
  %v350 = vunpack.c.h.b16 %v64
  %v351 = vunpack.c.l.b16 %v65
  %v352 = vunpack.c.h.b16 %v65
  %v353 = vunpack.c.l.b16 %v66
  %v354 = vunpack.c.h.b16 %v66
  %v355 = vunpack.c.l.b16 %v67
  %v356 = vunpack.c.h.b16 %v67
  %v357 = vunpack.c.l.b16 %v68
  %v358 = vunpack.c.h.b16 %v68
  %v359 = vunpack.c.l.b16 %v69
  %v360 = vunpack.c.h.b16 %v69
  %v361 = vunpack.c.l.b16 %v70
  %v362 = vunpack.c.h.b16 %v70
  %v363 = vunpack.c.l.b16 %v71
  %v364 = vunpack.c.h.b16 %v71
  %v365 = vunpack.c.l.b16 %v72
  %v366 = vunpack.c.h.b16 %v72
  %v367 = vunpack.c.l.b16 %v73
  %v368 = vunpack.c.h.b16 %v73
  %v369 = vunpack.c.l.b16 %v74
  %v370 = vunpack.c.h.b16 %v74
  %v371 = vunpack.c.l.b16 %v75
  %v372 = vunpack.c.h.b16 %v75
  %v373 = vunpack.c.l.b16 %v76
  %v374 = vunpack.c.h.b16 %v76
  %v375 = vunpack.c.l.b16 %v77
  %v376 = vunpack.c.h.b16 %v77
  %v377 = vunpack.c.l.b16 %v78
  %v378 = vunpack.c.h.b16 %v78
  %v379 = vunpack.c.l.b16 %v79
  %v380 = vunpack.c.h.b16 %v79
  %v381 = vunpack.c.l.b16 %v80
  %v382 = vunpack.c.h.b16 %v80
  %v383 = vunpack.c.l.b16 %v81
  %v384 = vunpack.c.h.b16 %v81
  %v385 = vunpack.c.l.b16 %v82
  %v386 = vunpack.c.h.b16 %v82
  %v387 = vunpack.c.l.b16 %v83
  %v388 = vunpack.c.h.b16 %v83
  %v389 = vunpack.c.l.b16 %v84
  %v390 = vunpack.c.h.b16 %v84
  %v391 = vunpack.c.l.b16 %v85
  %v392 = vunpack.c.h.b16 %v85
  %v393 = vunpack.c.l.b16 %v86
  %v394 = vunpack.c.h.b16 %v86
  %v395 = vunpack.c.l.b16 %v87
  %v396 = vunpack.c.h.b16 %v87
  %v397 = vunpack.c.l.b16 %v88
  %v398 = vunpack.c.h.b16 %v88
  %v399 = vunpack.c.l.b16 %v89
  %v400 = vunpack.c.h.b16 %v89
  %v401 = vunpack.c.l.b16 %v90
  %v402 = vunpack.c.h.b16 %v90
  %v403 = vunpack.c.l.b16 %v91
  %v404 = vunpack.c.h.b16 %v91
  %v405 = vunpack.c.l.b16 %v92
  %v406 = vunpack.c.h.b16 %v92
  %v407 = vunpack.c.l.b16 %v93
  %v408 = vunpack.c.h.b16 %v93
  %v409 = vunpack.c.l.b16 %v94
  %v410 = vunpack.c.h.b16 %v94
  %v411 = vunpack.c.l.b16 %v95
  %v412 = vunpack.c.h.b16 %v95
  %v413 = vunpack.c.l.b16 %v96
  %v414 = vunpack.c.h.b16 %v96
  %v415 = vunpack.c.l.b16 %v97
  %v416 = vunpack.c.h.b16 %v97
  %v417 = vunpack.c.l.b16 %v98
  %v418 = vunpack.c.h.b16 %v98
  %v419 = vunpack.c.l.b16 %v99
  %v420 = vunpack.c.h.b16 %v99
  %v421 = vunpack.c.l.b16 %v100
  %v422 = vunpack.c.h.b16 %v100
  %v423 = vunpack.c.l.b16 %v101
  %v424 = vunpack.c.h.b16 %v101
  %v425 = vunpack.c.l.b16 %v102
  %v426 = vunpack.c.h.b16 %v102
  %v427 = vunpack.c.l.b16 %v103
  %v428 = vunpack.c.h.b16 %v103
  %v429 = vunpack.c.l.b16 %v104
  %v430 = vunpack.c.h.b16 %v104
  %v431 = vunpack.c.l.b16 %v105
  %v432 = vunpack.c.h.b16 %v105
  %v433 = vunpack.c.l.b16 %v106
  %v434 = vunpack.c.h.b16 %v106
  %v435 = vunpack.c.l.b16 %v107
  %v436 = vunpack.c.h.b16 %v107
  %v437 = vunpack.c.l.b16 %v108
  %v438 = vunpack.c.h.b16 %v108
  %v439 = vunpack.c.l.b16 %v109
  %v440 = vunpack.c.h.b16 %v109
  %v441 = vunpack.c.l.b16 %v110
  %v442 = vunpack.c.h.b16 %v110
  %v443 = vunpack.c.l.b16 %v111
  %v444 = vunpack.c.h.b16 %v111
  %v445 = vunpack.c.l.b16 %v112
  %v446 = vunpack.c.h.b16 %v112
  %v447 = vunpack.c.l.b16 %v113
  %v448 = vunpack.c.h.b16 %v113
  %v449 = vunpack.c.l.b16 %v114
  %v450 = vunpack.c.h.b16 %v114
  %v451 = vunpack.c.l.b16 %v115
  %v452 = vunpack.c.h.b16 %v115
  %v453 = vunpack.c.l.b16 %v116
  %v454 = vunpack.c.h.b16 %v116
  %v455 = vunpack.c.l.b16 %v117
  %v456 = vunpack.c.h.b16 %v117
  %v457 = vunpack.c.l.b16 %v118
  %v458 = vunpack.c.h.b16 %v118
  %v459 = vunpack.c.l.b16 %v119
  %v460 = vunpack.c.h.b16 %v119
  %v461 = vunpack.c.l.b16 %v120
  %v462 = vunpack.c.h.b16 %v120
  %v463 = vunpack.c.l.b16 %v121
  %v464 = vunpack.c.h.b16 %v121
  %v465 = vunpack.c.l.b16 %v122
  %v466 = vunpack.c.h.b16 %v122
  %v467 = vunpack.c.l.b16 %v123
  %v468 = vunpack.c.h.b16 %v123
  %v469 = vunpack.c.l.b16 %v124
  %v470 = vunpack.c.h.b16 %v124
  %v471 = vunpack.c.l.b16 %v125
  %v472 = vunpack.c.h.b16 %v125
  %v473 = vunpack.c.l.b16 %v126
  %v474 = vunpack.c.h.b16 %v126
  %v475 = vunpack.c.l.b16 %v127
  %v476 = vunpack.c.h.b16 %v127
  %v477 = vunpack.c.l.b16 %v128
  %v478 = vunpack.c.h.b16 %v128
  %v479 = vunpack.c.l.b16 %v129
  %v480 = vunpack.c.h.b16 %v129
  %v481 = vunpack.c.l.b16 %v130
  %v482 = vunpack.c.h.b16 %v130
  %v483 = vunpack.c.l.b16 %v131
  %v484 = vunpack.c.h.b16 %v131
  %v485 = vunpack.c.l.b16 %v132
  %v486 = vunpack.c.h.b16 %v132
  %v487 = vunpack.c.l.b16 %v133
  %v488 = vunpack.c.h.b16 %v133
  %v489 = vunpack.c.l.b16 %v134
  %v490 = vunpack.c.h.b16 %v134
  %v491 = vunpack.c.l.b16 %v135
  %v492 = vunpack.c.h.b16 %v135
  %v493 = vunpack.c.l.b16 %v136
  %v494 = vunpack.c.h.b16 %v136
  %v495 = vunpack.c.l.b16 %v137
  %v496 = vunpack.c.h.b16 %v137
  %v497 = vunpack.c.l.b16 %v138
  %v498 = vunpack.c.h.b16 %v138
  %v499 = vunpack.c.l.b16 %v139
  %v500 = vunpack.c.h.b16 %v139
  %v501 = vunpack.c.l.b16 %v140
  %v502 = vunpack.c.h.b16 %v140
  %v503 = vunpack.c.l.b16 %v141
  %v504 = vunpack.c.h.b16 %v141
  %v505 = vunpack.c.l.b16 %v142
  %v506 = vunpack.c.h.b16 %v142
  %v507 = vunpack.c.l.b16 %v143
  %v508 = vunpack.c.h.b16 %v143
  %v509 = vunpack.c.l.b16 %v144
  %v510 = vunpack.c.h.b16 %v144
  %v511 = vunpack.c.l.b16 %v145
  %v512 = vunpack.c.h.b16 %v145
  %v513 = vunpack.c.l.b16 %v146
  %v514 = vunpack.c.h.b16 %v146
  %v515 = vunpack.c.l.b16 %v147
  %v516 = vunpack.c.h.b16 %v147
  %v517 = vunpack.c.l.b16 %v148
  %v518 = vunpack.c.h.b16 %v148
  %v519 = vunpack.c.l.b16 %v149
  %v520 = vunpack.c.h.b16 %v149
  %v521 = vunpack.c.l.b16 %v150
  %v522 = vunpack.c.h.b16 %v150
  %v523 = vunpack.c.l.b16 %v151
  %v524 = vunpack.c.h.b16 %v151
  %v525 = vunpack.c.l.b16 %v152
  %v526 = vunpack.c.h.b16 %v152
  %v527 = vunpack.c.l.b16 %v153
  %v528 = vunpack.c.h.b16 %v153
  %v529 = vunpack.c.l.b16 %v154
  %v530 = vunpack.c.h.b16 %v154
  %v531 = vunpack.c.l.b16 %v155
  %v532 = vunpack.c.h.b16 %v155
  %v533 = vunpack.c.l.b16 %v156
  %v534 = vunpack.c.h.b16 %v156
  %v535 = vunpack.c.l.b16 %v157
  %v536 = vunpack.c.h.b16 %v157
  %v537 = vunpack.c.l.b16 %v158
  %v538 = vunpack.c.h.b16 %v158
  %v539 = vunpack.c.l.b16 %v159
  %v540 = vunpack.c.h.b16 %v159
  %v541 = vunpack.c.l.b16 %v160
  %v542 = vunpack.c.h.b16 %v160
  %v543 = vunpack.c.l.b16 %v161
  %v544 = vunpack.c.h.b16 %v161
  %v545 = vunpack.c.l.b16 %v162
  %v546 = vunpack.c.h.b16 %v162
  %v547 = vpack.c.b16 %v299, %v291
  %v548 = vpack.c.b16 %v300, %v292
  %v549 = vpack.c.b16 %v301, %v293
  %v550 = vpack.c.b16 %v302, %v294
  %v551 = vpack.c.b16 %v303, %v295
  %v552 = vpack.c.b16 %v304, %v296
  %v553 = vpack.c.b16 %v305, %v297
  %v554 = vpack.c.b16 %v306, %v298
  %v555 = vpack.c.b16 %v315, %v307
  %v556 = vpack.c.b16 %v316, %v308
  %v557 = vpack.c.b16 %v317, %v309
  %v558 = vpack.c.b16 %v318, %v310
  %v559 = vpack.c.b16 %v319, %v311
  %v560 = vpack.c.b16 %v320, %v312
  %v561 = vpack.c.b16 %v321, %v313
  %v562 = vpack.c.b16 %v322, %v314
  %v563 = vpack.c.b16 %v331, %v323
  %v564 = vpack.c.b16 %v332, %v324
  %v565 = vpack.c.b16 %v333, %v325
  %v566 = vpack.c.b16 %v334, %v326
  %v567 = vpack.c.b16 %v335, %v327
  %v568 = vpack.c.b16 %v336, %v328
  %v569 = vpack.c.b16 %v337, %v329
  %v570 = vpack.c.b16 %v338, %v330
  %v571 = vpack.c.b16 %v347, %v339
  %v572 = vpack.c.b16 %v348, %v340
  %v573 = vpack.c.b16 %v349, %v341
  %v574 = vpack.c.b16 %v350, %v342
  %v575 = vpack.c.b16 %v351, %v343
  %v576 = vpack.c.b16 %v352, %v344
  %v577 = vpack.c.b16 %v353, %v345
  %v578 = vpack.c.b16 %v354, %v346
  %v579 = vpack.c.b16 %v363, %v355
  %v580 = vpack.c.b16 %v364, %v356
  %v581 = vpack.c.b16 %v365, %v357
  %v582 = vpack.c.b16 %v366, %v358
  %v583 = vpack.c.b16 %v367, %v359
  %v584 = vpack.c.b16 %v368, %v360
  %v585 = vpack.c.b16 %v369, %v361
  %v586 = vpack.c.b16 %v370, %v362
  %v587 = vpack.c.b16 %v379, %v371
  %v588 = vpack.c.b16 %v380, %v372
  %v589 = vpack.c.b16 %v381, %v373
  %v590 = vpack.c.b16 %v382, %v374
  %v591 = vpack.c.b16 %v383, %v375
  %v592 = vpack.c.b16 %v384, %v376
  %v593 = vpack.c.b16 %v385, %v377
  %v594 = vpack.c.b16 %v386, %v378
  %v595 = vpack.c.b16 %v395, %v387
  %v596 = vpack.c.b16 %v396, %v388
  %v597 = vpack.c.b16 %v397, %v389
  %v598 = vpack.c.b16 %v398, %v390
  %v599 = vpack.c.b16 %v399, %v391
  %v600 = vpack.c.b16 %v400, %v392
  %v601 = vpack.c.b16 %v401, %v393
  %v602 = vpack.c.b16 %v402, %v394
  %v603 = vpack.c.b16 %v411, %v403
  %v604 = vpack.c.b16 %v412, %v404
  %v605 = vpack.c.b16 %v413, %v405
  %v606 = vpack.c.b16 %v414, %v406
  %v607 = vpack.c.b16 %v415, %v407
  %v608 = vpack.c.b16 %v416, %v408
  %v609 = vpack.c.b16 %v417, %v409
  %v610 = vpack.c.b16 %v418, %v410
  %v611 = vpack.c.b16 %v427, %v419
  %v612 = vpack.c.b16 %v428, %v420
  %v613 = vpack.c.b16 %v429, %v421
  %v614 = vpack.c.b16 %v430, %v422
  %v615 = vpack.c.b16 %v431, %v423
  %v616 = vpack.c.b16 %v432, %v424
  %v617 = vpack.c.b16 %v433, %v425
  %v618 = vpack.c.b16 %v434, %v426
  %v619 = vpack.c.b16 %v443, %v435
  %v620 = vpack.c.b16 %v444, %v436
  %v621 = vpack.c.b16 %v445, %v437
  %v622 = vpack.c.b16 %v446, %v438
  %v623 = vpack.c.b16 %v447, %v439
  %v624 = vpack.c.b16 %v448, %v440
  %v625 = vpack.c.b16 %v449, %v441
  %v626 = vpack.c.b16 %v450, %v442
  %v627 = vpack.c.b16 %v459, %v451
  %v628 = vpack.c.b16 %v460, %v452
  %v629 = vpack.c.b16 %v461, %v453
  %v630 = vpack.c.b16 %v462, %v454
  %v631 = vpack.c.b16 %v463, %v455
  %v632 = vpack.c.b16 %v464, %v456
  %v633 = vpack.c.b16 %v465, %v457
  %v634 = vpack.c.b16 %v466, %v458
  %v635 = vpack.c.b16 %v475, %v467
  %v636 = vpack.c.b16 %v476, %v468
  %v637 = vpack.c.b16 %v477, %v469
  %v638 = vpack.c.b16 %v478, %v470
  %v639 = vpack.c.b16 %v479, %v471
  %v640 = vpack.c.b16 %v480, %v472
  %v641 = vpack.c.b16 %v481, %v473
  %v642 = vpack.c.b16 %v482, %v474
  %v643 = vpack.c.b16 %v491, %v483
  %v644 = vpack.c.b16 %v492, %v484
  %v645 = vpack.c.b16 %v493, %v485
  %v646 = vpack.c.b16 %v494, %v486
  %v647 = vpack.c.b16 %v495, %v487
  %v648 = vpack.c.b16 %v496, %v488
  %v649 = vpack.c.b16 %v497, %v489
  %v650 = vpack.c.b16 %v498, %v490
  %v651 = vpack.c.b16 %v507, %v499
  %v652 = vpack.c.b16 %v508, %v500
  %v653 = vpack.c.b16 %v509, %v501
  %v654 = vpack.c.b16 %v510, %v502
  %v655 = vpack.c.b16 %v511, %v503
  %v656 = vpack.c.b16 %v512, %v504
  %v657 = vpack.c.b16 %v513, %v505
  %v658 = vpack.c.b16 %v514, %v506
  %v659 = vpack.c.b16 %v523, %v515
  %v660 = vpack.c.b16 %v524, %v516
  %v661 = vpack.c.b16 %v525, %v517
  %v662 = vpack.c.b16 %v526, %v518
  %v663 = vpack.c.b16 %v527, %v519
  %v664 = vpack.c.b16 %v528, %v520
  %v665 = vpack.c.b16 %v529, %v521
  %v666 = vpack.c.b16 %v530, %v522
  %v667 = vpack.c.b16 %v539, %v531
  %v668 = vpack.c.b16 %v540, %v532
  %v669 = vpack.c.b16 %v541, %v533
  %v670 = vpack.c.b16 %v542, %v534
  %v671 = vpack.c.b16 %v543, %v535
  %v672 = vpack.c.b16 %v544, %v536
  %v673 = vpack.c.b16 %v545, %v537
  %v674 = vpack.c.b16 %v546, %v538
  %803 = vmatprep.subr.bf16.mxu0 %v548
  %804 = vmatpush1.bf16.msra.mxu0 %v547
  %805 = vmatprep.subr.bf16.mxu0 %v556
  %806 = vmatpush1.bf16.msra.mxu0 %v555
  %807 = vmatprep.subr.bf16.mxu0 %v564
  %808 = vmatpush1.bf16.msra.mxu0 %v563
  %809 = vmatprep.subr.bf16.mxu0 %v572
  %810 = vmatpush1.bf16.msra.mxu0 %v571
  %811 = vmatprep.subr.bf16.mxu0 %v580
  %812 = vmatpush1.bf16.msra.mxu0 %v579
  %813 = vmatprep.subr.bf16.mxu0 %v588
  %814 = vmatpush1.bf16.msra.mxu0 %v587
  %815 = vmatprep.subr.bf16.mxu0 %v596
  %816 = vmatpush1.bf16.msra.mxu0 %v595
  %817 = vmatprep.subr.bf16.mxu0 %v604
  %818 = vmatpush1.bf16.msra.mxu0 %v603
  %819 = vmatprep.subr.bf16.mxu0 %v612
  %820 = vmatpush1.bf16.msra.mxu0 %v611
  %821 = vmatprep.subr.bf16.mxu0 %v620
  %822 = vmatpush1.bf16.msra.mxu0 %v619
  %823 = vmatprep.subr.bf16.mxu0 %v628
  %824 = vmatpush1.bf16.msra.mxu0 %v627
  %825 = vmatprep.subr.bf16.mxu0 %v636
  %826 = vmatpush1.bf16.msra.mxu0 %v635
  %827 = vmatprep.subr.bf16.mxu0 %v644
  %828 = vmatpush1.bf16.msra.mxu0 %v643
  %829 = vmatprep.subr.bf16.mxu0 %v652
  %830 = vmatpush1.bf16.msra.mxu0 %v651
  %831 = vmatprep.subr.bf16.mxu0 %v660
  %832 = vmatpush1.bf16.msra.mxu0 %v659
  %833 = vmatprep.subr.bf16.mxu0 %v668
  %834 = vmatpush1.bf16.msra.mxu0 %v667
  %835 = vmatprep.mubr.bf16.mxu0 %v28
  %836 = vmatmul.mubr.bf16.gmra.mrb[0].mxu0 %v27
  %v837 = vpop.f32.mrb[0].mxu0
  %v838 = vadd.f32 0.0, %v837
  %v839 = vpop.f32.mrb[0].mxu0
  %v840 = vadd.f32 0.0, %v839
  %v841 = vpop.f32.mrb[0].mxu0
  %v842 = vadd.f32 0.0, %v841
  %v843 = vpop.f32.mrb[0].mxu0
  %v844 = vadd.f32 0.0, %v843
  %845 = vmatprep.mubr.bf16.mxu0 %v30
  %846 = vmatmul.mubr.bf16.gmra.mrb[0].mxu0 %v29
  %v847 = vpop.f32.mrb[0].mxu0
  %v848 = vadd.f32 0.0, %v847
  %v849 = vpop.f32.mrb[0].mxu0
  %v850 = vadd.f32 0.0, %v849
  %v851 = vpop.f32.mrb[0].mxu0
  %v852 = vadd.f32 0.0, %v851
  %v853 = vpop.f32.mrb[0].mxu0
  %v854 = vadd.f32 0.0, %v853
  %855 = vmatprep.mubr.bf16.mxu0 %v32
  %856 = vmatmul.mubr.bf16.gmra.mrb[0].mxu0 %v31
  %v857 = vpop.f32.mrb[0].mxu0
  %v858 = vadd.f32 0.0, %v857
  %v859 = vpop.f32.mrb[0].mxu0
  %v860 = vadd.f32 0.0, %v859
  %v861 = vpop.f32.mrb[0].mxu0
  %v862 = vadd.f32 0.0, %v861
  %v863 = vpop.f32.mrb[0].mxu0
  %v864 = vadd.f32 0.0, %v863
  %865 = vmatprep.mubr.bf16.mxu0 %v34
  %866 = vmatmul.mubr.bf16.gmra.mrb[0].mxu0 %v33
  %v867 = vpop.f32.mrb[0].mxu0
  %v868 = vadd.f32 0.0, %v867
  %v869 = vpop.f32.mrb[0].mxu0
  %v870 = vadd.f32 0.0, %v869
  %v871 = vpop.f32.mrb[0].mxu0
  %v872 = vadd.f32 0.0, %v871
  %v873 = vpop.f32.mrb[0].mxu0
  %v874 = vadd.f32 0.0, %v873
  %875 = vdwg.mxu0
  %876 = vmatprep.subr.bf16.mxu0 %v550
  %877 = vmatpush1.bf16.msra.mxu0 %v549
  %878 = vmatprep.subr.bf16.mxu0 %v558
  %879 = vmatpush1.bf16.msra.mxu0 %v557
  %880 = vmatprep.subr.bf16.mxu0 %v566
  %881 = vmatpush1.bf16.msra.mxu0 %v565
  %882 = vmatprep.subr.bf16.mxu0 %v574
  %883 = vmatpush1.bf16.msra.mxu0 %v573
  %884 = vmatprep.subr.bf16.mxu0 %v582
  %885 = vmatpush1.bf16.msra.mxu0 %v581
  %886 = vmatprep.subr.bf16.mxu0 %v590
  %887 = vmatpush1.bf16.msra.mxu0 %v589
  %888 = vmatprep.subr.bf16.mxu0 %v598
  %889 = vmatpush1.bf16.msra.mxu0 %v597
  %890 = vmatprep.subr.bf16.mxu0 %v606
  %891 = vmatpush1.bf16.msra.mxu0 %v605
  %892 = vmatprep.subr.bf16.mxu0 %v614
  %893 = vmatpush1.bf16.msra.mxu0 %v613
  %894 = vmatprep.subr.bf16.mxu0 %v622
  %895 = vmatpush1.bf16.msra.mxu0 %v621
  %896 = vmatprep.subr.bf16.mxu0 %v630
  %897 = vmatpush1.bf16.msra.mxu0 %v629
  %898 = vmatprep.subr.bf16.mxu0 %v638
  %899 = vmatpush1.bf16.msra.mxu0 %v637
  %900 = vmatprep.subr.bf16.mxu0 %v646
  %901 = vmatpush1.bf16.msra.mxu0 %v645
  %902 = vmatprep.subr.bf16.mxu0 %v654
  %903 = vmatpush1.bf16.msra.mxu0 %v653
  %904 = vmatprep.subr.bf16.mxu0 %v662
  %905 = vmatpush1.bf16.msra.mxu0 %v661
  %906 = vmatprep.subr.bf16.mxu0 %v670
  %907 = vmatpush1.bf16.msra.mxu0 %v669
  %908 = vmatprep.mubr.bf16.mxu0 %v28
  %909 = vmatmul.mubr.bf16.gmra.mrb[0].mxu0 %v27
  %v910 = vpop.f32.mrb[0].mxu0
  %v911 = vadd.f32 0.0, %v910
  %v912 = vpop.f32.mrb[0].mxu0
  %v913 = vadd.f32 0.0, %v912
  %v914 = vpop.f32.mrb[0].mxu0
  %v915 = vadd.f32 0.0, %v914
  %v916 = vpop.f32.mrb[0].mxu0
  %v917 = vadd.f32 0.0, %v916
  %918 = vmatprep.mubr.bf16.mxu0 %v30
  %919 = vmatmul.mubr.bf16.gmra.mrb[0].mxu0 %v29
  %v920 = vpop.f32.mrb[0].mxu0
  %v921 = vadd.f32 0.0, %v920
  %v922 = vpop.f32.mrb[0].mxu0
  %v923 = vadd.f32 0.0, %v922
  %v924 = vpop.f32.mrb[0].mxu0
  %v925 = vadd.f32 0.0, %v924
  %v926 = vpop.f32.mrb[0].mxu0
  %v927 = vadd.f32 0.0, %v926
  %928 = vmatprep.mubr.bf16.mxu0 %v32
  %929 = vmatmul.mubr.bf16.gmra.mrb[0].mxu0 %v31
  %v930 = vpop.f32.mrb[0].mxu0
  %v931 = vadd.f32 0.0, %v930
  %v932 = vpop.f32.mrb[0].mxu0
  %v933 = vadd.f32 0.0, %v932
  %v934 = vpop.f32.mrb[0].mxu0
  %v935 = vadd.f32 0.0, %v934
  %v936 = vpop.f32.mrb[0].mxu0
  %v937 = vadd.f32 0.0, %v936
  %938 = vmatprep.mubr.bf16.mxu0 %v34
  %939 = vmatmul.mubr.bf16.gmra.mrb[0].mxu0 %v33
  %v940 = vpop.f32.mrb[0].mxu0
  %v941 = vadd.f32 0.0, %v940
  %v942 = vpop.f32.mrb[0].mxu0
  %v943 = vadd.f32 0.0, %v942
  %v944 = vpop.f32.mrb[0].mxu0
  %v945 = vadd.f32 0.0, %v944
  %v946 = vpop.f32.mrb[0].mxu0
  %v947 = vadd.f32 0.0, %v946
  %948 = vdwg.mxu0
  %949 = vmatprep.subr.bf16.mxu0 %v552
  %950 = vmatpush1.bf16.msra.mxu0 %v551
  %951 = vmatprep.subr.bf16.mxu0 %v560
  %952 = vmatpush1.bf16.msra.mxu0 %v559
  %953 = vmatprep.subr.bf16.mxu0 %v568
  %954 = vmatpush1.bf16.msra.mxu0 %v567
  %955 = vmatprep.subr.bf16.mxu0 %v576
  %956 = vmatpush1.bf16.msra.mxu0 %v575
  %957 = vmatprep.subr.bf16.mxu0 %v584
  %958 = vmatpush1.bf16.msra.mxu0 %v583
  %959 = vmatprep.subr.bf16.mxu0 %v592
  %960 = vmatpush1.bf16.msra.mxu0 %v591
  %961 = vmatprep.subr.bf16.mxu0 %v600
  %962 = vmatpush1.bf16.msra.mxu0 %v599
  %963 = vmatprep.subr.bf16.mxu0 %v608
  %964 = vmatpush1.bf16.msra.mxu0 %v607
  %965 = vmatprep.subr.bf16.mxu0 %v616
  %966 = vmatpush1.bf16.msra.mxu0 %v615
  %967 = vmatprep.subr.bf16.mxu0 %v624
  %968 = vmatpush1.bf16.msra.mxu0 %v623
  %969 = vmatprep.subr.bf16.mxu0 %v632
  %970 = vmatpush1.bf16.msra.mxu0 %v631
  %971 = vmatprep.subr.bf16.mxu0 %v640
  %972 = vmatpush1.bf16.msra.mxu0 %v639
  %973 = vmatprep.subr.bf16.mxu0 %v648
  %974 = vmatpush1.bf16.msra.mxu0 %v647
  %975 = vmatprep.subr.bf16.mxu0 %v656
  %976 = vmatpush1.bf16.msra.mxu0 %v655
  %977 = vmatprep.subr.bf16.mxu0 %v664
  %978 = vmatpush1.bf16.msra.mxu0 %v663
  %979 = vmatprep.subr.bf16.mxu0 %v672
  %980 = vmatpush1.bf16.msra.mxu0 %v671
  %981 = vmatprep.mubr.bf16.mxu0 %v28
  %982 = vmatmul.mubr.bf16.gmra.mrb[0].mxu0 %v27
  %v983 = vpop.f32.mrb[0].mxu0
  %v984 = vadd.f32 0.0, %v983
  %v985 = vpop.f32.mrb[0].mxu0
  %v986 = vadd.f32 0.0, %v985
  %v987 = vpop.f32.mrb[0].mxu0
  %v988 = vadd.f32 0.0, %v987
  %v989 = vpop.f32.mrb[0].mxu0
  %v990 = vadd.f32 0.0, %v989
  %991 = vmatprep.mubr.bf16.mxu0 %v30
  %992 = vmatmul.mubr.bf16.gmra.mrb[0].mxu0 %v29
  %v993 = vpop.f32.mrb[0].mxu0
  %v994 = vadd.f32 0.0, %v993
  %v995 = vpop.f32.mrb[0].mxu0
  %v996 = vadd.f32 0.0, %v995
  %v997 = vpop.f32.mrb[0].mxu0
  %v998 = vadd.f32 0.0, %v997
  %v999 = vpop.f32.mrb[0].mxu0
  %v1000 = vadd.f32 0.0, %v999
  %1001 = vmatprep.mubr.bf16.mxu0 %v32
  %1002 = vmatmul.mubr.bf16.gmra.mrb[0].mxu0 %v31
  %v1003 = vpop.f32.mrb[0].mxu0
  %v1004 = vadd.f32 0.0, %v1003
  %v1005 = vpop.f32.mrb[0].mxu0
  %v1006 = vadd.f32 0.0, %v1005
  %v1007 = vpop.f32.mrb[0].mxu0
  %v1008 = vadd.f32 0.0, %v1007
  %v1009 = vpop.f32.mrb[0].mxu0
  %v1010 = vadd.f32 0.0, %v1009
  %1011 = vmatprep.mubr.bf16.mxu0 %v34
  %1012 = vmatmul.mubr.bf16.gmra.mrb[0].mxu0 %v33
  %v1013 = vpop.f32.mrb[0].mxu0
  %v1014 = vadd.f32 0.0, %v1013
  %v1015 = vpop.f32.mrb[0].mxu0
  %v1016 = vadd.f32 0.0, %v1015
  %v1017 = vpop.f32.mrb[0].mxu0
  %v1018 = vadd.f32 0.0, %v1017
  %v1019 = vpop.f32.mrb[0].mxu0
  %v1020 = vadd.f32 0.0, %v1019
  %1021 = vdwg.mxu0
  %1022 = vmatprep.subr.bf16.mxu0 %v554
  %1023 = vmatpush1.bf16.msra.mxu0 %v553
  %1024 = vmatprep.subr.bf16.mxu0 %v562
  %1025 = vmatpush1.bf16.msra.mxu0 %v561
  %1026 = vmatprep.subr.bf16.mxu0 %v570
  %1027 = vmatpush1.bf16.msra.mxu0 %v569
  %1028 = vmatprep.subr.bf16.mxu0 %v578
  %1029 = vmatpush1.bf16.msra.mxu0 %v577
  %1030 = vmatprep.subr.bf16.mxu0 %v586
  %1031 = vmatpush1.bf16.msra.mxu0 %v585
  %1032 = vmatprep.subr.bf16.mxu0 %v594
  %1033 = vmatpush1.bf16.msra.mxu0 %v593
  %1034 = vmatprep.subr.bf16.mxu0 %v602
  %1035 = vmatpush1.bf16.msra.mxu0 %v601
  %1036 = vmatprep.subr.bf16.mxu0 %v610
  %1037 = vmatpush1.bf16.msra.mxu0 %v609
  %1038 = vmatprep.subr.bf16.mxu0 %v618
  %1039 = vmatpush1.bf16.msra.mxu0 %v617
  %1040 = vmatprep.subr.bf16.mxu0 %v626
  %1041 = vmatpush1.bf16.msra.mxu0 %v625
  %1042 = vmatprep.subr.bf16.mxu0 %v634
  %1043 = vmatpush1.bf16.msra.mxu0 %v633
  %1044 = vmatprep.subr.bf16.mxu0 %v642
  %1045 = vmatpush1.bf16.msra.mxu0 %v641
  %1046 = vmatprep.subr.bf16.mxu0 %v650
  %1047 = vmatpush1.bf16.msra.mxu0 %v649
  %1048 = vmatprep.subr.bf16.mxu0 %v658
  %1049 = vmatpush1.bf16.msra.mxu0 %v657
  %1050 = vmatprep.subr.bf16.mxu0 %v666
  %1051 = vmatpush1.bf16.msra.mxu0 %v665
  %1052 = vmatprep.subr.bf16.mxu0 %v674
  %1053 = vmatpush1.bf16.msra.mxu0 %v673
  %1054 = vmatprep.mubr.bf16.mxu0 %v28
  %1055 = vmatmul.mubr.bf16.gmra.mrb[0].mxu0 %v27
  %v1056 = vpop.f32.mrb[0].mxu0
  %v1057 = vadd.f32 0.0, %v1056
  %v1058 = vpop.f32.mrb[0].mxu0
  %v1059 = vadd.f32 0.0, %v1058
  %v1060 = vpop.f32.mrb[0].mxu0
  %v1061 = vadd.f32 0.0, %v1060
  %v1062 = vpop.f32.mrb[0].mxu0
  %v1063 = vadd.f32 0.0, %v1062
  %1064 = vmatprep.mubr.bf16.mxu0 %v30
  %1065 = vmatmul.mubr.bf16.gmra.mrb[0].mxu0 %v29
  %v1066 = vpop.f32.mrb[0].mxu0
  %v1067 = vadd.f32 0.0, %v1066
  %v1068 = vpop.f32.mrb[0].mxu0
  %v1069 = vadd.f32 0.0, %v1068
  %v1070 = vpop.f32.mrb[0].mxu0
  %v1071 = vadd.f32 0.0, %v1070
  %v1072 = vpop.f32.mrb[0].mxu0
  %v1073 = vadd.f32 0.0, %v1072
  %1074 = vmatprep.mubr.bf16.mxu0 %v32
  %1075 = vmatmul.mubr.bf16.gmra.mrb[0].mxu0 %v31
  %v1076 = vpop.f32.mrb[0].mxu0
  %v1077 = vadd.f32 0.0, %v1076
  %v1078 = vpop.f32.mrb[0].mxu0
  %v1079 = vadd.f32 0.0, %v1078
  %v1080 = vpop.f32.mrb[0].mxu0
  %v1081 = vadd.f32 0.0, %v1080
  %v1082 = vpop.f32.mrb[0].mxu0
  %v1083 = vadd.f32 0.0, %v1082
  %1084 = vmatprep.mubr.bf16.mxu0 %v34
  %1085 = vmatmul.mubr.bf16.gmra.mrb[0].mxu0 %v33
  %v1086 = vpop.f32.mrb[0].mxu0
  %v1087 = vadd.f32 0.0, %v1086
  %v1088 = vpop.f32.mrb[0].mxu0
  %v1089 = vadd.f32 0.0, %v1088
  %v1090 = vpop.f32.mrb[0].mxu0
  %v1091 = vadd.f32 0.0, %v1090
  %v1092 = vpop.f32.mrb[0].mxu0
  %v1093 = vadd.f32 0.0, %v1092
  %1094 = vdwg.mxu0
  %1095 = vst [vmem:[%s2] sm:$0xff] %v838
  %1096 = vst [vmem:[%s2 + $0x8] sm:$0xff] %v840
  %1097 = vst [vmem:[%s2 + $0x10] sm:$0xff] %v911
  %1098 = vst [vmem:[%s2 + $0x18] sm:$0xff] %v913
  %1099 = vst [vmem:[%s2 + $0x20] sm:$0xff] %v984
  %1100 = vst [vmem:[%s2 + $0x28] sm:$0xff] %v986
  %1101 = vst [vmem:[%s2 + $0x30] sm:$0xff] %v1057
  %1102 = vst [vmem:[%s2 + $0x38] sm:$0xff] %v1059
  %1103 = vst [vmem:[%s2 + $0x40] sm:$0xff] %v842
  %1104 = vst [vmem:[%s2 + $0x48] sm:$0xff] %v844
  %1105 = vst [vmem:[%s2 + $0x50] sm:$0xff] %v915
  %1106 = vst [vmem:[%s2 + $0x58] sm:$0xff] %v917
  %1107 = vst [vmem:[%s2 + $0x60] sm:$0xff] %v988
  %1108 = vst [vmem:[%s2 + $0x68] sm:$0xff] %v990
  %1109 = vst [vmem:[%s2 + $0x70] sm:$0xff] %v1061
  %1110 = vst [vmem:[%s2 + $0x78] sm:$0xff] %v1063
  %1111 = vst [vmem:[%s2 + $0x80] sm:$0xff] %v848
  %1112 = vst [vmem:[%s2 + $0x88] sm:$0xff] %v850
  %1113 = vst [vmem:[%s2 + $0x90] sm:$0xff] %v921
  %1114 = vst [vmem:[%s2 + $0x98] sm:$0xff] %v923
  %1115 = vst [vmem:[%s2 + $0xa0] sm:$0xff] %v994
  %1116 = vst [vmem:[%s2 + $0xa8] sm:$0xff] %v996
  %1117 = vst [vmem:[%s2 + $0xb0] sm:$0xff] %v1067
  %1118 = vst [vmem:[%s2 + $0xb8] sm:$0xff] %v1069
  %1119 = vst [vmem:[%s2 + $0xc0] sm:$0xff] %v852
  %1120 = vst [vmem:[%s2 + $0xc8] sm:$0xff] %v854
  %1121 = vst [vmem:[%s2 + $0xd0] sm:$0xff] %v925
  %1122 = vst [vmem:[%s2 + $0xd8] sm:$0xff] %v927
  %1123 = vst [vmem:[%s2 + $0xe0] sm:$0xff] %v998
  %1124 = vst [vmem:[%s2 + $0xe8] sm:$0xff] %v1000
  %1125 = vst [vmem:[%s2 + $0xf0] sm:$0xff] %v1071
  %1126 = vst [vmem:[%s2 + $0xf8] sm:$0xff] %v1073
  %1127 = vst [vmem:[%s2 + $0x100] sm:$0xff] %v858
  %1128 = vst [vmem:[%s2 + $0x108] sm:$0xff] %v860
  %1129 = vst [vmem:[%s2 + $0x110] sm:$0xff] %v931
  %1130 = vst [vmem:[%s2 + $0x118] sm:$0xff] %v933
  %1131 = vst [vmem:[%s2 + $0x120] sm:$0xff] %v1004
  %1132 = vst [vmem:[%s2 + $0x128] sm:$0xff] %v1006
  %1133 = vst [vmem:[%s2 + $0x130] sm:$0xff] %v1077
  %1134 = vst [vmem:[%s2 + $0x138] sm:$0xff] %v1079
  %1135 = vst [vmem:[%s2 + $0x140] sm:$0xff] %v862
  %1136 = vst [vmem:[%s2 + $0x148] sm:$0xff] %v864
  %1137 = vst [vmem:[%s2 + $0x150] sm:$0xff] %v935
  %1138 = vst [vmem:[%s2 + $0x158] sm:$0xff] %v937
  %1139 = vst [vmem:[%s2 + $0x160] sm:$0xff] %v1008
  %1140 = vst [vmem:[%s2 + $0x168] sm:$0xff] %v1010
  %1141 = vst [vmem:[%s2 + $0x170] sm:$0xff] %v1081
  %1142 = vst [vmem:[%s2 + $0x178] sm:$0xff] %v1083
  %1143 = vst [vmem:[%s2 + $0x180] sm:$0xff] %v868
  %1144 = vst [vmem:[%s2 + $0x188] sm:$0xff] %v870
  %1145 = vst [vmem:[%s2 + $0x190] sm:$0xff] %v941
  %1146 = vst [vmem:[%s2 + $0x198] sm:$0xff] %v943
  %1147 = vst [vmem:[%s2 + $0x1a0] sm:$0xff] %v1014
  %1148 = vst [vmem:[%s2 + $0x1a8] sm:$0xff] %v1016
  %1149 = vst [vmem:[%s2 + $0x1b0] sm:$0xff] %v1087
  %1150 = vst [vmem:[%s2 + $0x1b8] sm:$0xff] %v1089
  %1151 = vst [vmem:[%s2 + $0x1c0] sm:$0xff] %v872
  %1152 = vst [vmem:[%s2 + $0x1c8] sm:$0xff] %v874
  %1153 = vst [vmem:[%s2 + $0x1d0] sm:$0xff] %v945
  %1154 = vst [vmem:[%s2 + $0x1d8] sm:$0xff] %v947
  %1155 = vst [vmem:[%s2 + $0x1e0] sm:$0xff] %v1018
  %1156 = vst [vmem:[%s2 + $0x1e8] sm:$0xff] %v1020
  %1157 = vst [vmem:[%s2 + $0x1f0] sm:$0xff] %v1091
  %1158 = vst [vmem:[%s2 + $0x1f8] sm:$0xff] %v1093
  // Predicated region
  $region10: #{decoder_forward.5} parent=0 // pred_check
    _
  $region11: #{decoder_forward.5} parent=0 // pred_check_branch
    %1160 = sbr.rel (0) target = $region13
  $region12: #{decoder_forward.5} parent=0 // pred_region
    _
  $region13: #{decoder_forward.5} parent=0 // pred_fallthru
    _
  // Predicated region
  $region14: #{decoder_forward.5} parent=0 // pred_check
    _
  $region15: #{decoder_forward.5} parent=0 // pred_check_branch
    %1162 = sbr.rel (0) target = $region17
  $region16: #{decoder_forward.5} parent=0 // pred_region
    _
  $region17: #{decoder_forward.5} parent=0 // pred_fallthru
    _

// kernel: decoder_forward.6
$region0: #{decoder_forward.6}
  #allocation0 [shape = 'u32[]', space=smem, size = 0x4, offset = 0x4, fixed_abs, tag = 'smem constant byte address 0x4 - core index']
  #allocation1 [shape = 'u32[144,128]{1,0:T(1,128)}', space=vmem, size = 0x12000, scoped, tag = 'internal scratch']
  %s0 = inlined_call_operand.vmem [shape: f32[256,64], index: 0, kind: input, shape index: {}]
  %s1 = inlined_call_operand.vmem [shape: f32[1,64], index: 1, kind: input, shape index: {}]
  %s2 = inlined_call_operand.vmem [shape: f32[1,64], index: 2, kind: input, shape index: {}]
  %s3 = inlined_call_operand.vmem [shape: bf16[64,512], index: 3, kind: input, shape index: {}]
  %s4 = inlined_call_operand.vmem [shape: f32[256,512], index: 4, kind: output, shape index: {}]
  %s5 = sld [smem:[#allocation0]]
  $region26: #{decoder_forward.6} parent=0
    _
  %s7 = ssub.s32 1, %s5
  %s8 = scalar_select 0, %s7, %s5
  // Predicated region
  $region2: #{decoder_forward.6} parent=0 // pred_check
    _
  $region3: #{decoder_forward.6} parent=0 // pred_check_branch
    %10 = sbr.rel (0) target = $region5
  $region4: #{decoder_forward.6} parent=0 // pred_region
    _
  $region5: #{decoder_forward.6} parent=0 // pred_fallthru
    _
  // Predicated region
  $region6: #{decoder_forward.6} parent=0 // pred_check
    _
  $region7: #{decoder_forward.6} parent=0 // pred_check_branch
    %12 = sbr.rel (0) target = $region9
  $region8: #{decoder_forward.6} parent=0 // pred_region
    _
  $region9: #{decoder_forward.6} parent=0 // pred_fallthru
    _
  // Predicated region
  $region10: #{decoder_forward.6} parent=0 // pred_check
    _
  $region11: #{decoder_forward.6} parent=0 // pred_check_branch
    %14 = sbr.rel (0) target = $region13
  $region12: #{decoder_forward.6} parent=0 // pred_region
    _
  $region13: #{decoder_forward.6} parent=0 // pred_fallthru
    _
  // Predicated region
  $region14: #{decoder_forward.6} parent=0 // pred_check
    _
  $region15: #{decoder_forward.6} parent=0 // pred_check_branch
    %16 = sbr.rel (0) target = $region17
  $region16: #{decoder_forward.6} parent=0 // pred_region
    _
  $region17: #{decoder_forward.6} parent=0 // pred_fallthru
    _
  %v18 = vld [vmem:[%s0] sm:$0xff]
  %v19 = vld [vmem:[%s0 + $0x8] sm:$0xff]
  %v20 = vld [vmem:[%s0 + $0x10] sm:$0xff]
  %v21 = vld [vmem:[%s0 + $0x18] sm:$0xff]
  %v22 = vld [vmem:[%s0 + $0x20] sm:$0xff]
  %v23 = vld [vmem:[%s0 + $0x28] sm:$0xff]
  %v24 = vld [vmem:[%s0 + $0x30] sm:$0xff]
  %v25 = vld [vmem:[%s0 + $0x38] sm:$0xff]
  %v26 = vld [vmem:[%s0 + $0x40] sm:$0xff]
  %v27 = vld [vmem:[%s0 + $0x48] sm:$0xff]
  %v28 = vld [vmem:[%s0 + $0x50] sm:$0xff]
  %v29 = vld [vmem:[%s0 + $0x58] sm:$0xff]
  %v30 = vld [vmem:[%s0 + $0x60] sm:$0xff]
  %v31 = vld [vmem:[%s0 + $0x68] sm:$0xff]
  %v32 = vld [vmem:[%s0 + $0x70] sm:$0xff]
  %v33 = vld [vmem:[%s0 + $0x78] sm:$0xff]
  %v34 = vld [vmem:[%s0 + $0x80] sm:$0xff]
  %v35 = vld [vmem:[%s0 + $0x88] sm:$0xff]
  %v36 = vld [vmem:[%s0 + $0x90] sm:$0xff]
  %v37 = vld [vmem:[%s0 + $0x98] sm:$0xff]
  %v38 = vld [vmem:[%s0 + $0xa0] sm:$0xff]
  %v39 = vld [vmem:[%s0 + $0xa8] sm:$0xff]
  %v40 = vld [vmem:[%s0 + $0xb0] sm:$0xff]
  %v41 = vld [vmem:[%s0 + $0xb8] sm:$0xff]
  %v42 = vld [vmem:[%s0 + $0xc0] sm:$0xff]
  %v43 = vld [vmem:[%s0 + $0xc8] sm:$0xff]
  %v44 = vld [vmem:[%s0 + $0xd0] sm:$0xff]
  %v45 = vld [vmem:[%s0 + $0xd8] sm:$0xff]
  %v46 = vld [vmem:[%s0 + $0xe0] sm:$0xff]
  %v47 = vld [vmem:[%s0 + $0xe8] sm:$0xff]
  %v48 = vld [vmem:[%s0 + $0xf0] sm:$0xff]
  %v49 = vld [vmem:[%s0 + $0xf8] sm:$0xff]
  %v50 = vld [vmem:[%s1] sm:$0x1]
  %v52 = vlaneseq
  %v53 = vshrl.u32 %v52, 7
  %v54 = vsub.s32 0, %v53
  %v55 = vrot.slane %v50, %v54
  %v57 = vmul.f32 %v18, %v55
  %v58 = vmul.f32 %v19, %v55
  %v59 = vmul.f32 %v20, %v55
  %v60 = vmul.f32 %v21, %v55
  %v61 = vmul.f32 %v22, %v55
  %v62 = vmul.f32 %v23, %v55
  %v63 = vmul.f32 %v24, %v55
  %v64 = vmul.f32 %v25, %v55
  %v65 = vmul.f32 %v26, %v55
  %v66 = vmul.f32 %v27, %v55
  %v67 = vmul.f32 %v28, %v55
  %v68 = vmul.f32 %v29, %v55
  %v69 = vmul.f32 %v30, %v55
  %v70 = vmul.f32 %v31, %v55
  %v71 = vmul.f32 %v32, %v55
  %v72 = vmul.f32 %v33, %v55
  %v73 = vmul.f32 %v34, %v55
  %v74 = vmul.f32 %v35, %v55
  %v75 = vmul.f32 %v36, %v55
  %v76 = vmul.f32 %v37, %v55
  %v77 = vmul.f32 %v38, %v55
  %v78 = vmul.f32 %v39, %v55
  %v79 = vmul.f32 %v40, %v55
  %v80 = vmul.f32 %v41, %v55
  %v81 = vmul.f32 %v42, %v55
  %v82 = vmul.f32 %v43, %v55
  %v83 = vmul.f32 %v44, %v55
  %v84 = vmul.f32 %v45, %v55
  %v85 = vmul.f32 %v46, %v55
  %v86 = vmul.f32 %v47, %v55
  %v87 = vmul.f32 %v48, %v55
  %v88 = vmul.f32 %v49, %v55
  %v89 = vld [vmem:[%s2] sm:$0x1]
  %v91 = vlaneseq
  %v92 = vshrl.u32 %v91, 7
  %v93 = vsub.s32 0, %v92
  %v94 = vrot.slane %v89, %v93
  %v96 = vadd.f32 %v57, %v94
  %v97 = vadd.f32 %v58, %v94
  %v98 = vadd.f32 %v59, %v94
  %v99 = vadd.f32 %v60, %v94
  %v100 = vadd.f32 %v61, %v94
  %v101 = vadd.f32 %v62, %v94
  %v102 = vadd.f32 %v63, %v94
  %v103 = vadd.f32 %v64, %v94
  %v104 = vadd.f32 %v65, %v94
  %v105 = vadd.f32 %v66, %v94
  %v106 = vadd.f32 %v67, %v94
  %v107 = vadd.f32 %v68, %v94
  %v108 = vadd.f32 %v69, %v94
  %v109 = vadd.f32 %v70, %v94
  %v110 = vadd.f32 %v71, %v94
  %v111 = vadd.f32 %v72, %v94
  %v112 = vadd.f32 %v73, %v94
  %v113 = vadd.f32 %v74, %v94
  %v114 = vadd.f32 %v75, %v94
  %v115 = vadd.f32 %v76, %v94
  %v116 = vadd.f32 %v77, %v94
  %v117 = vadd.f32 %v78, %v94
  %v118 = vadd.f32 %v79, %v94
  %v119 = vadd.f32 %v80, %v94
  %v120 = vadd.f32 %v81, %v94
  %v121 = vadd.f32 %v82, %v94
  %v122 = vadd.f32 %v83, %v94
  %v123 = vadd.f32 %v84, %v94
  %v124 = vadd.f32 %v85, %v94
  %v125 = vadd.f32 %v86, %v94
  %v126 = vadd.f32 %v87, %v94
  %v127 = vadd.f32 %v88, %v94
  %vm128 = vcmp.ge.f32.partialorder %v96, 0.0
  %vm129 = vcmp.ge.f32.partialorder %v97, 0.0
  %vm130 = vcmp.ge.f32.partialorder %v98, 0.0
  %vm131 = vcmp.ge.f32.partialorder %v99, 0.0
  %vm132 = vcmp.ge.f32.partialorder %v100, 0.0
  %vm133 = vcmp.ge.f32.partialorder %v101, 0.0
  %vm134 = vcmp.ge.f32.partialorder %v102, 0.0
  %vm135 = vcmp.ge.f32.partialorder %v103, 0.0
  %vm136 = vcmp.ge.f32.partialorder %v104, 0.0
  %vm137 = vcmp.ge.f32.partialorder %v105, 0.0
  %vm138 = vcmp.ge.f32.partialorder %v106, 0.0
  %vm139 = vcmp.ge.f32.partialorder %v107, 0.0
  %vm140 = vcmp.ge.f32.partialorder %v108, 0.0
  %vm141 = vcmp.ge.f32.partialorder %v109, 0.0
  %vm142 = vcmp.ge.f32.partialorder %v110, 0.0
  %vm143 = vcmp.ge.f32.partialorder %v111, 0.0
  %vm144 = vcmp.ge.f32.partialorder %v112, 0.0
  %vm145 = vcmp.ge.f32.partialorder %v113, 0.0
  %vm146 = vcmp.ge.f32.partialorder %v114, 0.0
  %vm147 = vcmp.ge.f32.partialorder %v115, 0.0
  %vm148 = vcmp.ge.f32.partialorder %v116, 0.0
  %vm149 = vcmp.ge.f32.partialorder %v117, 0.0
  %vm150 = vcmp.ge.f32.partialorder %v118, 0.0
  %vm151 = vcmp.ge.f32.partialorder %v119, 0.0
  %vm152 = vcmp.ge.f32.partialorder %v120, 0.0
  %vm153 = vcmp.ge.f32.partialorder %v121, 0.0
  %vm154 = vcmp.ge.f32.partialorder %v122, 0.0
  %vm155 = vcmp.ge.f32.partialorder %v123, 0.0
  %vm156 = vcmp.ge.f32.partialorder %v124, 0.0
  %vm157 = vcmp.ge.f32.partialorder %v125, 0.0
  %vm158 = vcmp.ge.f32.partialorder %v126, 0.0
  %vm159 = vcmp.ge.f32.partialorder %v127, 0.0
  %v160 = vmul.f32 %v96, 0.01
  %v161 = vmul.f32 %v97, 0.01
  %v162 = vmul.f32 %v98, 0.01
  %v163 = vmul.f32 %v99, 0.01
  %v164 = vmul.f32 %v100, 0.01
  %v165 = vmul.f32 %v101, 0.01
  %v166 = vmul.f32 %v102, 0.01
  %v167 = vmul.f32 %v103, 0.01
  %v168 = vmul.f32 %v104, 0.01
  %v169 = vmul.f32 %v105, 0.01
  %v170 = vmul.f32 %v106, 0.01
  %v171 = vmul.f32 %v107, 0.01
  %v172 = vmul.f32 %v108, 0.01
  %v173 = vmul.f32 %v109, 0.01
  %v174 = vmul.f32 %v110, 0.01
  %v175 = vmul.f32 %v111, 0.01
  %v176 = vmul.f32 %v112, 0.01
  %v177 = vmul.f32 %v113, 0.01
  %v178 = vmul.f32 %v114, 0.01
  %v179 = vmul.f32 %v115, 0.01
  %v180 = vmul.f32 %v116, 0.01
  %v181 = vmul.f32 %v117, 0.01
  %v182 = vmul.f32 %v118, 0.01
  %v183 = vmul.f32 %v119, 0.01
  %v184 = vmul.f32 %v120, 0.01
  %v185 = vmul.f32 %v121, 0.01
  %v186 = vmul.f32 %v122, 0.01
  %v187 = vmul.f32 %v123, 0.01
  %v188 = vmul.f32 %v124, 0.01
  %v189 = vmul.f32 %v125, 0.01
  %v190 = vmul.f32 %v126, 0.01
  %v191 = vmul.f32 %v127, 0.01
  %v192 = vsel %vm128, %v96, %v160
  %v193 = vsel %vm129, %v97, %v161
  %v194 = vsel %vm130, %v98, %v162
  %v195 = vsel %vm131, %v99, %v163
  %v196 = vsel %vm132, %v100, %v164
  %v197 = vsel %vm133, %v101, %v165
  %v198 = vsel %vm134, %v102, %v166
  %v199 = vsel %vm135, %v103, %v167
  %v200 = vsel %vm136, %v104, %v168
  %v201 = vsel %vm137, %v105, %v169
  %v202 = vsel %vm138, %v106, %v170
  %v203 = vsel %vm139, %v107, %v171
  %v204 = vsel %vm140, %v108, %v172
  %v205 = vsel %vm141, %v109, %v173
  %v206 = vsel %vm142, %v110, %v174
  %v207 = vsel %vm143, %v111, %v175
  %v208 = vsel %vm144, %v112, %v176
  %v209 = vsel %vm145, %v113, %v177
  %v210 = vsel %vm146, %v114, %v178
  %v211 = vsel %vm147, %v115, %v179
  %v212 = vsel %vm148, %v116, %v180
  %v213 = vsel %vm149, %v117, %v181
  %v214 = vsel %vm150, %v118, %v182
  %v215 = vsel %vm151, %v119, %v183
  %v216 = vsel %vm152, %v120, %v184
  %v217 = vsel %vm153, %v121, %v185
  %v218 = vsel %vm154, %v122, %v186
  %v219 = vsel %vm155, %v123, %v187
  %v220 = vsel %vm156, %v124, %v188
  %v221 = vsel %vm157, %v125, %v189
  %v222 = vsel %vm158, %v126, %v190
  %v223 = vsel %vm159, %v127, %v191
  %v224 = vpack.c.bf16 %v193, %v192
  %v225 = vpack.c.bf16 %v195, %v194
  %v226 = vpack.c.bf16 %v197, %v196
  %v227 = vpack.c.bf16 %v199, %v198
  %v228 = vpack.c.bf16 %v201, %v200
  %v229 = vpack.c.bf16 %v203, %v202
  %v230 = vpack.c.bf16 %v205, %v204
  %v231 = vpack.c.bf16 %v207, %v206
  %v232 = vpack.c.bf16 %v209, %v208
  %v233 = vpack.c.bf16 %v211, %v210
  %v234 = vpack.c.bf16 %v213, %v212
  %v235 = vpack.c.bf16 %v215, %v214
  %v236 = vpack.c.bf16 %v217, %v216
  %v237 = vpack.c.bf16 %v219, %v218
  %v238 = vpack.c.bf16 %v221, %v220
  %v239 = vpack.c.bf16 %v223, %v222
  %v240 = vld [vmem:[%s3] sm:$0xff]
  %v241 = vld [vmem:[%s3 + $0x8] sm:$0xff]
  %v242 = vld [vmem:[%s3 + $0x10] sm:$0xff]
  %v243 = vld [vmem:[%s3 + $0x18] sm:$0xff]
  %v244 = vld [vmem:[%s3 + $0x20] sm:$0xff]
  %v245 = vld [vmem:[%s3 + $0x28] sm:$0xff]
  %v246 = vld [vmem:[%s3 + $0x30] sm:$0xff]
  %v247 = vld [vmem:[%s3 + $0x38] sm:$0xff]
  %v248 = vld [vmem:[%s3 + $0x40] sm:$0xff]
  %v249 = vld [vmem:[%s3 + $0x48] sm:$0xff]
  %v250 = vld [vmem:[%s3 + $0x50] sm:$0xff]
  %v251 = vld [vmem:[%s3 + $0x58] sm:$0xff]
  %v252 = vld [vmem:[%s3 + $0x60] sm:$0xff]
  %v253 = vld [vmem:[%s3 + $0x68] sm:$0xff]
  %v254 = vld [vmem:[%s3 + $0x70] sm:$0xff]
  %v255 = vld [vmem:[%s3 + $0x78] sm:$0xff]
  %v272 = vunpack.c.l.b16 %v240
  %v273 = vunpack.c.h.b16 %v240
  %v274 = vunpack.c.l.b16 %v241
  %v275 = vunpack.c.h.b16 %v241
  %v276 = vunpack.c.l.b16 %v242
  %v277 = vunpack.c.h.b16 %v242
  %v278 = vunpack.c.l.b16 %v243
  %v279 = vunpack.c.h.b16 %v243
  %v280 = vunpack.c.l.b16 %v244
  %v281 = vunpack.c.h.b16 %v244
  %v282 = vunpack.c.l.b16 %v245
  %v283 = vunpack.c.h.b16 %v245
  %v284 = vunpack.c.l.b16 %v246
  %v285 = vunpack.c.h.b16 %v246
  %v286 = vunpack.c.l.b16 %v247
  %v287 = vunpack.c.h.b16 %v247
  %v288 = vunpack.c.l.b16 %v248
  %v289 = vunpack.c.h.b16 %v248
  %v290 = vunpack.c.l.b16 %v249
  %v291 = vunpack.c.h.b16 %v249
  %v292 = vunpack.c.l.b16 %v250
  %v293 = vunpack.c.h.b16 %v250
  %v294 = vunpack.c.l.b16 %v251
  %v295 = vunpack.c.h.b16 %v251
  %v296 = vunpack.c.l.b16 %v252
  %v297 = vunpack.c.h.b16 %v252
  %v298 = vunpack.c.l.b16 %v253
  %v299 = vunpack.c.h.b16 %v253
  %v300 = vunpack.c.l.b16 %v254
  %v301 = vunpack.c.h.b16 %v254
  %v302 = vunpack.c.l.b16 %v255
  %v303 = vunpack.c.h.b16 %v255
  %v304 = vpack.c.b16 %v276, %v272
  %v305 = vpack.c.b16 %v277, %v273
  %v306 = vpack.c.b16 %v278, %v274
  %v307 = vpack.c.b16 %v279, %v275
  %v308 = vpack.c.b16 %v284, %v280
  %v309 = vpack.c.b16 %v285, %v281
  %v310 = vpack.c.b16 %v286, %v282
  %v311 = vpack.c.b16 %v287, %v283
  %v312 = vpack.c.b16 %v292, %v288
  %v313 = vpack.c.b16 %v293, %v289
  %v314 = vpack.c.b16 %v294, %v290
  %v315 = vpack.c.b16 %v295, %v291
  %v316 = vpack.c.b16 %v300, %v296
  %v317 = vpack.c.b16 %v301, %v297
  %v318 = vpack.c.b16 %v302, %v298
  %v319 = vpack.c.b16 %v303, %v299
  %vm336 = vcmask 523264
  %v338 = vsel %vm336, %v224, 0
  %v341 = vsel %vm336, %v225, 0
  %v344 = vsel %vm336, %v226, 0
  %v347 = vsel %vm336, %v227, 0
  %v350 = vsel %vm336, %v228, 0
  %v353 = vsel %vm336, %v229, 0
  %v356 = vsel %vm336, %v230, 0
  %v359 = vsel %vm336, %v231, 0
  %v362 = vsel %vm336, %v232, 0
  %v365 = vsel %vm336, %v233, 0
  %v368 = vsel %vm336, %v234, 0
  %v371 = vsel %vm336, %v235, 0
  %v374 = vsel %vm336, %v236, 0
  %v377 = vsel %vm336, %v237, 0
  %v380 = vsel %vm336, %v238, 0
  %v383 = vsel %vm336, %v239, 0
  %385 = vmatprep.subr.bf16.mxu0 %v305
  %386 = vmatpush1.bf16.msra.mxu0 %v304
  %387 = vmatprep.subr.bf16.mxu0 %v309
  %388 = vmatpush1.bf16.msra.mxu0 %v308
  %389 = vmatprep.subr.bf16.mxu0 %v313
  %390 = vmatpush1.bf16.msra.mxu0 %v312
  %391 = vmatprep.subr.bf16.mxu0 %v317
  %392 = vmatpush1.bf16.msra.mxu0 %v316
  %393 = vmatprep.subr.bf16.mxu0 0
  %394 = vmatpush1.bf16.msra.mxu0 0
  %395 = vmatprep.subr.bf16.mxu0 0
  %396 = vmatpush1.bf16.msra.mxu0 0
  %397 = vmatprep.subr.bf16.mxu0 0
  %398 = vmatpush1.bf16.msra.mxu0 0
  %399 = vmatprep.subr.bf16.mxu0 0
  %400 = vmatpush1.bf16.msra.mxu0 0
  %401 = vmatprep.subr.bf16.mxu0 0
  %402 = vmatpush1.bf16.msra.mxu0 0
  %403 = vmatprep.subr.bf16.mxu0 0
  %404 = vmatpush1.bf16.msra.mxu0 0
  %405 = vmatprep.subr.bf16.mxu0 0
  %406 = vmatpush1.bf16.msra.mxu0 0
  %407 = vmatprep.subr.bf16.mxu0 0
  %408 = vmatpush1.bf16.msra.mxu0 0
  %409 = vmatprep.subr.bf16.mxu0 0
  %410 = vmatpush1.bf16.msra.mxu0 0
  %411 = vmatprep.subr.bf16.mxu0 0
  %412 = vmatpush1.bf16.msra.mxu0 0
  %413 = vmatprep.subr.bf16.mxu0 0
  %414 = vmatpush1.bf16.msra.mxu0 0
  %415 = vmatprep.subr.bf16.mxu0 0
  %416 = vmatpush1.bf16.msra.mxu0 0
  %417 = vmatprep.mubr.bf16.mxu0 0
  %418 = vmatmul.mubr.bf16.gmra.mrb[0].mxu0 %v338
  %v419 = vpop.f32.mrb[0].mxu0
  %v420 = vadd.f32 0.0, %v419
  %v421 = vpop.f32.mrb[0].mxu0
  %v422 = vadd.f32 0.0, %v421
  %v423 = vpop.f32.mrb[0].mxu0
  %v424 = vadd.f32 0.0, %v423
  %v425 = vpop.f32.mrb[0].mxu0
  %v426 = vadd.f32 0.0, %v425
  %427 = vmatprep.mubr.bf16.mxu0 0
  %428 = vmatmul.mubr.bf16.gmra.mrb[0].mxu0 %v341
  %v429 = vpop.f32.mrb[0].mxu0
  %v430 = vadd.f32 0.0, %v429
  %v431 = vpop.f32.mrb[0].mxu0
  %v432 = vadd.f32 0.0, %v431
  %v433 = vpop.f32.mrb[0].mxu0
  %v434 = vadd.f32 0.0, %v433
  %v435 = vpop.f32.mrb[0].mxu0
  %v436 = vadd.f32 0.0, %v435
  %437 = vmatprep.mubr.bf16.mxu0 0
  %438 = vmatmul.mubr.bf16.gmra.mrb[0].mxu0 %v344
  %v439 = vpop.f32.mrb[0].mxu0
  %v440 = vadd.f32 0.0, %v439
  %v441 = vpop.f32.mrb[0].mxu0
  %v442 = vadd.f32 0.0, %v441
  %v443 = vpop.f32.mrb[0].mxu0
  %v444 = vadd.f32 0.0, %v443
  %v445 = vpop.f32.mrb[0].mxu0
  %v446 = vadd.f32 0.0, %v445
  %447 = vmatprep.mubr.bf16.mxu0 0
  %448 = vmatmul.mubr.bf16.gmra.mrb[0].mxu0 %v347
  %v449 = vpop.f32.mrb[0].mxu0
  %v450 = vadd.f32 0.0, %v449
  %v451 = vpop.f32.mrb[0].mxu0
  %v452 = vadd.f32 0.0, %v451
  %v453 = vpop.f32.mrb[0].mxu0
  %v454 = vadd.f32 0.0, %v453
  %v455 = vpop.f32.mrb[0].mxu0
  %v456 = vadd.f32 0.0, %v455
  %457 = vmatprep.mubr.bf16.mxu0 0
  %458 = vmatmul.mubr.bf16.gmra.mrb[0].mxu0 %v350
  %v459 = vpop.f32.mrb[0].mxu0
  %v460 = vadd.f32 0.0, %v459
  %v461 = vpop.f32.mrb[0].mxu0
  %v462 = vadd.f32 0.0, %v461
  %v463 = vpop.f32.mrb[0].mxu0
  %v464 = vadd.f32 0.0, %v463
  %v465 = vpop.f32.mrb[0].mxu0
  %v466 = vadd.f32 0.0, %v465
  %467 = vmatprep.mubr.bf16.mxu0 0
  %468 = vmatmul.mubr.bf16.gmra.mrb[0].mxu0 %v353
  %v469 = vpop.f32.mrb[0].mxu0
  %v470 = vadd.f32 0.0, %v469
  %v471 = vpop.f32.mrb[0].mxu0
  %v472 = vadd.f32 0.0, %v471
  %v473 = vpop.f32.mrb[0].mxu0
  %v474 = vadd.f32 0.0, %v473
  %v475 = vpop.f32.mrb[0].mxu0
  %v476 = vadd.f32 0.0, %v475
  %477 = vmatprep.mubr.bf16.mxu0 0
  %478 = vmatmul.mubr.bf16.gmra.mrb[0].mxu0 %v356
  %v479 = vpop.f32.mrb[0].mxu0
  %v480 = vadd.f32 0.0, %v479
  %v481 = vpop.f32.mrb[0].mxu0
  %v482 = vadd.f32 0.0, %v481
  %v483 = vpop.f32.mrb[0].mxu0
  %v484 = vadd.f32 0.0, %v483
  %v485 = vpop.f32.mrb[0].mxu0
  %v486 = vadd.f32 0.0, %v485
  %487 = vmatprep.mubr.bf16.mxu0 0
  %488 = vmatmul.mubr.bf16.gmra.mrb[0].mxu0 %v359
  %v489 = vpop.f32.mrb[0].mxu0
  %v490 = vadd.f32 0.0, %v489
  %v491 = vpop.f32.mrb[0].mxu0
  %v492 = vadd.f32 0.0, %v491
  %v493 = vpop.f32.mrb[0].mxu0
  %v494 = vadd.f32 0.0, %v493
  %v495 = vpop.f32.mrb[0].mxu0
  %v496 = vadd.f32 0.0, %v495
  %497 = vmatprep.mubr.bf16.mxu0 0
  %498 = vmatmul.mubr.bf16.gmra.mrb[0].mxu0 %v362
  %v499 = vpop.f32.mrb[0].mxu0
  %v500 = vadd.f32 0.0, %v499
  %v501 = vpop.f32.mrb[0].mxu0
  %v502 = vadd.f32 0.0, %v501
  %v503 = vpop.f32.mrb[0].mxu0
  %v504 = vadd.f32 0.0, %v503
  %v505 = vpop.f32.mrb[0].mxu0
  %v506 = vadd.f32 0.0, %v505
  %507 = vmatprep.mubr.bf16.mxu0 0
  %508 = vmatmul.mubr.bf16.gmra.mrb[0].mxu0 %v365
  %v509 = vpop.f32.mrb[0].mxu0
  %v510 = vadd.f32 0.0, %v509
  %v511 = vpop.f32.mrb[0].mxu0
  %v512 = vadd.f32 0.0, %v511
  %v513 = vpop.f32.mrb[0].mxu0
  %v514 = vadd.f32 0.0, %v513
  %v515 = vpop.f32.mrb[0].mxu0
  %v516 = vadd.f32 0.0, %v515
  %517 = vmatprep.mubr.bf16.mxu0 0
  %518 = vmatmul.mubr.bf16.gmra.mrb[0].mxu0 %v368
  %v519 = vpop.f32.mrb[0].mxu0
  %v520 = vadd.f32 0.0, %v519
  %v521 = vpop.f32.mrb[0].mxu0
  %v522 = vadd.f32 0.0, %v521
  %v523 = vpop.f32.mrb[0].mxu0
  %v524 = vadd.f32 0.0, %v523
  %v525 = vpop.f32.mrb[0].mxu0
  %v526 = vadd.f32 0.0, %v525
  %527 = vmatprep.mubr.bf16.mxu0 0
  %528 = vmatmul.mubr.bf16.gmra.mrb[0].mxu0 %v371
  %v529 = vpop.f32.mrb[0].mxu0
  %v530 = vadd.f32 0.0, %v529
  %v531 = vpop.f32.mrb[0].mxu0
  %v532 = vadd.f32 0.0, %v531
  %v533 = vpop.f32.mrb[0].mxu0
  %v534 = vadd.f32 0.0, %v533
  %v535 = vpop.f32.mrb[0].mxu0
  %v536 = vadd.f32 0.0, %v535
  %537 = vmatprep.mubr.bf16.mxu0 0
  %538 = vmatmul.mubr.bf16.gmra.mrb[0].mxu0 %v374
  %v539 = vpop.f32.mrb[0].mxu0
  %v540 = vadd.f32 0.0, %v539
  %v541 = vpop.f32.mrb[0].mxu0
  %v542 = vadd.f32 0.0, %v541
  %v543 = vpop.f32.mrb[0].mxu0
  %v544 = vadd.f32 0.0, %v543
  %v545 = vpop.f32.mrb[0].mxu0
  %v546 = vadd.f32 0.0, %v545
  %547 = vmatprep.mubr.bf16.mxu0 0
  %548 = vmatmul.mubr.bf16.gmra.mrb[0].mxu0 %v377
  %v549 = vpop.f32.mrb[0].mxu0
  %v550 = vadd.f32 0.0, %v549
  %v551 = vpop.f32.mrb[0].mxu0
  %v552 = vadd.f32 0.0, %v551
  %v553 = vpop.f32.mrb[0].mxu0
  %v554 = vadd.f32 0.0, %v553
  %v555 = vpop.f32.mrb[0].mxu0
  %v556 = vadd.f32 0.0, %v555
  %557 = vmatprep.mubr.bf16.mxu0 0
  %558 = vmatmul.mubr.bf16.gmra.mrb[0].mxu0 %v380
  %v559 = vpop.f32.mrb[0].mxu0
  %v560 = vadd.f32 0.0, %v559
  %v561 = vpop.f32.mrb[0].mxu0
  %v562 = vadd.f32 0.0, %v561
  %v563 = vpop.f32.mrb[0].mxu0
  %v564 = vadd.f32 0.0, %v563
  %v565 = vpop.f32.mrb[0].mxu0
  %v566 = vadd.f32 0.0, %v565
  %567 = vmatprep.mubr.bf16.mxu0 0
  %568 = vmatmul.mubr.bf16.gmra.mrb[0].mxu0 %v383
  %v569 = vpop.f32.mrb[0].mxu0
  %v570 = vadd.f32 0.0, %v569
  %v571 = vpop.f32.mrb[0].mxu0
  %v572 = vadd.f32 0.0, %v571
  %v573 = vpop.f32.mrb[0].mxu0
  %v574 = vadd.f32 0.0, %v573
  %v575 = vpop.f32.mrb[0].mxu0
  %v576 = vadd.f32 0.0, %v575
  %577 = vdwg.mxu0
  %578 = vmatprep.subr.bf16.mxu0 %v307
  %579 = vmatpush1.bf16.msra.mxu0 %v306
  %580 = vmatprep.subr.bf16.mxu0 %v311
  %581 = vmatpush1.bf16.msra.mxu0 %v310
  %582 = vmatprep.subr.bf16.mxu0 %v315
  %583 = vmatpush1.bf16.msra.mxu0 %v314
  %584 = vmatprep.subr.bf16.mxu0 %v319
  %585 = vmatpush1.bf16.msra.mxu0 %v318
  %586 = vmatprep.subr.bf16.mxu0 0
  %587 = vmatpush1.bf16.msra.mxu0 0
  %588 = vmatprep.subr.bf16.mxu0 0
  %589 = vmatpush1.bf16.msra.mxu0 0
  %590 = vmatprep.subr.bf16.mxu0 0
  %591 = vmatpush1.bf16.msra.mxu0 0
  %592 = vmatprep.subr.bf16.mxu0 0
  %593 = vmatpush1.bf16.msra.mxu0 0
  %594 = vmatprep.subr.bf16.mxu0 0
  %595 = vmatpush1.bf16.msra.mxu0 0
  %596 = vmatprep.subr.bf16.mxu0 0
  %597 = vmatpush1.bf16.msra.mxu0 0
  %598 = vmatprep.subr.bf16.mxu0 0
  %599 = vmatpush1.bf16.msra.mxu0 0
  %600 = vmatprep.subr.bf16.mxu0 0
  %601 = vmatpush1.bf16.msra.mxu0 0
  %602 = vmatprep.subr.bf16.mxu0 0
  %603 = vmatpush1.bf16.msra.mxu0 0
  %604 = vmatprep.subr.bf16.mxu0 0
  %605 = vmatpush1.bf16.msra.mxu0 0
  %606 = vmatprep.subr.bf16.mxu0 0
  %607 = vmatpush1.bf16.msra.mxu0 0
  %608 = vmatprep.subr.bf16.mxu0 0
  %609 = vmatpush1.bf16.msra.mxu0 0
  %610 = vmatprep.mubr.bf16.mxu0 0
  %611 = vmatmul.mubr.bf16.gmra.mrb[0].mxu0 %v338
  %v612 = vpop.f32.mrb[0].mxu0
  %v613 = vadd.f32 0.0, %v612
  %v614 = vpop.f32.mrb[0].mxu0
  %v615 = vadd.f32 0.0, %v614
  %v616 = vpop.f32.mrb[0].mxu0
  %v617 = vadd.f32 0.0, %v616
  %v618 = vpop.f32.mrb[0].mxu0
  %v619 = vadd.f32 0.0, %v618
  %620 = vmatprep.mubr.bf16.mxu0 0
  %621 = vmatmul.mubr.bf16.gmra.mrb[0].mxu0 %v341
  %v622 = vpop.f32.mrb[0].mxu0
  %v623 = vadd.f32 0.0, %v622
  %v624 = vpop.f32.mrb[0].mxu0
  %v625 = vadd.f32 0.0, %v624
  %v626 = vpop.f32.mrb[0].mxu0
  %v627 = vadd.f32 0.0, %v626
  %v628 = vpop.f32.mrb[0].mxu0
  %v629 = vadd.f32 0.0, %v628
  %630 = vmatprep.mubr.bf16.mxu0 0
  %631 = vmatmul.mubr.bf16.gmra.mrb[0].mxu0 %v344
  %v632 = vpop.f32.mrb[0].mxu0
  %v633 = vadd.f32 0.0, %v632
  %v634 = vpop.f32.mrb[0].mxu0
  %v635 = vadd.f32 0.0, %v634
  %v636 = vpop.f32.mrb[0].mxu0
  %v637 = vadd.f32 0.0, %v636
  %v638 = vpop.f32.mrb[0].mxu0
  %v639 = vadd.f32 0.0, %v638
  %640 = vmatprep.mubr.bf16.mxu0 0
  %641 = vmatmul.mubr.bf16.gmra.mrb[0].mxu0 %v347
  %v642 = vpop.f32.mrb[0].mxu0
  %v643 = vadd.f32 0.0, %v642
  %v644 = vpop.f32.mrb[0].mxu0
  %v645 = vadd.f32 0.0, %v644
  %v646 = vpop.f32.mrb[0].mxu0
  %v647 = vadd.f32 0.0, %v646
  %v648 = vpop.f32.mrb[0].mxu0
  %v649 = vadd.f32 0.0, %v648
  %650 = vmatprep.mubr.bf16.mxu0 0
  %651 = vmatmul.mubr.bf16.gmra.mrb[0].mxu0 %v350
  %v652 = vpop.f32.mrb[0].mxu0
  %v653 = vadd.f32 0.0, %v652
  %v654 = vpop.f32.mrb[0].mxu0
  %v655 = vadd.f32 0.0, %v654
  %v656 = vpop.f32.mrb[0].mxu0
  %v657 = vadd.f32 0.0, %v656
  %v658 = vpop.f32.mrb[0].mxu0
  %v659 = vadd.f32 0.0, %v658
  %660 = vmatprep.mubr.bf16.mxu0 0
  %661 = vmatmul.mubr.bf16.gmra.mrb[0].mxu0 %v353
  %v662 = vpop.f32.mrb[0].mxu0
  %v663 = vadd.f32 0.0, %v662
  %v664 = vpop.f32.mrb[0].mxu0
  %v665 = vadd.f32 0.0, %v664
  %v666 = vpop.f32.mrb[0].mxu0
  %v667 = vadd.f32 0.0, %v666
  %v668 = vpop.f32.mrb[0].mxu0
  %v669 = vadd.f32 0.0, %v668
  %670 = vmatprep.mubr.bf16.mxu0 0
  %671 = vmatmul.mubr.bf16.gmra.mrb[0].mxu0 %v356
  %v672 = vpop.f32.mrb[0].mxu0
  %v673 = vadd.f32 0.0, %v672
  %v674 = vpop.f32.mrb[0].mxu0
  %v675 = vadd.f32 0.0, %v674
  %v676 = vpop.f32.mrb[0].mxu0
  %v677 = vadd.f32 0.0, %v676
  %v678 = vpop.f32.mrb[0].mxu0
  %v679 = vadd.f32 0.0, %v678
  %680 = vmatprep.mubr.bf16.mxu0 0
  %681 = vmatmul.mubr.bf16.gmra.mrb[0].mxu0 %v359
  %v682 = vpop.f32.mrb[0].mxu0
  %v683 = vadd.f32 0.0, %v682
  %v684 = vpop.f32.mrb[0].mxu0
  %v685 = vadd.f32 0.0, %v684
  %v686 = vpop.f32.mrb[0].mxu0
  %v687 = vadd.f32 0.0, %v686
  %v688 = vpop.f32.mrb[0].mxu0
  %v689 = vadd.f32 0.0, %v688
  %690 = vmatprep.mubr.bf16.mxu0 0
  %691 = vmatmul.mubr.bf16.gmra.mrb[0].mxu0 %v362
  %v692 = vpop.f32.mrb[0].mxu0
  %v693 = vadd.f32 0.0, %v692
  %v694 = vpop.f32.mrb[0].mxu0
  %v695 = vadd.f32 0.0, %v694
  %v696 = vpop.f32.mrb[0].mxu0
  %v697 = vadd.f32 0.0, %v696
  %v698 = vpop.f32.mrb[0].mxu0
  %v699 = vadd.f32 0.0, %v698
  %700 = vmatprep.mubr.bf16.mxu0 0
  %701 = vmatmul.mubr.bf16.gmra.mrb[0].mxu0 %v365
  %v702 = vpop.f32.mrb[0].mxu0
  %v703 = vadd.f32 0.0, %v702
  %v704 = vpop.f32.mrb[0].mxu0
  %v705 = vadd.f32 0.0, %v704
  %v706 = vpop.f32.mrb[0].mxu0
  %v707 = vadd.f32 0.0, %v706
  %v708 = vpop.f32.mrb[0].mxu0
  %v709 = vadd.f32 0.0, %v708
  %710 = vmatprep.mubr.bf16.mxu0 0
  %711 = vmatmul.mubr.bf16.gmra.mrb[0].mxu0 %v368
  %v712 = vpop.f32.mrb[0].mxu0
  %v713 = vadd.f32 0.0, %v712
  %v714 = vpop.f32.mrb[0].mxu0
  %v715 = vadd.f32 0.0, %v714
  %v716 = vpop.f32.mrb[0].mxu0
  %v717 = vadd.f32 0.0, %v716
  %v718 = vpop.f32.mrb[0].mxu0
  %v719 = vadd.f32 0.0, %v718
  %720 = vmatprep.mubr.bf16.mxu0 0
  %721 = vmatmul.mubr.bf16.gmra.mrb[0].mxu0 %v371
  %v722 = vpop.f32.mrb[0].mxu0
  %v723 = vadd.f32 0.0, %v722
  %v724 = vpop.f32.mrb[0].mxu0
  %v725 = vadd.f32 0.0, %v724
  %v726 = vpop.f32.mrb[0].mxu0
  %v727 = vadd.f32 0.0, %v726
  %v728 = vpop.f32.mrb[0].mxu0
  %v729 = vadd.f32 0.0, %v728
  %730 = vmatprep.mubr.bf16.mxu0 0
  %731 = vmatmul.mubr.bf16.gmra.mrb[0].mxu0 %v374
  %v732 = vpop.f32.mrb[0].mxu0
  %v733 = vadd.f32 0.0, %v732
  %v734 = vpop.f32.mrb[0].mxu0
  %v735 = vadd.f32 0.0, %v734
  %v736 = vpop.f32.mrb[0].mxu0
  %v737 = vadd.f32 0.0, %v736
  %v738 = vpop.f32.mrb[0].mxu0
  %v739 = vadd.f32 0.0, %v738
  %740 = vmatprep.mubr.bf16.mxu0 0
  %741 = vmatmul.mubr.bf16.gmra.mrb[0].mxu0 %v377
  %v742 = vpop.f32.mrb[0].mxu0
  %v743 = vadd.f32 0.0, %v742
  %v744 = vpop.f32.mrb[0].mxu0
  %v745 = vadd.f32 0.0, %v744
  %v746 = vpop.f32.mrb[0].mxu0
  %v747 = vadd.f32 0.0, %v746
  %v748 = vpop.f32.mrb[0].mxu0
  %v749 = vadd.f32 0.0, %v748
  %750 = vmatprep.mubr.bf16.mxu0 0
  %751 = vmatmul.mubr.bf16.gmra.mrb[0].mxu0 %v380
  %v752 = vpop.f32.mrb[0].mxu0
  %v753 = vadd.f32 0.0, %v752
  %v754 = vpop.f32.mrb[0].mxu0
  %v755 = vadd.f32 0.0, %v754
  %v756 = vpop.f32.mrb[0].mxu0
  %v757 = vadd.f32 0.0, %v756
  %v758 = vpop.f32.mrb[0].mxu0
  %v759 = vadd.f32 0.0, %v758
  %760 = vmatprep.mubr.bf16.mxu0 0
  %761 = vmatmul.mubr.bf16.gmra.mrb[0].mxu0 %v383
  %v762 = vpop.f32.mrb[0].mxu0
  %v763 = vadd.f32 0.0, %v762
  %v764 = vpop.f32.mrb[0].mxu0
  %v765 = vadd.f32 0.0, %v764
  %v766 = vpop.f32.mrb[0].mxu0
  %v767 = vadd.f32 0.0, %v766
  %v768 = vpop.f32.mrb[0].mxu0
  %v769 = vadd.f32 0.0, %v768
  %770 = vdwg.mxu0
  %771 = vst [vmem:[%s4] sm:$0xff] %v420
  %772 = vst [vmem:[%s4 + $0x8] sm:$0xff] %v422
  %773 = vst [vmem:[%s4 + $0x10] sm:$0xff] %v613
  %774 = vst [vmem:[%s4 + $0x18] sm:$0xff] %v615
  %775 = vst [vmem:[%s4 + $0x20] sm:$0xff] %v424
  %776 = vst [vmem:[%s4 + $0x28] sm:$0xff] %v426
  %777 = vst [vmem:[%s4 + $0x30] sm:$0xff] %v617
  %778 = vst [vmem:[%s4 + $0x38] sm:$0xff] %v619
  %779 = vst [vmem:[%s4 + $0x40] sm:$0xff] %v430
  %780 = vst [vmem:[%s4 + $0x48] sm:$0xff] %v432
  %781 = vst [vmem:[%s4 + $0x50] sm:$0xff] %v623
  %782 = vst [vmem:[%s4 + $0x58] sm:$0xff] %v625
  %783 = vst [vmem:[%s4 + $0x60] sm:$0xff] %v434
  %784 = vst [vmem:[%s4 + $0x68] sm:$0xff] %v436
  %785 = vst [vmem:[%s4 + $0x70] sm:$0xff] %v627
  %786 = vst [vmem:[%s4 + $0x78] sm:$0xff] %v629
  %787 = vst [vmem:[%s4 + $0x80] sm:$0xff] %v440
  %788 = vst [vmem:[%s4 + $0x88] sm:$0xff] %v442
  %789 = vst [vmem:[%s4 + $0x90] sm:$0xff] %v633
  %790 = vst [vmem:[%s4 + $0x98] sm:$0xff] %v635
  %791 = vst [vmem:[%s4 + $0xa0] sm:$0xff] %v444
  %792 = vst [vmem:[%s4 + $0xa8] sm:$0xff] %v446
  %793 = vst [vmem:[%s4 + $0xb0] sm:$0xff] %v637
  %794 = vst [vmem:[%s4 + $0xb8] sm:$0xff] %v639
  %795 = vst [vmem:[%s4 + $0xc0] sm:$0xff] %v450
  %796 = vst [vmem:[%s4 + $0xc8] sm:$0xff] %v452
  %797 = vst [vmem:[%s4 + $0xd0] sm:$0xff] %v643
  %798 = vst [vmem:[%s4 + $0xd8] sm:$0xff] %v645
  %799 = vst [vmem:[%s4 + $0xe0] sm:$0xff] %v454
  %800 = vst [vmem:[%s4 + $0xe8] sm:$0xff] %v456
  %801 = vst [vmem:[%s4 + $0xf0] sm:$0xff] %v647
  %802 = vst [vmem:[%s4 + $0xf8] sm:$0xff] %v649
  %803 = vst [vmem:[%s4 + $0x100] sm:$0xff] %v460
  %804 = vst [vmem:[%s4 + $0x108] sm:$0xff] %v462
  %805 = vst [vmem:[%s4 + $0x110] sm:$0xff] %v653
  %806 = vst [vmem:[%s4 + $0x118] sm:$0xff] %v655
  %807 = vst [vmem:[%s4 + $0x120] sm:$0xff] %v464
  %808 = vst [vmem:[%s4 + $0x128] sm:$0xff] %v466
  %809 = vst [vmem:[%s4 + $0x130] sm:$0xff] %v657
  %810 = vst [vmem:[%s4 + $0x138] sm:$0xff] %v659
  %811 = vst [vmem:[%s4 + $0x140] sm:$0xff] %v470
  %812 = vst [vmem:[%s4 + $0x148] sm:$0xff] %v472
  %813 = vst [vmem:[%s4 + $0x150] sm:$0xff] %v663
  %814 = vst [vmem:[%s4 + $0x158] sm:$0xff] %v665
  %815 = vst [vmem:[%s4 + $0x160] sm:$0xff] %v474
  %816 = vst [vmem:[%s4 + $0x168] sm:$0xff] %v476
  %817 = vst [vmem:[%s4 + $0x170] sm:$0xff] %v667
  %818 = vst [vmem:[%s4 + $0x178] sm:$0xff] %v669
  %819 = vst [vmem:[%s4 + $0x180] sm:$0xff] %v480
  %820 = vst [vmem:[%s4 + $0x188] sm:$0xff] %v482
  %821 = vst [vmem:[%s4 + $0x190] sm:$0xff] %v673
  %822 = vst [vmem:[%s4 + $0x198] sm:$0xff] %v675
  %823 = vst [vmem:[%s4 + $0x1a0] sm:$0xff] %v484
  %824 = vst [vmem:[%s4 + $0x1a8] sm:$0xff] %v486
  %825 = vst [vmem:[%s4 + $0x1b0] sm:$0xff] %v677
  %826 = vst [vmem:[%s4 + $0x1b8] sm:$0xff] %v679
  %827 = vst [vmem:[%s4 + $0x1c0] sm:$0xff] %v490
  %828 = vst [vmem:[%s4 + $0x1c8] sm:$0xff] %v492
  %829 = vst [vmem:[%s4 + $0x1d0] sm:$0xff] %v683
  %830 = vst [vmem:[%s4 + $0x1d8] sm:$0xff] %v685
  %831 = vst [vmem:[%s4 + $0x1e0] sm:$0xff] %v494
  %832 = vst [vmem:[%s4 + $0x1e8] sm:$0xff] %v496
  %833 = vst [vmem:[%s4 + $0x1f0] sm:$0xff] %v687
  %834 = vst [vmem:[%s4 + $0x1f8] sm:$0xff] %v689
  %835 = vst [vmem:[%s4 + $0x200] sm:$0xff] %v500
  %836 = vst [vmem:[%s4 + $0x208] sm:$0xff] %v502
  %837 = vst [vmem:[%s4 + $0x210] sm:$0xff] %v693
  %838 = vst [vmem:[%s4 + $0x218] sm:$0xff] %v695
  %839 = vst [vmem:[%s4 + $0x220] sm:$0xff] %v504
  %840 = vst [vmem:[%s4 + $0x228] sm:$0xff] %v506
  %841 = vst [vmem:[%s4 + $0x230] sm:$0xff] %v697
  %842 = vst [vmem:[%s4 + $0x238] sm:$0xff] %v699
  %843 = vst [vmem:[%s4 + $0x240] sm:$0xff] %v510
  %844 = vst [vmem:[%s4 + $0x248] sm:$0xff] %v512
  %845 = vst [vmem:[%s4 + $0x250] sm:$0xff] %v703
  %846 = vst [vmem:[%s4 + $0x258] sm:$0xff] %v705
  %847 = vst [vmem:[%s4 + $0x260] sm:$0xff] %v514
  %848 = vst [vmem:[%s4 + $0x268] sm:$0xff] %v516
  %849 = vst [vmem:[%s4 + $0x270] sm:$0xff] %v707
  %850 = vst [vmem:[%s4 + $0x278] sm:$0xff] %v709
  %851 = vst [vmem:[%s4 + $0x280] sm:$0xff] %v520
  %852 = vst [vmem:[%s4 + $0x288] sm:$0xff] %v522
  %853 = vst [vmem:[%s4 + $0x290] sm:$0xff] %v713
  %854 = vst [vmem:[%s4 + $0x298] sm:$0xff] %v715
  %855 = vst [vmem:[%s4 + $0x2a0] sm:$0xff] %v524
  %856 = vst [vmem:[%s4 + $0x2a8] sm:$0xff] %v526
  %857 = vst [vmem:[%s4 + $0x2b0] sm:$0xff] %v717
  %858 = vst [vmem:[%s4 + $0x2b8] sm:$0xff] %v719
  %859 = vst [vmem:[%s4 + $0x2c0] sm:$0xff] %v530
  %860 = vst [vmem:[%s4 + $0x2c8] sm:$0xff] %v532
  %861 = vst [vmem:[%s4 + $0x2d0] sm:$0xff] %v723
  %862 = vst [vmem:[%s4 + $0x2d8] sm:$0xff] %v725
  %863 = vst [vmem:[%s4 + $0x2e0] sm:$0xff] %v534
  %864 = vst [vmem:[%s4 + $0x2e8] sm:$0xff] %v536
  %865 = vst [vmem:[%s4 + $0x2f0] sm:$0xff] %v727
  %866 = vst [vmem:[%s4 + $0x2f8] sm:$0xff] %v729
  %867 = vst [vmem:[%s4 + $0x300] sm:$0xff] %v540
  %868 = vst [vmem:[%s4 + $0x308] sm:$0xff] %v542
  %869 = vst [vmem:[%s4 + $0x310] sm:$0xff] %v733
  %870 = vst [vmem:[%s4 + $0x318] sm:$0xff] %v735
  %871 = vst [vmem:[%s4 + $0x320] sm:$0xff] %v544
  %872 = vst [vmem:[%s4 + $0x328] sm:$0xff] %v546
  %873 = vst [vmem:[%s4 + $0x330] sm:$0xff] %v737
  %874 = vst [vmem:[%s4 + $0x338] sm:$0xff] %v739
  %875 = vst [vmem:[%s4 + $0x340] sm:$0xff] %v550
  %876 = vst [vmem:[%s4 + $0x348] sm:$0xff] %v552
  %877 = vst [vmem:[%s4 + $0x350] sm:$0xff] %v743
  %878 = vst [vmem:[%s4 + $0x358] sm:$0xff] %v745
  %879 = vst [vmem:[%s4 + $0x360] sm:$0xff] %v554
  %880 = vst [vmem:[%s4 + $0x368] sm:$0xff] %v556
  %881 = vst [vmem:[%s4 + $0x370] sm:$0xff] %v747
  %882 = vst [vmem:[%s4 + $0x378] sm:$0xff] %v749
  %883 = vst [vmem:[%s4 + $0x380] sm:$0xff] %v560
  %884 = vst [vmem:[%s4 + $0x388] sm:$0xff] %v562
  %885 = vst [vmem:[%s4 + $0x390] sm:$0xff] %v753
  %886 = vst [vmem:[%s4 + $0x398] sm:$0xff] %v755
  %887 = vst [vmem:[%s4 + $0x3a0] sm:$0xff] %v564
  %888 = vst [vmem:[%s4 + $0x3a8] sm:$0xff] %v566
  %889 = vst [vmem:[%s4 + $0x3b0] sm:$0xff] %v757
  %890 = vst [vmem:[%s4 + $0x3b8] sm:$0xff] %v759
  %891 = vst [vmem:[%s4 + $0x3c0] sm:$0xff] %v570
  %892 = vst [vmem:[%s4 + $0x3c8] sm:$0xff] %v572
  %893 = vst [vmem:[%s4 + $0x3d0] sm:$0xff] %v763
  %894 = vst [vmem:[%s4 + $0x3d8] sm:$0xff] %v765
  %895 = vst [vmem:[%s4 + $0x3e0] sm:$0xff] %v574
  %896 = vst [vmem:[%s4 + $0x3e8] sm:$0xff] %v576
  %897 = vst [vmem:[%s4 + $0x3f0] sm:$0xff] %v767
  %898 = vst [vmem:[%s4 + $0x3f8] sm:$0xff] %v769
  // Predicated region
  $region18: #{decoder_forward.6} parent=0 // pred_check
    _
  $region19: #{decoder_forward.6} parent=0 // pred_check_branch
    %900 = sbr.rel (0) target = $region21
  $region20: #{decoder_forward.6} parent=0 // pred_region
    _
  $region21: #{decoder_forward.6} parent=0 // pred_fallthru
    _
  // Predicated region
  $region22: #{decoder_forward.6} parent=0 // pred_check
    _
  $region23: #{decoder_forward.6} parent=0 // pred_check_branch
    %902 = sbr.rel (0) target = $region25
  $region24: #{decoder_forward.6} parent=0 // pred_region
    _
  $region25: #{decoder_forward.6} parent=0 // pred_fallthru
    _

// kernel: decoder_forward.4
$region0: #{decoder_forward.4}
  #allocation0 [shape = 'u32[]', space=smem, size = 0x4, offset = 0x4, fixed_abs, tag = 'smem constant byte address 0x4 - core index']
  #allocation1 [shape = 'u32[144,128]{1,0:T(1,128)}', space=vmem, size = 0x12000, scoped, tag = 'internal scratch']
  %s0 = inlined_call_operand.hbm [shape: f32[4,256], index: 0, kind: input, shape index: {}]
  %s1 = inlined_call_operand.hbm [shape: bf16[256,4096], index: 1, kind: input, shape index: {}]
  %s2 = inlined_call_operand.hbm [shape: f32[1,4096], index: 2, kind: input, shape index: {}]
  %s3 = inlined_call_operand.hbm [shape: f32[1,4096], index: 3, kind: input, shape index: {}]
  %s4 = inlined_call_operand.vmem [shape: f32[4,4096], index: 4, kind: output, shape index: {}]
  %s5 = sld [smem:[#allocation0]]
  $region42: #{decoder_forward.4} parent=0
    _
  %s7 = ssub.s32 1, %s5
  %s8 = scalar_select 0, %s7, %s5
  $region1: #{decoder_forward.4} parent=0
    #allocation2 [shape = 'u8[4096]{0}', space=vmem, size = 0x1000, scoped, tag = 'input window, operand 0, single buffered']
    #allocation3 [shape = 's32[1]{0}', space=sflag, size = 0x4, scoped, tag = 'scoped memory for decoder_forward.4']
    #allocation4 [shape = 'u8[2097152]{0}', space=vmem, size = 0x200000, scoped, tag = 'input window, operand 1, single buffered']
    #allocation5 [shape = 's32[1]{0}', space=sflag, size = 0x4, scoped, tag = 'scoped memory for decoder_forward.4']
    #allocation6 [shape = 'u8[16384]{0}', space=vmem, size = 0x4000, scoped, tag = 'input window, operand 2, single buffered']
    #allocation7 [shape = 'u8[16384]{0}', space=vmem, size = 0x4000, scoped, tag = 'input window, operand 3, single buffered']
    #allocation8 [shape = 's32[1]{0}', space=sflag, size = 0x4, scoped, tag = 'scoped memory for decoder_forward.4']
    %9 = vsyncpa [#allocation3], 0
    %10 = vsyncpa [#allocation5], 0
    %11 = vsyncpa [#allocation8], 0
    // Predicated region
    $region2: #{decoder_forward.4} parent=1 // pred_check
      _
    $region3: #{decoder_forward.4} parent=1 // pred_check_branch
      %13 = sbr.rel (0) target = $region5
    $region4: #{decoder_forward.4} parent=1 // pred_region
      %s15 = ssub.s32 128, 128
      %16 = vsyncadd [#allocation3], %s15
      %s18 = sshll.u32 [#allocation2], 4
      %s19 = int_to_ptr.vmem [resolvable:$true] %s18
      %21 = dma.hbm_to_vmem [thread:$0]  %s0, 128, %s19, [#allocation3]
    $region5: #{decoder_forward.4} parent=1 // pred_fallthru
      _
    // Predicated region
    $region6: #{decoder_forward.4} parent=1 // pred_check
      _
    $region7: #{decoder_forward.4} parent=1 // pred_check_branch
      %23 = sbr.rel (0) target = $region9
    $region8: #{decoder_forward.4} parent=1 // pred_region
      %s25 = ssub.s32 65536, 65536
      %26 = vsyncadd [#allocation5], %s25
      %s27 = sshll.u32 [#allocation4], 4
      %s28 = int_to_ptr.vmem [resolvable:$true] %s27
      %33 = dma.hbm_to_vmem [thread:$0]  %s1, 65536, %s28, [#allocation5], 2048, 2048, 128
    $region9: #{decoder_forward.4} parent=1 // pred_fallthru
      _
    // Predicated region
    $region10: #{decoder_forward.4} parent=1 // pred_check
      _
    $region11: #{decoder_forward.4} parent=1 // pred_check_branch
      %35 = sbr.rel (0) target = $region13
    $region12: #{decoder_forward.4} parent=1 // pred_region
      %s37 = ssub.s32 512, 512
      %38 = vsyncadd [#allocation5], %s37
      %s40 = sshll.u32 [#allocation6], 4
      %s41 = int_to_ptr.vmem [resolvable:$true] %s40
      %43 = dma.hbm_to_vmem [thread:$0]  %s2, 512, %s41, [#allocation5]
    $region13: #{decoder_forward.4} parent=1 // pred_fallthru
      _
    // Predicated region
    $region14: #{decoder_forward.4} parent=1 // pred_check
      _
    $region15: #{decoder_forward.4} parent=1 // pred_check_branch
      %45 = sbr.rel (0) target = $region17
    $region16: #{decoder_forward.4} parent=1 // pred_region
      %s47 = ssub.s32 512, 512
      %48 = vsyncadd [#allocation8], %s47
      %s50 = sshll.u32 [#allocation7], 4
      %s51 = int_to_ptr.vmem [resolvable:$true] %s50
      %53 = dma.hbm_to_vmem [thread:$0]  %s3, 512, %s51, [#allocation8]
    $region17: #{decoder_forward.4} parent=1 // pred_fallthru
      _
    // Predicated region
    $region18: #{decoder_forward.4} parent=1 // pred_check
      _
    $region19: #{decoder_forward.4} parent=1 // pred_check_branch
      %55 = sbr.rel (0) target = $region21
    $region20: #{decoder_forward.4} parent=1 // pred_region
      %56 = dma.done [#allocation3], 128
    $region21: #{decoder_forward.4} parent=1 // pred_fallthru
      _
    // Predicated region
    $region22: #{decoder_forward.4} parent=1 // pred_check
      _
    $region23: #{decoder_forward.4} parent=1 // pred_check_branch
      %58 = sbr.rel (0) target = $region25
    $region24: #{decoder_forward.4} parent=1 // pred_region
      %59 = dma.done [#allocation5], 65536
    $region25: #{decoder_forward.4} parent=1 // pred_fallthru
      _
    // Predicated region
    $region26: #{decoder_forward.4} parent=1 // pred_check
      _
    $region27: #{decoder_forward.4} parent=1 // pred_check_branch
      %61 = sbr.rel (0) target = $region29
    $region28: #{decoder_forward.4} parent=1 // pred_region
      %62 = dma.done [#allocation5], 512
    $region29: #{decoder_forward.4} parent=1 // pred_fallthru
      _
    // Predicated region
    $region30: #{decoder_forward.4} parent=1 // pred_check
      _
    $region31: #{decoder_forward.4} parent=1 // pred_check_branch
      %64 = sbr.rel (0) target = $region33
    $region32: #{decoder_forward.4} parent=1 // pred_region
      %65 = dma.done [#allocation8], 512
    $region33: #{decoder_forward.4} parent=1 // pred_fallthru
      _
    %v66 = vld [vmem:[#allocation2] sm:$0xff]
    %v68 = vcombine.high %v66, %v66
    %v70 = vpack.c.bf16 %v66, %v66
    %v71 = vpack.c.bf16 %v68, %v68
    %v72 = vld [vmem:[#allocation4] sm:$0xff]
    %v73 = vld [vmem:[#allocation4 + $0x8] sm:$0xff]
    %v74 = vld [vmem:[#allocation4 + $0x10] sm:$0xff]
    %v75 = vld [vmem:[#allocation4 + $0x18] sm:$0xff]
    %v76 = vld [vmem:[#allocation4 + $0x20] sm:$0xff]
    %v77 = vld [vmem:[#allocation4 + $0x28] sm:$0xff]
    %v78 = vld [vmem:[#allocation4 + $0x30] sm:$0xff]
    %v79 = vld [vmem:[#allocation4 + $0x38] sm:$0xff]
    %v80 = vld [vmem:[#allocation4 + $0x40] sm:$0xff]
    %v81 = vld [vmem:[#allocation4 + $0x48] sm:$0xff]
    %v82 = vld [vmem:[#allocation4 + $0x50] sm:$0xff]
    %v83 = vld [vmem:[#allocation4 + $0x58] sm:$0xff]
    %v84 = vld [vmem:[#allocation4 + $0x60] sm:$0xff]
    %v85 = vld [vmem:[#allocation4 + $0x68] sm:$0xff]
    %v86 = vld [vmem:[#allocation4 + $0x70] sm:$0xff]
    %v87 = vld [vmem:[#allocation4 + $0x78] sm:$0xff]
    %v88 = vld [vmem:[#allocation4 + $0x80] sm:$0xff]
    %v89 = vld [vmem:[#allocation4 + $0x88] sm:$0xff]
    %v90 = vld [vmem:[#allocation4 + $0x90] sm:$0xff]
    %v91 = vld [vmem:[#allocation4 + $0x98] sm:$0xff]
    %v92 = vld [vmem:[#allocation4 + $0xa0] sm:$0xff]
    %v93 = vld [vmem:[#allocation4 + $0xa8] sm:$0xff]
    %v94 = vld [vmem:[#allocation4 + $0xb0] sm:$0xff]
    %v95 = vld [vmem:[#allocation4 + $0xb8] sm:$0xff]
    %v96 = vld [vmem:[#allocation4 + $0xc0] sm:$0xff]
    %v97 = vld [vmem:[#allocation4 + $0xc8] sm:$0xff]
    %v98 = vld [vmem:[#allocation4 + $0xd0] sm:$0xff]
    %v99 = vld [vmem:[#allocation4 + $0xd8] sm:$0xff]
    %v100 = vld [vmem:[#allocation4 + $0xe0] sm:$0xff]
    %v101 = vld [vmem:[#allocation4 + $0xe8] sm:$0xff]
    %v102 = vld [vmem:[#allocation4 + $0xf0] sm:$0xff]
    %v103 = vld [vmem:[#allocation4 + $0xf8] sm:$0xff]
    %v104 = vld [vmem:[#allocation4 + $0x100] sm:$0xff]
    %v105 = vld [vmem:[#allocation4 + $0x108] sm:$0xff]
    %v106 = vld [vmem:[#allocation4 + $0x110] sm:$0xff]
    %v107 = vld [vmem:[#allocation4 + $0x118] sm:$0xff]
    %v108 = vld [vmem:[#allocation4 + $0x120] sm:$0xff]
    %v109 = vld [vmem:[#allocation4 + $0x128] sm:$0xff]
    %v110 = vld [vmem:[#allocation4 + $0x130] sm:$0xff]
    %v111 = vld [vmem:[#allocation4 + $0x138] sm:$0xff]
    %v112 = vld [vmem:[#allocation4 + $0x140] sm:$0xff]
    %v113 = vld [vmem:[#allocation4 + $0x148] sm:$0xff]
    %v114 = vld [vmem:[#allocation4 + $0x150] sm:$0xff]
    %v115 = vld [vmem:[#allocation4 + $0x158] sm:$0xff]
    %v116 = vld [vmem:[#allocation4 + $0x160] sm:$0xff]
    %v117 = vld [vmem:[#allocation4 + $0x168] sm:$0xff]
    %v118 = vld [vmem:[#allocation4 + $0x170] sm:$0xff]
    %v119 = vld [vmem:[#allocation4 + $0x178] sm:$0xff]
    %v120 = vld [vmem:[#allocation4 + $0x180] sm:$0xff]
    %v121 = vld [vmem:[#allocation4 + $0x188] sm:$0xff]
    %v122 = vld [vmem:[#allocation4 + $0x190] sm:$0xff]
    %v123 = vld [vmem:[#allocation4 + $0x198] sm:$0xff]
    %v124 = vld [vmem:[#allocation4 + $0x1a0] sm:$0xff]
    %v125 = vld [vmem:[#allocation4 + $0x1a8] sm:$0xff]
    %v126 = vld [vmem:[#allocation4 + $0x1b0] sm:$0xff]
    %v127 = vld [vmem:[#allocation4 + $0x1b8] sm:$0xff]
    %v128 = vld [vmem:[#allocation4 + $0x1c0] sm:$0xff]
    %v129 = vld [vmem:[#allocation4 + $0x1c8] sm:$0xff]
    %v130 = vld [vmem:[#allocation4 + $0x1d0] sm:$0xff]
    %v131 = vld [vmem:[#allocation4 + $0x1d8] sm:$0xff]
    %v132 = vld [vmem:[#allocation4 + $0x1e0] sm:$0xff]
    %v133 = vld [vmem:[#allocation4 + $0x1e8] sm:$0xff]
    %v134 = vld [vmem:[#allocation4 + $0x1f0] sm:$0xff]
    %v135 = vld [vmem:[#allocation4 + $0x1f8] sm:$0xff]
    %v136 = vld [vmem:[#allocation4 + $0x200] sm:$0xff]
    %v137 = vld [vmem:[#allocation4 + $0x208] sm:$0xff]
    %v138 = vld [vmem:[#allocation4 + $0x210] sm:$0xff]
    %v139 = vld [vmem:[#allocation4 + $0x218] sm:$0xff]
    %v140 = vld [vmem:[#allocation4 + $0x220] sm:$0xff]
    %v141 = vld [vmem:[#allocation4 + $0x228] sm:$0xff]
    %v142 = vld [vmem:[#allocation4 + $0x230] sm:$0xff]
    %v143 = vld [vmem:[#allocation4 + $0x238] sm:$0xff]
    %v144 = vld [vmem:[#allocation4 + $0x240] sm:$0xff]
    %v145 = vld [vmem:[#allocation4 + $0x248] sm:$0xff]
    %v146 = vld [vmem:[#allocation4 + $0x250] sm:$0xff]
    %v147 = vld [vmem:[#allocation4 + $0x258] sm:$0xff]
    %v148 = vld [vmem:[#allocation4 + $0x260] sm:$0xff]
    %v149 = vld [vmem:[#allocation4 + $0x268] sm:$0xff]
    %v150 = vld [vmem:[#allocation4 + $0x270] sm:$0xff]
    %v151 = vld [vmem:[#allocation4 + $0x278] sm:$0xff]
    %v152 = vld [vmem:[#allocation4 + $0x280] sm:$0xff]
    %v153 = vld [vmem:[#allocation4 + $0x288] sm:$0xff]
    %v154 = vld [vmem:[#allocation4 + $0x290] sm:$0xff]
    %v155 = vld [vmem:[#allocation4 + $0x298] sm:$0xff]
    %v156 = vld [vmem:[#allocation4 + $0x2a0] sm:$0xff]
    %v157 = vld [vmem:[#allocation4 + $0x2a8] sm:$0xff]
    %v158 = vld [vmem:[#allocation4 + $0x2b0] sm:$0xff]
    %v159 = vld [vmem:[#allocation4 + $0x2b8] sm:$0xff]
    %v160 = vld [vmem:[#allocation4 + $0x2c0] sm:$0xff]
    %v161 = vld [vmem:[#allocation4 + $0x2c8] sm:$0xff]
    %v162 = vld [vmem:[#allocation4 + $0x2d0] sm:$0xff]
    %v163 = vld [vmem:[#allocation4 + $0x2d8] sm:$0xff]
    %v164 = vld [vmem:[#allocation4 + $0x2e0] sm:$0xff]
    %v165 = vld [vmem:[#allocation4 + $0x2e8] sm:$0xff]
    %v166 = vld [vmem:[#allocation4 + $0x2f0] sm:$0xff]
    %v167 = vld [vmem:[#allocation4 + $0x2f8] sm:$0xff]
    %v168 = vld [vmem:[#allocation4 + $0x300] sm:$0xff]
    %v169 = vld [vmem:[#allocation4 + $0x308] sm:$0xff]
    %v170 = vld [vmem:[#allocation4 + $0x310] sm:$0xff]
    %v171 = vld [vmem:[#allocation4 + $0x318] sm:$0xff]
    %v172 = vld [vmem:[#allocation4 + $0x320] sm:$0xff]
    %v173 = vld [vmem:[#allocation4 + $0x328] sm:$0xff]
    %v174 = vld [vmem:[#allocation4 + $0x330] sm:$0xff]
    %v175 = vld [vmem:[#allocation4 + $0x338] sm:$0xff]
    %v176 = vld [vmem:[#allocation4 + $0x340] sm:$0xff]
    %v177 = vld [vmem:[#allocation4 + $0x348] sm:$0xff]
    %v178 = vld [vmem:[#allocation4 + $0x350] sm:$0xff]
    %v179 = vld [vmem:[#allocation4 + $0x358] sm:$0xff]
    %v180 = vld [vmem:[#allocation4 + $0x360] sm:$0xff]
    %v181 = vld [vmem:[#allocation4 + $0x368] sm:$0xff]
    %v182 = vld [vmem:[#allocation4 + $0x370] sm:$0xff]
    %v183 = vld [vmem:[#allocation4 + $0x378] sm:$0xff]
    %v184 = vld [vmem:[#allocation4 + $0x380] sm:$0xff]
    %v185 = vld [vmem:[#allocation4 + $0x388] sm:$0xff]
    %v186 = vld [vmem:[#allocation4 + $0x390] sm:$0xff]
    %v187 = vld [vmem:[#allocation4 + $0x398] sm:$0xff]
    %v188 = vld [vmem:[#allocation4 + $0x3a0] sm:$0xff]
    %v189 = vld [vmem:[#allocation4 + $0x3a8] sm:$0xff]
    %v190 = vld [vmem:[#allocation4 + $0x3b0] sm:$0xff]
    %v191 = vld [vmem:[#allocation4 + $0x3b8] sm:$0xff]
    %v192 = vld [vmem:[#allocation4 + $0x3c0] sm:$0xff]
    %v193 = vld [vmem:[#allocation4 + $0x3c8] sm:$0xff]
    %v194 = vld [vmem:[#allocation4 + $0x3d0] sm:$0xff]
    %v195 = vld [vmem:[#allocation4 + $0x3d8] sm:$0xff]
    %v196 = vld [vmem:[#allocation4 + $0x3e0] sm:$0xff]
    %v197 = vld [vmem:[#allocation4 + $0x3e8] sm:$0xff]
    %v198 = vld [vmem:[#allocation4 + $0x3f0] sm:$0xff]
    %v199 = vld [vmem:[#allocation4 + $0x3f8] sm:$0xff]
    %v200 = vld [vmem:[#allocation4 + $0x400] sm:$0xff]
    %v201 = vld [vmem:[#allocation4 + $0x408] sm:$0xff]
    %v202 = vld [vmem:[#allocation4 + $0x410] sm:$0xff]
    %v203 = vld [vmem:[#allocation4 + $0x418] sm:$0xff]
    %v204 = vld [vmem:[#allocation4 + $0x420] sm:$0xff]
    %v205 = vld [vmem:[#allocation4 + $0x428] sm:$0xff]
    %v206 = vld [vmem:[#allocation4 + $0x430] sm:$0xff]
    %v207 = vld [vmem:[#allocation4 + $0x438] sm:$0xff]
    %v208 = vld [vmem:[#allocation4 + $0x440] sm:$0xff]
    %v209 = vld [vmem:[#allocation4 + $0x448] sm:$0xff]
    %v210 = vld [vmem:[#allocation4 + $0x450] sm:$0xff]
    %v211 = vld [vmem:[#allocation4 + $0x458] sm:$0xff]
    %v212 = vld [vmem:[#allocation4 + $0x460] sm:$0xff]
    %v213 = vld [vmem:[#allocation4 + $0x468] sm:$0xff]
    %v214 = vld [vmem:[#allocation4 + $0x470] sm:$0xff]
    %v215 = vld [vmem:[#allocation4 + $0x478] sm:$0xff]
    %v216 = vld [vmem:[#allocation4 + $0x480] sm:$0xff]
    %v217 = vld [vmem:[#allocation4 + $0x488] sm:$0xff]
    %v218 = vld [vmem:[#allocation4 + $0x490] sm:$0xff]
    %v219 = vld [vmem:[#allocation4 + $0x498] sm:$0xff]
    %v220 = vld [vmem:[#allocation4 + $0x4a0] sm:$0xff]
    %v221 = vld [vmem:[#allocation4 + $0x4a8] sm:$0xff]
    %v222 = vld [vmem:[#allocation4 + $0x4b0] sm:$0xff]
    %v223 = vld [vmem:[#allocation4 + $0x4b8] sm:$0xff]
    %v224 = vld [vmem:[#allocation4 + $0x4c0] sm:$0xff]
    %v225 = vld [vmem:[#allocation4 + $0x4c8] sm:$0xff]
    %v226 = vld [vmem:[#allocation4 + $0x4d0] sm:$0xff]
    %v227 = vld [vmem:[#allocation4 + $0x4d8] sm:$0xff]
    %v228 = vld [vmem:[#allocation4 + $0x4e0] sm:$0xff]
    %v229 = vld [vmem:[#allocation4 + $0x4e8] sm:$0xff]
    %v230 = vld [vmem:[#allocation4 + $0x4f0] sm:$0xff]
    %v231 = vld [vmem:[#allocation4 + $0x4f8] sm:$0xff]
    %v232 = vld [vmem:[#allocation4 + $0x500] sm:$0xff]
    %v233 = vld [vmem:[#allocation4 + $0x508] sm:$0xff]
    %v234 = vld [vmem:[#allocation4 + $0x510] sm:$0xff]
    %v235 = vld [vmem:[#allocation4 + $0x518] sm:$0xff]
    %v236 = vld [vmem:[#allocation4 + $0x520] sm:$0xff]
    %v237 = vld [vmem:[#allocation4 + $0x528] sm:$0xff]
    %v238 = vld [vmem:[#allocation4 + $0x530] sm:$0xff]
    %v239 = vld [vmem:[#allocation4 + $0x538] sm:$0xff]
    %v240 = vld [vmem:[#allocation4 + $0x540] sm:$0xff]
    %v241 = vld [vmem:[#allocation4 + $0x548] sm:$0xff]
    %v242 = vld [vmem:[#allocation4 + $0x550] sm:$0xff]
    %v243 = vld [vmem:[#allocation4 + $0x558] sm:$0xff]
    %v244 = vld [vmem:[#allocation4 + $0x560] sm:$0xff]
    %v245 = vld [vmem:[#allocation4 + $0x568] sm:$0xff]
    %v246 = vld [vmem:[#allocation4 + $0x570] sm:$0xff]
    %v247 = vld [vmem:[#allocation4 + $0x578] sm:$0xff]
    %v248 = vld [vmem:[#allocation4 + $0x580] sm:$0xff]
    %v249 = vld [vmem:[#allocation4 + $0x588] sm:$0xff]
    %v250 = vld [vmem:[#allocation4 + $0x590] sm:$0xff]
    %v251 = vld [vmem:[#allocation4 + $0x598] sm:$0xff]
    %v252 = vld [vmem:[#allocation4 + $0x5a0] sm:$0xff]
    %v253 = vld [vmem:[#allocation4 + $0x5a8] sm:$0xff]
    %v254 = vld [vmem:[#allocation4 + $0x5b0] sm:$0xff]
    %v255 = vld [vmem:[#allocation4 + $0x5b8] sm:$0xff]
    %v256 = vld [vmem:[#allocation4 + $0x5c0] sm:$0xff]
    %v257 = vld [vmem:[#allocation4 + $0x5c8] sm:$0xff]
    %v258 = vld [vmem:[#allocation4 + $0x5d0] sm:$0xff]
    %v259 = vld [vmem:[#allocation4 + $0x5d8] sm:$0xff]
    %v260 = vld [vmem:[#allocation4 + $0x5e0] sm:$0xff]
    %v261 = vld [vmem:[#allocation4 + $0x5e8] sm:$0xff]
    %v262 = vld [vmem:[#allocation4 + $0x5f0] sm:$0xff]
    %v263 = vld [vmem:[#allocation4 + $0x5f8] sm:$0xff]
    %v264 = vld [vmem:[#allocation4 + $0x600] sm:$0xff]
    %v265 = vld [vmem:[#allocation4 + $0x608] sm:$0xff]
    %v266 = vld [vmem:[#allocation4 + $0x610] sm:$0xff]
    %v267 = vld [vmem:[#allocation4 + $0x618] sm:$0xff]
    %v268 = vld [vmem:[#allocation4 + $0x620] sm:$0xff]
    %v269 = vld [vmem:[#allocation4 + $0x628] sm:$0xff]
    %v270 = vld [vmem:[#allocation4 + $0x630] sm:$0xff]
    %v271 = vld [vmem:[#allocation4 + $0x638] sm:$0xff]
    %v272 = vld [vmem:[#allocation4 + $0x640] sm:$0xff]
    %v273 = vld [vmem:[#allocation4 + $0x648] sm:$0xff]
    %v274 = vld [vmem:[#allocation4 + $0x650] sm:$0xff]
    %v275 = vld [vmem:[#allocation4 + $0x658] sm:$0xff]
    %v276 = vld [vmem:[#allocation4 + $0x660] sm:$0xff]
    %v277 = vld [vmem:[#allocation4 + $0x668] sm:$0xff]
    %v278 = vld [vmem:[#allocation4 + $0x670] sm:$0xff]
    %v279 = vld [vmem:[#allocation4 + $0x678] sm:$0xff]
    %v280 = vld [vmem:[#allocation4 + $0x680] sm:$0xff]
    %v281 = vld [vmem:[#allocation4 + $0x688] sm:$0xff]
    %v282 = vld [vmem:[#allocation4 + $0x690] sm:$0xff]
    %v283 = vld [vmem:[#allocation4 + $0x698] sm:$0xff]
    %v284 = vld [vmem:[#allocation4 + $0x6a0] sm:$0xff]
    %v285 = vld [vmem:[#allocation4 + $0x6a8] sm:$0xff]
    %v286 = vld [vmem:[#allocation4 + $0x6b0] sm:$0xff]
    %v287 = vld [vmem:[#allocation4 + $0x6b8] sm:$0xff]
    %v288 = vld [vmem:[#allocation4 + $0x6c0] sm:$0xff]
    %v289 = vld [vmem:[#allocation4 + $0x6c8] sm:$0xff]
    %v290 = vld [vmem:[#allocation4 + $0x6d0] sm:$0xff]
    %v291 = vld [vmem:[#allocation4 + $0x6d8] sm:$0xff]
    %v292 = vld [vmem:[#allocation4 + $0x6e0] sm:$0xff]
    %v293 = vld [vmem:[#allocation4 + $0x6e8] sm:$0xff]
    %v294 = vld [vmem:[#allocation4 + $0x6f0] sm:$0xff]
    %v295 = vld [vmem:[#allocation4 + $0x6f8] sm:$0xff]
    %v296 = vld [vmem:[#allocation4 + $0x700] sm:$0xff]
    %v297 = vld [vmem:[#allocation4 + $0x708] sm:$0xff]
    %v298 = vld [vmem:[#allocation4 + $0x710] sm:$0xff]
    %v299 = vld [vmem:[#allocation4 + $0x718] sm:$0xff]
    %v300 = vld [vmem:[#allocation4 + $0x720] sm:$0xff]
    %v301 = vld [vmem:[#allocation4 + $0x728] sm:$0xff]
    %v302 = vld [vmem:[#allocation4 + $0x730] sm:$0xff]
    %v303 = vld [vmem:[#allocation4 + $0x738] sm:$0xff]
    %v304 = vld [vmem:[#allocation4 + $0x740] sm:$0xff]
    %v305 = vld [vmem:[#allocation4 + $0x748] sm:$0xff]
    %v306 = vld [vmem:[#allocation4 + $0x750] sm:$0xff]
    %v307 = vld [vmem:[#allocation4 + $0x758] sm:$0xff]
    %v308 = vld [vmem:[#allocation4 + $0x760] sm:$0xff]
    %v309 = vld [vmem:[#allocation4 + $0x768] sm:$0xff]
    %v310 = vld [vmem:[#allocation4 + $0x770] sm:$0xff]
    %v311 = vld [vmem:[#allocation4 + $0x778] sm:$0xff]
    %v312 = vld [vmem:[#allocation4 + $0x780] sm:$0xff]
    %v313 = vld [vmem:[#allocation4 + $0x788] sm:$0xff]
    %v314 = vld [vmem:[#allocation4 + $0x790] sm:$0xff]
    %v315 = vld [vmem:[#allocation4 + $0x798] sm:$0xff]
    %v316 = vld [vmem:[#allocation4 + $0x7a0] sm:$0xff]
    %v317 = vld [vmem:[#allocation4 + $0x7a8] sm:$0xff]
    %v318 = vld [vmem:[#allocation4 + $0x7b0] sm:$0xff]
    %v319 = vld [vmem:[#allocation4 + $0x7b8] sm:$0xff]
    %v320 = vld [vmem:[#allocation4 + $0x7c0] sm:$0xff]
    %v321 = vld [vmem:[#allocation4 + $0x7c8] sm:$0xff]
    %v322 = vld [vmem:[#allocation4 + $0x7d0] sm:$0xff]
    %v323 = vld [vmem:[#allocation4 + $0x7d8] sm:$0xff]
    %v324 = vld [vmem:[#allocation4 + $0x7e0] sm:$0xff]
    %v325 = vld [vmem:[#allocation4 + $0x7e8] sm:$0xff]
    %v326 = vld [vmem:[#allocation4 + $0x7f0] sm:$0xff]
    %v327 = vld [vmem:[#allocation4 + $0x7f8] sm:$0xff]
    %v328 = vld [vmem:[#allocation4 + $0x800] sm:$0xff]
    %v329 = vld [vmem:[#allocation4 + $0x808] sm:$0xff]
    %v330 = vld [vmem:[#allocation4 + $0x810] sm:$0xff]
    %v331 = vld [vmem:[#allocation4 + $0x818] sm:$0xff]
    %v332 = vld [vmem:[#allocation4 + $0x820] sm:$0xff]
    %v333 = vld [vmem:[#allocation4 + $0x828] sm:$0xff]
    %v334 = vld [vmem:[#allocation4 + $0x830] sm:$0xff]
    %v335 = vld [vmem:[#allocation4 + $0x838] sm:$0xff]
    %v336 = vld [vmem:[#allocation4 + $0x840] sm:$0xff]
    %v337 = vld [vmem:[#allocation4 + $0x848] sm:$0xff]
    %v338 = vld [vmem:[#allocation4 + $0x850] sm:$0xff]
    %v339 = vld [vmem:[#allocation4 + $0x858] sm:$0xff]
    %v340 = vld [vmem:[#allocation4 + $0x860] sm:$0xff]
    %v341 = vld [vmem:[#allocation4 + $0x868] sm:$0xff]
    %v342 = vld [vmem:[#allocation4 + $0x870] sm:$0xff]
    %v343 = vld [vmem:[#allocation4 + $0x878] sm:$0xff]
    %v344 = vld [vmem:[#allocation4 + $0x880] sm:$0xff]
    %v345 = vld [vmem:[#allocation4 + $0x888] sm:$0xff]
    %v346 = vld [vmem:[#allocation4 + $0x890] sm:$0xff]
    %v347 = vld [vmem:[#allocation4 + $0x898] sm:$0xff]
    %v348 = vld [vmem:[#allocation4 + $0x8a0] sm:$0xff]
    %v349 = vld [vmem:[#allocation4 + $0x8a8] sm:$0xff]
    %v350 = vld [vmem:[#allocation4 + $0x8b0] sm:$0xff]
    %v351 = vld [vmem:[#allocation4 + $0x8b8] sm:$0xff]
    %v352 = vld [vmem:[#allocation4 + $0x8c0] sm:$0xff]
    %v353 = vld [vmem:[#allocation4 + $0x8c8] sm:$0xff]
    %v354 = vld [vmem:[#allocation4 + $0x8d0] sm:$0xff]
    %v355 = vld [vmem:[#allocation4 + $0x8d8] sm:$0xff]
    %v356 = vld [vmem:[#allocation4 + $0x8e0] sm:$0xff]
    %v357 = vld [vmem:[#allocation4 + $0x8e8] sm:$0xff]
    %v358 = vld [vmem:[#allocation4 + $0x8f0] sm:$0xff]
    %v359 = vld [vmem:[#allocation4 + $0x8f8] sm:$0xff]
    %v360 = vld [vmem:[#allocation4 + $0x900] sm:$0xff]
    %v361 = vld [vmem:[#allocation4 + $0x908] sm:$0xff]
    %v362 = vld [vmem:[#allocation4 + $0x910] sm:$0xff]
    %v363 = vld [vmem:[#allocation4 + $0x918] sm:$0xff]
    %v364 = vld [vmem:[#allocation4 + $0x920] sm:$0xff]
    %v365 = vld [vmem:[#allocation4 + $0x928] sm:$0xff]
    %v366 = vld [vmem:[#allocation4 + $0x930] sm:$0xff]
    %v367 = vld [vmem:[#allocation4 + $0x938] sm:$0xff]
    %v368 = vld [vmem:[#allocation4 + $0x940] sm:$0xff]
    %v369 = vld [vmem:[#allocation4 + $0x948] sm:$0xff]
    %v370 = vld [vmem:[#allocation4 + $0x950] sm:$0xff]
    %v371 = vld [vmem:[#allocation4 + $0x958] sm:$0xff]
    %v372 = vld [vmem:[#allocation4 + $0x960] sm:$0xff]
    %v373 = vld [vmem:[#allocation4 + $0x968] sm:$0xff]
    %v374 = vld [vmem:[#allocation4 + $0x970] sm:$0xff]
    %v375 = vld [vmem:[#allocation4 + $0x978] sm:$0xff]
    %v376 = vld [vmem:[#allocation4 + $0x980] sm:$0xff]
    %v377 = vld [vmem:[#allocation4 + $0x988] sm:$0xff]
    %v378 = vld [vmem:[#allocation4 + $0x990] sm:$0xff]
    %v379 = vld [vmem:[#allocation4 + $0x998] sm:$0xff]
    %v380 = vld [vmem:[#allocation4 + $0x9a0] sm:$0xff]
    %v381 = vld [vmem:[#allocation4 + $0x9a8] sm:$0xff]
    %v382 = vld [vmem:[#allocation4 + $0x9b0] sm:$0xff]
    %v383 = vld [vmem:[#allocation4 + $0x9b8] sm:$0xff]
    %v384 = vld [vmem:[#allocation4 + $0x9c0] sm:$0xff]
    %v385 = vld [vmem:[#allocation4 + $0x9c8] sm:$0xff]
    %v386 = vld [vmem:[#allocation4 + $0x9d0] sm:$0xff]
    %v387 = vld [vmem:[#allocation4 + $0x9d8] sm:$0xff]
    %v388 = vld [vmem:[#allocation4 + $0x9e0] sm:$0xff]
    %v389 = vld [vmem:[#allocation4 + $0x9e8] sm:$0xff]
    %v390 = vld [vmem:[#allocation4 + $0x9f0] sm:$0xff]
    %v391 = vld [vmem:[#allocation4 + $0x9f8] sm:$0xff]
    %v392 = vld [vmem:[#allocation4 + $0xa00] sm:$0xff]
    %v393 = vld [vmem:[#allocation4 + $0xa08] sm:$0xff]
    %v394 = vld [vmem:[#allocation4 + $0xa10] sm:$0xff]
    %v395 = vld [vmem:[#allocation4 + $0xa18] sm:$0xff]
    %v396 = vld [vmem:[#allocation4 + $0xa20] sm:$0xff]
    %v397 = vld [vmem:[#allocation4 + $0xa28] sm:$0xff]
    %v398 = vld [vmem:[#allocation4 + $0xa30] sm:$0xff]
    %v399 = vld [vmem:[#allocation4 + $0xa38] sm:$0xff]
    %v400 = vld [vmem:[#allocation4 + $0xa40] sm:$0xff]
    %v401 = vld [vmem:[#allocation4 + $0xa48] sm:$0xff]
    %v402 = vld [vmem:[#allocation4 + $0xa50] sm:$0xff]
    %v403 = vld [vmem:[#allocation4 + $0xa58] sm:$0xff]
    %v404 = vld [vmem:[#allocation4 + $0xa60] sm:$0xff]
    %v405 = vld [vmem:[#allocation4 + $0xa68] sm:$0xff]
    %v406 = vld [vmem:[#allocation4 + $0xa70] sm:$0xff]
    %v407 = vld [vmem:[#allocation4 + $0xa78] sm:$0xff]
    %v408 = vld [vmem:[#allocation4 + $0xa80] sm:$0xff]
    %v409 = vld [vmem:[#allocation4 + $0xa88] sm:$0xff]
    %v410 = vld [vmem:[#allocation4 + $0xa90] sm:$0xff]
    %v411 = vld [vmem:[#allocation4 + $0xa98] sm:$0xff]
    %v412 = vld [vmem:[#allocation4 + $0xaa0] sm:$0xff]
    %v413 = vld [vmem:[#allocation4 + $0xaa8] sm:$0xff]
    %v414 = vld [vmem:[#allocation4 + $0xab0] sm:$0xff]
    %v415 = vld [vmem:[#allocation4 + $0xab8] sm:$0xff]
    %v416 = vld [vmem:[#allocation4 + $0xac0] sm:$0xff]
    %v417 = vld [vmem:[#allocation4 + $0xac8] sm:$0xff]
    %v418 = vld [vmem:[#allocation4 + $0xad0] sm:$0xff]
    %v419 = vld [vmem:[#allocation4 + $0xad8] sm:$0xff]
    %v420 = vld [vmem:[#allocation4 + $0xae0] sm:$0xff]
    %v421 = vld [vmem:[#allocation4 + $0xae8] sm:$0xff]
    %v422 = vld [vmem:[#allocation4 + $0xaf0] sm:$0xff]
    %v423 = vld [vmem:[#allocation4 + $0xaf8] sm:$0xff]
    %v424 = vld [vmem:[#allocation4 + $0xb00] sm:$0xff]
    %v425 = vld [vmem:[#allocation4 + $0xb08] sm:$0xff]
    %v426 = vld [vmem:[#allocation4 + $0xb10] sm:$0xff]
    %v427 = vld [vmem:[#allocation4 + $0xb18] sm:$0xff]
    %v428 = vld [vmem:[#allocation4 + $0xb20] sm:$0xff]
    %v429 = vld [vmem:[#allocation4 + $0xb28] sm:$0xff]
    %v430 = vld [vmem:[#allocation4 + $0xb30] sm:$0xff]
    %v431 = vld [vmem:[#allocation4 + $0xb38] sm:$0xff]
    %v432 = vld [vmem:[#allocation4 + $0xb40] sm:$0xff]
    %v433 = vld [vmem:[#allocation4 + $0xb48] sm:$0xff]
    %v434 = vld [vmem:[#allocation4 + $0xb50] sm:$0xff]
    %v435 = vld [vmem:[#allocation4 + $0xb58] sm:$0xff]
    %v436 = vld [vmem:[#allocation4 + $0xb60] sm:$0xff]
    %v437 = vld [vmem:[#allocation4 + $0xb68] sm:$0xff]
    %v438 = vld [vmem:[#allocation4 + $0xb70] sm:$0xff]
    %v439 = vld [vmem:[#allocation4 + $0xb78] sm:$0xff]
    %v440 = vld [vmem:[#allocation4 + $0xb80] sm:$0xff]
    %v441 = vld [vmem:[#allocation4 + $0xb88] sm:$0xff]
    %v442 = vld [vmem:[#allocation4 + $0xb90] sm:$0xff]
    %v443 = vld [vmem:[#allocation4 + $0xb98] sm:$0xff]
    %v444 = vld [vmem:[#allocation4 + $0xba0] sm:$0xff]
    %v445 = vld [vmem:[#allocation4 + $0xba8] sm:$0xff]
    %v446 = vld [vmem:[#allocation4 + $0xbb0] sm:$0xff]
    %v447 = vld [vmem:[#allocation4 + $0xbb8] sm:$0xff]
    %v448 = vld [vmem:[#allocation4 + $0xbc0] sm:$0xff]
    %v449 = vld [vmem:[#allocation4 + $0xbc8] sm:$0xff]
    %v450 = vld [vmem:[#allocation4 + $0xbd0] sm:$0xff]
    %v451 = vld [vmem:[#allocation4 + $0xbd8] sm:$0xff]
    %v452 = vld [vmem:[#allocation4 + $0xbe0] sm:$0xff]
    %v453 = vld [vmem:[#allocation4 + $0xbe8] sm:$0xff]
    %v454 = vld [vmem:[#allocation4 + $0xbf0] sm:$0xff]
    %v455 = vld [vmem:[#allocation4 + $0xbf8] sm:$0xff]
    %v456 = vld [vmem:[#allocation4 + $0xc00] sm:$0xff]
    %v457 = vld [vmem:[#allocation4 + $0xc08] sm:$0xff]
    %v458 = vld [vmem:[#allocation4 + $0xc10] sm:$0xff]
    %v459 = vld [vmem:[#allocation4 + $0xc18] sm:$0xff]
    %v460 = vld [vmem:[#allocation4 + $0xc20] sm:$0xff]
    %v461 = vld [vmem:[#allocation4 + $0xc28] sm:$0xff]
    %v462 = vld [vmem:[#allocation4 + $0xc30] sm:$0xff]
    %v463 = vld [vmem:[#allocation4 + $0xc38] sm:$0xff]
    %v464 = vld [vmem:[#allocation4 + $0xc40] sm:$0xff]
    %v465 = vld [vmem:[#allocation4 + $0xc48] sm:$0xff]
    %v466 = vld [vmem:[#allocation4 + $0xc50] sm:$0xff]
    %v467 = vld [vmem:[#allocation4 + $0xc58] sm:$0xff]
    %v468 = vld [vmem:[#allocation4 + $0xc60] sm:$0xff]
    %v469 = vld [vmem:[#allocation4 + $0xc68] sm:$0xff]
    %v470 = vld [vmem:[#allocation4 + $0xc70] sm:$0xff]
    %v471 = vld [vmem:[#allocation4 + $0xc78] sm:$0xff]
    %v472 = vld [vmem:[#allocation4 + $0xc80] sm:$0xff]
    %v473 = vld [vmem:[#allocation4 + $0xc88] sm:$0xff]
    %v474 = vld [vmem:[#allocation4 + $0xc90] sm:$0xff]
    %v475 = vld [vmem:[#allocation4 + $0xc98] sm:$0xff]
    %v476 = vld [vmem:[#allocation4 + $0xca0] sm:$0xff]
    %v477 = vld [vmem:[#allocation4 + $0xca8] sm:$0xff]
    %v478 = vld [vmem:[#allocation4 + $0xcb0] sm:$0xff]
    %v479 = vld [vmem:[#allocation4 + $0xcb8] sm:$0xff]
    %v480 = vld [vmem:[#allocation4 + $0xcc0] sm:$0xff]
    %v481 = vld [vmem:[#allocation4 + $0xcc8] sm:$0xff]
    %v482 = vld [vmem:[#allocation4 + $0xcd0] sm:$0xff]
    %v483 = vld [vmem:[#allocation4 + $0xcd8] sm:$0xff]
    %v484 = vld [vmem:[#allocation4 + $0xce0] sm:$0xff]
    %v485 = vld [vmem:[#allocation4 + $0xce8] sm:$0xff]
    %v486 = vld [vmem:[#allocation4 + $0xcf0] sm:$0xff]
    %v487 = vld [vmem:[#allocation4 + $0xcf8] sm:$0xff]
    %v488 = vld [vmem:[#allocation4 + $0xd00] sm:$0xff]
    %v489 = vld [vmem:[#allocation4 + $0xd08] sm:$0xff]
    %v490 = vld [vmem:[#allocation4 + $0xd10] sm:$0xff]
    %v491 = vld [vmem:[#allocation4 + $0xd18] sm:$0xff]
    %v492 = vld [vmem:[#allocation4 + $0xd20] sm:$0xff]
    %v493 = vld [vmem:[#allocation4 + $0xd28] sm:$0xff]
    %v494 = vld [vmem:[#allocation4 + $0xd30] sm:$0xff]
    %v495 = vld [vmem:[#allocation4 + $0xd38] sm:$0xff]
    %v496 = vld [vmem:[#allocation4 + $0xd40] sm:$0xff]
    %v497 = vld [vmem:[#allocation4 + $0xd48] sm:$0xff]
    %v498 = vld [vmem:[#allocation4 + $0xd50] sm:$0xff]
    %v499 = vld [vmem:[#allocation4 + $0xd58] sm:$0xff]
    %v500 = vld [vmem:[#allocation4 + $0xd60] sm:$0xff]
    %v501 = vld [vmem:[#allocation4 + $0xd68] sm:$0xff]
    %v502 = vld [vmem:[#allocation4 + $0xd70] sm:$0xff]
    %v503 = vld [vmem:[#allocation4 + $0xd78] sm:$0xff]
    %v504 = vld [vmem:[#allocation4 + $0xd80] sm:$0xff]
    %v505 = vld [vmem:[#allocation4 + $0xd88] sm:$0xff]
    %v506 = vld [vmem:[#allocation4 + $0xd90] sm:$0xff]
    %v507 = vld [vmem:[#allocation4 + $0xd98] sm:$0xff]
    %v508 = vld [vmem:[#allocation4 + $0xda0] sm:$0xff]
    %v509 = vld [vmem:[#allocation4 + $0xda8] sm:$0xff]
    %v510 = vld [vmem:[#allocation4 + $0xdb0] sm:$0xff]
    %v511 = vld [vmem:[#allocation4 + $0xdb8] sm:$0xff]
    %v512 = vld [vmem:[#allocation4 + $0xdc0] sm:$0xff]
    %v513 = vld [vmem:[#allocation4 + $0xdc8] sm:$0xff]
    %v514 = vld [vmem:[#allocation4 + $0xdd0] sm:$0xff]
    %v515 = vld [vmem:[#allocation4 + $0xdd8] sm:$0xff]
    %v516 = vld [vmem:[#allocation4 + $0xde0] sm:$0xff]
    %v517 = vld [vmem:[#allocation4 + $0xde8] sm:$0xff]
    %v518 = vld [vmem:[#allocation4 + $0xdf0] sm:$0xff]
    %v519 = vld [vmem:[#allocation4 + $0xdf8] sm:$0xff]
    %v520 = vld [vmem:[#allocation4 + $0xe00] sm:$0xff]
    %v521 = vld [vmem:[#allocation4 + $0xe08] sm:$0xff]
    %v522 = vld [vmem:[#allocation4 + $0xe10] sm:$0xff]
    %v523 = vld [vmem:[#allocation4 + $0xe18] sm:$0xff]
    %v524 = vld [vmem:[#allocation4 + $0xe20] sm:$0xff]
    %v525 = vld [vmem:[#allocation4 + $0xe28] sm:$0xff]
    %v526 = vld [vmem:[#allocation4 + $0xe30] sm:$0xff]
    %v527 = vld [vmem:[#allocation4 + $0xe38] sm:$0xff]
    %v528 = vld [vmem:[#allocation4 + $0xe40] sm:$0xff]
    %v529 = vld [vmem:[#allocation4 + $0xe48] sm:$0xff]
    %v530 = vld [vmem:[#allocation4 + $0xe50] sm:$0xff]
    %v531 = vld [vmem:[#allocation4 + $0xe58] sm:$0xff]
    %v532 = vld [vmem:[#allocation4 + $0xe60] sm:$0xff]
    %v533 = vld [vmem:[#allocation4 + $0xe68] sm:$0xff]
    %v534 = vld [vmem:[#allocation4 + $0xe70] sm:$0xff]
    %v535 = vld [vmem:[#allocation4 + $0xe78] sm:$0xff]
    %v536 = vld [vmem:[#allocation4 + $0xe80] sm:$0xff]
    %v537 = vld [vmem:[#allocation4 + $0xe88] sm:$0xff]
    %v538 = vld [vmem:[#allocation4 + $0xe90] sm:$0xff]
    %v539 = vld [vmem:[#allocation4 + $0xe98] sm:$0xff]
    %v540 = vld [vmem:[#allocation4 + $0xea0] sm:$0xff]
    %v541 = vld [vmem:[#allocation4 + $0xea8] sm:$0xff]
    %v542 = vld [vmem:[#allocation4 + $0xeb0] sm:$0xff]
    %v543 = vld [vmem:[#allocation4 + $0xeb8] sm:$0xff]
    %v544 = vld [vmem:[#allocation4 + $0xec0] sm:$0xff]
    %v545 = vld [vmem:[#allocation4 + $0xec8] sm:$0xff]
    %v546 = vld [vmem:[#allocation4 + $0xed0] sm:$0xff]
    %v547 = vld [vmem:[#allocation4 + $0xed8] sm:$0xff]
    %v548 = vld [vmem:[#allocation4 + $0xee0] sm:$0xff]
    %v549 = vld [vmem:[#allocation4 + $0xee8] sm:$0xff]
    %v550 = vld [vmem:[#allocation4 + $0xef0] sm:$0xff]
    %v551 = vld [vmem:[#allocation4 + $0xef8] sm:$0xff]
    %v552 = vld [vmem:[#allocation4 + $0xf00] sm:$0xff]
    %v553 = vld [vmem:[#allocation4 + $0xf08] sm:$0xff]
    %v554 = vld [vmem:[#allocation4 + $0xf10] sm:$0xff]
    %v555 = vld [vmem:[#allocation4 + $0xf18] sm:$0xff]
    %v556 = vld [vmem:[#allocation4 + $0xf20] sm:$0xff]
    %v557 = vld [vmem:[#allocation4 + $0xf28] sm:$0xff]
    %v558 = vld [vmem:[#allocation4 + $0xf30] sm:$0xff]
    %v559 = vld [vmem:[#allocation4 + $0xf38] sm:$0xff]
    %v560 = vld [vmem:[#allocation4 + $0xf40] sm:$0xff]
    %v561 = vld [vmem:[#allocation4 + $0xf48] sm:$0xff]
    %v562 = vld [vmem:[#allocation4 + $0xf50] sm:$0xff]
    %v563 = vld [vmem:[#allocation4 + $0xf58] sm:$0xff]
    %v564 = vld [vmem:[#allocation4 + $0xf60] sm:$0xff]
    %v565 = vld [vmem:[#allocation4 + $0xf68] sm:$0xff]
    %v566 = vld [vmem:[#allocation4 + $0xf70] sm:$0xff]
    %v567 = vld [vmem:[#allocation4 + $0xf78] sm:$0xff]
    %v568 = vld [vmem:[#allocation4 + $0xf80] sm:$0xff]
    %v569 = vld [vmem:[#allocation4 + $0xf88] sm:$0xff]
    %v570 = vld [vmem:[#allocation4 + $0xf90] sm:$0xff]
    %v571 = vld [vmem:[#allocation4 + $0xf98] sm:$0xff]
    %v572 = vld [vmem:[#allocation4 + $0xfa0] sm:$0xff]
    %v573 = vld [vmem:[#allocation4 + $0xfa8] sm:$0xff]
    %v574 = vld [vmem:[#allocation4 + $0xfb0] sm:$0xff]
    %v575 = vld [vmem:[#allocation4 + $0xfb8] sm:$0xff]
    %v576 = vld [vmem:[#allocation4 + $0xfc0] sm:$0xff]
    %v577 = vld [vmem:[#allocation4 + $0xfc8] sm:$0xff]
    %v578 = vld [vmem:[#allocation4 + $0xfd0] sm:$0xff]
    %v579 = vld [vmem:[#allocation4 + $0xfd8] sm:$0xff]
    %v580 = vld [vmem:[#allocation4 + $0xfe0] sm:$0xff]
    %v581 = vld [vmem:[#allocation4 + $0xfe8] sm:$0xff]
    %v582 = vld [vmem:[#allocation4 + $0xff0] sm:$0xff]
    %v583 = vld [vmem:[#allocation4 + $0xff8] sm:$0xff]
    %v1096 = vunpack.c.l.b16 %v72
    %v1097 = vunpack.c.h.b16 %v72
    %v1098 = vunpack.c.l.b16 %v73
    %v1099 = vunpack.c.h.b16 %v73
    %v1100 = vunpack.c.l.b16 %v74
    %v1101 = vunpack.c.h.b16 %v74
    %v1102 = vunpack.c.l.b16 %v75
    %v1103 = vunpack.c.h.b16 %v75
    %v1104 = vunpack.c.l.b16 %v76
    %v1105 = vunpack.c.h.b16 %v76
    %v1106 = vunpack.c.l.b16 %v77
    %v1107 = vunpack.c.h.b16 %v77
    %v1108 = vunpack.c.l.b16 %v78
    %v1109 = vunpack.c.h.b16 %v78
    %v1110 = vunpack.c.l.b16 %v79
    %v1111 = vunpack.c.h.b16 %v79
    %v1112 = vunpack.c.l.b16 %v80
    %v1113 = vunpack.c.h.b16 %v80
    %v1114 = vunpack.c.l.b16 %v81
    %v1115 = vunpack.c.h.b16 %v81
    %v1116 = vunpack.c.l.b16 %v82
    %v1117 = vunpack.c.h.b16 %v82
    %v1118 = vunpack.c.l.b16 %v83
    %v1119 = vunpack.c.h.b16 %v83
    %v1120 = vunpack.c.l.b16 %v84
    %v1121 = vunpack.c.h.b16 %v84
    %v1122 = vunpack.c.l.b16 %v85
    %v1123 = vunpack.c.h.b16 %v85
    %v1124 = vunpack.c.l.b16 %v86
    %v1125 = vunpack.c.h.b16 %v86
    %v1126 = vunpack.c.l.b16 %v87
    %v1127 = vunpack.c.h.b16 %v87
    %v1128 = vunpack.c.l.b16 %v88
    %v1129 = vunpack.c.h.b16 %v88
    %v1130 = vunpack.c.l.b16 %v89
    %v1131 = vunpack.c.h.b16 %v89
    %v1132 = vunpack.c.l.b16 %v90
    %v1133 = vunpack.c.h.b16 %v90
    %v1134 = vunpack.c.l.b16 %v91
    %v1135 = vunpack.c.h.b16 %v91
    %v1136 = vunpack.c.l.b16 %v92
    %v1137 = vunpack.c.h.b16 %v92
    %v1138 = vunpack.c.l.b16 %v93
    %v1139 = vunpack.c.h.b16 %v93
    %v1140 = vunpack.c.l.b16 %v94
    %v1141 = vunpack.c.h.b16 %v94
    %v1142 = vunpack.c.l.b16 %v95
    %v1143 = vunpack.c.h.b16 %v95
    %v1144 = vunpack.c.l.b16 %v96
    %v1145 = vunpack.c.h.b16 %v96
    %v1146 = vunpack.c.l.b16 %v97
    %v1147 = vunpack.c.h.b16 %v97
    %v1148 = vunpack.c.l.b16 %v98
    %v1149 = vunpack.c.h.b16 %v98
    %v1150 = vunpack.c.l.b16 %v99
    %v1151 = vunpack.c.h.b16 %v99
    %v1152 = vunpack.c.l.b16 %v100
    %v1153 = vunpack.c.h.b16 %v100
    %v1154 = vunpack.c.l.b16 %v101
    %v1155 = vunpack.c.h.b16 %v101
    %v1156 = vunpack.c.l.b16 %v102
    %v1157 = vunpack.c.h.b16 %v102
    %v1158 = vunpack.c.l.b16 %v103
    %v1159 = vunpack.c.h.b16 %v103
    %v1160 = vunpack.c.l.b16 %v104
    %v1161 = vunpack.c.h.b16 %v104
    %v1162 = vunpack.c.l.b16 %v105
    %v1163 = vunpack.c.h.b16 %v105
    %v1164 = vunpack.c.l.b16 %v106
    %v1165 = vunpack.c.h.b16 %v106
    %v1166 = vunpack.c.l.b16 %v107
    %v1167 = vunpack.c.h.b16 %v107
    %v1168 = vunpack.c.l.b16 %v108
    %v1169 = vunpack.c.h.b16 %v108
    %v1170 = vunpack.c.l.b16 %v109
    %v1171 = vunpack.c.h.b16 %v109
    %v1172 = vunpack.c.l.b16 %v110
    %v1173 = vunpack.c.h.b16 %v110
    %v1174 = vunpack.c.l.b16 %v111
    %v1175 = vunpack.c.h.b16 %v111
    %v1176 = vunpack.c.l.b16 %v112
    %v1177 = vunpack.c.h.b16 %v112
    %v1178 = vunpack.c.l.b16 %v113
    %v1179 = vunpack.c.h.b16 %v113
    %v1180 = vunpack.c.l.b16 %v114
    %v1181 = vunpack.c.h.b16 %v114
    %v1182 = vunpack.c.l.b16 %v115
    %v1183 = vunpack.c.h.b16 %v115
    %v1184 = vunpack.c.l.b16 %v116
    %v1185 = vunpack.c.h.b16 %v116
    %v1186 = vunpack.c.l.b16 %v117
    %v1187 = vunpack.c.h.b16 %v117
    %v1188 = vunpack.c.l.b16 %v118
    %v1189 = vunpack.c.h.b16 %v118
    %v1190 = vunpack.c.l.b16 %v119
    %v1191 = vunpack.c.h.b16 %v119
    %v1192 = vunpack.c.l.b16 %v120
    %v1193 = vunpack.c.h.b16 %v120
    %v1194 = vunpack.c.l.b16 %v121
    %v1195 = vunpack.c.h.b16 %v121
    %v1196 = vunpack.c.l.b16 %v122
    %v1197 = vunpack.c.h.b16 %v122
    %v1198 = vunpack.c.l.b16 %v123
    %v1199 = vunpack.c.h.b16 %v123
    %v1200 = vunpack.c.l.b16 %v124
    %v1201 = vunpack.c.h.b16 %v124
    %v1202 = vunpack.c.l.b16 %v125
    %v1203 = vunpack.c.h.b16 %v125
    %v1204 = vunpack.c.l.b16 %v126
    %v1205 = vunpack.c.h.b16 %v126
    %v1206 = vunpack.c.l.b16 %v127
    %v1207 = vunpack.c.h.b16 %v127
    %v1208 = vunpack.c.l.b16 %v128
    %v1209 = vunpack.c.h.b16 %v128
    %v1210 = vunpack.c.l.b16 %v129
    %v1211 = vunpack.c.h.b16 %v129
    %v1212 = vunpack.c.l.b16 %v130
    %v1213 = vunpack.c.h.b16 %v130
    %v1214 = vunpack.c.l.b16 %v131
    %v1215 = vunpack.c.h.b16 %v131
    %v1216 = vunpack.c.l.b16 %v132
    %v1217 = vunpack.c.h.b16 %v132
    %v1218 = vunpack.c.l.b16 %v133
    %v1219 = vunpack.c.h.b16 %v133
    %v1220 = vunpack.c.l.b16 %v134
    %v1221 = vunpack.c.h.b16 %v134
    %v1222 = vunpack.c.l.b16 %v135
    %v1223 = vunpack.c.h.b16 %v135
    %v1224 = vunpack.c.l.b16 %v136
    %v1225 = vunpack.c.h.b16 %v136
    %v1226 = vunpack.c.l.b16 %v137
    %v1227 = vunpack.c.h.b16 %v137
    %v1228 = vunpack.c.l.b16 %v138
    %v1229 = vunpack.c.h.b16 %v138
    %v1230 = vunpack.c.l.b16 %v139
    %v1231 = vunpack.c.h.b16 %v139
    %v1232 = vunpack.c.l.b16 %v140
    %v1233 = vunpack.c.h.b16 %v140
    %v1234 = vunpack.c.l.b16 %v141
    %v1235 = vunpack.c.h.b16 %v141
    %v1236 = vunpack.c.l.b16 %v142
    %v1237 = vunpack.c.h.b16 %v142
    %v1238 = vunpack.c.l.b16 %v143
    %v1239 = vunpack.c.h.b16 %v143
    %v1240 = vunpack.c.l.b16 %v144
    %v1241 = vunpack.c.h.b16 %v144
    %v1242 = vunpack.c.l.b16 %v145
    %v1243 = vunpack.c.h.b16 %v145
    %v1244 = vunpack.c.l.b16 %v146
    %v1245 = vunpack.c.h.b16 %v146
    %v1246 = vunpack.c.l.b16 %v147
    %v1247 = vunpack.c.h.b16 %v147
    %v1248 = vunpack.c.l.b16 %v148
    %v1249 = vunpack.c.h.b16 %v148
    %v1250 = vunpack.c.l.b16 %v149
    %v1251 = vunpack.c.h.b16 %v149
    %v1252 = vunpack.c.l.b16 %v150
    %v1253 = vunpack.c.h.b16 %v150
    %v1254 = vunpack.c.l.b16 %v151
    %v1255 = vunpack.c.h.b16 %v151
    %v1256 = vunpack.c.l.b16 %v152
    %v1257 = vunpack.c.h.b16 %v152
    %v1258 = vunpack.c.l.b16 %v153
    %v1259 = vunpack.c.h.b16 %v153
    %v1260 = vunpack.c.l.b16 %v154
    %v1261 = vunpack.c.h.b16 %v154
    %v1262 = vunpack.c.l.b16 %v155
    %v1263 = vunpack.c.h.b16 %v155
    %v1264 = vunpack.c.l.b16 %v156
    %v1265 = vunpack.c.h.b16 %v156
    %v1266 = vunpack.c.l.b16 %v157
    %v1267 = vunpack.c.h.b16 %v157
    %v1268 = vunpack.c.l.b16 %v158
    %v1269 = vunpack.c.h.b16 %v158
    %v1270 = vunpack.c.l.b16 %v159
    %v1271 = vunpack.c.h.b16 %v159
    %v1272 = vunpack.c.l.b16 %v160
    %v1273 = vunpack.c.h.b16 %v160
    %v1274 = vunpack.c.l.b16 %v161
    %v1275 = vunpack.c.h.b16 %v161
    %v1276 = vunpack.c.l.b16 %v162
    %v1277 = vunpack.c.h.b16 %v162
    %v1278 = vunpack.c.l.b16 %v163
    %v1279 = vunpack.c.h.b16 %v163
    %v1280 = vunpack.c.l.b16 %v164
    %v1281 = vunpack.c.h.b16 %v164
    %v1282 = vunpack.c.l.b16 %v165
    %v1283 = vunpack.c.h.b16 %v165
    %v1284 = vunpack.c.l.b16 %v166
    %v1285 = vunpack.c.h.b16 %v166
    %v1286 = vunpack.c.l.b16 %v167
    %v1287 = vunpack.c.h.b16 %v167
    %v1288 = vunpack.c.l.b16 %v168
    %v1289 = vunpack.c.h.b16 %v168
    %v1290 = vunpack.c.l.b16 %v169
    %v1291 = vunpack.c.h.b16 %v169
    %v1292 = vunpack.c.l.b16 %v170
    %v1293 = vunpack.c.h.b16 %v170
    %v1294 = vunpack.c.l.b16 %v171
    %v1295 = vunpack.c.h.b16 %v171
    %v1296 = vunpack.c.l.b16 %v172
    %v1297 = vunpack.c.h.b16 %v172
    %v1298 = vunpack.c.l.b16 %v173
    %v1299 = vunpack.c.h.b16 %v173
    %v1300 = vunpack.c.l.b16 %v174
    %v1301 = vunpack.c.h.b16 %v174
    %v1302 = vunpack.c.l.b16 %v175
    %v1303 = vunpack.c.h.b16 %v175
    %v1304 = vunpack.c.l.b16 %v176
    %v1305 = vunpack.c.h.b16 %v176
    %v1306 = vunpack.c.l.b16 %v177
    %v1307 = vunpack.c.h.b16 %v177
    %v1308 = vunpack.c.l.b16 %v178
    %v1309 = vunpack.c.h.b16 %v178
    %v1310 = vunpack.c.l.b16 %v179
    %v1311 = vunpack.c.h.b16 %v179
    %v1312 = vunpack.c.l.b16 %v180
    %v1313 = vunpack.c.h.b16 %v180
    %v1314 = vunpack.c.l.b16 %v181
    %v1315 = vunpack.c.h.b16 %v181
    %v1316 = vunpack.c.l.b16 %v182
    %v1317 = vunpack.c.h.b16 %v182
    %v1318 = vunpack.c.l.b16 %v183
    %v1319 = vunpack.c.h.b16 %v183
    %v1320 = vunpack.c.l.b16 %v184
    %v1321 = vunpack.c.h.b16 %v184
    %v1322 = vunpack.c.l.b16 %v185
    %v1323 = vunpack.c.h.b16 %v185
    %v1324 = vunpack.c.l.b16 %v186
    %v1325 = vunpack.c.h.b16 %v186
    %v1326 = vunpack.c.l.b16 %v187
    %v1327 = vunpack.c.h.b16 %v187
    %v1328 = vunpack.c.l.b16 %v188
    %v1329 = vunpack.c.h.b16 %v188
    %v1330 = vunpack.c.l.b16 %v189
    %v1331 = vunpack.c.h.b16 %v189
    %v1332 = vunpack.c.l.b16 %v190
    %v1333 = vunpack.c.h.b16 %v190
    %v1334 = vunpack.c.l.b16 %v191
    %v1335 = vunpack.c.h.b16 %v191
    %v1336 = vunpack.c.l.b16 %v192
    %v1337 = vunpack.c.h.b16 %v192
    %v1338 = vunpack.c.l.b16 %v193
    %v1339 = vunpack.c.h.b16 %v193
    %v1340 = vunpack.c.l.b16 %v194
    %v1341 = vunpack.c.h.b16 %v194
    %v1342 = vunpack.c.l.b16 %v195
    %v1343 = vunpack.c.h.b16 %v195
    %v1344 = vunpack.c.l.b16 %v196
    %v1345 = vunpack.c.h.b16 %v196
    %v1346 = vunpack.c.l.b16 %v197
    %v1347 = vunpack.c.h.b16 %v197
    %v1348 = vunpack.c.l.b16 %v198
    %v1349 = vunpack.c.h.b16 %v198
    %v1350 = vunpack.c.l.b16 %v199
    %v1351 = vunpack.c.h.b16 %v199
    %v1352 = vunpack.c.l.b16 %v200
    %v1353 = vunpack.c.h.b16 %v200
    %v1354 = vunpack.c.l.b16 %v201
    %v1355 = vunpack.c.h.b16 %v201
    %v1356 = vunpack.c.l.b16 %v202
    %v1357 = vunpack.c.h.b16 %v202
    %v1358 = vunpack.c.l.b16 %v203
    %v1359 = vunpack.c.h.b16 %v203
    %v1360 = vunpack.c.l.b16 %v204
    %v1361 = vunpack.c.h.b16 %v204
    %v1362 = vunpack.c.l.b16 %v205
    %v1363 = vunpack.c.h.b16 %v205
    %v1364 = vunpack.c.l.b16 %v206
    %v1365 = vunpack.c.h.b16 %v206
    %v1366 = vunpack.c.l.b16 %v207
    %v1367 = vunpack.c.h.b16 %v207
    %v1368 = vunpack.c.l.b16 %v208
    %v1369 = vunpack.c.h.b16 %v208
    %v1370 = vunpack.c.l.b16 %v209
    %v1371 = vunpack.c.h.b16 %v209
    %v1372 = vunpack.c.l.b16 %v210
    %v1373 = vunpack.c.h.b16 %v210
    %v1374 = vunpack.c.l.b16 %v211
    %v1375 = vunpack.c.h.b16 %v211
    %v1376 = vunpack.c.l.b16 %v212
    %v1377 = vunpack.c.h.b16 %v212
    %v1378 = vunpack.c.l.b16 %v213
    %v1379 = vunpack.c.h.b16 %v213
    %v1380 = vunpack.c.l.b16 %v214
    %v1381 = vunpack.c.h.b16 %v214
    %v1382 = vunpack.c.l.b16 %v215
    %v1383 = vunpack.c.h.b16 %v215
    %v1384 = vunpack.c.l.b16 %v216
    %v1385 = vunpack.c.h.b16 %v216
    %v1386 = vunpack.c.l.b16 %v217
    %v1387 = vunpack.c.h.b16 %v217
    %v1388 = vunpack.c.l.b16 %v218
    %v1389 = vunpack.c.h.b16 %v218
    %v1390 = vunpack.c.l.b16 %v219
    %v1391 = vunpack.c.h.b16 %v219
    %v1392 = vunpack.c.l.b16 %v220
    %v1393 = vunpack.c.h.b16 %v220
    %v1394 = vunpack.c.l.b16 %v221
    %v1395 = vunpack.c.h.b16 %v221
    %v1396 = vunpack.c.l.b16 %v222
    %v1397 = vunpack.c.h.b16 %v222
    %v1398 = vunpack.c.l.b16 %v223
    %v1399 = vunpack.c.h.b16 %v223
    %v1400 = vunpack.c.l.b16 %v224
    %v1401 = vunpack.c.h.b16 %v224
    %v1402 = vunpack.c.l.b16 %v225
    %v1403 = vunpack.c.h.b16 %v225
    %v1404 = vunpack.c.l.b16 %v226
    %v1405 = vunpack.c.h.b16 %v226
    %v1406 = vunpack.c.l.b16 %v227
    %v1407 = vunpack.c.h.b16 %v227
    %v1408 = vunpack.c.l.b16 %v228
    %v1409 = vunpack.c.h.b16 %v228
    %v1410 = vunpack.c.l.b16 %v229
    %v1411 = vunpack.c.h.b16 %v229
    %v1412 = vunpack.c.l.b16 %v230
    %v1413 = vunpack.c.h.b16 %v230
    %v1414 = vunpack.c.l.b16 %v231
    %v1415 = vunpack.c.h.b16 %v231
    %v1416 = vunpack.c.l.b16 %v232
    %v1417 = vunpack.c.h.b16 %v232
    %v1418 = vunpack.c.l.b16 %v233
    %v1419 = vunpack.c.h.b16 %v233
    %v1420 = vunpack.c.l.b16 %v234
    %v1421 = vunpack.c.h.b16 %v234
    %v1422 = vunpack.c.l.b16 %v235
    %v1423 = vunpack.c.h.b16 %v235
    %v1424 = vunpack.c.l.b16 %v236
    %v1425 = vunpack.c.h.b16 %v236
    %v1426 = vunpack.c.l.b16 %v237
    %v1427 = vunpack.c.h.b16 %v237
    %v1428 = vunpack.c.l.b16 %v238
    %v1429 = vunpack.c.h.b16 %v238
    %v1430 = vunpack.c.l.b16 %v239
    %v1431 = vunpack.c.h.b16 %v239
    %v1432 = vunpack.c.l.b16 %v240
    %v1433 = vunpack.c.h.b16 %v240
    %v1434 = vunpack.c.l.b16 %v241
    %v1435 = vunpack.c.h.b16 %v241
    %v1436 = vunpack.c.l.b16 %v242
    %v1437 = vunpack.c.h.b16 %v242
    %v1438 = vunpack.c.l.b16 %v243
    %v1439 = vunpack.c.h.b16 %v243
    %v1440 = vunpack.c.l.b16 %v244
    %v1441 = vunpack.c.h.b16 %v244
    %v1442 = vunpack.c.l.b16 %v245
    %v1443 = vunpack.c.h.b16 %v245
    %v1444 = vunpack.c.l.b16 %v246
    %v1445 = vunpack.c.h.b16 %v246
    %v1446 = vunpack.c.l.b16 %v247
    %v1447 = vunpack.c.h.b16 %v247
    %v1448 = vunpack.c.l.b16 %v248
    %v1449 = vunpack.c.h.b16 %v248
    %v1450 = vunpack.c.l.b16 %v249
    %v1451 = vunpack.c.h.b16 %v249
    %v1452 = vunpack.c.l.b16 %v250
    %v1453 = vunpack.c.h.b16 %v250
    %v1454 = vunpack.c.l.b16 %v251
    %v1455 = vunpack.c.h.b16 %v251
    %v1456 = vunpack.c.l.b16 %v252
    %v1457 = vunpack.c.h.b16 %v252
    %v1458 = vunpack.c.l.b16 %v253
    %v1459 = vunpack.c.h.b16 %v253
    %v1460 = vunpack.c.l.b16 %v254
    %v1461 = vunpack.c.h.b16 %v254
    %v1462 = vunpack.c.l.b16 %v255
    %v1463 = vunpack.c.h.b16 %v255
    %v1464 = vunpack.c.l.b16 %v256
    %v1465 = vunpack.c.h.b16 %v256
    %v1466 = vunpack.c.l.b16 %v257
    %v1467 = vunpack.c.h.b16 %v257
    %v1468 = vunpack.c.l.b16 %v258
    %v1469 = vunpack.c.h.b16 %v258
    %v1470 = vunpack.c.l.b16 %v259
    %v1471 = vunpack.c.h.b16 %v259
    %v1472 = vunpack.c.l.b16 %v260
    %v1473 = vunpack.c.h.b16 %v260
    %v1474 = vunpack.c.l.b16 %v261
    %v1475 = vunpack.c.h.b16 %v261
    %v1476 = vunpack.c.l.b16 %v262
    %v1477 = vunpack.c.h.b16 %v262
    %v1478 = vunpack.c.l.b16 %v263
    %v1479 = vunpack.c.h.b16 %v263
    %v1480 = vunpack.c.l.b16 %v264
    %v1481 = vunpack.c.h.b16 %v264
    %v1482 = vunpack.c.l.b16 %v265
    %v1483 = vunpack.c.h.b16 %v265
    %v1484 = vunpack.c.l.b16 %v266
    %v1485 = vunpack.c.h.b16 %v266
    %v1486 = vunpack.c.l.b16 %v267
    %v1487 = vunpack.c.h.b16 %v267
    %v1488 = vunpack.c.l.b16 %v268
    %v1489 = vunpack.c.h.b16 %v268
    %v1490 = vunpack.c.l.b16 %v269
    %v1491 = vunpack.c.h.b16 %v269
    %v1492 = vunpack.c.l.b16 %v270
    %v1493 = vunpack.c.h.b16 %v270
    %v1494 = vunpack.c.l.b16 %v271
    %v1495 = vunpack.c.h.b16 %v271
    %v1496 = vunpack.c.l.b16 %v272
    %v1497 = vunpack.c.h.b16 %v272
    %v1498 = vunpack.c.l.b16 %v273
    %v1499 = vunpack.c.h.b16 %v273
    %v1500 = vunpack.c.l.b16 %v274
    %v1501 = vunpack.c.h.b16 %v274
    %v1502 = vunpack.c.l.b16 %v275
    %v1503 = vunpack.c.h.b16 %v275
    %v1504 = vunpack.c.l.b16 %v276
    %v1505 = vunpack.c.h.b16 %v276
    %v1506 = vunpack.c.l.b16 %v277
    %v1507 = vunpack.c.h.b16 %v277
    %v1508 = vunpack.c.l.b16 %v278
    %v1509 = vunpack.c.h.b16 %v278
    %v1510 = vunpack.c.l.b16 %v279
    %v1511 = vunpack.c.h.b16 %v279
    %v1512 = vunpack.c.l.b16 %v280
    %v1513 = vunpack.c.h.b16 %v280
    %v1514 = vunpack.c.l.b16 %v281
    %v1515 = vunpack.c.h.b16 %v281
    %v1516 = vunpack.c.l.b16 %v282
    %v1517 = vunpack.c.h.b16 %v282
    %v1518 = vunpack.c.l.b16 %v283
    %v1519 = vunpack.c.h.b16 %v283
    %v1520 = vunpack.c.l.b16 %v284
    %v1521 = vunpack.c.h.b16 %v284
    %v1522 = vunpack.c.l.b16 %v285
    %v1523 = vunpack.c.h.b16 %v285
    %v1524 = vunpack.c.l.b16 %v286
    %v1525 = vunpack.c.h.b16 %v286
    %v1526 = vunpack.c.l.b16 %v287
    %v1527 = vunpack.c.h.b16 %v287
    %v1528 = vunpack.c.l.b16 %v288
    %v1529 = vunpack.c.h.b16 %v288
    %v1530 = vunpack.c.l.b16 %v289
    %v1531 = vunpack.c.h.b16 %v289
    %v1532 = vunpack.c.l.b16 %v290
    %v1533 = vunpack.c.h.b16 %v290
    %v1534 = vunpack.c.l.b16 %v291
    %v1535 = vunpack.c.h.b16 %v291
    %v1536 = vunpack.c.l.b16 %v292
    %v1537 = vunpack.c.h.b16 %v292
    %v1538 = vunpack.c.l.b16 %v293
    %v1539 = vunpack.c.h.b16 %v293
    %v1540 = vunpack.c.l.b16 %v294
    %v1541 = vunpack.c.h.b16 %v294
    %v1542 = vunpack.c.l.b16 %v295
    %v1543 = vunpack.c.h.b16 %v295
    %v1544 = vunpack.c.l.b16 %v296
    %v1545 = vunpack.c.h.b16 %v296
    %v1546 = vunpack.c.l.b16 %v297
    %v1547 = vunpack.c.h.b16 %v297
    %v1548 = vunpack.c.l.b16 %v298
    %v1549 = vunpack.c.h.b16 %v298
    %v1550 = vunpack.c.l.b16 %v299
    %v1551 = vunpack.c.h.b16 %v299
    %v1552 = vunpack.c.l.b16 %v300
    %v1553 = vunpack.c.h.b16 %v300
    %v1554 = vunpack.c.l.b16 %v301
    %v1555 = vunpack.c.h.b16 %v301
    %v1556 = vunpack.c.l.b16 %v302
    %v1557 = vunpack.c.h.b16 %v302
    %v1558 = vunpack.c.l.b16 %v303
    %v1559 = vunpack.c.h.b16 %v303
    %v1560 = vunpack.c.l.b16 %v304
    %v1561 = vunpack.c.h.b16 %v304
    %v1562 = vunpack.c.l.b16 %v305
    %v1563 = vunpack.c.h.b16 %v305
    %v1564 = vunpack.c.l.b16 %v306
    %v1565 = vunpack.c.h.b16 %v306
    %v1566 = vunpack.c.l.b16 %v307
    %v1567 = vunpack.c.h.b16 %v307
    %v1568 = vunpack.c.l.b16 %v308
    %v1569 = vunpack.c.h.b16 %v308
    %v1570 = vunpack.c.l.b16 %v309
    %v1571 = vunpack.c.h.b16 %v309
    %v1572 = vunpack.c.l.b16 %v310
    %v1573 = vunpack.c.h.b16 %v310
    %v1574 = vunpack.c.l.b16 %v311
    %v1575 = vunpack.c.h.b16 %v311
    %v1576 = vunpack.c.l.b16 %v312
    %v1577 = vunpack.c.h.b16 %v312
    %v1578 = vunpack.c.l.b16 %v313
    %v1579 = vunpack.c.h.b16 %v313
    %v1580 = vunpack.c.l.b16 %v314
    %v1581 = vunpack.c.h.b16 %v314
    %v1582 = vunpack.c.l.b16 %v315
    %v1583 = vunpack.c.h.b16 %v315
    %v1584 = vunpack.c.l.b16 %v316
    %v1585 = vunpack.c.h.b16 %v316
    %v1586 = vunpack.c.l.b16 %v317
    %v1587 = vunpack.c.h.b16 %v317
    %v1588 = vunpack.c.l.b16 %v318
    %v1589 = vunpack.c.h.b16 %v318
    %v1590 = vunpack.c.l.b16 %v319
    %v1591 = vunpack.c.h.b16 %v319
    %v1592 = vunpack.c.l.b16 %v320
    %v1593 = vunpack.c.h.b16 %v320
    %v1594 = vunpack.c.l.b16 %v321
    %v1595 = vunpack.c.h.b16 %v321
    %v1596 = vunpack.c.l.b16 %v322
    %v1597 = vunpack.c.h.b16 %v322
    %v1598 = vunpack.c.l.b16 %v323
    %v1599 = vunpack.c.h.b16 %v323
    %v1600 = vunpack.c.l.b16 %v324
    %v1601 = vunpack.c.h.b16 %v324
    %v1602 = vunpack.c.l.b16 %v325
    %v1603 = vunpack.c.h.b16 %v325
    %v1604 = vunpack.c.l.b16 %v326
    %v1605 = vunpack.c.h.b16 %v326
    %v1606 = vunpack.c.l.b16 %v327
    %v1607 = vunpack.c.h.b16 %v327
    %v1608 = vunpack.c.l.b16 %v328
    %v1609 = vunpack.c.h.b16 %v328
    %v1610 = vunpack.c.l.b16 %v329
    %v1611 = vunpack.c.h.b16 %v329
    %v1612 = vunpack.c.l.b16 %v330
    %v1613 = vunpack.c.h.b16 %v330
    %v1614 = vunpack.c.l.b16 %v331
    %v1615 = vunpack.c.h.b16 %v331
    %v1616 = vunpack.c.l.b16 %v332
    %v1617 = vunpack.c.h.b16 %v332
    %v1618 = vunpack.c.l.b16 %v333
    %v1619 = vunpack.c.h.b16 %v333
    %v1620 = vunpack.c.l.b16 %v334
    %v1621 = vunpack.c.h.b16 %v334
    %v1622 = vunpack.c.l.b16 %v335
    %v1623 = vunpack.c.h.b16 %v335
    %v1624 = vunpack.c.l.b16 %v336
    %v1625 = vunpack.c.h.b16 %v336
    %v1626 = vunpack.c.l.b16 %v337
    %v1627 = vunpack.c.h.b16 %v337
    %v1628 = vunpack.c.l.b16 %v338
    %v1629 = vunpack.c.h.b16 %v338
    %v1630 = vunpack.c.l.b16 %v339
    %v1631 = vunpack.c.h.b16 %v339
    %v1632 = vunpack.c.l.b16 %v340
    %v1633 = vunpack.c.h.b16 %v340
    %v1634 = vunpack.c.l.b16 %v341
    %v1635 = vunpack.c.h.b16 %v341
    %v1636 = vunpack.c.l.b16 %v342
    %v1637 = vunpack.c.h.b16 %v342
    %v1638 = vunpack.c.l.b16 %v343
    %v1639 = vunpack.c.h.b16 %v343
    %v1640 = vunpack.c.l.b16 %v344
    %v1641 = vunpack.c.h.b16 %v344
    %v1642 = vunpack.c.l.b16 %v345
    %v1643 = vunpack.c.h.b16 %v345
    %v1644 = vunpack.c.l.b16 %v346
    %v1645 = vunpack.c.h.b16 %v346
    %v1646 = vunpack.c.l.b16 %v347
    %v1647 = vunpack.c.h.b16 %v347
    %v1648 = vunpack.c.l.b16 %v348
    %v1649 = vunpack.c.h.b16 %v348
    %v1650 = vunpack.c.l.b16 %v349
    %v1651 = vunpack.c.h.b16 %v349
    %v1652 = vunpack.c.l.b16 %v350
    %v1653 = vunpack.c.h.b16 %v350
    %v1654 = vunpack.c.l.b16 %v351
    %v1655 = vunpack.c.h.b16 %v351
    %v1656 = vunpack.c.l.b16 %v352
    %v1657 = vunpack.c.h.b16 %v352
    %v1658 = vunpack.c.l.b16 %v353
    %v1659 = vunpack.c.h.b16 %v353
    %v1660 = vunpack.c.l.b16 %v354
    %v1661 = vunpack.c.h.b16 %v354
    %v1662 = vunpack.c.l.b16 %v355
    %v1663 = vunpack.c.h.b16 %v355
    %v1664 = vunpack.c.l.b16 %v356
    %v1665 = vunpack.c.h.b16 %v356
    %v1666 = vunpack.c.l.b16 %v357
    %v1667 = vunpack.c.h.b16 %v357
    %v1668 = vunpack.c.l.b16 %v358
    %v1669 = vunpack.c.h.b16 %v358
    %v1670 = vunpack.c.l.b16 %v359
    %v1671 = vunpack.c.h.b16 %v359
    %v1672 = vunpack.c.l.b16 %v360
    %v1673 = vunpack.c.h.b16 %v360
    %v1674 = vunpack.c.l.b16 %v361
    %v1675 = vunpack.c.h.b16 %v361
    %v1676 = vunpack.c.l.b16 %v362
    %v1677 = vunpack.c.h.b16 %v362
    %v1678 = vunpack.c.l.b16 %v363
    %v1679 = vunpack.c.h.b16 %v363
    %v1680 = vunpack.c.l.b16 %v364
    %v1681 = vunpack.c.h.b16 %v364
    %v1682 = vunpack.c.l.b16 %v365
    %v1683 = vunpack.c.h.b16 %v365
    %v1684 = vunpack.c.l.b16 %v366
    %v1685 = vunpack.c.h.b16 %v366
    %v1686 = vunpack.c.l.b16 %v367
    %v1687 = vunpack.c.h.b16 %v367
    %v1688 = vunpack.c.l.b16 %v368
    %v1689 = vunpack.c.h.b16 %v368
    %v1690 = vunpack.c.l.b16 %v369
    %v1691 = vunpack.c.h.b16 %v369
    %v1692 = vunpack.c.l.b16 %v370
    %v1693 = vunpack.c.h.b16 %v370
    %v1694 = vunpack.c.l.b16 %v371
    %v1695 = vunpack.c.h.b16 %v371
    %v1696 = vunpack.c.l.b16 %v372
    %v1697 = vunpack.c.h.b16 %v372
    %v1698 = vunpack.c.l.b16 %v373
    %v1699 = vunpack.c.h.b16 %v373
    %v1700 = vunpack.c.l.b16 %v374
    %v1701 = vunpack.c.h.b16 %v374
    %v1702 = vunpack.c.l.b16 %v375
    %v1703 = vunpack.c.h.b16 %v375
    %v1704 = vunpack.c.l.b16 %v376
    %v1705 = vunpack.c.h.b16 %v376
    %v1706 = vunpack.c.l.b16 %v377
    %v1707 = vunpack.c.h.b16 %v377
    %v1708 = vunpack.c.l.b16 %v378
    %v1709 = vunpack.c.h.b16 %v378
    %v1710 = vunpack.c.l.b16 %v379
    %v1711 = vunpack.c.h.b16 %v379
    %v1712 = vunpack.c.l.b16 %v380
    %v1713 = vunpack.c.h.b16 %v380
    %v1714 = vunpack.c.l.b16 %v381
    %v1715 = vunpack.c.h.b16 %v381
    %v1716 = vunpack.c.l.b16 %v382
    %v1717 = vunpack.c.h.b16 %v382
    %v1718 = vunpack.c.l.b16 %v383
    %v1719 = vunpack.c.h.b16 %v383
    %v1720 = vunpack.c.l.b16 %v384
    %v1721 = vunpack.c.h.b16 %v384
    %v1722 = vunpack.c.l.b16 %v385
    %v1723 = vunpack.c.h.b16 %v385
    %v1724 = vunpack.c.l.b16 %v386
    %v1725 = vunpack.c.h.b16 %v386
    %v1726 = vunpack.c.l.b16 %v387
    %v1727 = vunpack.c.h.b16 %v387
    %v1728 = vunpack.c.l.b16 %v388
    %v1729 = vunpack.c.h.b16 %v388
    %v1730 = vunpack.c.l.b16 %v389
    %v1731 = vunpack.c.h.b16 %v389
    %v1732 = vunpack.c.l.b16 %v390
    %v1733 = vunpack.c.h.b16 %v390
    %v1734 = vunpack.c.l.b16 %v391
    %v1735 = vunpack.c.h.b16 %v391
    %v1736 = vunpack.c.l.b16 %v392
    %v1737 = vunpack.c.h.b16 %v392
    %v1738 = vunpack.c.l.b16 %v393
    %v1739 = vunpack.c.h.b16 %v393
    %v1740 = vunpack.c.l.b16 %v394
    %v1741 = vunpack.c.h.b16 %v394
    %v1742 = vunpack.c.l.b16 %v395
    %v1743 = vunpack.c.h.b16 %v395
    %v1744 = vunpack.c.l.b16 %v396
    %v1745 = vunpack.c.h.b16 %v396
    %v1746 = vunpack.c.l.b16 %v397
    %v1747 = vunpack.c.h.b16 %v397
    %v1748 = vunpack.c.l.b16 %v398
    %v1749 = vunpack.c.h.b16 %v398
    %v1750 = vunpack.c.l.b16 %v399
    %v1751 = vunpack.c.h.b16 %v399
    %v1752 = vunpack.c.l.b16 %v400
    %v1753 = vunpack.c.h.b16 %v400
    %v1754 = vunpack.c.l.b16 %v401
    %v1755 = vunpack.c.h.b16 %v401
    %v1756 = vunpack.c.l.b16 %v402
    %v1757 = vunpack.c.h.b16 %v402
    %v1758 = vunpack.c.l.b16 %v403
    %v1759 = vunpack.c.h.b16 %v403
    %v1760 = vunpack.c.l.b16 %v404
    %v1761 = vunpack.c.h.b16 %v404
    %v1762 = vunpack.c.l.b16 %v405
    %v1763 = vunpack.c.h.b16 %v405
    %v1764 = vunpack.c.l.b16 %v406
    %v1765 = vunpack.c.h.b16 %v406
    %v1766 = vunpack.c.l.b16 %v407
    %v1767 = vunpack.c.h.b16 %v407
    %v1768 = vunpack.c.l.b16 %v408
    %v1769 = vunpack.c.h.b16 %v408
    %v1770 = vunpack.c.l.b16 %v409
    %v1771 = vunpack.c.h.b16 %v409
    %v1772 = vunpack.c.l.b16 %v410
    %v1773 = vunpack.c.h.b16 %v410
    %v1774 = vunpack.c.l.b16 %v411
    %v1775 = vunpack.c.h.b16 %v411
    %v1776 = vunpack.c.l.b16 %v412
    %v1777 = vunpack.c.h.b16 %v412
    %v1778 = vunpack.c.l.b16 %v413
    %v1779 = vunpack.c.h.b16 %v413
    %v1780 = vunpack.c.l.b16 %v414
    %v1781 = vunpack.c.h.b16 %v414
    %v1782 = vunpack.c.l.b16 %v415
    %v1783 = vunpack.c.h.b16 %v415
    %v1784 = vunpack.c.l.b16 %v416
    %v1785 = vunpack.c.h.b16 %v416
    %v1786 = vunpack.c.l.b16 %v417
    %v1787 = vunpack.c.h.b16 %v417
    %v1788 = vunpack.c.l.b16 %v418
    %v1789 = vunpack.c.h.b16 %v418
    %v1790 = vunpack.c.l.b16 %v419
    %v1791 = vunpack.c.h.b16 %v419
    %v1792 = vunpack.c.l.b16 %v420
    %v1793 = vunpack.c.h.b16 %v420
    %v1794 = vunpack.c.l.b16 %v421
    %v1795 = vunpack.c.h.b16 %v421
    %v1796 = vunpack.c.l.b16 %v422
    %v1797 = vunpack.c.h.b16 %v422
    %v1798 = vunpack.c.l.b16 %v423
    %v1799 = vunpack.c.h.b16 %v423
    %v1800 = vunpack.c.l.b16 %v424
    %v1801 = vunpack.c.h.b16 %v424
    %v1802 = vunpack.c.l.b16 %v425
    %v1803 = vunpack.c.h.b16 %v425
    %v1804 = vunpack.c.l.b16 %v426
    %v1805 = vunpack.c.h.b16 %v426
    %v1806 = vunpack.c.l.b16 %v427
    %v1807 = vunpack.c.h.b16 %v427
    %v1808 = vunpack.c.l.b16 %v428
    %v1809 = vunpack.c.h.b16 %v428
    %v1810 = vunpack.c.l.b16 %v429
    %v1811 = vunpack.c.h.b16 %v429
    %v1812 = vunpack.c.l.b16 %v430
    %v1813 = vunpack.c.h.b16 %v430
    %v1814 = vunpack.c.l.b16 %v431
    %v1815 = vunpack.c.h.b16 %v431
    %v1816 = vunpack.c.l.b16 %v432
    %v1817 = vunpack.c.h.b16 %v432
    %v1818 = vunpack.c.l.b16 %v433
    %v1819 = vunpack.c.h.b16 %v433
    %v1820 = vunpack.c.l.b16 %v434
    %v1821 = vunpack.c.h.b16 %v434
    %v1822 = vunpack.c.l.b16 %v435
    %v1823 = vunpack.c.h.b16 %v435
    %v1824 = vunpack.c.l.b16 %v436
    %v1825 = vunpack.c.h.b16 %v436
    %v1826 = vunpack.c.l.b16 %v437
    %v1827 = vunpack.c.h.b16 %v437
    %v1828 = vunpack.c.l.b16 %v438
    %v1829 = vunpack.c.h.b16 %v438
    %v1830 = vunpack.c.l.b16 %v439
    %v1831 = vunpack.c.h.b16 %v439
    %v1832 = vunpack.c.l.b16 %v440
    %v1833 = vunpack.c.h.b16 %v440
    %v1834 = vunpack.c.l.b16 %v441
    %v1835 = vunpack.c.h.b16 %v441
    %v1836 = vunpack.c.l.b16 %v442
    %v1837 = vunpack.c.h.b16 %v442
    %v1838 = vunpack.c.l.b16 %v443
    %v1839 = vunpack.c.h.b16 %v443
    %v1840 = vunpack.c.l.b16 %v444
    %v1841 = vunpack.c.h.b16 %v444
    %v1842 = vunpack.c.l.b16 %v445
    %v1843 = vunpack.c.h.b16 %v445
    %v1844 = vunpack.c.l.b16 %v446
    %v1845 = vunpack.c.h.b16 %v446
    %v1846 = vunpack.c.l.b16 %v447
    %v1847 = vunpack.c.h.b16 %v447
    %v1848 = vunpack.c.l.b16 %v448
    %v1849 = vunpack.c.h.b16 %v448
    %v1850 = vunpack.c.l.b16 %v449
    %v1851 = vunpack.c.h.b16 %v449
    %v1852 = vunpack.c.l.b16 %v450
    %v1853 = vunpack.c.h.b16 %v450
    %v1854 = vunpack.c.l.b16 %v451
    %v1855 = vunpack.c.h.b16 %v451
    %v1856 = vunpack.c.l.b16 %v452
    %v1857 = vunpack.c.h.b16 %v452
    %v1858 = vunpack.c.l.b16 %v453
    %v1859 = vunpack.c.h.b16 %v453
    %v1860 = vunpack.c.l.b16 %v454
    %v1861 = vunpack.c.h.b16 %v454
    %v1862 = vunpack.c.l.b16 %v455
    %v1863 = vunpack.c.h.b16 %v455
    %v1864 = vunpack.c.l.b16 %v456
    %v1865 = vunpack.c.h.b16 %v456
    %v1866 = vunpack.c.l.b16 %v457
    %v1867 = vunpack.c.h.b16 %v457
    %v1868 = vunpack.c.l.b16 %v458
    %v1869 = vunpack.c.h.b16 %v458
    %v1870 = vunpack.c.l.b16 %v459
    %v1871 = vunpack.c.h.b16 %v459
    %v1872 = vunpack.c.l.b16 %v460
    %v1873 = vunpack.c.h.b16 %v460
    %v1874 = vunpack.c.l.b16 %v461
    %v1875 = vunpack.c.h.b16 %v461
    %v1876 = vunpack.c.l.b16 %v462
    %v1877 = vunpack.c.h.b16 %v462
    %v1878 = vunpack.c.l.b16 %v463
    %v1879 = vunpack.c.h.b16 %v463
    %v1880 = vunpack.c.l.b16 %v464
    %v1881 = vunpack.c.h.b16 %v464
    %v1882 = vunpack.c.l.b16 %v465
    %v1883 = vunpack.c.h.b16 %v465
    %v1884 = vunpack.c.l.b16 %v466
    %v1885 = vunpack.c.h.b16 %v466
    %v1886 = vunpack.c.l.b16 %v467
    %v1887 = vunpack.c.h.b16 %v467
    %v1888 = vunpack.c.l.b16 %v468
    %v1889 = vunpack.c.h.b16 %v468
    %v1890 = vunpack.c.l.b16 %v469
    %v1891 = vunpack.c.h.b16 %v469
    %v1892 = vunpack.c.l.b16 %v470
    %v1893 = vunpack.c.h.b16 %v470
    %v1894 = vunpack.c.l.b16 %v471
    %v1895 = vunpack.c.h.b16 %v471
    %v1896 = vunpack.c.l.b16 %v472
    %v1897 = vunpack.c.h.b16 %v472
    %v1898 = vunpack.c.l.b16 %v473
    %v1899 = vunpack.c.h.b16 %v473
    %v1900 = vunpack.c.l.b16 %v474
    %v1901 = vunpack.c.h.b16 %v474
    %v1902 = vunpack.c.l.b16 %v475
    %v1903 = vunpack.c.h.b16 %v475
    %v1904 = vunpack.c.l.b16 %v476
    %v1905 = vunpack.c.h.b16 %v476
    %v1906 = vunpack.c.l.b16 %v477
    %v1907 = vunpack.c.h.b16 %v477
    %v1908 = vunpack.c.l.b16 %v478
    %v1909 = vunpack.c.h.b16 %v478
    %v1910 = vunpack.c.l.b16 %v479
    %v1911 = vunpack.c.h.b16 %v479
    %v1912 = vunpack.c.l.b16 %v480
    %v1913 = vunpack.c.h.b16 %v480
    %v1914 = vunpack.c.l.b16 %v481
    %v1915 = vunpack.c.h.b16 %v481
    %v1916 = vunpack.c.l.b16 %v482
    %v1917 = vunpack.c.h.b16 %v482
    %v1918 = vunpack.c.l.b16 %v483
    %v1919 = vunpack.c.h.b16 %v483
    %v1920 = vunpack.c.l.b16 %v484
    %v1921 = vunpack.c.h.b16 %v484
    %v1922 = vunpack.c.l.b16 %v485
    %v1923 = vunpack.c.h.b16 %v485
    %v1924 = vunpack.c.l.b16 %v486
    %v1925 = vunpack.c.h.b16 %v486
    %v1926 = vunpack.c.l.b16 %v487
    %v1927 = vunpack.c.h.b16 %v487
    %v1928 = vunpack.c.l.b16 %v488
    %v1929 = vunpack.c.h.b16 %v488
    %v1930 = vunpack.c.l.b16 %v489
    %v1931 = vunpack.c.h.b16 %v489
    %v1932 = vunpack.c.l.b16 %v490
    %v1933 = vunpack.c.h.b16 %v490
    %v1934 = vunpack.c.l.b16 %v491
    %v1935 = vunpack.c.h.b16 %v491
    %v1936 = vunpack.c.l.b16 %v492
    %v1937 = vunpack.c.h.b16 %v492
    %v1938 = vunpack.c.l.b16 %v493
    %v1939 = vunpack.c.h.b16 %v493
    %v1940 = vunpack.c.l.b16 %v494
    %v1941 = vunpack.c.h.b16 %v494
    %v1942 = vunpack.c.l.b16 %v495
    %v1943 = vunpack.c.h.b16 %v495
    %v1944 = vunpack.c.l.b16 %v496
    %v1945 = vunpack.c.h.b16 %v496
    %v1946 = vunpack.c.l.b16 %v497
    %v1947 = vunpack.c.h.b16 %v497
    %v1948 = vunpack.c.l.b16 %v498
    %v1949 = vunpack.c.h.b16 %v498
    %v1950 = vunpack.c.l.b16 %v499
    %v1951 = vunpack.c.h.b16 %v499
    %v1952 = vunpack.c.l.b16 %v500
    %v1953 = vunpack.c.h.b16 %v500
    %v1954 = vunpack.c.l.b16 %v501
    %v1955 = vunpack.c.h.b16 %v501
    %v1956 = vunpack.c.l.b16 %v502
    %v1957 = vunpack.c.h.b16 %v502
    %v1958 = vunpack.c.l.b16 %v503
    %v1959 = vunpack.c.h.b16 %v503
    %v1960 = vunpack.c.l.b16 %v504
    %v1961 = vunpack.c.h.b16 %v504
    %v1962 = vunpack.c.l.b16 %v505
    %v1963 = vunpack.c.h.b16 %v505
    %v1964 = vunpack.c.l.b16 %v506
    %v1965 = vunpack.c.h.b16 %v506
    %v1966 = vunpack.c.l.b16 %v507
    %v1967 = vunpack.c.h.b16 %v507
    %v1968 = vunpack.c.l.b16 %v508
    %v1969 = vunpack.c.h.b16 %v508
    %v1970 = vunpack.c.l.b16 %v509
    %v1971 = vunpack.c.h.b16 %v509
    %v1972 = vunpack.c.l.b16 %v510
    %v1973 = vunpack.c.h.b16 %v510
    %v1974 = vunpack.c.l.b16 %v511
    %v1975 = vunpack.c.h.b16 %v511
    %v1976 = vunpack.c.l.b16 %v512
    %v1977 = vunpack.c.h.b16 %v512
    %v1978 = vunpack.c.l.b16 %v513
    %v1979 = vunpack.c.h.b16 %v513
    %v1980 = vunpack.c.l.b16 %v514
    %v1981 = vunpack.c.h.b16 %v514
    %v1982 = vunpack.c.l.b16 %v515
    %v1983 = vunpack.c.h.b16 %v515
    %v1984 = vunpack.c.l.b16 %v516
    %v1985 = vunpack.c.h.b16 %v516
    %v1986 = vunpack.c.l.b16 %v517
    %v1987 = vunpack.c.h.b16 %v517
    %v1988 = vunpack.c.l.b16 %v518
    %v1989 = vunpack.c.h.b16 %v518
    %v1990 = vunpack.c.l.b16 %v519
    %v1991 = vunpack.c.h.b16 %v519
    %v1992 = vunpack.c.l.b16 %v520
    %v1993 = vunpack.c.h.b16 %v520
    %v1994 = vunpack.c.l.b16 %v521
    %v1995 = vunpack.c.h.b16 %v521
    %v1996 = vunpack.c.l.b16 %v522
    %v1997 = vunpack.c.h.b16 %v522
    %v1998 = vunpack.c.l.b16 %v523
    %v1999 = vunpack.c.h.b16 %v523
    %v2000 = vunpack.c.l.b16 %v524
    %v2001 = vunpack.c.h.b16 %v524
    %v2002 = vunpack.c.l.b16 %v525
    %v2003 = vunpack.c.h.b16 %v525
    %v2004 = vunpack.c.l.b16 %v526
    %v2005 = vunpack.c.h.b16 %v526
    %v2006 = vunpack.c.l.b16 %v527
    %v2007 = vunpack.c.h.b16 %v527
    %v2008 = vunpack.c.l.b16 %v528
    %v2009 = vunpack.c.h.b16 %v528
    %v2010 = vunpack.c.l.b16 %v529
    %v2011 = vunpack.c.h.b16 %v529
    %v2012 = vunpack.c.l.b16 %v530
    %v2013 = vunpack.c.h.b16 %v530
    %v2014 = vunpack.c.l.b16 %v531
    %v2015 = vunpack.c.h.b16 %v531
    %v2016 = vunpack.c.l.b16 %v532
    %v2017 = vunpack.c.h.b16 %v532
    %v2018 = vunpack.c.l.b16 %v533
    %v2019 = vunpack.c.h.b16 %v533
    %v2020 = vunpack.c.l.b16 %v534
    %v2021 = vunpack.c.h.b16 %v534
    %v2022 = vunpack.c.l.b16 %v535
    %v2023 = vunpack.c.h.b16 %v535
    %v2024 = vunpack.c.l.b16 %v536
    %v2025 = vunpack.c.h.b16 %v536
    %v2026 = vunpack.c.l.b16 %v537
    %v2027 = vunpack.c.h.b16 %v537
    %v2028 = vunpack.c.l.b16 %v538
    %v2029 = vunpack.c.h.b16 %v538
    %v2030 = vunpack.c.l.b16 %v539
    %v2031 = vunpack.c.h.b16 %v539
    %v2032 = vunpack.c.l.b16 %v540
    %v2033 = vunpack.c.h.b16 %v540
    %v2034 = vunpack.c.l.b16 %v541
    %v2035 = vunpack.c.h.b16 %v541
    %v2036 = vunpack.c.l.b16 %v542
    %v2037 = vunpack.c.h.b16 %v542
    %v2038 = vunpack.c.l.b16 %v543
    %v2039 = vunpack.c.h.b16 %v543
    %v2040 = vunpack.c.l.b16 %v544
    %v2041 = vunpack.c.h.b16 %v544
    %v2042 = vunpack.c.l.b16 %v545
    %v2043 = vunpack.c.h.b16 %v545
    %v2044 = vunpack.c.l.b16 %v546
    %v2045 = vunpack.c.h.b16 %v546
    %v2046 = vunpack.c.l.b16 %v547
    %v2047 = vunpack.c.h.b16 %v547
    %v2048 = vunpack.c.l.b16 %v548
    %v2049 = vunpack.c.h.b16 %v548
    %v2050 = vunpack.c.l.b16 %v549
    %v2051 = vunpack.c.h.b16 %v549
    %v2052 = vunpack.c.l.b16 %v550
    %v2053 = vunpack.c.h.b16 %v550
    %v2054 = vunpack.c.l.b16 %v551
    %v2055 = vunpack.c.h.b16 %v551
    %v2056 = vunpack.c.l.b16 %v552
    %v2057 = vunpack.c.h.b16 %v552
    %v2058 = vunpack.c.l.b16 %v553
    %v2059 = vunpack.c.h.b16 %v553
    %v2060 = vunpack.c.l.b16 %v554
    %v2061 = vunpack.c.h.b16 %v554
    %v2062 = vunpack.c.l.b16 %v555
    %v2063 = vunpack.c.h.b16 %v555
    %v2064 = vunpack.c.l.b16 %v556
    %v2065 = vunpack.c.h.b16 %v556
    %v2066 = vunpack.c.l.b16 %v557
    %v2067 = vunpack.c.h.b16 %v557
    %v2068 = vunpack.c.l.b16 %v558
    %v2069 = vunpack.c.h.b16 %v558
    %v2070 = vunpack.c.l.b16 %v559
    %v2071 = vunpack.c.h.b16 %v559
    %v2072 = vunpack.c.l.b16 %v560
    %v2073 = vunpack.c.h.b16 %v560
    %v2074 = vunpack.c.l.b16 %v561
    %v2075 = vunpack.c.h.b16 %v561
    %v2076 = vunpack.c.l.b16 %v562
    %v2077 = vunpack.c.h.b16 %v562
    %v2078 = vunpack.c.l.b16 %v563
    %v2079 = vunpack.c.h.b16 %v563
    %v2080 = vunpack.c.l.b16 %v564
    %v2081 = vunpack.c.h.b16 %v564
    %v2082 = vunpack.c.l.b16 %v565
    %v2083 = vunpack.c.h.b16 %v565
    %v2084 = vunpack.c.l.b16 %v566
    %v2085 = vunpack.c.h.b16 %v566
    %v2086 = vunpack.c.l.b16 %v567
    %v2087 = vunpack.c.h.b16 %v567
    %v2088 = vunpack.c.l.b16 %v568
    %v2089 = vunpack.c.h.b16 %v568
    %v2090 = vunpack.c.l.b16 %v569
    %v2091 = vunpack.c.h.b16 %v569
    %v2092 = vunpack.c.l.b16 %v570
    %v2093 = vunpack.c.h.b16 %v570
    %v2094 = vunpack.c.l.b16 %v571
    %v2095 = vunpack.c.h.b16 %v571
    %v2096 = vunpack.c.l.b16 %v572
    %v2097 = vunpack.c.h.b16 %v572
    %v2098 = vunpack.c.l.b16 %v573
    %v2099 = vunpack.c.h.b16 %v573
    %v2100 = vunpack.c.l.b16 %v574
    %v2101 = vunpack.c.h.b16 %v574
    %v2102 = vunpack.c.l.b16 %v575
    %v2103 = vunpack.c.h.b16 %v575
    %v2104 = vunpack.c.l.b16 %v576
    %v2105 = vunpack.c.h.b16 %v576
    %v2106 = vunpack.c.l.b16 %v577
    %v2107 = vunpack.c.h.b16 %v577
    %v2108 = vunpack.c.l.b16 %v578
    %v2109 = vunpack.c.h.b16 %v578
    %v2110 = vunpack.c.l.b16 %v579
    %v2111 = vunpack.c.h.b16 %v579
    %v2112 = vunpack.c.l.b16 %v580
    %v2113 = vunpack.c.h.b16 %v580
    %v2114 = vunpack.c.l.b16 %v581
    %v2115 = vunpack.c.h.b16 %v581
    %v2116 = vunpack.c.l.b16 %v582
    %v2117 = vunpack.c.h.b16 %v582
    %v2118 = vunpack.c.l.b16 %v583
    %v2119 = vunpack.c.h.b16 %v583
    %v2120 = vpack.c.b16 %v1128, %v1096
    %v2121 = vpack.c.b16 %v1129, %v1097
    %v2122 = vpack.c.b16 %v1130, %v1098
    %v2123 = vpack.c.b16 %v1131, %v1099
    %v2124 = vpack.c.b16 %v1132, %v1100
    %v2125 = vpack.c.b16 %v1133, %v1101
    %v2126 = vpack.c.b16 %v1134, %v1102
    %v2127 = vpack.c.b16 %v1135, %v1103
    %v2128 = vpack.c.b16 %v1136, %v1104
    %v2129 = vpack.c.b16 %v1137, %v1105
    %v2130 = vpack.c.b16 %v1138, %v1106
    %v2131 = vpack.c.b16 %v1139, %v1107
    %v2132 = vpack.c.b16 %v1140, %v1108
    %v2133 = vpack.c.b16 %v1141, %v1109
    %v2134 = vpack.c.b16 %v1142, %v1110
    %v2135 = vpack.c.b16 %v1143, %v1111
    %v2136 = vpack.c.b16 %v1144, %v1112
    %v2137 = vpack.c.b16 %v1145, %v1113
    %v2138 = vpack.c.b16 %v1146, %v1114
    %v2139 = vpack.c.b16 %v1147, %v1115
    %v2140 = vpack.c.b16 %v1148, %v1116
    %v2141 = vpack.c.b16 %v1149, %v1117
    %v2142 = vpack.c.b16 %v1150, %v1118
    %v2143 = vpack.c.b16 %v1151, %v1119
    %v2144 = vpack.c.b16 %v1152, %v1120
    %v2145 = vpack.c.b16 %v1153, %v1121
    %v2146 = vpack.c.b16 %v1154, %v1122
    %v2147 = vpack.c.b16 %v1155, %v1123
    %v2148 = vpack.c.b16 %v1156, %v1124
    %v2149 = vpack.c.b16 %v1157, %v1125
    %v2150 = vpack.c.b16 %v1158, %v1126
    %v2151 = vpack.c.b16 %v1159, %v1127
    %v2152 = vpack.c.b16 %v1192, %v1160
    %v2153 = vpack.c.b16 %v1193, %v1161
    %v2154 = vpack.c.b16 %v1194, %v1162
    %v2155 = vpack.c.b16 %v1195, %v1163
    %v2156 = vpack.c.b16 %v1196, %v1164
    %v2157 = vpack.c.b16 %v1197, %v1165
    %v2158 = vpack.c.b16 %v1198, %v1166
    %v2159 = vpack.c.b16 %v1199, %v1167
    %v2160 = vpack.c.b16 %v1200, %v1168
    %v2161 = vpack.c.b16 %v1201, %v1169
    %v2162 = vpack.c.b16 %v1202, %v1170
    %v2163 = vpack.c.b16 %v1203, %v1171
    %v2164 = vpack.c.b16 %v1204, %v1172
    %v2165 = vpack.c.b16 %v1205, %v1173
    %v2166 = vpack.c.b16 %v1206, %v1174
    %v2167 = vpack.c.b16 %v1207, %v1175
    %v2168 = vpack.c.b16 %v1208, %v1176
    %v2169 = vpack.c.b16 %v1209, %v1177
    %v2170 = vpack.c.b16 %v1210, %v1178
    %v2171 = vpack.c.b16 %v1211, %v1179
    %v2172 = vpack.c.b16 %v1212, %v1180
    %v2173 = vpack.c.b16 %v1213, %v1181
    %v2174 = vpack.c.b16 %v1214, %v1182
    %v2175 = vpack.c.b16 %v1215, %v1183
    %v2176 = vpack.c.b16 %v1216, %v1184
    %v2177 = vpack.c.b16 %v1217, %v1185
    %v2178 = vpack.c.b16 %v1218, %v1186
    %v2179 = vpack.c.b16 %v1219, %v1187
    %v2180 = vpack.c.b16 %v1220, %v1188
    %v2181 = vpack.c.b16 %v1221, %v1189
    %v2182 = vpack.c.b16 %v1222, %v1190
    %v2183 = vpack.c.b16 %v1223, %v1191
    %v2184 = vpack.c.b16 %v1256, %v1224
    %v2185 = vpack.c.b16 %v1257, %v1225
    %v2186 = vpack.c.b16 %v1258, %v1226
    %v2187 = vpack.c.b16 %v1259, %v1227
    %v2188 = vpack.c.b16 %v1260, %v1228
    %v2189 = vpack.c.b16 %v1261, %v1229
    %v2190 = vpack.c.b16 %v1262, %v1230
    %v2191 = vpack.c.b16 %v1263, %v1231
    %v2192 = vpack.c.b16 %v1264, %v1232
    %v2193 = vpack.c.b16 %v1265, %v1233
    %v2194 = vpack.c.b16 %v1266, %v1234
    %v2195 = vpack.c.b16 %v1267, %v1235
    %v2196 = vpack.c.b16 %v1268, %v1236
    %v2197 = vpack.c.b16 %v1269, %v1237
    %v2198 = vpack.c.b16 %v1270, %v1238
    %v2199 = vpack.c.b16 %v1271, %v1239
    %v2200 = vpack.c.b16 %v1272, %v1240
    %v2201 = vpack.c.b16 %v1273, %v1241
    %v2202 = vpack.c.b16 %v1274, %v1242
    %v2203 = vpack.c.b16 %v1275, %v1243
    %v2204 = vpack.c.b16 %v1276, %v1244
    %v2205 = vpack.c.b16 %v1277, %v1245
    %v2206 = vpack.c.b16 %v1278, %v1246
    %v2207 = vpack.c.b16 %v1279, %v1247
    %v2208 = vpack.c.b16 %v1280, %v1248
    %v2209 = vpack.c.b16 %v1281, %v1249
    %v2210 = vpack.c.b16 %v1282, %v1250
    %v2211 = vpack.c.b16 %v1283, %v1251
    %v2212 = vpack.c.b16 %v1284, %v1252
    %v2213 = vpack.c.b16 %v1285, %v1253
    %v2214 = vpack.c.b16 %v1286, %v1254
    %v2215 = vpack.c.b16 %v1287, %v1255
    %v2216 = vpack.c.b16 %v1320, %v1288
    %v2217 = vpack.c.b16 %v1321, %v1289
    %v2218 = vpack.c.b16 %v1322, %v1290
    %v2219 = vpack.c.b16 %v1323, %v1291
    %v2220 = vpack.c.b16 %v1324, %v1292
    %v2221 = vpack.c.b16 %v1325, %v1293
    %v2222 = vpack.c.b16 %v1326, %v1294
    %v2223 = vpack.c.b16 %v1327, %v1295
    %v2224 = vpack.c.b16 %v1328, %v1296
    %v2225 = vpack.c.b16 %v1329, %v1297
    %v2226 = vpack.c.b16 %v1330, %v1298
    %v2227 = vpack.c.b16 %v1331, %v1299
    %v2228 = vpack.c.b16 %v1332, %v1300
    %v2229 = vpack.c.b16 %v1333, %v1301
    %v2230 = vpack.c.b16 %v1334, %v1302
    %v2231 = vpack.c.b16 %v1335, %v1303
    %v2232 = vpack.c.b16 %v1336, %v1304
    %v2233 = vpack.c.b16 %v1337, %v1305
    %v2234 = vpack.c.b16 %v1338, %v1306
    %v2235 = vpack.c.b16 %v1339, %v1307
    %v2236 = vpack.c.b16 %v1340, %v1308
    %v2237 = vpack.c.b16 %v1341, %v1309
    %v2238 = vpack.c.b16 %v1342, %v1310
    %v2239 = vpack.c.b16 %v1343, %v1311
    %v2240 = vpack.c.b16 %v1344, %v1312
    %v2241 = vpack.c.b16 %v1345, %v1313
    %v2242 = vpack.c.b16 %v1346, %v1314
    %v2243 = vpack.c.b16 %v1347, %v1315
    %v2244 = vpack.c.b16 %v1348, %v1316
    %v2245 = vpack.c.b16 %v1349, %v1317
    %v2246 = vpack.c.b16 %v1350, %v1318
    %v2247 = vpack.c.b16 %v1351, %v1319
    %v2248 = vpack.c.b16 %v1384, %v1352
    %v2249 = vpack.c.b16 %v1385, %v1353
    %v2250 = vpack.c.b16 %v1386, %v1354
    %v2251 = vpack.c.b16 %v1387, %v1355
    %v2252 = vpack.c.b16 %v1388, %v1356
    %v2253 = vpack.c.b16 %v1389, %v1357
    %v2254 = vpack.c.b16 %v1390, %v1358
    %v2255 = vpack.c.b16 %v1391, %v1359
    %v2256 = vpack.c.b16 %v1392, %v1360
    %v2257 = vpack.c.b16 %v1393, %v1361
    %v2258 = vpack.c.b16 %v1394, %v1362
    %v2259 = vpack.c.b16 %v1395, %v1363
    %v2260 = vpack.c.b16 %v1396, %v1364
    %v2261 = vpack.c.b16 %v1397, %v1365
    %v2262 = vpack.c.b16 %v1398, %v1366
    %v2263 = vpack.c.b16 %v1399, %v1367
    %v2264 = vpack.c.b16 %v1400, %v1368
    %v2265 = vpack.c.b16 %v1401, %v1369
    %v2266 = vpack.c.b16 %v1402, %v1370
    %v2267 = vpack.c.b16 %v1403, %v1371
    %v2268 = vpack.c.b16 %v1404, %v1372
    %v2269 = vpack.c.b16 %v1405, %v1373
    %v2270 = vpack.c.b16 %v1406, %v1374
    %v2271 = vpack.c.b16 %v1407, %v1375
    %v2272 = vpack.c.b16 %v1408, %v1376
    %v2273 = vpack.c.b16 %v1409, %v1377
    %v2274 = vpack.c.b16 %v1410, %v1378
    %v2275 = vpack.c.b16 %v1411, %v1379
    %v2276 = vpack.c.b16 %v1412, %v1380
    %v2277 = vpack.c.b16 %v1413, %v1381
    %v2278 = vpack.c.b16 %v1414, %v1382
    %v2279 = vpack.c.b16 %v1415, %v1383
    %v2280 = vpack.c.b16 %v1448, %v1416
    %v2281 = vpack.c.b16 %v1449, %v1417
    %v2282 = vpack.c.b16 %v1450, %v1418
    %v2283 = vpack.c.b16 %v1451, %v1419
    %v2284 = vpack.c.b16 %v1452, %v1420
    %v2285 = vpack.c.b16 %v1453, %v1421
    %v2286 = vpack.c.b16 %v1454, %v1422
    %v2287 = vpack.c.b16 %v1455, %v1423
    %v2288 = vpack.c.b16 %v1456, %v1424
    %v2289 = vpack.c.b16 %v1457, %v1425
    %v2290 = vpack.c.b16 %v1458, %v1426
    %v2291 = vpack.c.b16 %v1459, %v1427
    %v2292 = vpack.c.b16 %v1460, %v1428
    %v2293 = vpack.c.b16 %v1461, %v1429
    %v2294 = vpack.c.b16 %v1462, %v1430
    %v2295 = vpack.c.b16 %v1463, %v1431
    %v2296 = vpack.c.b16 %v1464, %v1432
    %v2297 = vpack.c.b16 %v1465, %v1433
    %v2298 = vpack.c.b16 %v1466, %v1434
    %v2299 = vpack.c.b16 %v1467, %v1435
    %v2300 = vpack.c.b16 %v1468, %v1436
    %v2301 = vpack.c.b16 %v1469, %v1437
    %v2302 = vpack.c.b16 %v1470, %v1438
    %v2303 = vpack.c.b16 %v1471, %v1439
    %v2304 = vpack.c.b16 %v1472, %v1440
    %v2305 = vpack.c.b16 %v1473, %v1441
    %v2306 = vpack.c.b16 %v1474, %v1442
    %v2307 = vpack.c.b16 %v1475, %v1443
    %v2308 = vpack.c.b16 %v1476, %v1444
    %v2309 = vpack.c.b16 %v1477, %v1445
    %v2310 = vpack.c.b16 %v1478, %v1446
    %v2311 = vpack.c.b16 %v1479, %v1447
    %v2312 = vpack.c.b16 %v1512, %v1480
    %v2313 = vpack.c.b16 %v1513, %v1481
    %v2314 = vpack.c.b16 %v1514, %v1482
    %v2315 = vpack.c.b16 %v1515, %v1483
    %v2316 = vpack.c.b16 %v1516, %v1484
    %v2317 = vpack.c.b16 %v1517, %v1485
    %v2318 = vpack.c.b16 %v1518, %v1486
    %v2319 = vpack.c.b16 %v1519, %v1487
    %v2320 = vpack.c.b16 %v1520, %v1488
    %v2321 = vpack.c.b16 %v1521, %v1489
    %v2322 = vpack.c.b16 %v1522, %v1490
    %v2323 = vpack.c.b16 %v1523, %v1491
    %v2324 = vpack.c.b16 %v1524, %v1492
    %v2325 = vpack.c.b16 %v1525, %v1493
    %v2326 = vpack.c.b16 %v1526, %v1494
    %v2327 = vpack.c.b16 %v1527, %v1495
    %v2328 = vpack.c.b16 %v1528, %v1496
    %v2329 = vpack.c.b16 %v1529, %v1497
    %v2330 = vpack.c.b16 %v1530, %v1498
    %v2331 = vpack.c.b16 %v1531, %v1499
    %v2332 = vpack.c.b16 %v1532, %v1500
    %v2333 = vpack.c.b16 %v1533, %v1501
    %v2334 = vpack.c.b16 %v1534, %v1502
    %v2335 = vpack.c.b16 %v1535, %v1503
    %v2336 = vpack.c.b16 %v1536, %v1504
    %v2337 = vpack.c.b16 %v1537, %v1505
    %v2338 = vpack.c.b16 %v1538, %v1506
    %v2339 = vpack.c.b16 %v1539, %v1507
    %v2340 = vpack.c.b16 %v1540, %v1508
    %v2341 = vpack.c.b16 %v1541, %v1509
    %v2342 = vpack.c.b16 %v1542, %v1510
    %v2343 = vpack.c.b16 %v1543, %v1511
    %v2344 = vpack.c.b16 %v1576, %v1544
    %v2345 = vpack.c.b16 %v1577, %v1545
    %v2346 = vpack.c.b16 %v1578, %v1546
    %v2347 = vpack.c.b16 %v1579, %v1547
    %v2348 = vpack.c.b16 %v1580, %v1548
    %v2349 = vpack.c.b16 %v1581, %v1549
    %v2350 = vpack.c.b16 %v1582, %v1550
    %v2351 = vpack.c.b16 %v1583, %v1551
    %v2352 = vpack.c.b16 %v1584, %v1552
    %v2353 = vpack.c.b16 %v1585, %v1553
    %v2354 = vpack.c.b16 %v1586, %v1554
    %v2355 = vpack.c.b16 %v1587, %v1555
    %v2356 = vpack.c.b16 %v1588, %v1556
    %v2357 = vpack.c.b16 %v1589, %v1557
    %v2358 = vpack.c.b16 %v1590, %v1558
    %v2359 = vpack.c.b16 %v1591, %v1559
    %v2360 = vpack.c.b16 %v1592, %v1560
    %v2361 = vpack.c.b16 %v1593, %v1561
    %v2362 = vpack.c.b16 %v1594, %v1562
    %v2363 = vpack.c.b16 %v1595, %v1563
    %v2364 = vpack.c.b16 %v1596, %v1564
    %v2365 = vpack.c.b16 %v1597, %v1565
    %v2366 = vpack.c.b16 %v1598, %v1566
    %v2367 = vpack.c.b16 %v1599, %v1567
    %v2368 = vpack.c.b16 %v1600, %v1568
    %v2369 = vpack.c.b16 %v1601, %v1569
    %v2370 = vpack.c.b16 %v1602, %v1570
    %v2371 = vpack.c.b16 %v1603, %v1571
    %v2372 = vpack.c.b16 %v1604, %v1572
    %v2373 = vpack.c.b16 %v1605, %v1573
    %v2374 = vpack.c.b16 %v1606, %v1574
    %v2375 = vpack.c.b16 %v1607, %v1575
    %v2376 = vpack.c.b16 %v1640, %v1608
    %v2377 = vpack.c.b16 %v1641, %v1609
    %v2378 = vpack.c.b16 %v1642, %v1610
    %v2379 = vpack.c.b16 %v1643, %v1611
    %v2380 = vpack.c.b16 %v1644, %v1612
    %v2381 = vpack.c.b16 %v1645, %v1613
    %v2382 = vpack.c.b16 %v1646, %v1614
    %v2383 = vpack.c.b16 %v1647, %v1615
    %v2384 = vpack.c.b16 %v1648, %v1616
    %v2385 = vpack.c.b16 %v1649, %v1617
    %v2386 = vpack.c.b16 %v1650, %v1618
    %v2387 = vpack.c.b16 %v1651, %v1619
    %v2388 = vpack.c.b16 %v1652, %v1620
    %v2389 = vpack.c.b16 %v1653, %v1621
    %v2390 = vpack.c.b16 %v1654, %v1622
    %v2391 = vpack.c.b16 %v1655, %v1623
    %v2392 = vpack.c.b16 %v1656, %v1624
    %v2393 = vpack.c.b16 %v1657, %v1625
    %v2394 = vpack.c.b16 %v1658, %v1626
    %v2395 = vpack.c.b16 %v1659, %v1627
    %v2396 = vpack.c.b16 %v1660, %v1628
    %v2397 = vpack.c.b16 %v1661, %v1629
    %v2398 = vpack.c.b16 %v1662, %v1630
    %v2399 = vpack.c.b16 %v1663, %v1631
    %v2400 = vpack.c.b16 %v1664, %v1632
    %v2401 = vpack.c.b16 %v1665, %v1633
    %v2402 = vpack.c.b16 %v1666, %v1634
    %v2403 = vpack.c.b16 %v1667, %v1635
    %v2404 = vpack.c.b16 %v1668, %v1636
    %v2405 = vpack.c.b16 %v1669, %v1637
    %v2406 = vpack.c.b16 %v1670, %v1638
    %v2407 = vpack.c.b16 %v1671, %v1639
    %v2408 = vpack.c.b16 %v1704, %v1672
    %v2409 = vpack.c.b16 %v1705, %v1673
    %v2410 = vpack.c.b16 %v1706, %v1674
    %v2411 = vpack.c.b16 %v1707, %v1675
    %v2412 = vpack.c.b16 %v1708, %v1676
    %v2413 = vpack.c.b16 %v1709, %v1677
    %v2414 = vpack.c.b16 %v1710, %v1678
    %v2415 = vpack.c.b16 %v1711, %v1679
    %v2416 = vpack.c.b16 %v1712, %v1680
    %v2417 = vpack.c.b16 %v1713, %v1681
    %v2418 = vpack.c.b16 %v1714, %v1682
    %v2419 = vpack.c.b16 %v1715, %v1683
    %v2420 = vpack.c.b16 %v1716, %v1684
    %v2421 = vpack.c.b16 %v1717, %v1685
    %v2422 = vpack.c.b16 %v1718, %v1686
    %v2423 = vpack.c.b16 %v1719, %v1687
    %v2424 = vpack.c.b16 %v1720, %v1688
    %v2425 = vpack.c.b16 %v1721, %v1689
    %v2426 = vpack.c.b16 %v1722, %v1690
    %v2427 = vpack.c.b16 %v1723, %v1691
    %v2428 = vpack.c.b16 %v1724, %v1692
    %v2429 = vpack.c.b16 %v1725, %v1693
    %v2430 = vpack.c.b16 %v1726, %v1694
    %v2431 = vpack.c.b16 %v1727, %v1695
    %v2432 = vpack.c.b16 %v1728, %v1696
    %v2433 = vpack.c.b16 %v1729, %v1697
    %v2434 = vpack.c.b16 %v1730, %v1698
    %v2435 = vpack.c.b16 %v1731, %v1699
    %v2436 = vpack.c.b16 %v1732, %v1700
    %v2437 = vpack.c.b16 %v1733, %v1701
    %v2438 = vpack.c.b16 %v1734, %v1702
    %v2439 = vpack.c.b16 %v1735, %v1703
    %v2440 = vpack.c.b16 %v1768, %v1736
    %v2441 = vpack.c.b16 %v1769, %v1737
    %v2442 = vpack.c.b16 %v1770, %v1738
    %v2443 = vpack.c.b16 %v1771, %v1739
    %v2444 = vpack.c.b16 %v1772, %v1740
    %v2445 = vpack.c.b16 %v1773, %v1741
    %v2446 = vpack.c.b16 %v1774, %v1742
    %v2447 = vpack.c.b16 %v1775, %v1743
    %v2448 = vpack.c.b16 %v1776, %v1744
    %v2449 = vpack.c.b16 %v1777, %v1745
    %v2450 = vpack.c.b16 %v1778, %v1746
    %v2451 = vpack.c.b16 %v1779, %v1747
    %v2452 = vpack.c.b16 %v1780, %v1748
    %v2453 = vpack.c.b16 %v1781, %v1749
    %v2454 = vpack.c.b16 %v1782, %v1750
    %v2455 = vpack.c.b16 %v1783, %v1751
    %v2456 = vpack.c.b16 %v1784, %v1752
    %v2457 = vpack.c.b16 %v1785, %v1753
    %v2458 = vpack.c.b16 %v1786, %v1754
    %v2459 = vpack.c.b16 %v1787, %v1755
    %v2460 = vpack.c.b16 %v1788, %v1756
    %v2461 = vpack.c.b16 %v1789, %v1757
    %v2462 = vpack.c.b16 %v1790, %v1758
    %v2463 = vpack.c.b16 %v1791, %v1759
    %v2464 = vpack.c.b16 %v1792, %v1760
    %v2465 = vpack.c.b16 %v1793, %v1761
    %v2466 = vpack.c.b16 %v1794, %v1762
    %v2467 = vpack.c.b16 %v1795, %v1763
    %v2468 = vpack.c.b16 %v1796, %v1764
    %v2469 = vpack.c.b16 %v1797, %v1765
    %v2470 = vpack.c.b16 %v1798, %v1766
    %v2471 = vpack.c.b16 %v1799, %v1767
    %v2472 = vpack.c.b16 %v1832, %v1800
    %v2473 = vpack.c.b16 %v1833, %v1801
    %v2474 = vpack.c.b16 %v1834, %v1802
    %v2475 = vpack.c.b16 %v1835, %v1803
    %v2476 = vpack.c.b16 %v1836, %v1804
    %v2477 = vpack.c.b16 %v1837, %v1805
    %v2478 = vpack.c.b16 %v1838, %v1806
    %v2479 = vpack.c.b16 %v1839, %v1807
    %v2480 = vpack.c.b16 %v1840, %v1808
    %v2481 = vpack.c.b16 %v1841, %v1809
    %v2482 = vpack.c.b16 %v1842, %v1810
    %v2483 = vpack.c.b16 %v1843, %v1811
    %v2484 = vpack.c.b16 %v1844, %v1812
    %v2485 = vpack.c.b16 %v1845, %v1813
    %v2486 = vpack.c.b16 %v1846, %v1814
    %v2487 = vpack.c.b16 %v1847, %v1815
    %v2488 = vpack.c.b16 %v1848, %v1816
    %v2489 = vpack.c.b16 %v1849, %v1817
    %v2490 = vpack.c.b16 %v1850, %v1818
    %v2491 = vpack.c.b16 %v1851, %v1819
    %v2492 = vpack.c.b16 %v1852, %v1820
    %v2493 = vpack.c.b16 %v1853, %v1821
    %v2494 = vpack.c.b16 %v1854, %v1822
    %v2495 = vpack.c.b16 %v1855, %v1823
    %v2496 = vpack.c.b16 %v1856, %v1824
    %v2497 = vpack.c.b16 %v1857, %v1825
    %v2498 = vpack.c.b16 %v1858, %v1826
    %v2499 = vpack.c.b16 %v1859, %v1827
    %v2500 = vpack.c.b16 %v1860, %v1828
    %v2501 = vpack.c.b16 %v1861, %v1829
    %v2502 = vpack.c.b16 %v1862, %v1830
    %v2503 = vpack.c.b16 %v1863, %v1831
    %v2504 = vpack.c.b16 %v1896, %v1864
    %v2505 = vpack.c.b16 %v1897, %v1865
    %v2506 = vpack.c.b16 %v1898, %v1866
    %v2507 = vpack.c.b16 %v1899, %v1867
    %v2508 = vpack.c.b16 %v1900, %v1868
    %v2509 = vpack.c.b16 %v1901, %v1869
    %v2510 = vpack.c.b16 %v1902, %v1870
    %v2511 = vpack.c.b16 %v1903, %v1871
    %v2512 = vpack.c.b16 %v1904, %v1872
    %v2513 = vpack.c.b16 %v1905, %v1873
    %v2514 = vpack.c.b16 %v1906, %v1874
    %v2515 = vpack.c.b16 %v1907, %v1875
    %v2516 = vpack.c.b16 %v1908, %v1876
    %v2517 = vpack.c.b16 %v1909, %v1877
    %v2518 = vpack.c.b16 %v1910, %v1878
    %v2519 = vpack.c.b16 %v1911, %v1879
    %v2520 = vpack.c.b16 %v1912, %v1880
    %v2521 = vpack.c.b16 %v1913, %v1881
    %v2522 = vpack.c.b16 %v1914, %v1882
    %v2523 = vpack.c.b16 %v1915, %v1883
    %v2524 = vpack.c.b16 %v1916, %v1884
    %v2525 = vpack.c.b16 %v1917, %v1885
    %v2526 = vpack.c.b16 %v1918, %v1886
    %v2527 = vpack.c.b16 %v1919, %v1887
    %v2528 = vpack.c.b16 %v1920, %v1888
    %v2529 = vpack.c.b16 %v1921, %v1889
    %v2530 = vpack.c.b16 %v1922, %v1890
    %v2531 = vpack.c.b16 %v1923, %v1891
    %v2532 = vpack.c.b16 %v1924, %v1892
    %v2533 = vpack.c.b16 %v1925, %v1893
    %v2534 = vpack.c.b16 %v1926, %v1894
    %v2535 = vpack.c.b16 %v1927, %v1895
    %v2536 = vpack.c.b16 %v1960, %v1928
    %v2537 = vpack.c.b16 %v1961, %v1929
    %v2538 = vpack.c.b16 %v1962, %v1930
    %v2539 = vpack.c.b16 %v1963, %v1931
    %v2540 = vpack.c.b16 %v1964, %v1932
    %v2541 = vpack.c.b16 %v1965, %v1933
    %v2542 = vpack.c.b16 %v1966, %v1934
    %v2543 = vpack.c.b16 %v1967, %v1935
    %v2544 = vpack.c.b16 %v1968, %v1936
    %v2545 = vpack.c.b16 %v1969, %v1937
    %v2546 = vpack.c.b16 %v1970, %v1938
    %v2547 = vpack.c.b16 %v1971, %v1939
    %v2548 = vpack.c.b16 %v1972, %v1940
    %v2549 = vpack.c.b16 %v1973, %v1941
    %v2550 = vpack.c.b16 %v1974, %v1942
    %v2551 = vpack.c.b16 %v1975, %v1943
    %v2552 = vpack.c.b16 %v1976, %v1944
    %v2553 = vpack.c.b16 %v1977, %v1945
    %v2554 = vpack.c.b16 %v1978, %v1946
    %v2555 = vpack.c.b16 %v1979, %v1947
    %v2556 = vpack.c.b16 %v1980, %v1948
    %v2557 = vpack.c.b16 %v1981, %v1949
    %v2558 = vpack.c.b16 %v1982, %v1950
    %v2559 = vpack.c.b16 %v1983, %v1951
    %v2560 = vpack.c.b16 %v1984, %v1952
    %v2561 = vpack.c.b16 %v1985, %v1953
    %v2562 = vpack.c.b16 %v1986, %v1954
    %v2563 = vpack.c.b16 %v1987, %v1955
    %v2564 = vpack.c.b16 %v1988, %v1956
    %v2565 = vpack.c.b16 %v1989, %v1957
    %v2566 = vpack.c.b16 %v1990, %v1958
    %v2567 = vpack.c.b16 %v1991, %v1959
    %v2568 = vpack.c.b16 %v2024, %v1992
    %v2569 = vpack.c.b16 %v2025, %v1993
    %v2570 = vpack.c.b16 %v2026, %v1994
    %v2571 = vpack.c.b16 %v2027, %v1995
    %v2572 = vpack.c.b16 %v2028, %v1996
    %v2573 = vpack.c.b16 %v2029, %v1997
    %v2574 = vpack.c.b16 %v2030, %v1998
    %v2575 = vpack.c.b16 %v2031, %v1999
    %v2576 = vpack.c.b16 %v2032, %v2000
    %v2577 = vpack.c.b16 %v2033, %v2001
    %v2578 = vpack.c.b16 %v2034, %v2002
    %v2579 = vpack.c.b16 %v2035, %v2003
    %v2580 = vpack.c.b16 %v2036, %v2004
    %v2581 = vpack.c.b16 %v2037, %v2005
    %v2582 = vpack.c.b16 %v2038, %v2006
    %v2583 = vpack.c.b16 %v2039, %v2007
    %v2584 = vpack.c.b16 %v2040, %v2008
    %v2585 = vpack.c.b16 %v2041, %v2009
    %v2586 = vpack.c.b16 %v2042, %v2010
    %v2587 = vpack.c.b16 %v2043, %v2011
    %v2588 = vpack.c.b16 %v2044, %v2012
    %v2589 = vpack.c.b16 %v2045, %v2013
    %v2590 = vpack.c.b16 %v2046, %v2014
    %v2591 = vpack.c.b16 %v2047, %v2015
    %v2592 = vpack.c.b16 %v2048, %v2016
    %v2593 = vpack.c.b16 %v2049, %v2017
    %v2594 = vpack.c.b16 %v2050, %v2018
    %v2595 = vpack.c.b16 %v2051, %v2019
    %v2596 = vpack.c.b16 %v2052, %v2020
    %v2597 = vpack.c.b16 %v2053, %v2021
    %v2598 = vpack.c.b16 %v2054, %v2022
    %v2599 = vpack.c.b16 %v2055, %v2023
    %v2600 = vpack.c.b16 %v2088, %v2056
    %v2601 = vpack.c.b16 %v2089, %v2057
    %v2602 = vpack.c.b16 %v2090, %v2058
    %v2603 = vpack.c.b16 %v2091, %v2059
    %v2604 = vpack.c.b16 %v2092, %v2060
    %v2605 = vpack.c.b16 %v2093, %v2061
    %v2606 = vpack.c.b16 %v2094, %v2062
    %v2607 = vpack.c.b16 %v2095, %v2063
    %v2608 = vpack.c.b16 %v2096, %v2064
    %v2609 = vpack.c.b16 %v2097, %v2065
    %v2610 = vpack.c.b16 %v2098, %v2066
    %v2611 = vpack.c.b16 %v2099, %v2067
    %v2612 = vpack.c.b16 %v2100, %v2068
    %v2613 = vpack.c.b16 %v2101, %v2069
    %v2614 = vpack.c.b16 %v2102, %v2070
    %v2615 = vpack.c.b16 %v2103, %v2071
    %v2616 = vpack.c.b16 %v2104, %v2072
    %v2617 = vpack.c.b16 %v2105, %v2073
    %v2618 = vpack.c.b16 %v2106, %v2074
    %v2619 = vpack.c.b16 %v2107, %v2075
    %v2620 = vpack.c.b16 %v2108, %v2076
    %v2621 = vpack.c.b16 %v2109, %v2077
    %v2622 = vpack.c.b16 %v2110, %v2078
    %v2623 = vpack.c.b16 %v2111, %v2079
    %v2624 = vpack.c.b16 %v2112, %v2080
    %v2625 = vpack.c.b16 %v2113, %v2081
    %v2626 = vpack.c.b16 %v2114, %v2082
    %v2627 = vpack.c.b16 %v2115, %v2083
    %v2628 = vpack.c.b16 %v2116, %v2084
    %v2629 = vpack.c.b16 %v2117, %v2085
    %v2630 = vpack.c.b16 %v2118, %v2086
    %v2631 = vpack.c.b16 %v2119, %v2087
    %3144 = vmatprep.subr.bf16.mxu0 %v2121
    %3145 = vmatpush1.bf16.msra.mxu0 %v2120
    %3146 = vmatprep.subr.bf16.mxu0 %v2153
    %3147 = vmatpush1.bf16.msra.mxu0 %v2152
    %3148 = vmatprep.subr.bf16.mxu0 %v2185
    %3149 = vmatpush1.bf16.msra.mxu0 %v2184
    %3150 = vmatprep.subr.bf16.mxu0 %v2217
    %3151 = vmatpush1.bf16.msra.mxu0 %v2216
    %3152 = vmatprep.subr.bf16.mxu0 %v2249
    %3153 = vmatpush1.bf16.msra.mxu0 %v2248
    %3154 = vmatprep.subr.bf16.mxu0 %v2281
    %3155 = vmatpush1.bf16.msra.mxu0 %v2280
    %3156 = vmatprep.subr.bf16.mxu0 %v2313
    %3157 = vmatpush1.bf16.msra.mxu0 %v2312
    %3158 = vmatprep.subr.bf16.mxu0 %v2345
    %3159 = vmatpush1.bf16.msra.mxu0 %v2344
    %3160 = vmatprep.subr.bf16.mxu0 %v2377
    %3161 = vmatpush1.bf16.msra.mxu0 %v2376
    %3162 = vmatprep.subr.bf16.mxu0 %v2409
    %3163 = vmatpush1.bf16.msra.mxu0 %v2408
    %3164 = vmatprep.subr.bf16.mxu0 %v2441
    %3165 = vmatpush1.bf16.msra.mxu0 %v2440
    %3166 = vmatprep.subr.bf16.mxu0 %v2473
    %3167 = vmatpush1.bf16.msra.mxu0 %v2472
    %3168 = vmatprep.subr.bf16.mxu0 %v2505
    %3169 = vmatpush1.bf16.msra.mxu0 %v2504
    %3170 = vmatprep.subr.bf16.mxu0 %v2537
    %3171 = vmatpush1.bf16.msra.mxu0 %v2536
    %3172 = vmatprep.subr.bf16.mxu0 %v2569
    %3173 = vmatpush1.bf16.msra.mxu0 %v2568
    %3174 = vmatprep.subr.bf16.mxu0 %v2601
    %3175 = vmatpush1.bf16.msra.mxu0 %v2600
    %3176 = vmatprep.mubr.bf16.mxu0 %v71
    %3177 = vmatmul.mubr.bf16.gmra.mrb[0].mxu0 %v70
    %v3178 = vpop.f32.mrb[0].mxu0
    %v3179 = vadd.f32 0.0, %v3178
    %v3180 = vpop.f32.mrb[0].mxu0
    %v3181 = vadd.f32 0.0, %v3180
    %v3182 = vpop.f32.mrb[0].mxu0
    %v3183 = vpop.f32.mrb[0].mxu0
    %3184 = vdwg.mxu0
    %3185 = vmatprep.subr.bf16.mxu0 %v2123
    %3186 = vmatpush1.bf16.msra.mxu0 %v2122
    %3187 = vmatprep.subr.bf16.mxu0 %v2155
    %3188 = vmatpush1.bf16.msra.mxu0 %v2154
    %3189 = vmatprep.subr.bf16.mxu0 %v2187
    %3190 = vmatpush1.bf16.msra.mxu0 %v2186
    %3191 = vmatprep.subr.bf16.mxu0 %v2219
    %3192 = vmatpush1.bf16.msra.mxu0 %v2218
    %3193 = vmatprep.subr.bf16.mxu0 %v2251
    %3194 = vmatpush1.bf16.msra.mxu0 %v2250
    %3195 = vmatprep.subr.bf16.mxu0 %v2283
    %3196 = vmatpush1.bf16.msra.mxu0 %v2282
    %3197 = vmatprep.subr.bf16.mxu0 %v2315
    %3198 = vmatpush1.bf16.msra.mxu0 %v2314
    %3199 = vmatprep.subr.bf16.mxu0 %v2347
    %3200 = vmatpush1.bf16.msra.mxu0 %v2346
    %3201 = vmatprep.subr.bf16.mxu0 %v2379
    %3202 = vmatpush1.bf16.msra.mxu0 %v2378
    %3203 = vmatprep.subr.bf16.mxu0 %v2411
    %3204 = vmatpush1.bf16.msra.mxu0 %v2410
    %3205 = vmatprep.subr.bf16.mxu0 %v2443
    %3206 = vmatpush1.bf16.msra.mxu0 %v2442
    %3207 = vmatprep.subr.bf16.mxu0 %v2475
    %3208 = vmatpush1.bf16.msra.mxu0 %v2474
    %3209 = vmatprep.subr.bf16.mxu0 %v2507
    %3210 = vmatpush1.bf16.msra.mxu0 %v2506
    %3211 = vmatprep.subr.bf16.mxu0 %v2539
    %3212 = vmatpush1.bf16.msra.mxu0 %v2538
    %3213 = vmatprep.subr.bf16.mxu0 %v2571
    %3214 = vmatpush1.bf16.msra.mxu0 %v2570
    %3215 = vmatprep.subr.bf16.mxu0 %v2603
    %3216 = vmatpush1.bf16.msra.mxu0 %v2602
    %3217 = vmatprep.mubr.bf16.mxu0 %v71
    %3218 = vmatmul.mubr.bf16.gmra.mrb[0].mxu0 %v70
    %v3219 = vpop.f32.mrb[0].mxu0
    %v3220 = vadd.f32 0.0, %v3219
    %v3221 = vpop.f32.mrb[0].mxu0
    %v3222 = vadd.f32 0.0, %v3221
    %v3223 = vpop.f32.mrb[0].mxu0
    %v3224 = vpop.f32.mrb[0].mxu0
    %3225 = vdwg.mxu0
    %3226 = vmatprep.subr.bf16.mxu0 %v2125
    %3227 = vmatpush1.bf16.msra.mxu0 %v2124
    %3228 = vmatprep.subr.bf16.mxu0 %v2157
    %3229 = vmatpush1.bf16.msra.mxu0 %v2156
    %3230 = vmatprep.subr.bf16.mxu0 %v2189
    %3231 = vmatpush1.bf16.msra.mxu0 %v2188
    %3232 = vmatprep.subr.bf16.mxu0 %v2221
    %3233 = vmatpush1.bf16.msra.mxu0 %v2220
    %3234 = vmatprep.subr.bf16.mxu0 %v2253
    %3235 = vmatpush1.bf16.msra.mxu0 %v2252
    %3236 = vmatprep.subr.bf16.mxu0 %v2285
    %3237 = vmatpush1.bf16.msra.mxu0 %v2284
    %3238 = vmatprep.subr.bf16.mxu0 %v2317
    %3239 = vmatpush1.bf16.msra.mxu0 %v2316
    %3240 = vmatprep.subr.bf16.mxu0 %v2349
    %3241 = vmatpush1.bf16.msra.mxu0 %v2348
    %3242 = vmatprep.subr.bf16.mxu0 %v2381
    %3243 = vmatpush1.bf16.msra.mxu0 %v2380
    %3244 = vmatprep.subr.bf16.mxu0 %v2413
    %3245 = vmatpush1.bf16.msra.mxu0 %v2412
    %3246 = vmatprep.subr.bf16.mxu0 %v2445
    %3247 = vmatpush1.bf16.msra.mxu0 %v2444
    %3248 = vmatprep.subr.bf16.mxu0 %v2477
    %3249 = vmatpush1.bf16.msra.mxu0 %v2476
    %3250 = vmatprep.subr.bf16.mxu0 %v2509
    %3251 = vmatpush1.bf16.msra.mxu0 %v2508
    %3252 = vmatprep.subr.bf16.mxu0 %v2541
    %3253 = vmatpush1.bf16.msra.mxu0 %v2540
    %3254 = vmatprep.subr.bf16.mxu0 %v2573
    %3255 = vmatpush1.bf16.msra.mxu0 %v2572
    %3256 = vmatprep.subr.bf16.mxu0 %v2605
    %3257 = vmatpush1.bf16.msra.mxu0 %v2604
    %3258 = vmatprep.mubr.bf16.mxu0 %v71
    %3259 = vmatmul.mubr.bf16.gmra.mrb[0].mxu0 %v70
    %v3260 = vpop.f32.mrb[0].mxu0
    %v3261 = vadd.f32 0.0, %v3260
    %v3262 = vpop.f32.mrb[0].mxu0
    %v3263 = vadd.f32 0.0, %v3262
    %v3264 = vpop.f32.mrb[0].mxu0
    %v3265 = vpop.f32.mrb[0].mxu0
    %3266 = vdwg.mxu0
    %3267 = vmatprep.subr.bf16.mxu0 %v2127
    %3268 = vmatpush1.bf16.msra.mxu0 %v2126
    %3269 = vmatprep.subr.bf16.mxu0 %v2159
    %3270 = vmatpush1.bf16.msra.mxu0 %v2158
    %3271 = vmatprep.subr.bf16.mxu0 %v2191
    %3272 = vmatpush1.bf16.msra.mxu0 %v2190
    %3273 = vmatprep.subr.bf16.mxu0 %v2223
    %3274 = vmatpush1.bf16.msra.mxu0 %v2222
    %3275 = vmatprep.subr.bf16.mxu0 %v2255
    %3276 = vmatpush1.bf16.msra.mxu0 %v2254
    %3277 = vmatprep.subr.bf16.mxu0 %v2287
    %3278 = vmatpush1.bf16.msra.mxu0 %v2286
    %3279 = vmatprep.subr.bf16.mxu0 %v2319
    %3280 = vmatpush1.bf16.msra.mxu0 %v2318
    %3281 = vmatprep.subr.bf16.mxu0 %v2351
    %3282 = vmatpush1.bf16.msra.mxu0 %v2350
    %3283 = vmatprep.subr.bf16.mxu0 %v2383
    %3284 = vmatpush1.bf16.msra.mxu0 %v2382
    %3285 = vmatprep.subr.bf16.mxu0 %v2415
    %3286 = vmatpush1.bf16.msra.mxu0 %v2414
    %3287 = vmatprep.subr.bf16.mxu0 %v2447
    %3288 = vmatpush1.bf16.msra.mxu0 %v2446
    %3289 = vmatprep.subr.bf16.mxu0 %v2479
    %3290 = vmatpush1.bf16.msra.mxu0 %v2478
    %3291 = vmatprep.subr.bf16.mxu0 %v2511
    %3292 = vmatpush1.bf16.msra.mxu0 %v2510
    %3293 = vmatprep.subr.bf16.mxu0 %v2543
    %3294 = vmatpush1.bf16.msra.mxu0 %v2542
    %3295 = vmatprep.subr.bf16.mxu0 %v2575
    %3296 = vmatpush1.bf16.msra.mxu0 %v2574
    %3297 = vmatprep.subr.bf16.mxu0 %v2607
    %3298 = vmatpush1.bf16.msra.mxu0 %v2606
    %3299 = vmatprep.mubr.bf16.mxu0 %v71
    %3300 = vmatmul.mubr.bf16.gmra.mrb[0].mxu0 %v70
    %v3301 = vpop.f32.mrb[0].mxu0
    %v3302 = vadd.f32 0.0, %v3301
    %v3303 = vpop.f32.mrb[0].mxu0
    %v3304 = vadd.f32 0.0, %v3303
    %v3305 = vpop.f32.mrb[0].mxu0
    %v3306 = vpop.f32.mrb[0].mxu0
    %3307 = vdwg.mxu0
    %3308 = vmatprep.subr.bf16.mxu0 %v2129
    %3309 = vmatpush1.bf16.msra.mxu0 %v2128
    %3310 = vmatprep.subr.bf16.mxu0 %v2161
    %3311 = vmatpush1.bf16.msra.mxu0 %v2160
    %3312 = vmatprep.subr.bf16.mxu0 %v2193
    %3313 = vmatpush1.bf16.msra.mxu0 %v2192
    %3314 = vmatprep.subr.bf16.mxu0 %v2225
    %3315 = vmatpush1.bf16.msra.mxu0 %v2224
    %3316 = vmatprep.subr.bf16.mxu0 %v2257
    %3317 = vmatpush1.bf16.msra.mxu0 %v2256
    %3318 = vmatprep.subr.bf16.mxu0 %v2289
    %3319 = vmatpush1.bf16.msra.mxu0 %v2288
    %3320 = vmatprep.subr.bf16.mxu0 %v2321
    %3321 = vmatpush1.bf16.msra.mxu0 %v2320
    %3322 = vmatprep.subr.bf16.mxu0 %v2353
    %3323 = vmatpush1.bf16.msra.mxu0 %v2352
    %3324 = vmatprep.subr.bf16.mxu0 %v2385
    %3325 = vmatpush1.bf16.msra.mxu0 %v2384
    %3326 = vmatprep.subr.bf16.mxu0 %v2417
    %3327 = vmatpush1.bf16.msra.mxu0 %v2416
    %3328 = vmatprep.subr.bf16.mxu0 %v2449
    %3329 = vmatpush1.bf16.msra.mxu0 %v2448
    %3330 = vmatprep.subr.bf16.mxu0 %v2481
    %3331 = vmatpush1.bf16.msra.mxu0 %v2480
    %3332 = vmatprep.subr.bf16.mxu0 %v2513
    %3333 = vmatpush1.bf16.msra.mxu0 %v2512
    %3334 = vmatprep.subr.bf16.mxu0 %v2545
    %3335 = vmatpush1.bf16.msra.mxu0 %v2544
    %3336 = vmatprep.subr.bf16.mxu0 %v2577
    %3337 = vmatpush1.bf16.msra.mxu0 %v2576
    %3338 = vmatprep.subr.bf16.mxu0 %v2609
    %3339 = vmatpush1.bf16.msra.mxu0 %v2608
    %3340 = vmatprep.mubr.bf16.mxu0 %v71
    %3341 = vmatmul.mubr.bf16.gmra.mrb[0].mxu0 %v70
    %v3342 = vpop.f32.mrb[0].mxu0
    %v3343 = vadd.f32 0.0, %v3342
    %v3344 = vpop.f32.mrb[0].mxu0
    %v3345 = vadd.f32 0.0, %v3344
    %v3346 = vpop.f32.mrb[0].mxu0
    %v3347 = vpop.f32.mrb[0].mxu0
    %3348 = vdwg.mxu0
    %3349 = vmatprep.subr.bf16.mxu0 %v2131
    %3350 = vmatpush1.bf16.msra.mxu0 %v2130
    %3351 = vmatprep.subr.bf16.mxu0 %v2163
    %3352 = vmatpush1.bf16.msra.mxu0 %v2162
    %3353 = vmatprep.subr.bf16.mxu0 %v2195
    %3354 = vmatpush1.bf16.msra.mxu0 %v2194
    %3355 = vmatprep.subr.bf16.mxu0 %v2227
    %3356 = vmatpush1.bf16.msra.mxu0 %v2226
    %3357 = vmatprep.subr.bf16.mxu0 %v2259
    %3358 = vmatpush1.bf16.msra.mxu0 %v2258
    %3359 = vmatprep.subr.bf16.mxu0 %v2291
    %3360 = vmatpush1.bf16.msra.mxu0 %v2290
    %3361 = vmatprep.subr.bf16.mxu0 %v2323
    %3362 = vmatpush1.bf16.msra.mxu0 %v2322
    %3363 = vmatprep.subr.bf16.mxu0 %v2355
    %3364 = vmatpush1.bf16.msra.mxu0 %v2354
    %3365 = vmatprep.subr.bf16.mxu0 %v2387
    %3366 = vmatpush1.bf16.msra.mxu0 %v2386
    %3367 = vmatprep.subr.bf16.mxu0 %v2419
    %3368 = vmatpush1.bf16.msra.mxu0 %v2418
    %3369 = vmatprep.subr.bf16.mxu0 %v2451
    %3370 = vmatpush1.bf16.msra.mxu0 %v2450
    %3371 = vmatprep.subr.bf16.mxu0 %v2483
    %3372 = vmatpush1.bf16.msra.mxu0 %v2482
    %3373 = vmatprep.subr.bf16.mxu0 %v2515
    %3374 = vmatpush1.bf16.msra.mxu0 %v2514
    %3375 = vmatprep.subr.bf16.mxu0 %v2547
    %3376 = vmatpush1.bf16.msra.mxu0 %v2546
    %3377 = vmatprep.subr.bf16.mxu0 %v2579
    %3378 = vmatpush1.bf16.msra.mxu0 %v2578
    %3379 = vmatprep.subr.bf16.mxu0 %v2611
    %3380 = vmatpush1.bf16.msra.mxu0 %v2610
    %3381 = vmatprep.mubr.bf16.mxu0 %v71
    %3382 = vmatmul.mubr.bf16.gmra.mrb[0].mxu0 %v70
    %v3383 = vpop.f32.mrb[0].mxu0
    %v3384 = vadd.f32 0.0, %v3383
    %v3385 = vpop.f32.mrb[0].mxu0
    %v3386 = vadd.f32 0.0, %v3385
    %v3387 = vpop.f32.mrb[0].mxu0
    %v3388 = vpop.f32.mrb[0].mxu0
    %3389 = vdwg.mxu0
    %3390 = vmatprep.subr.bf16.mxu0 %v2133
    %3391 = vmatpush1.bf16.msra.mxu0 %v2132
    %3392 = vmatprep.subr.bf16.mxu0 %v2165
    %3393 = vmatpush1.bf16.msra.mxu0 %v2164
    %3394 = vmatprep.subr.bf16.mxu0 %v2197
    %3395 = vmatpush1.bf16.msra.mxu0 %v2196
    %3396 = vmatprep.subr.bf16.mxu0 %v2229
    %3397 = vmatpush1.bf16.msra.mxu0 %v2228
    %3398 = vmatprep.subr.bf16.mxu0 %v2261
    %3399 = vmatpush1.bf16.msra.mxu0 %v2260
    %3400 = vmatprep.subr.bf16.mxu0 %v2293
    %3401 = vmatpush1.bf16.msra.mxu0 %v2292
    %3402 = vmatprep.subr.bf16.mxu0 %v2325
    %3403 = vmatpush1.bf16.msra.mxu0 %v2324
    %3404 = vmatprep.subr.bf16.mxu0 %v2357
    %3405 = vmatpush1.bf16.msra.mxu0 %v2356
    %3406 = vmatprep.subr.bf16.mxu0 %v2389
    %3407 = vmatpush1.bf16.msra.mxu0 %v2388
    %3408 = vmatprep.subr.bf16.mxu0 %v2421
    %3409 = vmatpush1.bf16.msra.mxu0 %v2420
    %3410 = vmatprep.subr.bf16.mxu0 %v2453
    %3411 = vmatpush1.bf16.msra.mxu0 %v2452
    %3412 = vmatprep.subr.bf16.mxu0 %v2485
    %3413 = vmatpush1.bf16.msra.mxu0 %v2484
    %3414 = vmatprep.subr.bf16.mxu0 %v2517
    %3415 = vmatpush1.bf16.msra.mxu0 %v2516
    %3416 = vmatprep.subr.bf16.mxu0 %v2549
    %3417 = vmatpush1.bf16.msra.mxu0 %v2548
    %3418 = vmatprep.subr.bf16.mxu0 %v2581
    %3419 = vmatpush1.bf16.msra.mxu0 %v2580
    %3420 = vmatprep.subr.bf16.mxu0 %v2613
    %3421 = vmatpush1.bf16.msra.mxu0 %v2612
    %3422 = vmatprep.mubr.bf16.mxu0 %v71
    %3423 = vmatmul.mubr.bf16.gmra.mrb[0].mxu0 %v70
    %v3424 = vpop.f32.mrb[0].mxu0
    %v3425 = vadd.f32 0.0, %v3424
    %v3426 = vpop.f32.mrb[0].mxu0
    %v3427 = vadd.f32 0.0, %v3426
    %v3428 = vpop.f32.mrb[0].mxu0
    %v3429 = vpop.f32.mrb[0].mxu0
    %3430 = vdwg.mxu0
    %3431 = vmatprep.subr.bf16.mxu0 %v2135
    %3432 = vmatpush1.bf16.msra.mxu0 %v2134
    %3433 = vmatprep.subr.bf16.mxu0 %v2167
    %3434 = vmatpush1.bf16.msra.mxu0 %v2166
    %3435 = vmatprep.subr.bf16.mxu0 %v2199
    %3436 = vmatpush1.bf16.msra.mxu0 %v2198
    %3437 = vmatprep.subr.bf16.mxu0 %v2231
    %3438 = vmatpush1.bf16.msra.mxu0 %v2230
    %3439 = vmatprep.subr.bf16.mxu0 %v2263
    %3440 = vmatpush1.bf16.msra.mxu0 %v2262
    %3441 = vmatprep.subr.bf16.mxu0 %v2295
    %3442 = vmatpush1.bf16.msra.mxu0 %v2294
    %3443 = vmatprep.subr.bf16.mxu0 %v2327
    %3444 = vmatpush1.bf16.msra.mxu0 %v2326
    %3445 = vmatprep.subr.bf16.mxu0 %v2359
    %3446 = vmatpush1.bf16.msra.mxu0 %v2358
    %3447 = vmatprep.subr.bf16.mxu0 %v2391
    %3448 = vmatpush1.bf16.msra.mxu0 %v2390
    %3449 = vmatprep.subr.bf16.mxu0 %v2423
    %3450 = vmatpush1.bf16.msra.mxu0 %v2422
    %3451 = vmatprep.subr.bf16.mxu0 %v2455
    %3452 = vmatpush1.bf16.msra.mxu0 %v2454
    %3453 = vmatprep.subr.bf16.mxu0 %v2487
    %3454 = vmatpush1.bf16.msra.mxu0 %v2486
    %3455 = vmatprep.subr.bf16.mxu0 %v2519
    %3456 = vmatpush1.bf16.msra.mxu0 %v2518
    %3457 = vmatprep.subr.bf16.mxu0 %v2551
    %3458 = vmatpush1.bf16.msra.mxu0 %v2550
    %3459 = vmatprep.subr.bf16.mxu0 %v2583
    %3460 = vmatpush1.bf16.msra.mxu0 %v2582
    %3461 = vmatprep.subr.bf16.mxu0 %v2615
    %3462 = vmatpush1.bf16.msra.mxu0 %v2614
    %3463 = vmatprep.mubr.bf16.mxu0 %v71
    %3464 = vmatmul.mubr.bf16.gmra.mrb[0].mxu0 %v70
    %v3465 = vpop.f32.mrb[0].mxu0
    %v3466 = vadd.f32 0.0, %v3465
    %v3467 = vpop.f32.mrb[0].mxu0
    %v3468 = vadd.f32 0.0, %v3467
    %v3469 = vpop.f32.mrb[0].mxu0
    %v3470 = vpop.f32.mrb[0].mxu0
    %3471 = vdwg.mxu0
    %3472 = vmatprep.subr.bf16.mxu0 %v2137
    %3473 = vmatpush1.bf16.msra.mxu0 %v2136
    %3474 = vmatprep.subr.bf16.mxu0 %v2169
    %3475 = vmatpush1.bf16.msra.mxu0 %v2168
    %3476 = vmatprep.subr.bf16.mxu0 %v2201
    %3477 = vmatpush1.bf16.msra.mxu0 %v2200
    %3478 = vmatprep.subr.bf16.mxu0 %v2233
    %3479 = vmatpush1.bf16.msra.mxu0 %v2232
    %3480 = vmatprep.subr.bf16.mxu0 %v2265
    %3481 = vmatpush1.bf16.msra.mxu0 %v2264
    %3482 = vmatprep.subr.bf16.mxu0 %v2297
    %3483 = vmatpush1.bf16.msra.mxu0 %v2296
    %3484 = vmatprep.subr.bf16.mxu0 %v2329
    %3485 = vmatpush1.bf16.msra.mxu0 %v2328
    %3486 = vmatprep.subr.bf16.mxu0 %v2361
    %3487 = vmatpush1.bf16.msra.mxu0 %v2360
    %3488 = vmatprep.subr.bf16.mxu0 %v2393
    %3489 = vmatpush1.bf16.msra.mxu0 %v2392
    %3490 = vmatprep.subr.bf16.mxu0 %v2425
    %3491 = vmatpush1.bf16.msra.mxu0 %v2424
    %3492 = vmatprep.subr.bf16.mxu0 %v2457
    %3493 = vmatpush1.bf16.msra.mxu0 %v2456
    %3494 = vmatprep.subr.bf16.mxu0 %v2489
    %3495 = vmatpush1.bf16.msra.mxu0 %v2488
    %3496 = vmatprep.subr.bf16.mxu0 %v2521
    %3497 = vmatpush1.bf16.msra.mxu0 %v2520
    %3498 = vmatprep.subr.bf16.mxu0 %v2553
    %3499 = vmatpush1.bf16.msra.mxu0 %v2552
    %3500 = vmatprep.subr.bf16.mxu0 %v2585
    %3501 = vmatpush1.bf16.msra.mxu0 %v2584
    %3502 = vmatprep.subr.bf16.mxu0 %v2617
    %3503 = vmatpush1.bf16.msra.mxu0 %v2616
    %3504 = vmatprep.mubr.bf16.mxu0 %v71
    %3505 = vmatmul.mubr.bf16.gmra.mrb[0].mxu0 %v70
    %v3506 = vpop.f32.mrb[0].mxu0
    %v3507 = vadd.f32 0.0, %v3506
    %v3508 = vpop.f32.mrb[0].mxu0
    %v3509 = vadd.f32 0.0, %v3508
    %v3510 = vpop.f32.mrb[0].mxu0
    %v3511 = vpop.f32.mrb[0].mxu0
    %3512 = vdwg.mxu0
    %3513 = vmatprep.subr.bf16.mxu0 %v2139
    %3514 = vmatpush1.bf16.msra.mxu0 %v2138
    %3515 = vmatprep.subr.bf16.mxu0 %v2171
    %3516 = vmatpush1.bf16.msra.mxu0 %v2170
    %3517 = vmatprep.subr.bf16.mxu0 %v2203
    %3518 = vmatpush1.bf16.msra.mxu0 %v2202
    %3519 = vmatprep.subr.bf16.mxu0 %v2235
    %3520 = vmatpush1.bf16.msra.mxu0 %v2234
    %3521 = vmatprep.subr.bf16.mxu0 %v2267
    %3522 = vmatpush1.bf16.msra.mxu0 %v2266
    %3523 = vmatprep.subr.bf16.mxu0 %v2299
    %3524 = vmatpush1.bf16.msra.mxu0 %v2298
    %3525 = vmatprep.subr.bf16.mxu0 %v2331
    %3526 = vmatpush1.bf16.msra.mxu0 %v2330
    %3527 = vmatprep.subr.bf16.mxu0 %v2363
    %3528 = vmatpush1.bf16.msra.mxu0 %v2362
    %3529 = vmatprep.subr.bf16.mxu0 %v2395
    %3530 = vmatpush1.bf16.msra.mxu0 %v2394
    %3531 = vmatprep.subr.bf16.mxu0 %v2427
    %3532 = vmatpush1.bf16.msra.mxu0 %v2426
    %3533 = vmatprep.subr.bf16.mxu0 %v2459
    %3534 = vmatpush1.bf16.msra.mxu0 %v2458
    %3535 = vmatprep.subr.bf16.mxu0 %v2491
    %3536 = vmatpush1.bf16.msra.mxu0 %v2490
    %3537 = vmatprep.subr.bf16.mxu0 %v2523
    %3538 = vmatpush1.bf16.msra.mxu0 %v2522
    %3539 = vmatprep.subr.bf16.mxu0 %v2555
    %3540 = vmatpush1.bf16.msra.mxu0 %v2554
    %3541 = vmatprep.subr.bf16.mxu0 %v2587
    %3542 = vmatpush1.bf16.msra.mxu0 %v2586
    %3543 = vmatprep.subr.bf16.mxu0 %v2619
    %3544 = vmatpush1.bf16.msra.mxu0 %v2618
    %3545 = vmatprep.mubr.bf16.mxu0 %v71
    %3546 = vmatmul.mubr.bf16.gmra.mrb[0].mxu0 %v70
    %v3547 = vpop.f32.mrb[0].mxu0
    %v3548 = vadd.f32 0.0, %v3547
    %v3549 = vpop.f32.mrb[0].mxu0
    %v3550 = vadd.f32 0.0, %v3549
    %v3551 = vpop.f32.mrb[0].mxu0
    %v3552 = vpop.f32.mrb[0].mxu0
    %3553 = vdwg.mxu0
    %3554 = vmatprep.subr.bf16.mxu0 %v2141
    %3555 = vmatpush1.bf16.msra.mxu0 %v2140
    %3556 = vmatprep.subr.bf16.mxu0 %v2173
    %3557 = vmatpush1.bf16.msra.mxu0 %v2172
    %3558 = vmatprep.subr.bf16.mxu0 %v2205
    %3559 = vmatpush1.bf16.msra.mxu0 %v2204
    %3560 = vmatprep.subr.bf16.mxu0 %v2237
    %3561 = vmatpush1.bf16.msra.mxu0 %v2236
    %3562 = vmatprep.subr.bf16.mxu0 %v2269
    %3563 = vmatpush1.bf16.msra.mxu0 %v2268
    %3564 = vmatprep.subr.bf16.mxu0 %v2301
    %3565 = vmatpush1.bf16.msra.mxu0 %v2300
    %3566 = vmatprep.subr.bf16.mxu0 %v2333
    %3567 = vmatpush1.bf16.msra.mxu0 %v2332
    %3568 = vmatprep.subr.bf16.mxu0 %v2365
    %3569 = vmatpush1.bf16.msra.mxu0 %v2364
    %3570 = vmatprep.subr.bf16.mxu0 %v2397
    %3571 = vmatpush1.bf16.msra.mxu0 %v2396
    %3572 = vmatprep.subr.bf16.mxu0 %v2429
    %3573 = vmatpush1.bf16.msra.mxu0 %v2428
    %3574 = vmatprep.subr.bf16.mxu0 %v2461
    %3575 = vmatpush1.bf16.msra.mxu0 %v2460
    %3576 = vmatprep.subr.bf16.mxu0 %v2493
    %3577 = vmatpush1.bf16.msra.mxu0 %v2492
    %3578 = vmatprep.subr.bf16.mxu0 %v2525
    %3579 = vmatpush1.bf16.msra.mxu0 %v2524
    %3580 = vmatprep.subr.bf16.mxu0 %v2557
    %3581 = vmatpush1.bf16.msra.mxu0 %v2556
    %3582 = vmatprep.subr.bf16.mxu0 %v2589
    %3583 = vmatpush1.bf16.msra.mxu0 %v2588
    %3584 = vmatprep.subr.bf16.mxu0 %v2621
    %3585 = vmatpush1.bf16.msra.mxu0 %v2620
    %3586 = vmatprep.mubr.bf16.mxu0 %v71
    %3587 = vmatmul.mubr.bf16.gmra.mrb[0].mxu0 %v70
    %v3588 = vpop.f32.mrb[0].mxu0
    %v3589 = vadd.f32 0.0, %v3588
    %v3590 = vpop.f32.mrb[0].mxu0
    %v3591 = vadd.f32 0.0, %v3590
    %v3592 = vpop.f32.mrb[0].mxu0
    %v3593 = vpop.f32.mrb[0].mxu0
    %3594 = vdwg.mxu0
    %3595 = vmatprep.subr.bf16.mxu0 %v2143
    %3596 = vmatpush1.bf16.msra.mxu0 %v2142
    %3597 = vmatprep.subr.bf16.mxu0 %v2175
    %3598 = vmatpush1.bf16.msra.mxu0 %v2174
    %3599 = vmatprep.subr.bf16.mxu0 %v2207
    %3600 = vmatpush1.bf16.msra.mxu0 %v2206
    %3601 = vmatprep.subr.bf16.mxu0 %v2239
    %3602 = vmatpush1.bf16.msra.mxu0 %v2238
    %3603 = vmatprep.subr.bf16.mxu0 %v2271
    %3604 = vmatpush1.bf16.msra.mxu0 %v2270
    %3605 = vmatprep.subr.bf16.mxu0 %v2303
    %3606 = vmatpush1.bf16.msra.mxu0 %v2302
    %3607 = vmatprep.subr.bf16.mxu0 %v2335
    %3608 = vmatpush1.bf16.msra.mxu0 %v2334
    %3609 = vmatprep.subr.bf16.mxu0 %v2367
    %3610 = vmatpush1.bf16.msra.mxu0 %v2366
    %3611 = vmatprep.subr.bf16.mxu0 %v2399
    %3612 = vmatpush1.bf16.msra.mxu0 %v2398
    %3613 = vmatprep.subr.bf16.mxu0 %v2431
    %3614 = vmatpush1.bf16.msra.mxu0 %v2430
    %3615 = vmatprep.subr.bf16.mxu0 %v2463
    %3616 = vmatpush1.bf16.msra.mxu0 %v2462
    %3617 = vmatprep.subr.bf16.mxu0 %v2495
    %3618 = vmatpush1.bf16.msra.mxu0 %v2494
    %3619 = vmatprep.subr.bf16.mxu0 %v2527
    %3620 = vmatpush1.bf16.msra.mxu0 %v2526
    %3621 = vmatprep.subr.bf16.mxu0 %v2559
    %3622 = vmatpush1.bf16.msra.mxu0 %v2558
    %3623 = vmatprep.subr.bf16.mxu0 %v2591
    %3624 = vmatpush1.bf16.msra.mxu0 %v2590
    %3625 = vmatprep.subr.bf16.mxu0 %v2623
    %3626 = vmatpush1.bf16.msra.mxu0 %v2622
    %3627 = vmatprep.mubr.bf16.mxu0 %v71
    %3628 = vmatmul.mubr.bf16.gmra.mrb[0].mxu0 %v70
    %v3629 = vpop.f32.mrb[0].mxu0
    %v3630 = vadd.f32 0.0, %v3629
    %v3631 = vpop.f32.mrb[0].mxu0
    %v3632 = vadd.f32 0.0, %v3631
    %v3633 = vpop.f32.mrb[0].mxu0
    %v3634 = vpop.f32.mrb[0].mxu0
    %3635 = vdwg.mxu0
    %3636 = vmatprep.subr.bf16.mxu0 %v2145
    %3637 = vmatpush1.bf16.msra.mxu0 %v2144
    %3638 = vmatprep.subr.bf16.mxu0 %v2177
    %3639 = vmatpush1.bf16.msra.mxu0 %v2176
    %3640 = vmatprep.subr.bf16.mxu0 %v2209
    %3641 = vmatpush1.bf16.msra.mxu0 %v2208
    %3642 = vmatprep.subr.bf16.mxu0 %v2241
    %3643 = vmatpush1.bf16.msra.mxu0 %v2240
    %3644 = vmatprep.subr.bf16.mxu0 %v2273
    %3645 = vmatpush1.bf16.msra.mxu0 %v2272
    %3646 = vmatprep.subr.bf16.mxu0 %v2305
    %3647 = vmatpush1.bf16.msra.mxu0 %v2304
    %3648 = vmatprep.subr.bf16.mxu0 %v2337
    %3649 = vmatpush1.bf16.msra.mxu0 %v2336
    %3650 = vmatprep.subr.bf16.mxu0 %v2369
    %3651 = vmatpush1.bf16.msra.mxu0 %v2368
    %3652 = vmatprep.subr.bf16.mxu0 %v2401
    %3653 = vmatpush1.bf16.msra.mxu0 %v2400
    %3654 = vmatprep.subr.bf16.mxu0 %v2433
    %3655 = vmatpush1.bf16.msra.mxu0 %v2432
    %3656 = vmatprep.subr.bf16.mxu0 %v2465
    %3657 = vmatpush1.bf16.msra.mxu0 %v2464
    %3658 = vmatprep.subr.bf16.mxu0 %v2497
    %3659 = vmatpush1.bf16.msra.mxu0 %v2496
    %3660 = vmatprep.subr.bf16.mxu0 %v2529
    %3661 = vmatpush1.bf16.msra.mxu0 %v2528
    %3662 = vmatprep.subr.bf16.mxu0 %v2561
    %3663 = vmatpush1.bf16.msra.mxu0 %v2560
    %3664 = vmatprep.subr.bf16.mxu0 %v2593
    %3665 = vmatpush1.bf16.msra.mxu0 %v2592
    %3666 = vmatprep.subr.bf16.mxu0 %v2625
    %3667 = vmatpush1.bf16.msra.mxu0 %v2624
    %3668 = vmatprep.mubr.bf16.mxu0 %v71
    %3669 = vmatmul.mubr.bf16.gmra.mrb[0].mxu0 %v70
    %v3670 = vpop.f32.mrb[0].mxu0
    %v3671 = vadd.f32 0.0, %v3670
    %v3672 = vpop.f32.mrb[0].mxu0
    %v3673 = vadd.f32 0.0, %v3672
    %v3674 = vpop.f32.mrb[0].mxu0
    %v3675 = vpop.f32.mrb[0].mxu0
    %3676 = vdwg.mxu0
    %3677 = vmatprep.subr.bf16.mxu0 %v2147
    %3678 = vmatpush1.bf16.msra.mxu0 %v2146
    %3679 = vmatprep.subr.bf16.mxu0 %v2179
    %3680 = vmatpush1.bf16.msra.mxu0 %v2178
    %3681 = vmatprep.subr.bf16.mxu0 %v2211
    %3682 = vmatpush1.bf16.msra.mxu0 %v2210
    %3683 = vmatprep.subr.bf16.mxu0 %v2243
    %3684 = vmatpush1.bf16.msra.mxu0 %v2242
    %3685 = vmatprep.subr.bf16.mxu0 %v2275
    %3686 = vmatpush1.bf16.msra.mxu0 %v2274
    %3687 = vmatprep.subr.bf16.mxu0 %v2307
    %3688 = vmatpush1.bf16.msra.mxu0 %v2306
    %3689 = vmatprep.subr.bf16.mxu0 %v2339
    %3690 = vmatpush1.bf16.msra.mxu0 %v2338
    %3691 = vmatprep.subr.bf16.mxu0 %v2371
    %3692 = vmatpush1.bf16.msra.mxu0 %v2370
    %3693 = vmatprep.subr.bf16.mxu0 %v2403
    %3694 = vmatpush1.bf16.msra.mxu0 %v2402
    %3695 = vmatprep.subr.bf16.mxu0 %v2435
    %3696 = vmatpush1.bf16.msra.mxu0 %v2434
    %3697 = vmatprep.subr.bf16.mxu0 %v2467
    %3698 = vmatpush1.bf16.msra.mxu0 %v2466
    %3699 = vmatprep.subr.bf16.mxu0 %v2499
    %3700 = vmatpush1.bf16.msra.mxu0 %v2498
    %3701 = vmatprep.subr.bf16.mxu0 %v2531
    %3702 = vmatpush1.bf16.msra.mxu0 %v2530
    %3703 = vmatprep.subr.bf16.mxu0 %v2563
    %3704 = vmatpush1.bf16.msra.mxu0 %v2562
    %3705 = vmatprep.subr.bf16.mxu0 %v2595
    %3706 = vmatpush1.bf16.msra.mxu0 %v2594
    %3707 = vmatprep.subr.bf16.mxu0 %v2627
    %3708 = vmatpush1.bf16.msra.mxu0 %v2626
    %3709 = vmatprep.mubr.bf16.mxu0 %v71
    %3710 = vmatmul.mubr.bf16.gmra.mrb[0].mxu0 %v70
    %v3711 = vpop.f32.mrb[0].mxu0
    %v3712 = vadd.f32 0.0, %v3711
    %v3713 = vpop.f32.mrb[0].mxu0
    %v3714 = vadd.f32 0.0, %v3713
    %v3715 = vpop.f32.mrb[0].mxu0
    %v3716 = vpop.f32.mrb[0].mxu0
    %3717 = vdwg.mxu0
    %3718 = vmatprep.subr.bf16.mxu0 %v2149
    %3719 = vmatpush1.bf16.msra.mxu0 %v2148
    %3720 = vmatprep.subr.bf16.mxu0 %v2181
    %3721 = vmatpush1.bf16.msra.mxu0 %v2180
    %3722 = vmatprep.subr.bf16.mxu0 %v2213
    %3723 = vmatpush1.bf16.msra.mxu0 %v2212
    %3724 = vmatprep.subr.bf16.mxu0 %v2245
    %3725 = vmatpush1.bf16.msra.mxu0 %v2244
    %3726 = vmatprep.subr.bf16.mxu0 %v2277
    %3727 = vmatpush1.bf16.msra.mxu0 %v2276
    %3728 = vmatprep.subr.bf16.mxu0 %v2309
    %3729 = vmatpush1.bf16.msra.mxu0 %v2308
    %3730 = vmatprep.subr.bf16.mxu0 %v2341
    %3731 = vmatpush1.bf16.msra.mxu0 %v2340
    %3732 = vmatprep.subr.bf16.mxu0 %v2373
    %3733 = vmatpush1.bf16.msra.mxu0 %v2372
    %3734 = vmatprep.subr.bf16.mxu0 %v2405
    %3735 = vmatpush1.bf16.msra.mxu0 %v2404
    %3736 = vmatprep.subr.bf16.mxu0 %v2437
    %3737 = vmatpush1.bf16.msra.mxu0 %v2436
    %3738 = vmatprep.subr.bf16.mxu0 %v2469
    %3739 = vmatpush1.bf16.msra.mxu0 %v2468
    %3740 = vmatprep.subr.bf16.mxu0 %v2501
    %3741 = vmatpush1.bf16.msra.mxu0 %v2500
    %3742 = vmatprep.subr.bf16.mxu0 %v2533
    %3743 = vmatpush1.bf16.msra.mxu0 %v2532
    %3744 = vmatprep.subr.bf16.mxu0 %v2565
    %3745 = vmatpush1.bf16.msra.mxu0 %v2564
    %3746 = vmatprep.subr.bf16.mxu0 %v2597
    %3747 = vmatpush1.bf16.msra.mxu0 %v2596
    %3748 = vmatprep.subr.bf16.mxu0 %v2629
    %3749 = vmatpush1.bf16.msra.mxu0 %v2628
    %3750 = vmatprep.mubr.bf16.mxu0 %v71
    %3751 = vmatmul.mubr.bf16.gmra.mrb[0].mxu0 %v70
    %v3752 = vpop.f32.mrb[0].mxu0
    %v3753 = vadd.f32 0.0, %v3752
    %v3754 = vpop.f32.mrb[0].mxu0
    %v3755 = vadd.f32 0.0, %v3754
    %v3756 = vpop.f32.mrb[0].mxu0
    %v3757 = vpop.f32.mrb[0].mxu0
    %3758 = vdwg.mxu0
    %3759 = vmatprep.subr.bf16.mxu0 %v2151
    %3760 = vmatpush1.bf16.msra.mxu0 %v2150
    %3761 = vmatprep.subr.bf16.mxu0 %v2183
    %3762 = vmatpush1.bf16.msra.mxu0 %v2182
    %3763 = vmatprep.subr.bf16.mxu0 %v2215
    %3764 = vmatpush1.bf16.msra.mxu0 %v2214
    %3765 = vmatprep.subr.bf16.mxu0 %v2247
    %3766 = vmatpush1.bf16.msra.mxu0 %v2246
    %3767 = vmatprep.subr.bf16.mxu0 %v2279
    %3768 = vmatpush1.bf16.msra.mxu0 %v2278
    %3769 = vmatprep.subr.bf16.mxu0 %v2311
    %3770 = vmatpush1.bf16.msra.mxu0 %v2310
    %3771 = vmatprep.subr.bf16.mxu0 %v2343
    %3772 = vmatpush1.bf16.msra.mxu0 %v2342
    %3773 = vmatprep.subr.bf16.mxu0 %v2375
    %3774 = vmatpush1.bf16.msra.mxu0 %v2374
    %3775 = vmatprep.subr.bf16.mxu0 %v2407
    %3776 = vmatpush1.bf16.msra.mxu0 %v2406
    %3777 = vmatprep.subr.bf16.mxu0 %v2439
    %3778 = vmatpush1.bf16.msra.mxu0 %v2438
    %3779 = vmatprep.subr.bf16.mxu0 %v2471
    %3780 = vmatpush1.bf16.msra.mxu0 %v2470
    %3781 = vmatprep.subr.bf16.mxu0 %v2503
    %3782 = vmatpush1.bf16.msra.mxu0 %v2502
    %3783 = vmatprep.subr.bf16.mxu0 %v2535
    %3784 = vmatpush1.bf16.msra.mxu0 %v2534
    %3785 = vmatprep.subr.bf16.mxu0 %v2567
    %3786 = vmatpush1.bf16.msra.mxu0 %v2566
    %3787 = vmatprep.subr.bf16.mxu0 %v2599
    %3788 = vmatpush1.bf16.msra.mxu0 %v2598
    %3789 = vmatprep.subr.bf16.mxu0 %v2631
    %3790 = vmatpush1.bf16.msra.mxu0 %v2630
    %3791 = vmatprep.mubr.bf16.mxu0 %v71
    %3792 = vmatmul.mubr.bf16.gmra.mrb[0].mxu0 %v70
    %v3793 = vpop.f32.mrb[0].mxu0
    %v3794 = vadd.f32 0.0, %v3793
    %v3795 = vpop.f32.mrb[0].mxu0
    %v3796 = vadd.f32 0.0, %v3795
    %v3797 = vpop.f32.mrb[0].mxu0
    %v3798 = vpop.f32.mrb[0].mxu0
    %3799 = vdwg.mxu0
    %vm3800 = vcmask 1043456
    %v3801 = vsel %vm3800, %v3179, 0.0
    %v3802 = vrot.slane %v3801, 4
    %v3803 = vadd.f32 %v3801, %v3802
    %v3804 = vrot.slane %v3803, 2
    %v3805 = vadd.f32 %v3803, %v3804
    %v3806 = vrot.slane %v3805, 1
    %v3807 = vadd.f32 %v3805, %v3806
    %v3808 = vsel %vm3800, %v3181, 0.0
    %v3809 = vrot.slane %v3808, 4
    %v3810 = vadd.f32 %v3808, %v3809
    %v3811 = vrot.slane %v3810, 2
    %v3812 = vadd.f32 %v3810, %v3811
    %v3813 = vrot.slane %v3812, 1
    %v3814 = vadd.f32 %v3812, %v3813
    %v3815 = vsel %vm3800, %v3220, 0.0
    %v3816 = vrot.slane %v3815, 4
    %v3817 = vadd.f32 %v3815, %v3816
    %v3818 = vrot.slane %v3817, 2
    %v3819 = vadd.f32 %v3817, %v3818
    %v3820 = vrot.slane %v3819, 1
    %v3821 = vadd.f32 %v3819, %v3820
    %v3822 = vsel %vm3800, %v3222, 0.0
    %v3823 = vrot.slane %v3822, 4
    %v3824 = vadd.f32 %v3822, %v3823
    %v3825 = vrot.slane %v3824, 2
    %v3826 = vadd.f32 %v3824, %v3825
    %v3827 = vrot.slane %v3826, 1
    %v3828 = vadd.f32 %v3826, %v3827
    %v3829 = vsel %vm3800, %v3261, 0.0
    %v3830 = vrot.slane %v3829, 4
    %v3831 = vadd.f32 %v3829, %v3830
    %v3832 = vrot.slane %v3831, 2
    %v3833 = vadd.f32 %v3831, %v3832
    %v3834 = vrot.slane %v3833, 1
    %v3835 = vadd.f32 %v3833, %v3834
    %v3836 = vsel %vm3800, %v3263, 0.0
    %v3837 = vrot.slane %v3836, 4
    %v3838 = vadd.f32 %v3836, %v3837
    %v3839 = vrot.slane %v3838, 2
    %v3840 = vadd.f32 %v3838, %v3839
    %v3841 = vrot.slane %v3840, 1
    %v3842 = vadd.f32 %v3840, %v3841
    %v3843 = vsel %vm3800, %v3302, 0.0
    %v3844 = vrot.slane %v3843, 4
    %v3845 = vadd.f32 %v3843, %v3844
    %v3846 = vrot.slane %v3845, 2
    %v3847 = vadd.f32 %v3845, %v3846
    %v3848 = vrot.slane %v3847, 1
    %v3849 = vadd.f32 %v3847, %v3848
    %v3850 = vsel %vm3800, %v3304, 0.0
    %v3851 = vrot.slane %v3850, 4
    %v3852 = vadd.f32 %v3850, %v3851
    %v3853 = vrot.slane %v3852, 2
    %v3854 = vadd.f32 %v3852, %v3853
    %v3855 = vrot.slane %v3854, 1
    %v3856 = vadd.f32 %v3854, %v3855
    %v3857 = vsel %vm3800, %v3343, 0.0
    %v3858 = vrot.slane %v3857, 4
    %v3859 = vadd.f32 %v3857, %v3858
    %v3860 = vrot.slane %v3859, 2
    %v3861 = vadd.f32 %v3859, %v3860
    %v3862 = vrot.slane %v3861, 1
    %v3863 = vadd.f32 %v3861, %v3862
    %v3864 = vsel %vm3800, %v3345, 0.0
    %v3865 = vrot.slane %v3864, 4
    %v3866 = vadd.f32 %v3864, %v3865
    %v3867 = vrot.slane %v3866, 2
    %v3868 = vadd.f32 %v3866, %v3867
    %v3869 = vrot.slane %v3868, 1
    %v3870 = vadd.f32 %v3868, %v3869
    %v3871 = vsel %vm3800, %v3384, 0.0
    %v3872 = vrot.slane %v3871, 4
    %v3873 = vadd.f32 %v3871, %v3872
    %v3874 = vrot.slane %v3873, 2
    %v3875 = vadd.f32 %v3873, %v3874
    %v3876 = vrot.slane %v3875, 1
    %v3877 = vadd.f32 %v3875, %v3876
    %v3878 = vsel %vm3800, %v3386, 0.0
    %v3879 = vrot.slane %v3878, 4
    %v3880 = vadd.f32 %v3878, %v3879
    %v3881 = vrot.slane %v3880, 2
    %v3882 = vadd.f32 %v3880, %v3881
    %v3883 = vrot.slane %v3882, 1
    %v3884 = vadd.f32 %v3882, %v3883
    %v3885 = vsel %vm3800, %v3425, 0.0
    %v3886 = vrot.slane %v3885, 4
    %v3887 = vadd.f32 %v3885, %v3886
    %v3888 = vrot.slane %v3887, 2
    %v3889 = vadd.f32 %v3887, %v3888
    %v3890 = vrot.slane %v3889, 1
    %v3891 = vadd.f32 %v3889, %v3890
    %v3892 = vsel %vm3800, %v3427, 0.0
    %v3893 = vrot.slane %v3892, 4
    %v3894 = vadd.f32 %v3892, %v3893
    %v3895 = vrot.slane %v3894, 2
    %v3896 = vadd.f32 %v3894, %v3895
    %v3897 = vrot.slane %v3896, 1
    %v3898 = vadd.f32 %v3896, %v3897
    %v3899 = vsel %vm3800, %v3466, 0.0
    %v3900 = vrot.slane %v3899, 4
    %v3901 = vadd.f32 %v3899, %v3900
    %v3902 = vrot.slane %v3901, 2
    %v3903 = vadd.f32 %v3901, %v3902
    %v3904 = vrot.slane %v3903, 1
    %v3905 = vadd.f32 %v3903, %v3904
    %v3906 = vsel %vm3800, %v3468, 0.0
    %v3907 = vrot.slane %v3906, 4
    %v3908 = vadd.f32 %v3906, %v3907
    %v3909 = vrot.slane %v3908, 2
    %v3910 = vadd.f32 %v3908, %v3909
    %v3911 = vrot.slane %v3910, 1
    %v3912 = vadd.f32 %v3910, %v3911
    %v3913 = vsel %vm3800, %v3507, 0.0
    %v3914 = vrot.slane %v3913, 4
    %v3915 = vadd.f32 %v3913, %v3914
    %v3916 = vrot.slane %v3915, 2
    %v3917 = vadd.f32 %v3915, %v3916
    %v3918 = vrot.slane %v3917, 1
    %v3919 = vadd.f32 %v3917, %v3918
    %v3920 = vsel %vm3800, %v3509, 0.0
    %v3921 = vrot.slane %v3920, 4
    %v3922 = vadd.f32 %v3920, %v3921
    %v3923 = vrot.slane %v3922, 2
    %v3924 = vadd.f32 %v3922, %v3923
    %v3925 = vrot.slane %v3924, 1
    %v3926 = vadd.f32 %v3924, %v3925
    %v3927 = vsel %vm3800, %v3548, 0.0
    %v3928 = vrot.slane %v3927, 4
    %v3929 = vadd.f32 %v3927, %v3928
    %v3930 = vrot.slane %v3929, 2
    %v3931 = vadd.f32 %v3929, %v3930
    %v3932 = vrot.slane %v3931, 1
    %v3933 = vadd.f32 %v3931, %v3932
    %v3934 = vsel %vm3800, %v3550, 0.0
    %v3935 = vrot.slane %v3934, 4
    %v3936 = vadd.f32 %v3934, %v3935
    %v3937 = vrot.slane %v3936, 2
    %v3938 = vadd.f32 %v3936, %v3937
    %v3939 = vrot.slane %v3938, 1
    %v3940 = vadd.f32 %v3938, %v3939
    %v3941 = vsel %vm3800, %v3589, 0.0
    %v3942 = vrot.slane %v3941, 4
    %v3943 = vadd.f32 %v3941, %v3942
    %v3944 = vrot.slane %v3943, 2
    %v3945 = vadd.f32 %v3943, %v3944
    %v3946 = vrot.slane %v3945, 1
    %v3947 = vadd.f32 %v3945, %v3946
    %v3948 = vsel %vm3800, %v3591, 0.0
    %v3949 = vrot.slane %v3948, 4
    %v3950 = vadd.f32 %v3948, %v3949
    %v3951 = vrot.slane %v3950, 2
    %v3952 = vadd.f32 %v3950, %v3951
    %v3953 = vrot.slane %v3952, 1
    %v3954 = vadd.f32 %v3952, %v3953
    %v3955 = vsel %vm3800, %v3630, 0.0
    %v3956 = vrot.slane %v3955, 4
    %v3957 = vadd.f32 %v3955, %v3956
    %v3958 = vrot.slane %v3957, 2
    %v3959 = vadd.f32 %v3957, %v3958
    %v3960 = vrot.slane %v3959, 1
    %v3961 = vadd.f32 %v3959, %v3960
    %v3962 = vsel %vm3800, %v3632, 0.0
    %v3963 = vrot.slane %v3962, 4
    %v3964 = vadd.f32 %v3962, %v3963
    %v3965 = vrot.slane %v3964, 2
    %v3966 = vadd.f32 %v3964, %v3965
    %v3967 = vrot.slane %v3966, 1
    %v3968 = vadd.f32 %v3966, %v3967
    %v3969 = vsel %vm3800, %v3671, 0.0
    %v3970 = vrot.slane %v3969, 4
    %v3971 = vadd.f32 %v3969, %v3970
    %v3972 = vrot.slane %v3971, 2
    %v3973 = vadd.f32 %v3971, %v3972
    %v3974 = vrot.slane %v3973, 1
    %v3975 = vadd.f32 %v3973, %v3974
    %v3976 = vsel %vm3800, %v3673, 0.0
    %v3977 = vrot.slane %v3976, 4
    %v3978 = vadd.f32 %v3976, %v3977
    %v3979 = vrot.slane %v3978, 2
    %v3980 = vadd.f32 %v3978, %v3979
    %v3981 = vrot.slane %v3980, 1
    %v3982 = vadd.f32 %v3980, %v3981
    %v3983 = vsel %vm3800, %v3712, 0.0
    %v3984 = vrot.slane %v3983, 4
    %v3985 = vadd.f32 %v3983, %v3984
    %v3986 = vrot.slane %v3985, 2
    %v3987 = vadd.f32 %v3985, %v3986
    %v3988 = vrot.slane %v3987, 1
    %v3989 = vadd.f32 %v3987, %v3988
    %v3990 = vsel %vm3800, %v3714, 0.0
    %v3991 = vrot.slane %v3990, 4
    %v3992 = vadd.f32 %v3990, %v3991
    %v3993 = vrot.slane %v3992, 2
    %v3994 = vadd.f32 %v3992, %v3993
    %v3995 = vrot.slane %v3994, 1
    %v3996 = vadd.f32 %v3994, %v3995
    %v3997 = vsel %vm3800, %v3753, 0.0
    %v3998 = vrot.slane %v3997, 4
    %v3999 = vadd.f32 %v3997, %v3998
    %v4000 = vrot.slane %v3999, 2
    %v4001 = vadd.f32 %v3999, %v4000
    %v4002 = vrot.slane %v4001, 1
    %v4003 = vadd.f32 %v4001, %v4002
    %v4004 = vsel %vm3800, %v3755, 0.0
    %v4005 = vrot.slane %v4004, 4
    %v4006 = vadd.f32 %v4004, %v4005
    %v4007 = vrot.slane %v4006, 2
    %v4008 = vadd.f32 %v4006, %v4007
    %v4009 = vrot.slane %v4008, 1
    %v4010 = vadd.f32 %v4008, %v4009
    %v4011 = vsel %vm3800, %v3794, 0.0
    %v4012 = vrot.slane %v4011, 4
    %v4013 = vadd.f32 %v4011, %v4012
    %v4014 = vrot.slane %v4013, 2
    %v4015 = vadd.f32 %v4013, %v4014
    %v4016 = vrot.slane %v4015, 1
    %v4017 = vadd.f32 %v4015, %v4016
    %v4018 = vsel %vm3800, %v3796, 0.0
    %v4019 = vrot.slane %v4018, 4
    %v4020 = vadd.f32 %v4018, %v4019
    %v4021 = vrot.slane %v4020, 2
    %v4022 = vadd.f32 %v4020, %v4021
    %v4023 = vrot.slane %v4022, 1
    %v4024 = vadd.f32 %v4022, %v4023
    %v4025 = vrcp.pop 4.0
    %v4026 = vmul.f32 %v3807, %v4025
    %v4027 = vmul.f32 %v3814, %v4025
    %v4028 = vmul.f32 %v3821, %v4025
    %v4029 = vmul.f32 %v3828, %v4025
    %v4030 = vmul.f32 %v3835, %v4025
    %v4031 = vmul.f32 %v3842, %v4025
    %v4032 = vmul.f32 %v3849, %v4025
    %v4033 = vmul.f32 %v3856, %v4025
    %v4034 = vmul.f32 %v3863, %v4025
    %v4035 = vmul.f32 %v3870, %v4025
    %v4036 = vmul.f32 %v3877, %v4025
    %v4037 = vmul.f32 %v3884, %v4025
    %v4038 = vmul.f32 %v3891, %v4025
    %v4039 = vmul.f32 %v3898, %v4025
    %v4040 = vmul.f32 %v3905, %v4025
    %v4041 = vmul.f32 %v3912, %v4025
    %v4042 = vmul.f32 %v3919, %v4025
    %v4043 = vmul.f32 %v3926, %v4025
    %v4044 = vmul.f32 %v3933, %v4025
    %v4045 = vmul.f32 %v3940, %v4025
    %v4046 = vmul.f32 %v3947, %v4025
    %v4047 = vmul.f32 %v3954, %v4025
    %v4048 = vmul.f32 %v3961, %v4025
    %v4049 = vmul.f32 %v3968, %v4025
    %v4050 = vmul.f32 %v3975, %v4025
    %v4051 = vmul.f32 %v3982, %v4025
    %v4052 = vmul.f32 %v3989, %v4025
    %v4053 = vmul.f32 %v3996, %v4025
    %v4054 = vmul.f32 %v4003, %v4025
    %v4055 = vmul.f32 %v4010, %v4025
    %v4056 = vmul.f32 %v4017, %v4025
    %v4057 = vmul.f32 %v4024, %v4025
    %v4058 = vsub.f32 %v3179, %v4026
    %v4059 = vsub.f32 %v3181, %v4027
    %v4060 = vsub.f32 %v3220, %v4028
    %v4061 = vsub.f32 %v3222, %v4029
    %v4062 = vsub.f32 %v3261, %v4030
    %v4063 = vsub.f32 %v3263, %v4031
    %v4064 = vsub.f32 %v3302, %v4032
    %v4065 = vsub.f32 %v3304, %v4033
    %v4066 = vsub.f32 %v3343, %v4034
    %v4067 = vsub.f32 %v3345, %v4035
    %v4068 = vsub.f32 %v3384, %v4036
    %v4069 = vsub.f32 %v3386, %v4037
    %v4070 = vsub.f32 %v3425, %v4038
    %v4071 = vsub.f32 %v3427, %v4039
    %v4072 = vsub.f32 %v3466, %v4040
    %v4073 = vsub.f32 %v3468, %v4041
    %v4074 = vsub.f32 %v3507, %v4042
    %v4075 = vsub.f32 %v3509, %v4043
    %v4076 = vsub.f32 %v3548, %v4044
    %v4077 = vsub.f32 %v3550, %v4045
    %v4078 = vsub.f32 %v3589, %v4046
    %v4079 = vsub.f32 %v3591, %v4047
    %v4080 = vsub.f32 %v3630, %v4048
    %v4081 = vsub.f32 %v3632, %v4049
    %v4082 = vsub.f32 %v3671, %v4050
    %v4083 = vsub.f32 %v3673, %v4051
    %v4084 = vsub.f32 %v3712, %v4052
    %v4085 = vsub.f32 %v3714, %v4053
    %v4086 = vsub.f32 %v3753, %v4054
    %v4087 = vsub.f32 %v3755, %v4055
    %v4088 = vsub.f32 %v3794, %v4056
    %v4089 = vsub.f32 %v3796, %v4057
    %v4090 = vmul.f32 %v4058, %v4058
    %v4091 = vmul.f32 %v4059, %v4059
    %v4092 = vmul.f32 %v4060, %v4060
    %v4093 = vmul.f32 %v4061, %v4061
    %v4094 = vmul.f32 %v4062, %v4062
    %v4095 = vmul.f32 %v4063, %v4063
    %v4096 = vmul.f32 %v4064, %v4064
    %v4097 = vmul.f32 %v4065, %v4065
    %v4098 = vmul.f32 %v4066, %v4066
    %v4099 = vmul.f32 %v4067, %v4067
    %v4100 = vmul.f32 %v4068, %v4068
    %v4101 = vmul.f32 %v4069, %v4069
    %v4102 = vmul.f32 %v4070, %v4070
    %v4103 = vmul.f32 %v4071, %v4071
    %v4104 = vmul.f32 %v4072, %v4072
    %v4105 = vmul.f32 %v4073, %v4073
    %v4106 = vmul.f32 %v4074, %v4074
    %v4107 = vmul.f32 %v4075, %v4075
    %v4108 = vmul.f32 %v4076, %v4076
    %v4109 = vmul.f32 %v4077, %v4077
    %v4110 = vmul.f32 %v4078, %v4078
    %v4111 = vmul.f32 %v4079, %v4079
    %v4112 = vmul.f32 %v4080, %v4080
    %v4113 = vmul.f32 %v4081, %v4081
    %v4114 = vmul.f32 %v4082, %v4082
    %v4115 = vmul.f32 %v4083, %v4083
    %v4116 = vmul.f32 %v4084, %v4084
    %v4117 = vmul.f32 %v4085, %v4085
    %v4118 = vmul.f32 %v4086, %v4086
    %v4119 = vmul.f32 %v4087, %v4087
    %v4120 = vmul.f32 %v4088, %v4088
    %v4121 = vmul.f32 %v4089, %v4089
    %v4122 = vsel %vm3800, %v4090, 0.0
    %v4123 = vrot.slane %v4122, 4
    %v4124 = vadd.f32 %v4122, %v4123
    %v4125 = vrot.slane %v4124, 2
    %v4126 = vadd.f32 %v4124, %v4125
    %v4127 = vrot.slane %v4126, 1
    %v4128 = vadd.f32 %v4126, %v4127
    %v4129 = vsel %vm3800, %v4091, 0.0
    %v4130 = vrot.slane %v4129, 4
    %v4131 = vadd.f32 %v4129, %v4130
    %v4132 = vrot.slane %v4131, 2
    %v4133 = vadd.f32 %v4131, %v4132
    %v4134 = vrot.slane %v4133, 1
    %v4135 = vadd.f32 %v4133, %v4134
    %v4136 = vsel %vm3800, %v4092, 0.0
    %v4137 = vrot.slane %v4136, 4
    %v4138 = vadd.f32 %v4136, %v4137
    %v4139 = vrot.slane %v4138, 2
    %v4140 = vadd.f32 %v4138, %v4139
    %v4141 = vrot.slane %v4140, 1
    %v4142 = vadd.f32 %v4140, %v4141
    %v4143 = vsel %vm3800, %v4093, 0.0
    %v4144 = vrot.slane %v4143, 4
    %v4145 = vadd.f32 %v4143, %v4144
    %v4146 = vrot.slane %v4145, 2
    %v4147 = vadd.f32 %v4145, %v4146
    %v4148 = vrot.slane %v4147, 1
    %v4149 = vadd.f32 %v4147, %v4148
    %v4150 = vsel %vm3800, %v4094, 0.0
    %v4151 = vrot.slane %v4150, 4
    %v4152 = vadd.f32 %v4150, %v4151
    %v4153 = vrot.slane %v4152, 2
    %v4154 = vadd.f32 %v4152, %v4153
    %v4155 = vrot.slane %v4154, 1
    %v4156 = vadd.f32 %v4154, %v4155
    %v4157 = vsel %vm3800, %v4095, 0.0
    %v4158 = vrot.slane %v4157, 4
    %v4159 = vadd.f32 %v4157, %v4158
    %v4160 = vrot.slane %v4159, 2
    %v4161 = vadd.f32 %v4159, %v4160
    %v4162 = vrot.slane %v4161, 1
    %v4163 = vadd.f32 %v4161, %v4162
    %v4164 = vsel %vm3800, %v4096, 0.0
    %v4165 = vrot.slane %v4164, 4
    %v4166 = vadd.f32 %v4164, %v4165
    %v4167 = vrot.slane %v4166, 2
    %v4168 = vadd.f32 %v4166, %v4167
    %v4169 = vrot.slane %v4168, 1
    %v4170 = vadd.f32 %v4168, %v4169
    %v4171 = vsel %vm3800, %v4097, 0.0
    %v4172 = vrot.slane %v4171, 4
    %v4173 = vadd.f32 %v4171, %v4172
    %v4174 = vrot.slane %v4173, 2
    %v4175 = vadd.f32 %v4173, %v4174
    %v4176 = vrot.slane %v4175, 1
    %v4177 = vadd.f32 %v4175, %v4176
    %v4178 = vsel %vm3800, %v4098, 0.0
    %v4179 = vrot.slane %v4178, 4
    %v4180 = vadd.f32 %v4178, %v4179
    %v4181 = vrot.slane %v4180, 2
    %v4182 = vadd.f32 %v4180, %v4181
    %v4183 = vrot.slane %v4182, 1
    %v4184 = vadd.f32 %v4182, %v4183
    %v4185 = vsel %vm3800, %v4099, 0.0
    %v4186 = vrot.slane %v4185, 4
    %v4187 = vadd.f32 %v4185, %v4186
    %v4188 = vrot.slane %v4187, 2
    %v4189 = vadd.f32 %v4187, %v4188
    %v4190 = vrot.slane %v4189, 1
    %v4191 = vadd.f32 %v4189, %v4190
    %v4192 = vsel %vm3800, %v4100, 0.0
    %v4193 = vrot.slane %v4192, 4
    %v4194 = vadd.f32 %v4192, %v4193
    %v4195 = vrot.slane %v4194, 2
    %v4196 = vadd.f32 %v4194, %v4195
    %v4197 = vrot.slane %v4196, 1
    %v4198 = vadd.f32 %v4196, %v4197
    %v4199 = vsel %vm3800, %v4101, 0.0
    %v4200 = vrot.slane %v4199, 4
    %v4201 = vadd.f32 %v4199, %v4200
    %v4202 = vrot.slane %v4201, 2
    %v4203 = vadd.f32 %v4201, %v4202
    %v4204 = vrot.slane %v4203, 1
    %v4205 = vadd.f32 %v4203, %v4204
    %v4206 = vsel %vm3800, %v4102, 0.0
    %v4207 = vrot.slane %v4206, 4
    %v4208 = vadd.f32 %v4206, %v4207
    %v4209 = vrot.slane %v4208, 2
    %v4210 = vadd.f32 %v4208, %v4209
    %v4211 = vrot.slane %v4210, 1
    %v4212 = vadd.f32 %v4210, %v4211
    %v4213 = vsel %vm3800, %v4103, 0.0
    %v4214 = vrot.slane %v4213, 4
    %v4215 = vadd.f32 %v4213, %v4214
    %v4216 = vrot.slane %v4215, 2
    %v4217 = vadd.f32 %v4215, %v4216
    %v4218 = vrot.slane %v4217, 1
    %v4219 = vadd.f32 %v4217, %v4218
    %v4220 = vsel %vm3800, %v4104, 0.0
    %v4221 = vrot.slane %v4220, 4
    %v4222 = vadd.f32 %v4220, %v4221
    %v4223 = vrot.slane %v4222, 2
    %v4224 = vadd.f32 %v4222, %v4223
    %v4225 = vrot.slane %v4224, 1
    %v4226 = vadd.f32 %v4224, %v4225
    %v4227 = vsel %vm3800, %v4105, 0.0
    %v4228 = vrot.slane %v4227, 4
    %v4229 = vadd.f32 %v4227, %v4228
    %v4230 = vrot.slane %v4229, 2
    %v4231 = vadd.f32 %v4229, %v4230
    %v4232 = vrot.slane %v4231, 1
    %v4233 = vadd.f32 %v4231, %v4232
    %v4234 = vsel %vm3800, %v4106, 0.0
    %v4235 = vrot.slane %v4234, 4
    %v4236 = vadd.f32 %v4234, %v4235
    %v4237 = vrot.slane %v4236, 2
    %v4238 = vadd.f32 %v4236, %v4237
    %v4239 = vrot.slane %v4238, 1
    %v4240 = vadd.f32 %v4238, %v4239
    %v4241 = vsel %vm3800, %v4107, 0.0
    %v4242 = vrot.slane %v4241, 4
    %v4243 = vadd.f32 %v4241, %v4242
    %v4244 = vrot.slane %v4243, 2
    %v4245 = vadd.f32 %v4243, %v4244
    %v4246 = vrot.slane %v4245, 1
    %v4247 = vadd.f32 %v4245, %v4246
    %v4248 = vsel %vm3800, %v4108, 0.0
    %v4249 = vrot.slane %v4248, 4
    %v4250 = vadd.f32 %v4248, %v4249
    %v4251 = vrot.slane %v4250, 2
    %v4252 = vadd.f32 %v4250, %v4251
    %v4253 = vrot.slane %v4252, 1
    %v4254 = vadd.f32 %v4252, %v4253
    %v4255 = vsel %vm3800, %v4109, 0.0
    %v4256 = vrot.slane %v4255, 4
    %v4257 = vadd.f32 %v4255, %v4256
    %v4258 = vrot.slane %v4257, 2
    %v4259 = vadd.f32 %v4257, %v4258
    %v4260 = vrot.slane %v4259, 1
    %v4261 = vadd.f32 %v4259, %v4260
    %v4262 = vsel %vm3800, %v4110, 0.0
    %v4263 = vrot.slane %v4262, 4
    %v4264 = vadd.f32 %v4262, %v4263
    %v4265 = vrot.slane %v4264, 2
    %v4266 = vadd.f32 %v4264, %v4265
    %v4267 = vrot.slane %v4266, 1
    %v4268 = vadd.f32 %v4266, %v4267
    %v4269 = vsel %vm3800, %v4111, 0.0
    %v4270 = vrot.slane %v4269, 4
    %v4271 = vadd.f32 %v4269, %v4270
    %v4272 = vrot.slane %v4271, 2
    %v4273 = vadd.f32 %v4271, %v4272
    %v4274 = vrot.slane %v4273, 1
    %v4275 = vadd.f32 %v4273, %v4274
    %v4276 = vsel %vm3800, %v4112, 0.0
    %v4277 = vrot.slane %v4276, 4
    %v4278 = vadd.f32 %v4276, %v4277
    %v4279 = vrot.slane %v4278, 2
    %v4280 = vadd.f32 %v4278, %v4279
    %v4281 = vrot.slane %v4280, 1
    %v4282 = vadd.f32 %v4280, %v4281
    %v4283 = vsel %vm3800, %v4113, 0.0
    %v4284 = vrot.slane %v4283, 4
    %v4285 = vadd.f32 %v4283, %v4284
    %v4286 = vrot.slane %v4285, 2
    %v4287 = vadd.f32 %v4285, %v4286
    %v4288 = vrot.slane %v4287, 1
    %v4289 = vadd.f32 %v4287, %v4288
    %v4290 = vsel %vm3800, %v4114, 0.0
    %v4291 = vrot.slane %v4290, 4
    %v4292 = vadd.f32 %v4290, %v4291
    %v4293 = vrot.slane %v4292, 2
    %v4294 = vadd.f32 %v4292, %v4293
    %v4295 = vrot.slane %v4294, 1
    %v4296 = vadd.f32 %v4294, %v4295
    %v4297 = vsel %vm3800, %v4115, 0.0
    %v4298 = vrot.slane %v4297, 4
    %v4299 = vadd.f32 %v4297, %v4298
    %v4300 = vrot.slane %v4299, 2
    %v4301 = vadd.f32 %v4299, %v4300
    %v4302 = vrot.slane %v4301, 1
    %v4303 = vadd.f32 %v4301, %v4302
    %v4304 = vsel %vm3800, %v4116, 0.0
    %v4305 = vrot.slane %v4304, 4
    %v4306 = vadd.f32 %v4304, %v4305
    %v4307 = vrot.slane %v4306, 2
    %v4308 = vadd.f32 %v4306, %v4307
    %v4309 = vrot.slane %v4308, 1
    %v4310 = vadd.f32 %v4308, %v4309
    %v4311 = vsel %vm3800, %v4117, 0.0
    %v4312 = vrot.slane %v4311, 4
    %v4313 = vadd.f32 %v4311, %v4312
    %v4314 = vrot.slane %v4313, 2
    %v4315 = vadd.f32 %v4313, %v4314
    %v4316 = vrot.slane %v4315, 1
    %v4317 = vadd.f32 %v4315, %v4316
    %v4318 = vsel %vm3800, %v4118, 0.0
    %v4319 = vrot.slane %v4318, 4
    %v4320 = vadd.f32 %v4318, %v4319
    %v4321 = vrot.slane %v4320, 2
    %v4322 = vadd.f32 %v4320, %v4321
    %v4323 = vrot.slane %v4322, 1
    %v4324 = vadd.f32 %v4322, %v4323
    %v4325 = vsel %vm3800, %v4119, 0.0
    %v4326 = vrot.slane %v4325, 4
    %v4327 = vadd.f32 %v4325, %v4326
    %v4328 = vrot.slane %v4327, 2
    %v4329 = vadd.f32 %v4327, %v4328
    %v4330 = vrot.slane %v4329, 1
    %v4331 = vadd.f32 %v4329, %v4330
    %v4332 = vsel %vm3800, %v4120, 0.0
    %v4333 = vrot.slane %v4332, 4
    %v4334 = vadd.f32 %v4332, %v4333
    %v4335 = vrot.slane %v4334, 2
    %v4336 = vadd.f32 %v4334, %v4335
    %v4337 = vrot.slane %v4336, 1
    %v4338 = vadd.f32 %v4336, %v4337
    %v4339 = vsel %vm3800, %v4121, 0.0
    %v4340 = vrot.slane %v4339, 4
    %v4341 = vadd.f32 %v4339, %v4340
    %v4342 = vrot.slane %v4341, 2
    %v4343 = vadd.f32 %v4341, %v4342
    %v4344 = vrot.slane %v4343, 1
    %v4345 = vadd.f32 %v4343, %v4344
    %v4346 = vmul.f32 %v4128, %v4025
    %v4347 = vmul.f32 %v4135, %v4025
    %v4348 = vmul.f32 %v4142, %v4025
    %v4349 = vmul.f32 %v4149, %v4025
    %v4350 = vmul.f32 %v4156, %v4025
    %v4351 = vmul.f32 %v4163, %v4025
    %v4352 = vmul.f32 %v4170, %v4025
    %v4353 = vmul.f32 %v4177, %v4025
    %v4354 = vmul.f32 %v4184, %v4025
    %v4355 = vmul.f32 %v4191, %v4025
    %v4356 = vmul.f32 %v4198, %v4025
    %v4357 = vmul.f32 %v4205, %v4025
    %v4358 = vmul.f32 %v4212, %v4025
    %v4359 = vmul.f32 %v4219, %v4025
    %v4360 = vmul.f32 %v4226, %v4025
    %v4361 = vmul.f32 %v4233, %v4025
    %v4362 = vmul.f32 %v4240, %v4025
    %v4363 = vmul.f32 %v4247, %v4025
    %v4364 = vmul.f32 %v4254, %v4025
    %v4365 = vmul.f32 %v4261, %v4025
    %v4366 = vmul.f32 %v4268, %v4025
    %v4367 = vmul.f32 %v4275, %v4025
    %v4368 = vmul.f32 %v4282, %v4025
    %v4369 = vmul.f32 %v4289, %v4025
    %v4370 = vmul.f32 %v4296, %v4025
    %v4371 = vmul.f32 %v4303, %v4025
    %v4372 = vmul.f32 %v4310, %v4025
    %v4373 = vmul.f32 %v4317, %v4025
    %v4374 = vmul.f32 %v4324, %v4025
    %v4375 = vmul.f32 %v4331, %v4025
    %v4376 = vmul.f32 %v4338, %v4025
    %v4377 = vmul.f32 %v4345, %v4025
    %v4378 = vld [vmem:[#allocation6] sm:$0xff]
    %v4379 = vld [vmem:[#allocation6 + $0x8] sm:$0xff]
    %v4380 = vld [vmem:[#allocation6 + $0x10] sm:$0xff]
    %v4381 = vld [vmem:[#allocation6 + $0x18] sm:$0xff]
    %v4382 = vadd.f32 %v4346, 1e-05
    %v4383 = vadd.f32 %v4347, 1e-05
    %v4384 = vadd.f32 %v4348, 1e-05
    %v4385 = vadd.f32 %v4349, 1e-05
    %v4386 = vadd.f32 %v4350, 1e-05
    %v4387 = vadd.f32 %v4351, 1e-05
    %v4388 = vadd.f32 %v4352, 1e-05
    %v4389 = vadd.f32 %v4353, 1e-05
    %v4390 = vadd.f32 %v4354, 1e-05
    %v4391 = vadd.f32 %v4355, 1e-05
    %v4392 = vadd.f32 %v4356, 1e-05
    %v4393 = vadd.f32 %v4357, 1e-05
    %v4394 = vadd.f32 %v4358, 1e-05
    %v4395 = vadd.f32 %v4359, 1e-05
    %v4396 = vadd.f32 %v4360, 1e-05
    %v4397 = vadd.f32 %v4361, 1e-05
    %v4398 = vadd.f32 %v4362, 1e-05
    %v4399 = vadd.f32 %v4363, 1e-05
    %v4400 = vadd.f32 %v4364, 1e-05
    %v4401 = vadd.f32 %v4365, 1e-05
    %v4402 = vadd.f32 %v4366, 1e-05
    %v4403 = vadd.f32 %v4367, 1e-05
    %v4404 = vadd.f32 %v4368, 1e-05
    %v4405 = vadd.f32 %v4369, 1e-05
    %v4406 = vadd.f32 %v4370, 1e-05
    %v4407 = vadd.f32 %v4371, 1e-05
    %v4408 = vadd.f32 %v4372, 1e-05
    %v4409 = vadd.f32 %v4373, 1e-05
    %v4410 = vadd.f32 %v4374, 1e-05
    %v4411 = vadd.f32 %v4375, 1e-05
    %v4412 = vadd.f32 %v4376, 1e-05
    %v4413 = vadd.f32 %v4377, 1e-05
    %v4414 = vrsqrt.pop %v4382
    %v4415 = vrsqrt.pop %v4383
    %v4416 = vrsqrt.pop %v4384
    %v4417 = vrsqrt.pop %v4385
    %v4418 = vrsqrt.pop %v4386
    %v4419 = vrsqrt.pop %v4387
    %v4420 = vrsqrt.pop %v4388
    %v4421 = vrsqrt.pop %v4389
    %v4422 = vrsqrt.pop %v4390
    %v4423 = vrsqrt.pop %v4391
    %v4424 = vrsqrt.pop %v4392
    %v4425 = vrsqrt.pop %v4393
    %v4426 = vrsqrt.pop %v4394
    %v4427 = vrsqrt.pop %v4395
    %v4428 = vrsqrt.pop %v4396
    %v4429 = vrsqrt.pop %v4397
    %v4430 = vrsqrt.pop %v4398
    %v4431 = vrsqrt.pop %v4399
    %v4432 = vrsqrt.pop %v4400
    %v4433 = vrsqrt.pop %v4401
    %v4434 = vrsqrt.pop %v4402
    %v4435 = vrsqrt.pop %v4403
    %v4436 = vrsqrt.pop %v4404
    %v4437 = vrsqrt.pop %v4405
    %v4438 = vrsqrt.pop %v4406
    %v4439 = vrsqrt.pop %v4407
    %v4440 = vrsqrt.pop %v4408
    %v4441 = vrsqrt.pop %v4409
    %v4442 = vrsqrt.pop %v4410
    %v4443 = vrsqrt.pop %v4411
    %v4444 = vrsqrt.pop %v4412
    %v4445 = vrsqrt.pop %v4413
    %v4478 = vcombine.low %v4414, %v4415
    %v4479 = vcombine.low %v4416, %v4417
    %v4480 = vcombine.low %v4418, %v4419
    %v4481 = vcombine.low %v4420, %v4421
    %v4483 = vunpack.c.l.s4 1966171168
    %v4484 = vunpack.c.0.s8 %v4483
    %v4485 = vlaneseq
    %v4486 = vshrl.u32 %v4485, 7
    %v4487 = vsub.s32 %v4484, %v4486
    %v4488 = vrot.slane %v4478, %v4487
    %v4490 = vunpack.c.l.s4 1966171168
    %v4491 = vunpack.c.0.s8 %v4490
    %v4492 = vlaneseq
    %v4493 = vshrl.u32 %v4492, 7
    %v4494 = vsub.s32 %v4491, %v4493
    %v4495 = vrot.slane %v4479, %v4494
    %v4497 = vunpack.c.l.s4 1966171168
    %v4498 = vunpack.c.0.s8 %v4497
    %v4499 = vlaneseq
    %v4500 = vshrl.u32 %v4499, 7
    %v4501 = vsub.s32 %v4498, %v4500
    %v4502 = vrot.slane %v4480, %v4501
    %v4504 = vunpack.c.l.s4 1966171168
    %v4505 = vunpack.c.0.s8 %v4504
    %v4506 = vlaneseq
    %v4507 = vshrl.u32 %v4506, 7
    %v4508 = vsub.s32 %v4505, %v4507
    %v4509 = vrot.slane %v4481, %v4508
    %v4510 = vcombine.low %v4488, %v4495
    %v4511 = vcombine.low %v4502, %v4509
    %v4513 = vunpack.c.l.s4 1966171168
    %v4514 = vunpack.c.0.s8 %v4513
    %v4515 = vlaneseq
    %v4516 = vshrl.u32 %v4515, 7
    %v4517 = vsub.s32 %v4514, %v4516
    %v4518 = vrot.slane %v4510, %v4517
    %v4520 = vunpack.c.l.s4 1966171168
    %v4521 = vunpack.c.0.s8 %v4520
    %v4522 = vlaneseq
    %v4523 = vshrl.u32 %v4522, 7
    %v4524 = vsub.s32 %v4521, %v4523
    %v4525 = vrot.slane %v4511, %v4524
    %v4526 = vcombine.low %v4518, %v4525
    %v4527 = vcombine.low %v4422, %v4423
    %v4528 = vcombine.low %v4424, %v4425
    %v4529 = vcombine.low %v4426, %v4427
    %v4530 = vcombine.low %v4428, %v4429
    %v4532 = vunpack.c.l.s4 1966171168
    %v4533 = vunpack.c.0.s8 %v4532
    %v4534 = vlaneseq
    %v4535 = vshrl.u32 %v4534, 7
    %v4536 = vsub.s32 %v4533, %v4535
    %v4537 = vrot.slane %v4527, %v4536
    %v4539 = vunpack.c.l.s4 1966171168
    %v4540 = vunpack.c.0.s8 %v4539
    %v4541 = vlaneseq
    %v4542 = vshrl.u32 %v4541, 7
    %v4543 = vsub.s32 %v4540, %v4542
    %v4544 = vrot.slane %v4528, %v4543
    %v4546 = vunpack.c.l.s4 1966171168
    %v4547 = vunpack.c.0.s8 %v4546
    %v4548 = vlaneseq
    %v4549 = vshrl.u32 %v4548, 7
    %v4550 = vsub.s32 %v4547, %v4549
    %v4551 = vrot.slane %v4529, %v4550
    %v4553 = vunpack.c.l.s4 1966171168
    %v4554 = vunpack.c.0.s8 %v4553
    %v4555 = vlaneseq
    %v4556 = vshrl.u32 %v4555, 7
    %v4557 = vsub.s32 %v4554, %v4556
    %v4558 = vrot.slane %v4530, %v4557
    %v4559 = vcombine.low %v4537, %v4544
    %v4560 = vcombine.low %v4551, %v4558
    %v4562 = vunpack.c.l.s4 1966171168
    %v4563 = vunpack.c.0.s8 %v4562
    %v4564 = vlaneseq
    %v4565 = vshrl.u32 %v4564, 7
    %v4566 = vsub.s32 %v4563, %v4565
    %v4567 = vrot.slane %v4559, %v4566
    %v4569 = vunpack.c.l.s4 1966171168
    %v4570 = vunpack.c.0.s8 %v4569
    %v4571 = vlaneseq
    %v4572 = vshrl.u32 %v4571, 7
    %v4573 = vsub.s32 %v4570, %v4572
    %v4574 = vrot.slane %v4560, %v4573
    %v4575 = vcombine.low %v4567, %v4574
    %v4576 = vcombine.low %v4430, %v4431
    %v4577 = vcombine.low %v4432, %v4433
    %v4578 = vcombine.low %v4434, %v4435
    %v4579 = vcombine.low %v4436, %v4437
    %v4581 = vunpack.c.l.s4 1966171168
    %v4582 = vunpack.c.0.s8 %v4581
    %v4583 = vlaneseq
    %v4584 = vshrl.u32 %v4583, 7
    %v4585 = vsub.s32 %v4582, %v4584
    %v4586 = vrot.slane %v4576, %v4585
    %v4588 = vunpack.c.l.s4 1966171168
    %v4589 = vunpack.c.0.s8 %v4588
    %v4590 = vlaneseq
    %v4591 = vshrl.u32 %v4590, 7
    %v4592 = vsub.s32 %v4589, %v4591
    %v4593 = vrot.slane %v4577, %v4592
    %v4595 = vunpack.c.l.s4 1966171168
    %v4596 = vunpack.c.0.s8 %v4595
    %v4597 = vlaneseq
    %v4598 = vshrl.u32 %v4597, 7
    %v4599 = vsub.s32 %v4596, %v4598
    %v4600 = vrot.slane %v4578, %v4599
    %v4602 = vunpack.c.l.s4 1966171168
    %v4603 = vunpack.c.0.s8 %v4602
    %v4604 = vlaneseq
    %v4605 = vshrl.u32 %v4604, 7
    %v4606 = vsub.s32 %v4603, %v4605
    %v4607 = vrot.slane %v4579, %v4606
    %v4608 = vcombine.low %v4586, %v4593
    %v4609 = vcombine.low %v4600, %v4607
    %v4611 = vunpack.c.l.s4 1966171168
    %v4612 = vunpack.c.0.s8 %v4611
    %v4613 = vlaneseq
    %v4614 = vshrl.u32 %v4613, 7
    %v4615 = vsub.s32 %v4612, %v4614
    %v4616 = vrot.slane %v4608, %v4615
    %v4618 = vunpack.c.l.s4 1966171168
    %v4619 = vunpack.c.0.s8 %v4618
    %v4620 = vlaneseq
    %v4621 = vshrl.u32 %v4620, 7
    %v4622 = vsub.s32 %v4619, %v4621
    %v4623 = vrot.slane %v4609, %v4622
    %v4624 = vcombine.low %v4616, %v4623
    %v4625 = vcombine.low %v4438, %v4439
    %v4626 = vcombine.low %v4440, %v4441
    %v4627 = vcombine.low %v4442, %v4443
    %v4628 = vcombine.low %v4444, %v4445
    %v4630 = vunpack.c.l.s4 1966171168
    %v4631 = vunpack.c.0.s8 %v4630
    %v4632 = vlaneseq
    %v4633 = vshrl.u32 %v4632, 7
    %v4634 = vsub.s32 %v4631, %v4633
    %v4635 = vrot.slane %v4625, %v4634
    %v4637 = vunpack.c.l.s4 1966171168
    %v4638 = vunpack.c.0.s8 %v4637
    %v4639 = vlaneseq
    %v4640 = vshrl.u32 %v4639, 7
    %v4641 = vsub.s32 %v4638, %v4640
    %v4642 = vrot.slane %v4626, %v4641
    %v4644 = vunpack.c.l.s4 1966171168
    %v4645 = vunpack.c.0.s8 %v4644
    %v4646 = vlaneseq
    %v4647 = vshrl.u32 %v4646, 7
    %v4648 = vsub.s32 %v4645, %v4647
    %v4649 = vrot.slane %v4627, %v4648
    %v4651 = vunpack.c.l.s4 1966171168
    %v4652 = vunpack.c.0.s8 %v4651
    %v4653 = vlaneseq
    %v4654 = vshrl.u32 %v4653, 7
    %v4655 = vsub.s32 %v4652, %v4654
    %v4656 = vrot.slane %v4628, %v4655
    %v4657 = vcombine.low %v4635, %v4642
    %v4658 = vcombine.low %v4649, %v4656
    %v4660 = vunpack.c.l.s4 1966171168
    %v4661 = vunpack.c.0.s8 %v4660
    %v4662 = vlaneseq
    %v4663 = vshrl.u32 %v4662, 7
    %v4664 = vsub.s32 %v4661, %v4663
    %v4665 = vrot.slane %v4657, %v4664
    %v4667 = vunpack.c.l.s4 1966171168
    %v4668 = vunpack.c.0.s8 %v4667
    %v4669 = vlaneseq
    %v4670 = vshrl.u32 %v4669, 7
    %v4671 = vsub.s32 %v4668, %v4670
    %v4672 = vrot.slane %v4658, %v4671
    %v4673 = vcombine.low %v4665, %v4672
    %v4678 = vmul.f32 %v4378, %v4526
    %v4679 = vmul.f32 %v4379, %v4575
    %v4680 = vmul.f32 %v4380, %v4624
    %v4681 = vmul.f32 %v4381, %v4673
    %v4686 = vlaneseq
    %v4687 = vshrl.u32 %v4686, 7
    %v4688 = vsub.s32 0, %v4687
    %v4689 = vrot.slane %v4678, %v4688
    %v4690 = vlaneseq
    %v4691 = vshrl.u32 %v4690, 7
    %v4692 = vsub.s32 1, %v4691
    %v4693 = vrot.slane %v4678, %v4692
    %v4694 = vlaneseq
    %v4695 = vshrl.u32 %v4694, 7
    %v4696 = vsub.s32 2, %v4695
    %v4697 = vrot.slane %v4678, %v4696
    %v4698 = vlaneseq
    %v4699 = vshrl.u32 %v4698, 7
    %v4700 = vsub.s32 3, %v4699
    %v4701 = vrot.slane %v4678, %v4700
    %v4702 = vlaneseq
    %v4703 = vshrl.u32 %v4702, 7
    %v4704 = vsub.s32 4, %v4703
    %v4705 = vrot.slane %v4678, %v4704
    %v4706 = vlaneseq
    %v4707 = vshrl.u32 %v4706, 7
    %v4708 = vsub.s32 5, %v4707
    %v4709 = vrot.slane %v4678, %v4708
    %v4710 = vlaneseq
    %v4711 = vshrl.u32 %v4710, 7
    %v4712 = vsub.s32 6, %v4711
    %v4713 = vrot.slane %v4678, %v4712
    %v4714 = vlaneseq
    %v4715 = vshrl.u32 %v4714, 7
    %v4716 = vsub.s32 7, %v4715
    %v4717 = vrot.slane %v4678, %v4716
    %v4718 = vlaneseq
    %v4719 = vshrl.u32 %v4718, 7
    %v4720 = vsub.s32 0, %v4719
    %v4721 = vrot.slane %v4679, %v4720
    %v4722 = vlaneseq
    %v4723 = vshrl.u32 %v4722, 7
    %v4724 = vsub.s32 1, %v4723
    %v4725 = vrot.slane %v4679, %v4724
    %v4726 = vlaneseq
    %v4727 = vshrl.u32 %v4726, 7
    %v4728 = vsub.s32 2, %v4727
    %v4729 = vrot.slane %v4679, %v4728
    %v4730 = vlaneseq
    %v4731 = vshrl.u32 %v4730, 7
    %v4732 = vsub.s32 3, %v4731
    %v4733 = vrot.slane %v4679, %v4732
    %v4734 = vlaneseq
    %v4735 = vshrl.u32 %v4734, 7
    %v4736 = vsub.s32 4, %v4735
    %v4737 = vrot.slane %v4679, %v4736
    %v4738 = vlaneseq
    %v4739 = vshrl.u32 %v4738, 7
    %v4740 = vsub.s32 5, %v4739
    %v4741 = vrot.slane %v4679, %v4740
    %v4742 = vlaneseq
    %v4743 = vshrl.u32 %v4742, 7
    %v4744 = vsub.s32 6, %v4743
    %v4745 = vrot.slane %v4679, %v4744
    %v4746 = vlaneseq
    %v4747 = vshrl.u32 %v4746, 7
    %v4748 = vsub.s32 7, %v4747
    %v4749 = vrot.slane %v4679, %v4748
    %v4750 = vlaneseq
    %v4751 = vshrl.u32 %v4750, 7
    %v4752 = vsub.s32 0, %v4751
    %v4753 = vrot.slane %v4680, %v4752
    %v4754 = vlaneseq
    %v4755 = vshrl.u32 %v4754, 7
    %v4756 = vsub.s32 1, %v4755
    %v4757 = vrot.slane %v4680, %v4756
    %v4758 = vlaneseq
    %v4759 = vshrl.u32 %v4758, 7
    %v4760 = vsub.s32 2, %v4759
    %v4761 = vrot.slane %v4680, %v4760
    %v4762 = vlaneseq
    %v4763 = vshrl.u32 %v4762, 7
    %v4764 = vsub.s32 3, %v4763
    %v4765 = vrot.slane %v4680, %v4764
    %v4766 = vlaneseq
    %v4767 = vshrl.u32 %v4766, 7
    %v4768 = vsub.s32 4, %v4767
    %v4769 = vrot.slane %v4680, %v4768
    %v4770 = vlaneseq
    %v4771 = vshrl.u32 %v4770, 7
    %v4772 = vsub.s32 5, %v4771
    %v4773 = vrot.slane %v4680, %v4772
    %v4774 = vlaneseq
    %v4775 = vshrl.u32 %v4774, 7
    %v4776 = vsub.s32 6, %v4775
    %v4777 = vrot.slane %v4680, %v4776
    %v4778 = vlaneseq
    %v4779 = vshrl.u32 %v4778, 7
    %v4780 = vsub.s32 7, %v4779
    %v4781 = vrot.slane %v4680, %v4780
    %v4782 = vlaneseq
    %v4783 = vshrl.u32 %v4782, 7
    %v4784 = vsub.s32 0, %v4783
    %v4785 = vrot.slane %v4681, %v4784
    %v4786 = vlaneseq
    %v4787 = vshrl.u32 %v4786, 7
    %v4788 = vsub.s32 1, %v4787
    %v4789 = vrot.slane %v4681, %v4788
    %v4790 = vlaneseq
    %v4791 = vshrl.u32 %v4790, 7
    %v4792 = vsub.s32 2, %v4791
    %v4793 = vrot.slane %v4681, %v4792
    %v4794 = vlaneseq
    %v4795 = vshrl.u32 %v4794, 7
    %v4796 = vsub.s32 3, %v4795
    %v4797 = vrot.slane %v4681, %v4796
    %v4798 = vlaneseq
    %v4799 = vshrl.u32 %v4798, 7
    %v4800 = vsub.s32 4, %v4799
    %v4801 = vrot.slane %v4681, %v4800
    %v4802 = vlaneseq
    %v4803 = vshrl.u32 %v4802, 7
    %v4804 = vsub.s32 5, %v4803
    %v4805 = vrot.slane %v4681, %v4804
    %v4806 = vlaneseq
    %v4807 = vshrl.u32 %v4806, 7
    %v4808 = vsub.s32 6, %v4807
    %v4809 = vrot.slane %v4681, %v4808
    %v4810 = vlaneseq
    %v4811 = vshrl.u32 %v4810, 7
    %v4812 = vsub.s32 7, %v4811
    %v4813 = vrot.slane %v4681, %v4812
    %v4846 = vmul.f32 %v4058, %v4689
    %v4847 = vmul.f32 %v4059, %v4693
    %v4848 = vmul.f32 %v4060, %v4697
    %v4849 = vmul.f32 %v4061, %v4701
    %v4850 = vmul.f32 %v4062, %v4705
    %v4851 = vmul.f32 %v4063, %v4709
    %v4852 = vmul.f32 %v4064, %v4713
    %v4853 = vmul.f32 %v4065, %v4717
    %v4854 = vmul.f32 %v4066, %v4721
    %v4855 = vmul.f32 %v4067, %v4725
    %v4856 = vmul.f32 %v4068, %v4729
    %v4857 = vmul.f32 %v4069, %v4733
    %v4858 = vmul.f32 %v4070, %v4737
    %v4859 = vmul.f32 %v4071, %v4741
    %v4860 = vmul.f32 %v4072, %v4745
    %v4861 = vmul.f32 %v4073, %v4749
    %v4862 = vmul.f32 %v4074, %v4753
    %v4863 = vmul.f32 %v4075, %v4757
    %v4864 = vmul.f32 %v4076, %v4761
    %v4865 = vmul.f32 %v4077, %v4765
    %v4866 = vmul.f32 %v4078, %v4769
    %v4867 = vmul.f32 %v4079, %v4773
    %v4868 = vmul.f32 %v4080, %v4777
    %v4869 = vmul.f32 %v4081, %v4781
    %v4870 = vmul.f32 %v4082, %v4785
    %v4871 = vmul.f32 %v4083, %v4789
    %v4872 = vmul.f32 %v4084, %v4793
    %v4873 = vmul.f32 %v4085, %v4797
    %v4874 = vmul.f32 %v4086, %v4801
    %v4875 = vmul.f32 %v4087, %v4805
    %v4876 = vmul.f32 %v4088, %v4809
    %v4877 = vmul.f32 %v4089, %v4813
    %v4878 = vld [vmem:[#allocation7] sm:$0xff]
    %v4879 = vld [vmem:[#allocation7 + $0x8] sm:$0xff]
    %v4880 = vld [vmem:[#allocation7 + $0x10] sm:$0xff]
    %v4881 = vld [vmem:[#allocation7 + $0x18] sm:$0xff]
    %v4886 = vlaneseq
    %v4887 = vshrl.u32 %v4886, 7
    %v4888 = vsub.s32 0, %v4887
    %v4889 = vrot.slane %v4878, %v4888
    %v4890 = vlaneseq
    %v4891 = vshrl.u32 %v4890, 7
    %v4892 = vsub.s32 1, %v4891
    %v4893 = vrot.slane %v4878, %v4892
    %v4894 = vlaneseq
    %v4895 = vshrl.u32 %v4894, 7
    %v4896 = vsub.s32 2, %v4895
    %v4897 = vrot.slane %v4878, %v4896
    %v4898 = vlaneseq
    %v4899 = vshrl.u32 %v4898, 7
    %v4900 = vsub.s32 3, %v4899
    %v4901 = vrot.slane %v4878, %v4900
    %v4902 = vlaneseq
    %v4903 = vshrl.u32 %v4902, 7
    %v4904 = vsub.s32 4, %v4903
    %v4905 = vrot.slane %v4878, %v4904
    %v4906 = vlaneseq
    %v4907 = vshrl.u32 %v4906, 7
    %v4908 = vsub.s32 5, %v4907
    %v4909 = vrot.slane %v4878, %v4908
    %v4910 = vlaneseq
    %v4911 = vshrl.u32 %v4910, 7
    %v4912 = vsub.s32 6, %v4911
    %v4913 = vrot.slane %v4878, %v4912
    %v4914 = vlaneseq
    %v4915 = vshrl.u32 %v4914, 7
    %v4916 = vsub.s32 7, %v4915
    %v4917 = vrot.slane %v4878, %v4916
    %v4918 = vlaneseq
    %v4919 = vshrl.u32 %v4918, 7
    %v4920 = vsub.s32 0, %v4919
    %v4921 = vrot.slane %v4879, %v4920
    %v4922 = vlaneseq
    %v4923 = vshrl.u32 %v4922, 7
    %v4924 = vsub.s32 1, %v4923
    %v4925 = vrot.slane %v4879, %v4924
    %v4926 = vlaneseq
    %v4927 = vshrl.u32 %v4926, 7
    %v4928 = vsub.s32 2, %v4927
    %v4929 = vrot.slane %v4879, %v4928
    %v4930 = vlaneseq
    %v4931 = vshrl.u32 %v4930, 7
    %v4932 = vsub.s32 3, %v4931
    %v4933 = vrot.slane %v4879, %v4932
    %v4934 = vlaneseq
    %v4935 = vshrl.u32 %v4934, 7
    %v4936 = vsub.s32 4, %v4935
    %v4937 = vrot.slane %v4879, %v4936
    %v4938 = vlaneseq
    %v4939 = vshrl.u32 %v4938, 7
    %v4940 = vsub.s32 5, %v4939
    %v4941 = vrot.slane %v4879, %v4940
    %v4942 = vlaneseq
    %v4943 = vshrl.u32 %v4942, 7
    %v4944 = vsub.s32 6, %v4943
    %v4945 = vrot.slane %v4879, %v4944
    %v4946 = vlaneseq
    %v4947 = vshrl.u32 %v4946, 7
    %v4948 = vsub.s32 7, %v4947
    %v4949 = vrot.slane %v4879, %v4948
    %v4950 = vlaneseq
    %v4951 = vshrl.u32 %v4950, 7
    %v4952 = vsub.s32 0, %v4951
    %v4953 = vrot.slane %v4880, %v4952
    %v4954 = vlaneseq
    %v4955 = vshrl.u32 %v4954, 7
    %v4956 = vsub.s32 1, %v4955
    %v4957 = vrot.slane %v4880, %v4956
    %v4958 = vlaneseq
    %v4959 = vshrl.u32 %v4958, 7
    %v4960 = vsub.s32 2, %v4959
    %v4961 = vrot.slane %v4880, %v4960
    %v4962 = vlaneseq
    %v4963 = vshrl.u32 %v4962, 7
    %v4964 = vsub.s32 3, %v4963
    %v4965 = vrot.slane %v4880, %v4964
    %v4966 = vlaneseq
    %v4967 = vshrl.u32 %v4966, 7
    %v4968 = vsub.s32 4, %v4967
    %v4969 = vrot.slane %v4880, %v4968
    %v4970 = vlaneseq
    %v4971 = vshrl.u32 %v4970, 7
    %v4972 = vsub.s32 5, %v4971
    %v4973 = vrot.slane %v4880, %v4972
    %v4974 = vlaneseq
    %v4975 = vshrl.u32 %v4974, 7
    %v4976 = vsub.s32 6, %v4975
    %v4977 = vrot.slane %v4880, %v4976
    %v4978 = vlaneseq
    %v4979 = vshrl.u32 %v4978, 7
    %v4980 = vsub.s32 7, %v4979
    %v4981 = vrot.slane %v4880, %v4980
    %v4982 = vlaneseq
    %v4983 = vshrl.u32 %v4982, 7
    %v4984 = vsub.s32 0, %v4983
    %v4985 = vrot.slane %v4881, %v4984
    %v4986 = vlaneseq
    %v4987 = vshrl.u32 %v4986, 7
    %v4988 = vsub.s32 1, %v4987
    %v4989 = vrot.slane %v4881, %v4988
    %v4990 = vlaneseq
    %v4991 = vshrl.u32 %v4990, 7
    %v4992 = vsub.s32 2, %v4991
    %v4993 = vrot.slane %v4881, %v4992
    %v4994 = vlaneseq
    %v4995 = vshrl.u32 %v4994, 7
    %v4996 = vsub.s32 3, %v4995
    %v4997 = vrot.slane %v4881, %v4996
    %v4998 = vlaneseq
    %v4999 = vshrl.u32 %v4998, 7
    %v5000 = vsub.s32 4, %v4999
    %v5001 = vrot.slane %v4881, %v5000
    %v5002 = vlaneseq
    %v5003 = vshrl.u32 %v5002, 7
    %v5004 = vsub.s32 5, %v5003
    %v5005 = vrot.slane %v4881, %v5004
    %v5006 = vlaneseq
    %v5007 = vshrl.u32 %v5006, 7
    %v5008 = vsub.s32 6, %v5007
    %v5009 = vrot.slane %v4881, %v5008
    %v5010 = vlaneseq
    %v5011 = vshrl.u32 %v5010, 7
    %v5012 = vsub.s32 7, %v5011
    %v5013 = vrot.slane %v4881, %v5012
    %v5046 = vadd.f32 %v4846, %v4889
    %v5047 = vadd.f32 %v4847, %v4893
    %v5048 = vadd.f32 %v4848, %v4897
    %v5049 = vadd.f32 %v4849, %v4901
    %v5050 = vadd.f32 %v4850, %v4905
    %v5051 = vadd.f32 %v4851, %v4909
    %v5052 = vadd.f32 %v4852, %v4913
    %v5053 = vadd.f32 %v4853, %v4917
    %v5054 = vadd.f32 %v4854, %v4921
    %v5055 = vadd.f32 %v4855, %v4925
    %v5056 = vadd.f32 %v4856, %v4929
    %v5057 = vadd.f32 %v4857, %v4933
    %v5058 = vadd.f32 %v4858, %v4937
    %v5059 = vadd.f32 %v4859, %v4941
    %v5060 = vadd.f32 %v4860, %v4945
    %v5061 = vadd.f32 %v4861, %v4949
    %v5062 = vadd.f32 %v4862, %v4953
    %v5063 = vadd.f32 %v4863, %v4957
    %v5064 = vadd.f32 %v4864, %v4961
    %v5065 = vadd.f32 %v4865, %v4965
    %v5066 = vadd.f32 %v4866, %v4969
    %v5067 = vadd.f32 %v4867, %v4973
    %v5068 = vadd.f32 %v4868, %v4977
    %v5069 = vadd.f32 %v4869, %v4981
    %v5070 = vadd.f32 %v4870, %v4985
    %v5071 = vadd.f32 %v4871, %v4989
    %v5072 = vadd.f32 %v4872, %v4993
    %v5073 = vadd.f32 %v4873, %v4997
    %v5074 = vadd.f32 %v4874, %v5001
    %v5075 = vadd.f32 %v4875, %v5005
    %v5076 = vadd.f32 %v4876, %v5009
    %v5077 = vadd.f32 %v4877, %v5013
    %vm5078 = vcmp.ge.f32.partialorder %v5046, 0.0
    %vm5079 = vcmp.ge.f32.partialorder %v5047, 0.0
    %vm5080 = vcmp.ge.f32.partialorder %v5048, 0.0
    %vm5081 = vcmp.ge.f32.partialorder %v5049, 0.0
    %vm5082 = vcmp.ge.f32.partialorder %v5050, 0.0
    %vm5083 = vcmp.ge.f32.partialorder %v5051, 0.0
    %vm5084 = vcmp.ge.f32.partialorder %v5052, 0.0
    %vm5085 = vcmp.ge.f32.partialorder %v5053, 0.0
    %vm5086 = vcmp.ge.f32.partialorder %v5054, 0.0
    %vm5087 = vcmp.ge.f32.partialorder %v5055, 0.0
    %vm5088 = vcmp.ge.f32.partialorder %v5056, 0.0
    %vm5089 = vcmp.ge.f32.partialorder %v5057, 0.0
    %vm5090 = vcmp.ge.f32.partialorder %v5058, 0.0
    %vm5091 = vcmp.ge.f32.partialorder %v5059, 0.0
    %vm5092 = vcmp.ge.f32.partialorder %v5060, 0.0
    %vm5093 = vcmp.ge.f32.partialorder %v5061, 0.0
    %vm5094 = vcmp.ge.f32.partialorder %v5062, 0.0
    %vm5095 = vcmp.ge.f32.partialorder %v5063, 0.0
    %vm5096 = vcmp.ge.f32.partialorder %v5064, 0.0
    %vm5097 = vcmp.ge.f32.partialorder %v5065, 0.0
    %vm5098 = vcmp.ge.f32.partialorder %v5066, 0.0
    %vm5099 = vcmp.ge.f32.partialorder %v5067, 0.0
    %vm5100 = vcmp.ge.f32.partialorder %v5068, 0.0
    %vm5101 = vcmp.ge.f32.partialorder %v5069, 0.0
    %vm5102 = vcmp.ge.f32.partialorder %v5070, 0.0
    %vm5103 = vcmp.ge.f32.partialorder %v5071, 0.0
    %vm5104 = vcmp.ge.f32.partialorder %v5072, 0.0
    %vm5105 = vcmp.ge.f32.partialorder %v5073, 0.0
    %vm5106 = vcmp.ge.f32.partialorder %v5074, 0.0
    %vm5107 = vcmp.ge.f32.partialorder %v5075, 0.0
    %vm5108 = vcmp.ge.f32.partialorder %v5076, 0.0
    %vm5109 = vcmp.ge.f32.partialorder %v5077, 0.0
    %v5110 = vmul.f32 %v5046, 0.01
    %v5111 = vmul.f32 %v5047, 0.01
    %v5112 = vmul.f32 %v5048, 0.01
    %v5113 = vmul.f32 %v5049, 0.01
    %v5114 = vmul.f32 %v5050, 0.01
    %v5115 = vmul.f32 %v5051, 0.01
    %v5116 = vmul.f32 %v5052, 0.01
    %v5117 = vmul.f32 %v5053, 0.01
    %v5118 = vmul.f32 %v5054, 0.01
    %v5119 = vmul.f32 %v5055, 0.01
    %v5120 = vmul.f32 %v5056, 0.01
    %v5121 = vmul.f32 %v5057, 0.01
    %v5122 = vmul.f32 %v5058, 0.01
    %v5123 = vmul.f32 %v5059, 0.01
    %v5124 = vmul.f32 %v5060, 0.01
    %v5125 = vmul.f32 %v5061, 0.01
    %v5126 = vmul.f32 %v5062, 0.01
    %v5127 = vmul.f32 %v5063, 0.01
    %v5128 = vmul.f32 %v5064, 0.01
    %v5129 = vmul.f32 %v5065, 0.01
    %v5130 = vmul.f32 %v5066, 0.01
    %v5131 = vmul.f32 %v5067, 0.01
    %v5132 = vmul.f32 %v5068, 0.01
    %v5133 = vmul.f32 %v5069, 0.01
    %v5134 = vmul.f32 %v5070, 0.01
    %v5135 = vmul.f32 %v5071, 0.01
    %v5136 = vmul.f32 %v5072, 0.01
    %v5137 = vmul.f32 %v5073, 0.01
    %v5138 = vmul.f32 %v5074, 0.01
    %v5139 = vmul.f32 %v5075, 0.01
    %v5140 = vmul.f32 %v5076, 0.01
    %v5141 = vmul.f32 %v5077, 0.01
    %v5142 = vsel %vm5078, %v5046, %v5110
    %v5143 = vsel %vm5079, %v5047, %v5111
    %v5144 = vsel %vm5080, %v5048, %v5112
    %v5145 = vsel %vm5081, %v5049, %v5113
    %v5146 = vsel %vm5082, %v5050, %v5114
    %v5147 = vsel %vm5083, %v5051, %v5115
    %v5148 = vsel %vm5084, %v5052, %v5116
    %v5149 = vsel %vm5085, %v5053, %v5117
    %v5150 = vsel %vm5086, %v5054, %v5118
    %v5151 = vsel %vm5087, %v5055, %v5119
    %v5152 = vsel %vm5088, %v5056, %v5120
    %v5153 = vsel %vm5089, %v5057, %v5121
    %v5154 = vsel %vm5090, %v5058, %v5122
    %v5155 = vsel %vm5091, %v5059, %v5123
    %v5156 = vsel %vm5092, %v5060, %v5124
    %v5157 = vsel %vm5093, %v5061, %v5125
    %v5158 = vsel %vm5094, %v5062, %v5126
    %v5159 = vsel %vm5095, %v5063, %v5127
    %v5160 = vsel %vm5096, %v5064, %v5128
    %v5161 = vsel %vm5097, %v5065, %v5129
    %v5162 = vsel %vm5098, %v5066, %v5130
    %v5163 = vsel %vm5099, %v5067, %v5131
    %v5164 = vsel %vm5100, %v5068, %v5132
    %v5165 = vsel %vm5101, %v5069, %v5133
    %v5166 = vsel %vm5102, %v5070, %v5134
    %v5167 = vsel %vm5103, %v5071, %v5135
    %v5168 = vsel %vm5104, %v5072, %v5136
    %v5169 = vsel %vm5105, %v5073, %v5137
    %v5170 = vsel %vm5106, %v5074, %v5138
    %v5171 = vsel %vm5107, %v5075, %v5139
    %v5172 = vsel %vm5108, %v5076, %v5140
    %v5173 = vsel %vm5109, %v5077, %v5141
    %v5206 = vcombine.low %v5142, %v5143
    %v5207 = vcombine.low %v5144, %v5145
    %v5208 = vcombine.low %v5146, %v5147
    %v5209 = vcombine.low %v5148, %v5149
    %v5210 = vcombine.low %v5150, %v5151
    %v5211 = vcombine.low %v5152, %v5153
    %v5212 = vcombine.low %v5154, %v5155
    %v5213 = vcombine.low %v5156, %v5157
    %v5214 = vcombine.low %v5158, %v5159
    %v5215 = vcombine.low %v5160, %v5161
    %v5216 = vcombine.low %v5162, %v5163
    %v5217 = vcombine.low %v5164, %v5165
    %v5218 = vcombine.low %v5166, %v5167
    %v5219 = vcombine.low %v5168, %v5169
    %v5220 = vcombine.low %v5170, %v5171
    %v5221 = vcombine.low %v5172, %v5173
    %5238 = vst [vmem:[%s4] sm:$0xff] %v5206
    %5239 = vst [vmem:[%s4 + $0x8] sm:$0xff] %v5207
    %5240 = vst [vmem:[%s4 + $0x10] sm:$0xff] %v5208
    %5241 = vst [vmem:[%s4 + $0x18] sm:$0xff] %v5209
    %5242 = vst [vmem:[%s4 + $0x20] sm:$0xff] %v5210
    %5243 = vst [vmem:[%s4 + $0x28] sm:$0xff] %v5211
    %5244 = vst [vmem:[%s4 + $0x30] sm:$0xff] %v5212
    %5245 = vst [vmem:[%s4 + $0x38] sm:$0xff] %v5213
    %5246 = vst [vmem:[%s4 + $0x40] sm:$0xff] %v5214
    %5247 = vst [vmem:[%s4 + $0x48] sm:$0xff] %v5215
    %5248 = vst [vmem:[%s4 + $0x50] sm:$0xff] %v5216
    %5249 = vst [vmem:[%s4 + $0x58] sm:$0xff] %v5217
    %5250 = vst [vmem:[%s4 + $0x60] sm:$0xff] %v5218
    %5251 = vst [vmem:[%s4 + $0x68] sm:$0xff] %v5219
    %5252 = vst [vmem:[%s4 + $0x70] sm:$0xff] %v5220
    %5253 = vst [vmem:[%s4 + $0x78] sm:$0xff] %v5221
    // Predicated region
    $region34: #{decoder_forward.4} parent=1 // pred_check
      _
    $region35: #{decoder_forward.4} parent=1 // pred_check_branch
      %5255 = sbr.rel (0) target = $region37
    $region36: #{decoder_forward.4} parent=1 // pred_region
      _
    $region37: #{decoder_forward.4} parent=1 // pred_fallthru
      _
    // Predicated region
    $region38: #{decoder_forward.4} parent=1 // pred_check
      _
    $region39: #{decoder_forward.4} parent=1 // pred_check_branch
      %5257 = sbr.rel (0) target = $region41
    $region40: #{decoder_forward.4} parent=1 // pred_region
      _
    $region41: #{decoder_forward.4} parent=1 // pred_fallthru
      _
    %5258 = vsyncpa [#allocation3], 1
    %5259 = vsyncpa [#allocation5], 1
    %5260 = vsyncpa [#allocation8], 1

// kernel: decoder_forward.7
$region0: #{decoder_forward.7}
  #allocation0 [shape = 'u32[]', space=smem, size = 0x4, offset = 0x4, fixed_abs, tag = 'smem constant byte address 0x4 - core index']
  #allocation1 [shape = 'u32[144,128]{1,0:T(1,128)}', space=vmem, size = 0x12000, scoped, tag = 'internal scratch']
  %s0 = inlined_call_operand.vmem [shape: f32[1024,32], index: 0, kind: input, shape index: {}]
  %s1 = inlined_call_operand.vmem [shape: f32[1,32], index: 1, kind: input, shape index: {}]
  %s2 = inlined_call_operand.vmem [shape: f32[1,32], index: 2, kind: input, shape index: {}]
  %s3 = inlined_call_operand.vmem [shape: bf16[32,128], index: 3, kind: input, shape index: {}]
  %s4 = inlined_call_operand.vmem [shape: f32[1024,128], index: 4, kind: output, shape index: {}]
  %s5 = sld [smem:[#allocation0]]
  $region26: #{decoder_forward.7} parent=0
    _
  %s7 = ssub.s32 1, %s5
  %s8 = scalar_select 0, %s7, %s5
  // Predicated region
  $region2: #{decoder_forward.7} parent=0 // pred_check
    _
  $region3: #{decoder_forward.7} parent=0 // pred_check_branch
    %10 = sbr.rel (0) target = $region5
  $region4: #{decoder_forward.7} parent=0 // pred_region
    _
  $region5: #{decoder_forward.7} parent=0 // pred_fallthru
    _
  // Predicated region
  $region6: #{decoder_forward.7} parent=0 // pred_check
    _
  $region7: #{decoder_forward.7} parent=0 // pred_check_branch
    %12 = sbr.rel (0) target = $region9
  $region8: #{decoder_forward.7} parent=0 // pred_region
    _
  $region9: #{decoder_forward.7} parent=0 // pred_fallthru
    _
  // Predicated region
  $region10: #{decoder_forward.7} parent=0 // pred_check
    _
  $region11: #{decoder_forward.7} parent=0 // pred_check_branch
    %14 = sbr.rel (0) target = $region13
  $region12: #{decoder_forward.7} parent=0 // pred_region
    _
  $region13: #{decoder_forward.7} parent=0 // pred_fallthru
    _
  // Predicated region
  $region14: #{decoder_forward.7} parent=0 // pred_check
    _
  $region15: #{decoder_forward.7} parent=0 // pred_check_branch
    %16 = sbr.rel (0) target = $region17
  $region16: #{decoder_forward.7} parent=0 // pred_region
    _
  $region17: #{decoder_forward.7} parent=0 // pred_fallthru
    _
  %v18 = vld [vmem:[%s0] sm:$0xff]
  %v19 = vld [vmem:[%s0 + $0x8] sm:$0xff]
  %v20 = vld [vmem:[%s0 + $0x10] sm:$0xff]
  %v21 = vld [vmem:[%s0 + $0x18] sm:$0xff]
  %v22 = vld [vmem:[%s0 + $0x20] sm:$0xff]
  %v23 = vld [vmem:[%s0 + $0x28] sm:$0xff]
  %v24 = vld [vmem:[%s0 + $0x30] sm:$0xff]
  %v25 = vld [vmem:[%s0 + $0x38] sm:$0xff]
  %v26 = vld [vmem:[%s0 + $0x40] sm:$0xff]
  %v27 = vld [vmem:[%s0 + $0x48] sm:$0xff]
  %v28 = vld [vmem:[%s0 + $0x50] sm:$0xff]
  %v29 = vld [vmem:[%s0 + $0x58] sm:$0xff]
  %v30 = vld [vmem:[%s0 + $0x60] sm:$0xff]
  %v31 = vld [vmem:[%s0 + $0x68] sm:$0xff]
  %v32 = vld [vmem:[%s0 + $0x70] sm:$0xff]
  %v33 = vld [vmem:[%s0 + $0x78] sm:$0xff]
  %v34 = vld [vmem:[%s0 + $0x80] sm:$0xff]
  %v35 = vld [vmem:[%s0 + $0x88] sm:$0xff]
  %v36 = vld [vmem:[%s0 + $0x90] sm:$0xff]
  %v37 = vld [vmem:[%s0 + $0x98] sm:$0xff]
  %v38 = vld [vmem:[%s0 + $0xa0] sm:$0xff]
  %v39 = vld [vmem:[%s0 + $0xa8] sm:$0xff]
  %v40 = vld [vmem:[%s0 + $0xb0] sm:$0xff]
  %v41 = vld [vmem:[%s0 + $0xb8] sm:$0xff]
  %v42 = vld [vmem:[%s0 + $0xc0] sm:$0xff]
  %v43 = vld [vmem:[%s0 + $0xc8] sm:$0xff]
  %v44 = vld [vmem:[%s0 + $0xd0] sm:$0xff]
  %v45 = vld [vmem:[%s0 + $0xd8] sm:$0xff]
  %v46 = vld [vmem:[%s0 + $0xe0] sm:$0xff]
  %v47 = vld [vmem:[%s0 + $0xe8] sm:$0xff]
  %v48 = vld [vmem:[%s0 + $0xf0] sm:$0xff]
  %v49 = vld [vmem:[%s0 + $0xf8] sm:$0xff]
  %v50 = vld [vmem:[%s0 + $0x100] sm:$0xff]
  %v51 = vld [vmem:[%s0 + $0x108] sm:$0xff]
  %v52 = vld [vmem:[%s0 + $0x110] sm:$0xff]
  %v53 = vld [vmem:[%s0 + $0x118] sm:$0xff]
  %v54 = vld [vmem:[%s0 + $0x120] sm:$0xff]
  %v55 = vld [vmem:[%s0 + $0x128] sm:$0xff]
  %v56 = vld [vmem:[%s0 + $0x130] sm:$0xff]
  %v57 = vld [vmem:[%s0 + $0x138] sm:$0xff]
  %v58 = vld [vmem:[%s0 + $0x140] sm:$0xff]
  %v59 = vld [vmem:[%s0 + $0x148] sm:$0xff]
  %v60 = vld [vmem:[%s0 + $0x150] sm:$0xff]
  %v61 = vld [vmem:[%s0 + $0x158] sm:$0xff]
  %v62 = vld [vmem:[%s0 + $0x160] sm:$0xff]
  %v63 = vld [vmem:[%s0 + $0x168] sm:$0xff]
  %v64 = vld [vmem:[%s0 + $0x170] sm:$0xff]
  %v65 = vld [vmem:[%s0 + $0x178] sm:$0xff]
  %v66 = vld [vmem:[%s0 + $0x180] sm:$0xff]
  %v67 = vld [vmem:[%s0 + $0x188] sm:$0xff]
  %v68 = vld [vmem:[%s0 + $0x190] sm:$0xff]
  %v69 = vld [vmem:[%s0 + $0x198] sm:$0xff]
  %v70 = vld [vmem:[%s0 + $0x1a0] sm:$0xff]
  %v71 = vld [vmem:[%s0 + $0x1a8] sm:$0xff]
  %v72 = vld [vmem:[%s0 + $0x1b0] sm:$0xff]
  %v73 = vld [vmem:[%s0 + $0x1b8] sm:$0xff]
  %v74 = vld [vmem:[%s0 + $0x1c0] sm:$0xff]
  %v75 = vld [vmem:[%s0 + $0x1c8] sm:$0xff]
  %v76 = vld [vmem:[%s0 + $0x1d0] sm:$0xff]
  %v77 = vld [vmem:[%s0 + $0x1d8] sm:$0xff]
  %v78 = vld [vmem:[%s0 + $0x1e0] sm:$0xff]
  %v79 = vld [vmem:[%s0 + $0x1e8] sm:$0xff]
  %v80 = vld [vmem:[%s0 + $0x1f0] sm:$0xff]
  %v81 = vld [vmem:[%s0 + $0x1f8] sm:$0xff]
  %v82 = vld [vmem:[%s0 + $0x200] sm:$0xff]
  %v83 = vld [vmem:[%s0 + $0x208] sm:$0xff]
  %v84 = vld [vmem:[%s0 + $0x210] sm:$0xff]
  %v85 = vld [vmem:[%s0 + $0x218] sm:$0xff]
  %v86 = vld [vmem:[%s0 + $0x220] sm:$0xff]
  %v87 = vld [vmem:[%s0 + $0x228] sm:$0xff]
  %v88 = vld [vmem:[%s0 + $0x230] sm:$0xff]
  %v89 = vld [vmem:[%s0 + $0x238] sm:$0xff]
  %v90 = vld [vmem:[%s0 + $0x240] sm:$0xff]
  %v91 = vld [vmem:[%s0 + $0x248] sm:$0xff]
  %v92 = vld [vmem:[%s0 + $0x250] sm:$0xff]
  %v93 = vld [vmem:[%s0 + $0x258] sm:$0xff]
  %v94 = vld [vmem:[%s0 + $0x260] sm:$0xff]
  %v95 = vld [vmem:[%s0 + $0x268] sm:$0xff]
  %v96 = vld [vmem:[%s0 + $0x270] sm:$0xff]
  %v97 = vld [vmem:[%s0 + $0x278] sm:$0xff]
  %v98 = vld [vmem:[%s0 + $0x280] sm:$0xff]
  %v99 = vld [vmem:[%s0 + $0x288] sm:$0xff]
  %v100 = vld [vmem:[%s0 + $0x290] sm:$0xff]
  %v101 = vld [vmem:[%s0 + $0x298] sm:$0xff]
  %v102 = vld [vmem:[%s0 + $0x2a0] sm:$0xff]
  %v103 = vld [vmem:[%s0 + $0x2a8] sm:$0xff]
  %v104 = vld [vmem:[%s0 + $0x2b0] sm:$0xff]
  %v105 = vld [vmem:[%s0 + $0x2b8] sm:$0xff]
  %v106 = vld [vmem:[%s0 + $0x2c0] sm:$0xff]
  %v107 = vld [vmem:[%s0 + $0x2c8] sm:$0xff]
  %v108 = vld [vmem:[%s0 + $0x2d0] sm:$0xff]
  %v109 = vld [vmem:[%s0 + $0x2d8] sm:$0xff]
  %v110 = vld [vmem:[%s0 + $0x2e0] sm:$0xff]
  %v111 = vld [vmem:[%s0 + $0x2e8] sm:$0xff]
  %v112 = vld [vmem:[%s0 + $0x2f0] sm:$0xff]
  %v113 = vld [vmem:[%s0 + $0x2f8] sm:$0xff]
  %v114 = vld [vmem:[%s0 + $0x300] sm:$0xff]
  %v115 = vld [vmem:[%s0 + $0x308] sm:$0xff]
  %v116 = vld [vmem:[%s0 + $0x310] sm:$0xff]
  %v117 = vld [vmem:[%s0 + $0x318] sm:$0xff]
  %v118 = vld [vmem:[%s0 + $0x320] sm:$0xff]
  %v119 = vld [vmem:[%s0 + $0x328] sm:$0xff]
  %v120 = vld [vmem:[%s0 + $0x330] sm:$0xff]
  %v121 = vld [vmem:[%s0 + $0x338] sm:$0xff]
  %v122 = vld [vmem:[%s0 + $0x340] sm:$0xff]
  %v123 = vld [vmem:[%s0 + $0x348] sm:$0xff]
  %v124 = vld [vmem:[%s0 + $0x350] sm:$0xff]
  %v125 = vld [vmem:[%s0 + $0x358] sm:$0xff]
  %v126 = vld [vmem:[%s0 + $0x360] sm:$0xff]
  %v127 = vld [vmem:[%s0 + $0x368] sm:$0xff]
  %v128 = vld [vmem:[%s0 + $0x370] sm:$0xff]
  %v129 = vld [vmem:[%s0 + $0x378] sm:$0xff]
  %v130 = vld [vmem:[%s0 + $0x380] sm:$0xff]
  %v131 = vld [vmem:[%s0 + $0x388] sm:$0xff]
  %v132 = vld [vmem:[%s0 + $0x390] sm:$0xff]
  %v133 = vld [vmem:[%s0 + $0x398] sm:$0xff]
  %v134 = vld [vmem:[%s0 + $0x3a0] sm:$0xff]
  %v135 = vld [vmem:[%s0 + $0x3a8] sm:$0xff]
  %v136 = vld [vmem:[%s0 + $0x3b0] sm:$0xff]
  %v137 = vld [vmem:[%s0 + $0x3b8] sm:$0xff]
  %v138 = vld [vmem:[%s0 + $0x3c0] sm:$0xff]
  %v139 = vld [vmem:[%s0 + $0x3c8] sm:$0xff]
  %v140 = vld [vmem:[%s0 + $0x3d0] sm:$0xff]
  %v141 = vld [vmem:[%s0 + $0x3d8] sm:$0xff]
  %v142 = vld [vmem:[%s0 + $0x3e0] sm:$0xff]
  %v143 = vld [vmem:[%s0 + $0x3e8] sm:$0xff]
  %v144 = vld [vmem:[%s0 + $0x3f0] sm:$0xff]
  %v145 = vld [vmem:[%s0 + $0x3f8] sm:$0xff]
  %v146 = vld [vmem:[%s1] sm:$0x1]
  %v148 = vlaneseq
  %v149 = vshrl.u32 %v148, 7
  %v150 = vsub.s32 0, %v149
  %v151 = vrot.slane %v146, %v150
  %v153 = vmul.f32 %v18, %v151
  %v154 = vmul.f32 %v19, %v151
  %v155 = vmul.f32 %v20, %v151
  %v156 = vmul.f32 %v21, %v151
  %v157 = vmul.f32 %v22, %v151
  %v158 = vmul.f32 %v23, %v151
  %v159 = vmul.f32 %v24, %v151
  %v160 = vmul.f32 %v25, %v151
  %v161 = vmul.f32 %v26, %v151
  %v162 = vmul.f32 %v27, %v151
  %v163 = vmul.f32 %v28, %v151
  %v164 = vmul.f32 %v29, %v151
  %v165 = vmul.f32 %v30, %v151
  %v166 = vmul.f32 %v31, %v151
  %v167 = vmul.f32 %v32, %v151
  %v168 = vmul.f32 %v33, %v151
  %v169 = vmul.f32 %v34, %v151
  %v170 = vmul.f32 %v35, %v151
  %v171 = vmul.f32 %v36, %v151
  %v172 = vmul.f32 %v37, %v151
  %v173 = vmul.f32 %v38, %v151
  %v174 = vmul.f32 %v39, %v151
  %v175 = vmul.f32 %v40, %v151
  %v176 = vmul.f32 %v41, %v151
  %v177 = vmul.f32 %v42, %v151
  %v178 = vmul.f32 %v43, %v151
  %v179 = vmul.f32 %v44, %v151
  %v180 = vmul.f32 %v45, %v151
  %v181 = vmul.f32 %v46, %v151
  %v182 = vmul.f32 %v47, %v151
  %v183 = vmul.f32 %v48, %v151
  %v184 = vmul.f32 %v49, %v151
  %v185 = vmul.f32 %v50, %v151
  %v186 = vmul.f32 %v51, %v151
  %v187 = vmul.f32 %v52, %v151
  %v188 = vmul.f32 %v53, %v151
  %v189 = vmul.f32 %v54, %v151
  %v190 = vmul.f32 %v55, %v151
  %v191 = vmul.f32 %v56, %v151
  %v192 = vmul.f32 %v57, %v151
  %v193 = vmul.f32 %v58, %v151
  %v194 = vmul.f32 %v59, %v151
  %v195 = vmul.f32 %v60, %v151
  %v196 = vmul.f32 %v61, %v151
  %v197 = vmul.f32 %v62, %v151
  %v198 = vmul.f32 %v63, %v151
  %v199 = vmul.f32 %v64, %v151
  %v200 = vmul.f32 %v65, %v151
  %v201 = vmul.f32 %v66, %v151
  %v202 = vmul.f32 %v67, %v151
  %v203 = vmul.f32 %v68, %v151
  %v204 = vmul.f32 %v69, %v151
  %v205 = vmul.f32 %v70, %v151
  %v206 = vmul.f32 %v71, %v151
  %v207 = vmul.f32 %v72, %v151
  %v208 = vmul.f32 %v73, %v151
  %v209 = vmul.f32 %v74, %v151
  %v210 = vmul.f32 %v75, %v151
  %v211 = vmul.f32 %v76, %v151
  %v212 = vmul.f32 %v77, %v151
  %v213 = vmul.f32 %v78, %v151
  %v214 = vmul.f32 %v79, %v151
  %v215 = vmul.f32 %v80, %v151
  %v216 = vmul.f32 %v81, %v151
  %v217 = vmul.f32 %v82, %v151
  %v218 = vmul.f32 %v83, %v151
  %v219 = vmul.f32 %v84, %v151
  %v220 = vmul.f32 %v85, %v151
  %v221 = vmul.f32 %v86, %v151
  %v222 = vmul.f32 %v87, %v151
  %v223 = vmul.f32 %v88, %v151
  %v224 = vmul.f32 %v89, %v151
  %v225 = vmul.f32 %v90, %v151
  %v226 = vmul.f32 %v91, %v151
  %v227 = vmul.f32 %v92, %v151
  %v228 = vmul.f32 %v93, %v151
  %v229 = vmul.f32 %v94, %v151
  %v230 = vmul.f32 %v95, %v151
  %v231 = vmul.f32 %v96, %v151
  %v232 = vmul.f32 %v97, %v151
  %v233 = vmul.f32 %v98, %v151
  %v234 = vmul.f32 %v99, %v151
  %v235 = vmul.f32 %v100, %v151
  %v236 = vmul.f32 %v101, %v151
  %v237 = vmul.f32 %v102, %v151
  %v238 = vmul.f32 %v103, %v151
  %v239 = vmul.f32 %v104, %v151
  %v240 = vmul.f32 %v105, %v151
  %v241 = vmul.f32 %v106, %v151
  %v242 = vmul.f32 %v107, %v151
  %v243 = vmul.f32 %v108, %v151
  %v244 = vmul.f32 %v109, %v151
  %v245 = vmul.f32 %v110, %v151
  %v246 = vmul.f32 %v111, %v151
  %v247 = vmul.f32 %v112, %v151
  %v248 = vmul.f32 %v113, %v151
  %v249 = vmul.f32 %v114, %v151
  %v250 = vmul.f32 %v115, %v151
  %v251 = vmul.f32 %v116, %v151
  %v252 = vmul.f32 %v117, %v151
  %v253 = vmul.f32 %v118, %v151
  %v254 = vmul.f32 %v119, %v151
  %v255 = vmul.f32 %v120, %v151
  %v256 = vmul.f32 %v121, %v151
  %v257 = vmul.f32 %v122, %v151
  %v258 = vmul.f32 %v123, %v151
  %v259 = vmul.f32 %v124, %v151
  %v260 = vmul.f32 %v125, %v151
  %v261 = vmul.f32 %v126, %v151
  %v262 = vmul.f32 %v127, %v151
  %v263 = vmul.f32 %v128, %v151
  %v264 = vmul.f32 %v129, %v151
  %v265 = vmul.f32 %v130, %v151
  %v266 = vmul.f32 %v131, %v151
  %v267 = vmul.f32 %v132, %v151
  %v268 = vmul.f32 %v133, %v151
  %v269 = vmul.f32 %v134, %v151
  %v270 = vmul.f32 %v135, %v151
  %v271 = vmul.f32 %v136, %v151
  %v272 = vmul.f32 %v137, %v151
  %v273 = vmul.f32 %v138, %v151
  %v274 = vmul.f32 %v139, %v151
  %v275 = vmul.f32 %v140, %v151
  %v276 = vmul.f32 %v141, %v151
  %v277 = vmul.f32 %v142, %v151
  %v278 = vmul.f32 %v143, %v151
  %v279 = vmul.f32 %v144, %v151
  %v280 = vmul.f32 %v145, %v151
  %v281 = vld [vmem:[%s2] sm:$0x1]
  %v283 = vlaneseq
  %v284 = vshrl.u32 %v283, 7
  %v285 = vsub.s32 0, %v284
  %v286 = vrot.slane %v281, %v285
  %v288 = vadd.f32 %v153, %v286
  %v289 = vadd.f32 %v154, %v286
  %v290 = vadd.f32 %v155, %v286
  %v291 = vadd.f32 %v156, %v286
  %v292 = vadd.f32 %v157, %v286
  %v293 = vadd.f32 %v158, %v286
  %v294 = vadd.f32 %v159, %v286
  %v295 = vadd.f32 %v160, %v286
  %v296 = vadd.f32 %v161, %v286
  %v297 = vadd.f32 %v162, %v286
  %v298 = vadd.f32 %v163, %v286
  %v299 = vadd.f32 %v164, %v286
  %v300 = vadd.f32 %v165, %v286
  %v301 = vadd.f32 %v166, %v286
  %v302 = vadd.f32 %v167, %v286
  %v303 = vadd.f32 %v168, %v286
  %v304 = vadd.f32 %v169, %v286
  %v305 = vadd.f32 %v170, %v286
  %v306 = vadd.f32 %v171, %v286
  %v307 = vadd.f32 %v172, %v286
  %v308 = vadd.f32 %v173, %v286
  %v309 = vadd.f32 %v174, %v286
  %v310 = vadd.f32 %v175, %v286
  %v311 = vadd.f32 %v176, %v286
  %v312 = vadd.f32 %v177, %v286
  %v313 = vadd.f32 %v178, %v286
  %v314 = vadd.f32 %v179, %v286
  %v315 = vadd.f32 %v180, %v286
  %v316 = vadd.f32 %v181, %v286
  %v317 = vadd.f32 %v182, %v286
  %v318 = vadd.f32 %v183, %v286
  %v319 = vadd.f32 %v184, %v286
  %v320 = vadd.f32 %v185, %v286
  %v321 = vadd.f32 %v186, %v286
  %v322 = vadd.f32 %v187, %v286
  %v323 = vadd.f32 %v188, %v286
  %v324 = vadd.f32 %v189, %v286
  %v325 = vadd.f32 %v190, %v286
  %v326 = vadd.f32 %v191, %v286
  %v327 = vadd.f32 %v192, %v286
  %v328 = vadd.f32 %v193, %v286
  %v329 = vadd.f32 %v194, %v286
  %v330 = vadd.f32 %v195, %v286
  %v331 = vadd.f32 %v196, %v286
  %v332 = vadd.f32 %v197, %v286
  %v333 = vadd.f32 %v198, %v286
  %v334 = vadd.f32 %v199, %v286
  %v335 = vadd.f32 %v200, %v286
  %v336 = vadd.f32 %v201, %v286
  %v337 = vadd.f32 %v202, %v286
  %v338 = vadd.f32 %v203, %v286
  %v339 = vadd.f32 %v204, %v286
  %v340 = vadd.f32 %v205, %v286
  %v341 = vadd.f32 %v206, %v286
  %v342 = vadd.f32 %v207, %v286
  %v343 = vadd.f32 %v208, %v286
  %v344 = vadd.f32 %v209, %v286
  %v345 = vadd.f32 %v210, %v286
  %v346 = vadd.f32 %v211, %v286
  %v347 = vadd.f32 %v212, %v286
  %v348 = vadd.f32 %v213, %v286
  %v349 = vadd.f32 %v214, %v286
  %v350 = vadd.f32 %v215, %v286
  %v351 = vadd.f32 %v216, %v286
  %v352 = vadd.f32 %v217, %v286
  %v353 = vadd.f32 %v218, %v286
  %v354 = vadd.f32 %v219, %v286
  %v355 = vadd.f32 %v220, %v286
  %v356 = vadd.f32 %v221, %v286
  %v357 = vadd.f32 %v222, %v286
  %v358 = vadd.f32 %v223, %v286
  %v359 = vadd.f32 %v224, %v286
  %v360 = vadd.f32 %v225, %v286
  %v361 = vadd.f32 %v226, %v286
  %v362 = vadd.f32 %v227, %v286
  %v363 = vadd.f32 %v228, %v286
  %v364 = vadd.f32 %v229, %v286
  %v365 = vadd.f32 %v230, %v286
  %v366 = vadd.f32 %v231, %v286
  %v367 = vadd.f32 %v232, %v286
  %v368 = vadd.f32 %v233, %v286
  %v369 = vadd.f32 %v234, %v286
  %v370 = vadd.f32 %v235, %v286
  %v371 = vadd.f32 %v236, %v286
  %v372 = vadd.f32 %v237, %v286
  %v373 = vadd.f32 %v238, %v286
  %v374 = vadd.f32 %v239, %v286
  %v375 = vadd.f32 %v240, %v286
  %v376 = vadd.f32 %v241, %v286
  %v377 = vadd.f32 %v242, %v286
  %v378 = vadd.f32 %v243, %v286
  %v379 = vadd.f32 %v244, %v286
  %v380 = vadd.f32 %v245, %v286
  %v381 = vadd.f32 %v246, %v286
  %v382 = vadd.f32 %v247, %v286
  %v383 = vadd.f32 %v248, %v286
  %v384 = vadd.f32 %v249, %v286
  %v385 = vadd.f32 %v250, %v286
  %v386 = vadd.f32 %v251, %v286
  %v387 = vadd.f32 %v252, %v286
  %v388 = vadd.f32 %v253, %v286
  %v389 = vadd.f32 %v254, %v286
  %v390 = vadd.f32 %v255, %v286
  %v391 = vadd.f32 %v256, %v286
  %v392 = vadd.f32 %v257, %v286
  %v393 = vadd.f32 %v258, %v286
  %v394 = vadd.f32 %v259, %v286
  %v395 = vadd.f32 %v260, %v286
  %v396 = vadd.f32 %v261, %v286
  %v397 = vadd.f32 %v262, %v286
  %v398 = vadd.f32 %v263, %v286
  %v399 = vadd.f32 %v264, %v286
  %v400 = vadd.f32 %v265, %v286
  %v401 = vadd.f32 %v266, %v286
  %v402 = vadd.f32 %v267, %v286
  %v403 = vadd.f32 %v268, %v286
  %v404 = vadd.f32 %v269, %v286
  %v405 = vadd.f32 %v270, %v286
  %v406 = vadd.f32 %v271, %v286
  %v407 = vadd.f32 %v272, %v286
  %v408 = vadd.f32 %v273, %v286
  %v409 = vadd.f32 %v274, %v286
  %v410 = vadd.f32 %v275, %v286
  %v411 = vadd.f32 %v276, %v286
  %v412 = vadd.f32 %v277, %v286
  %v413 = vadd.f32 %v278, %v286
  %v414 = vadd.f32 %v279, %v286
  %v415 = vadd.f32 %v280, %v286
  %vm416 = vcmp.ge.f32.partialorder %v288, 0.0
  %vm417 = vcmp.ge.f32.partialorder %v289, 0.0
  %vm418 = vcmp.ge.f32.partialorder %v290, 0.0
  %vm419 = vcmp.ge.f32.partialorder %v291, 0.0
  %vm420 = vcmp.ge.f32.partialorder %v292, 0.0
  %vm421 = vcmp.ge.f32.partialorder %v293, 0.0
  %vm422 = vcmp.ge.f32.partialorder %v294, 0.0
  %vm423 = vcmp.ge.f32.partialorder %v295, 0.0
  %vm424 = vcmp.ge.f32.partialorder %v296, 0.0
  %vm425 = vcmp.ge.f32.partialorder %v297, 0.0
  %vm426 = vcmp.ge.f32.partialorder %v298, 0.0
  %vm427 = vcmp.ge.f32.partialorder %v299, 0.0
  %vm428 = vcmp.ge.f32.partialorder %v300, 0.0
  %vm429 = vcmp.ge.f32.partialorder %v301, 0.0
  %vm430 = vcmp.ge.f32.partialorder %v302, 0.0
  %vm431 = vcmp.ge.f32.partialorder %v303, 0.0
  %vm432 = vcmp.ge.f32.partialorder %v304, 0.0
  %vm433 = vcmp.ge.f32.partialorder %v305, 0.0
  %vm434 = vcmp.ge.f32.partialorder %v306, 0.0
  %vm435 = vcmp.ge.f32.partialorder %v307, 0.0
  %vm436 = vcmp.ge.f32.partialorder %v308, 0.0
  %vm437 = vcmp.ge.f32.partialorder %v309, 0.0
  %vm438 = vcmp.ge.f32.partialorder %v310, 0.0
  %vm439 = vcmp.ge.f32.partialorder %v311, 0.0
  %vm440 = vcmp.ge.f32.partialorder %v312, 0.0
  %vm441 = vcmp.ge.f32.partialorder %v313, 0.0
  %vm442 = vcmp.ge.f32.partialorder %v314, 0.0
  %vm443 = vcmp.ge.f32.partialorder %v315, 0.0
  %vm444 = vcmp.ge.f32.partialorder %v316, 0.0
  %vm445 = vcmp.ge.f32.partialorder %v317, 0.0
  %vm446 = vcmp.ge.f32.partialorder %v318, 0.0
  %vm447 = vcmp.ge.f32.partialorder %v319, 0.0
  %vm448 = vcmp.ge.f32.partialorder %v320, 0.0
  %vm449 = vcmp.ge.f32.partialorder %v321, 0.0
  %vm450 = vcmp.ge.f32.partialorder %v322, 0.0
  %vm451 = vcmp.ge.f32.partialorder %v323, 0.0
  %vm452 = vcmp.ge.f32.partialorder %v324, 0.0
  %vm453 = vcmp.ge.f32.partialorder %v325, 0.0
  %vm454 = vcmp.ge.f32.partialorder %v326, 0.0
  %vm455 = vcmp.ge.f32.partialorder %v327, 0.0
  %vm456 = vcmp.ge.f32.partialorder %v328, 0.0
  %vm457 = vcmp.ge.f32.partialorder %v329, 0.0
  %vm458 = vcmp.ge.f32.partialorder %v330, 0.0
  %vm459 = vcmp.ge.f32.partialorder %v331, 0.0
  %vm460 = vcmp.ge.f32.partialorder %v332, 0.0
  %vm461 = vcmp.ge.f32.partialorder %v333, 0.0
  %vm462 = vcmp.ge.f32.partialorder %v334, 0.0
  %vm463 = vcmp.ge.f32.partialorder %v335, 0.0
  %vm464 = vcmp.ge.f32.partialorder %v336, 0.0
  %vm465 = vcmp.ge.f32.partialorder %v337, 0.0
  %vm466 = vcmp.ge.f32.partialorder %v338, 0.0
  %vm467 = vcmp.ge.f32.partialorder %v339, 0.0
  %vm468 = vcmp.ge.f32.partialorder %v340, 0.0
  %vm469 = vcmp.ge.f32.partialorder %v341, 0.0
  %vm470 = vcmp.ge.f32.partialorder %v342, 0.0
  %vm471 = vcmp.ge.f32.partialorder %v343, 0.0
  %vm472 = vcmp.ge.f32.partialorder %v344, 0.0
  %vm473 = vcmp.ge.f32.partialorder %v345, 0.0
  %vm474 = vcmp.ge.f32.partialorder %v346, 0.0
  %vm475 = vcmp.ge.f32.partialorder %v347, 0.0
  %vm476 = vcmp.ge.f32.partialorder %v348, 0.0
  %vm477 = vcmp.ge.f32.partialorder %v349, 0.0
  %vm478 = vcmp.ge.f32.partialorder %v350, 0.0
  %vm479 = vcmp.ge.f32.partialorder %v351, 0.0
  %vm480 = vcmp.ge.f32.partialorder %v352, 0.0
  %vm481 = vcmp.ge.f32.partialorder %v353, 0.0
  %vm482 = vcmp.ge.f32.partialorder %v354, 0.0
  %vm483 = vcmp.ge.f32.partialorder %v355, 0.0
  %vm484 = vcmp.ge.f32.partialorder %v356, 0.0
  %vm485 = vcmp.ge.f32.partialorder %v357, 0.0
  %vm486 = vcmp.ge.f32.partialorder %v358, 0.0
  %vm487 = vcmp.ge.f32.partialorder %v359, 0.0
  %vm488 = vcmp.ge.f32.partialorder %v360, 0.0
  %vm489 = vcmp.ge.f32.partialorder %v361, 0.0
  %vm490 = vcmp.ge.f32.partialorder %v362, 0.0
  %vm491 = vcmp.ge.f32.partialorder %v363, 0.0
  %vm492 = vcmp.ge.f32.partialorder %v364, 0.0
  %vm493 = vcmp.ge.f32.partialorder %v365, 0.0
  %vm494 = vcmp.ge.f32.partialorder %v366, 0.0
  %vm495 = vcmp.ge.f32.partialorder %v367, 0.0
  %vm496 = vcmp.ge.f32.partialorder %v368, 0.0
  %vm497 = vcmp.ge.f32.partialorder %v369, 0.0
  %vm498 = vcmp.ge.f32.partialorder %v370, 0.0
  %vm499 = vcmp.ge.f32.partialorder %v371, 0.0
  %vm500 = vcmp.ge.f32.partialorder %v372, 0.0
  %vm501 = vcmp.ge.f32.partialorder %v373, 0.0
  %vm502 = vcmp.ge.f32.partialorder %v374, 0.0
  %vm503 = vcmp.ge.f32.partialorder %v375, 0.0
  %vm504 = vcmp.ge.f32.partialorder %v376, 0.0
  %vm505 = vcmp.ge.f32.partialorder %v377, 0.0
  %vm506 = vcmp.ge.f32.partialorder %v378, 0.0
  %vm507 = vcmp.ge.f32.partialorder %v379, 0.0
  %vm508 = vcmp.ge.f32.partialorder %v380, 0.0
  %vm509 = vcmp.ge.f32.partialorder %v381, 0.0
  %vm510 = vcmp.ge.f32.partialorder %v382, 0.0
  %vm511 = vcmp.ge.f32.partialorder %v383, 0.0
  %vm512 = vcmp.ge.f32.partialorder %v384, 0.0
  %vm513 = vcmp.ge.f32.partialorder %v385, 0.0
  %vm514 = vcmp.ge.f32.partialorder %v386, 0.0
  %vm515 = vcmp.ge.f32.partialorder %v387, 0.0
  %vm516 = vcmp.ge.f32.partialorder %v388, 0.0
  %vm517 = vcmp.ge.f32.partialorder %v389, 0.0
  %vm518 = vcmp.ge.f32.partialorder %v390, 0.0
  %vm519 = vcmp.ge.f32.partialorder %v391, 0.0
  %vm520 = vcmp.ge.f32.partialorder %v392, 0.0
  %vm521 = vcmp.ge.f32.partialorder %v393, 0.0
  %vm522 = vcmp.ge.f32.partialorder %v394, 0.0
  %vm523 = vcmp.ge.f32.partialorder %v395, 0.0
  %vm524 = vcmp.ge.f32.partialorder %v396, 0.0
  %vm525 = vcmp.ge.f32.partialorder %v397, 0.0
  %vm526 = vcmp.ge.f32.partialorder %v398, 0.0
  %vm527 = vcmp.ge.f32.partialorder %v399, 0.0
  %vm528 = vcmp.ge.f32.partialorder %v400, 0.0
  %vm529 = vcmp.ge.f32.partialorder %v401, 0.0
  %vm530 = vcmp.ge.f32.partialorder %v402, 0.0
  %vm531 = vcmp.ge.f32.partialorder %v403, 0.0
  %vm532 = vcmp.ge.f32.partialorder %v404, 0.0
  %vm533 = vcmp.ge.f32.partialorder %v405, 0.0
  %vm534 = vcmp.ge.f32.partialorder %v406, 0.0
  %vm535 = vcmp.ge.f32.partialorder %v407, 0.0
  %vm536 = vcmp.ge.f32.partialorder %v408, 0.0
  %vm537 = vcmp.ge.f32.partialorder %v409, 0.0
  %vm538 = vcmp.ge.f32.partialorder %v410, 0.0
  %vm539 = vcmp.ge.f32.partialorder %v411, 0.0
  %vm540 = vcmp.ge.f32.partialorder %v412, 0.0
  %vm541 = vcmp.ge.f32.partialorder %v413, 0.0
  %vm542 = vcmp.ge.f32.partialorder %v414, 0.0
  %vm543 = vcmp.ge.f32.partialorder %v415, 0.0
  %v544 = vmul.f32 %v288, 0.01
  %v545 = vmul.f32 %v289, 0.01
  %v546 = vmul.f32 %v290, 0.01
  %v547 = vmul.f32 %v291, 0.01
  %v548 = vmul.f32 %v292, 0.01
  %v549 = vmul.f32 %v293, 0.01
  %v550 = vmul.f32 %v294, 0.01
  %v551 = vmul.f32 %v295, 0.01
  %v552 = vmul.f32 %v296, 0.01
  %v553 = vmul.f32 %v297, 0.01
  %v554 = vmul.f32 %v298, 0.01
  %v555 = vmul.f32 %v299, 0.01
  %v556 = vmul.f32 %v300, 0.01
  %v557 = vmul.f32 %v301, 0.01
  %v558 = vmul.f32 %v302, 0.01
  %v559 = vmul.f32 %v303, 0.01
  %v560 = vmul.f32 %v304, 0.01
  %v561 = vmul.f32 %v305, 0.01
  %v562 = vmul.f32 %v306, 0.01
  %v563 = vmul.f32 %v307, 0.01
  %v564 = vmul.f32 %v308, 0.01
  %v565 = vmul.f32 %v309, 0.01
  %v566 = vmul.f32 %v310, 0.01
  %v567 = vmul.f32 %v311, 0.01
  %v568 = vmul.f32 %v312, 0.01
  %v569 = vmul.f32 %v313, 0.01
  %v570 = vmul.f32 %v314, 0.01
  %v571 = vmul.f32 %v315, 0.01
  %v572 = vmul.f32 %v316, 0.01
  %v573 = vmul.f32 %v317, 0.01
  %v574 = vmul.f32 %v318, 0.01
  %v575 = vmul.f32 %v319, 0.01
  %v576 = vmul.f32 %v320, 0.01
  %v577 = vmul.f32 %v321, 0.01
  %v578 = vmul.f32 %v322, 0.01
  %v579 = vmul.f32 %v323, 0.01
  %v580 = vmul.f32 %v324, 0.01
  %v581 = vmul.f32 %v325, 0.01
  %v582 = vmul.f32 %v326, 0.01
  %v583 = vmul.f32 %v327, 0.01
  %v584 = vmul.f32 %v328, 0.01
  %v585 = vmul.f32 %v329, 0.01
  %v586 = vmul.f32 %v330, 0.01
  %v587 = vmul.f32 %v331, 0.01
  %v588 = vmul.f32 %v332, 0.01
  %v589 = vmul.f32 %v333, 0.01
  %v590 = vmul.f32 %v334, 0.01
  %v591 = vmul.f32 %v335, 0.01
  %v592 = vmul.f32 %v336, 0.01
  %v593 = vmul.f32 %v337, 0.01
  %v594 = vmul.f32 %v338, 0.01
  %v595 = vmul.f32 %v339, 0.01
  %v596 = vmul.f32 %v340, 0.01
  %v597 = vmul.f32 %v341, 0.01
  %v598 = vmul.f32 %v342, 0.01
  %v599 = vmul.f32 %v343, 0.01
  %v600 = vmul.f32 %v344, 0.01
  %v601 = vmul.f32 %v345, 0.01
  %v602 = vmul.f32 %v346, 0.01
  %v603 = vmul.f32 %v347, 0.01
  %v604 = vmul.f32 %v348, 0.01
  %v605 = vmul.f32 %v349, 0.01
  %v606 = vmul.f32 %v350, 0.01
  %v607 = vmul.f32 %v351, 0.01
  %v608 = vmul.f32 %v352, 0.01
  %v609 = vmul.f32 %v353, 0.01
  %v610 = vmul.f32 %v354, 0.01
  %v611 = vmul.f32 %v355, 0.01
  %v612 = vmul.f32 %v356, 0.01
  %v613 = vmul.f32 %v357, 0.01
  %v614 = vmul.f32 %v358, 0.01
  %v615 = vmul.f32 %v359, 0.01
  %v616 = vmul.f32 %v360, 0.01
  %v617 = vmul.f32 %v361, 0.01
  %v618 = vmul.f32 %v362, 0.01
  %v619 = vmul.f32 %v363, 0.01
  %v620 = vmul.f32 %v364, 0.01
  %v621 = vmul.f32 %v365, 0.01
  %v622 = vmul.f32 %v366, 0.01
  %v623 = vmul.f32 %v367, 0.01
  %v624 = vmul.f32 %v368, 0.01
  %v625 = vmul.f32 %v369, 0.01
  %v626 = vmul.f32 %v370, 0.01
  %v627 = vmul.f32 %v371, 0.01
  %v628 = vmul.f32 %v372, 0.01
  %v629 = vmul.f32 %v373, 0.01
  %v630 = vmul.f32 %v374, 0.01
  %v631 = vmul.f32 %v375, 0.01
  %v632 = vmul.f32 %v376, 0.01
  %v633 = vmul.f32 %v377, 0.01
  %v634 = vmul.f32 %v378, 0.01
  %v635 = vmul.f32 %v379, 0.01
  %v636 = vmul.f32 %v380, 0.01
  %v637 = vmul.f32 %v381, 0.01
  %v638 = vmul.f32 %v382, 0.01
  %v639 = vmul.f32 %v383, 0.01
  %v640 = vmul.f32 %v384, 0.01
  %v641 = vmul.f32 %v385, 0.01
  %v642 = vmul.f32 %v386, 0.01
  %v643 = vmul.f32 %v387, 0.01
  %v644 = vmul.f32 %v388, 0.01
  %v645 = vmul.f32 %v389, 0.01
  %v646 = vmul.f32 %v390, 0.01
  %v647 = vmul.f32 %v391, 0.01
  %v648 = vmul.f32 %v392, 0.01
  %v649 = vmul.f32 %v393, 0.01
  %v650 = vmul.f32 %v394, 0.01
  %v651 = vmul.f32 %v395, 0.01
  %v652 = vmul.f32 %v396, 0.01
  %v653 = vmul.f32 %v397, 0.01
  %v654 = vmul.f32 %v398, 0.01
  %v655 = vmul.f32 %v399, 0.01
  %v656 = vmul.f32 %v400, 0.01
  %v657 = vmul.f32 %v401, 0.01
  %v658 = vmul.f32 %v402, 0.01
  %v659 = vmul.f32 %v403, 0.01
  %v660 = vmul.f32 %v404, 0.01
  %v661 = vmul.f32 %v405, 0.01
  %v662 = vmul.f32 %v406, 0.01
  %v663 = vmul.f32 %v407, 0.01
  %v664 = vmul.f32 %v408, 0.01
  %v665 = vmul.f32 %v409, 0.01
  %v666 = vmul.f32 %v410, 0.01
  %v667 = vmul.f32 %v411, 0.01
  %v668 = vmul.f32 %v412, 0.01
  %v669 = vmul.f32 %v413, 0.01
  %v670 = vmul.f32 %v414, 0.01
  %v671 = vmul.f32 %v415, 0.01
  %v672 = vsel %vm416, %v288, %v544
  %v673 = vsel %vm417, %v289, %v545
  %v674 = vsel %vm418, %v290, %v546
  %v675 = vsel %vm419, %v291, %v547
  %v676 = vsel %vm420, %v292, %v548
  %v677 = vsel %vm421, %v293, %v549
  %v678 = vsel %vm422, %v294, %v550
  %v679 = vsel %vm423, %v295, %v551
  %v680 = vsel %vm424, %v296, %v552
  %v681 = vsel %vm425, %v297, %v553
  %v682 = vsel %vm426, %v298, %v554
  %v683 = vsel %vm427, %v299, %v555
  %v684 = vsel %vm428, %v300, %v556
  %v685 = vsel %vm429, %v301, %v557
  %v686 = vsel %vm430, %v302, %v558
  %v687 = vsel %vm431, %v303, %v559
  %v688 = vsel %vm432, %v304, %v560
  %v689 = vsel %vm433, %v305, %v561
  %v690 = vsel %vm434, %v306, %v562
  %v691 = vsel %vm435, %v307, %v563
  %v692 = vsel %vm436, %v308, %v564
  %v693 = vsel %vm437, %v309, %v565
  %v694 = vsel %vm438, %v310, %v566
  %v695 = vsel %vm439, %v311, %v567
  %v696 = vsel %vm440, %v312, %v568
  %v697 = vsel %vm441, %v313, %v569
  %v698 = vsel %vm442, %v314, %v570
  %v699 = vsel %vm443, %v315, %v571
  %v700 = vsel %vm444, %v316, %v572
  %v701 = vsel %vm445, %v317, %v573
  %v702 = vsel %vm446, %v318, %v574
  %v703 = vsel %vm447, %v319, %v575
  %v704 = vsel %vm448, %v320, %v576
  %v705 = vsel %vm449, %v321, %v577
  %v706 = vsel %vm450, %v322, %v578
  %v707 = vsel %vm451, %v323, %v579
  %v708 = vsel %vm452, %v324, %v580
  %v709 = vsel %vm453, %v325, %v581
  %v710 = vsel %vm454, %v326, %v582
  %v711 = vsel %vm455, %v327, %v583
  %v712 = vsel %vm456, %v328, %v584
  %v713 = vsel %vm457, %v329, %v585
  %v714 = vsel %vm458, %v330, %v586
  %v715 = vsel %vm459, %v331, %v587
  %v716 = vsel %vm460, %v332, %v588
  %v717 = vsel %vm461, %v333, %v589
  %v718 = vsel %vm462, %v334, %v590
  %v719 = vsel %vm463, %v335, %v591
  %v720 = vsel %vm464, %v336, %v592
  %v721 = vsel %vm465, %v337, %v593
  %v722 = vsel %vm466, %v338, %v594
  %v723 = vsel %vm467, %v339, %v595
  %v724 = vsel %vm468, %v340, %v596
  %v725 = vsel %vm469, %v341, %v597
  %v726 = vsel %vm470, %v342, %v598
  %v727 = vsel %vm471, %v343, %v599
  %v728 = vsel %vm472, %v344, %v600
  %v729 = vsel %vm473, %v345, %v601
  %v730 = vsel %vm474, %v346, %v602
  %v731 = vsel %vm475, %v347, %v603
  %v732 = vsel %vm476, %v348, %v604
  %v733 = vsel %vm477, %v349, %v605
  %v734 = vsel %vm478, %v350, %v606
  %v735 = vsel %vm479, %v351, %v607
  %v736 = vsel %vm480, %v352, %v608
  %v737 = vsel %vm481, %v353, %v609
  %v738 = vsel %vm482, %v354, %v610
  %v739 = vsel %vm483, %v355, %v611
  %v740 = vsel %vm484, %v356, %v612
  %v741 = vsel %vm485, %v357, %v613
  %v742 = vsel %vm486, %v358, %v614
  %v743 = vsel %vm487, %v359, %v615
  %v744 = vsel %vm488, %v360, %v616
  %v745 = vsel %vm489, %v361, %v617
  %v746 = vsel %vm490, %v362, %v618
  %v747 = vsel %vm491, %v363, %v619
  %v748 = vsel %vm492, %v364, %v620
  %v749 = vsel %vm493, %v365, %v621
  %v750 = vsel %vm494, %v366, %v622
  %v751 = vsel %vm495, %v367, %v623
  %v752 = vsel %vm496, %v368, %v624
  %v753 = vsel %vm497, %v369, %v625
  %v754 = vsel %vm498, %v370, %v626
  %v755 = vsel %vm499, %v371, %v627
  %v756 = vsel %vm500, %v372, %v628
  %v757 = vsel %vm501, %v373, %v629
  %v758 = vsel %vm502, %v374, %v630
  %v759 = vsel %vm503, %v375, %v631
  %v760 = vsel %vm504, %v376, %v632
  %v761 = vsel %vm505, %v377, %v633
  %v762 = vsel %vm506, %v378, %v634
  %v763 = vsel %vm507, %v379, %v635
  %v764 = vsel %vm508, %v380, %v636
  %v765 = vsel %vm509, %v381, %v637
  %v766 = vsel %vm510, %v382, %v638
  %v767 = vsel %vm511, %v383, %v639
  %v768 = vsel %vm512, %v384, %v640
  %v769 = vsel %vm513, %v385, %v641
  %v770 = vsel %vm514, %v386, %v642
  %v771 = vsel %vm515, %v387, %v643
  %v772 = vsel %vm516, %v388, %v644
  %v773 = vsel %vm517, %v389, %v645
  %v774 = vsel %vm518, %v390, %v646
  %v775 = vsel %vm519, %v391, %v647
  %v776 = vsel %vm520, %v392, %v648
  %v777 = vsel %vm521, %v393, %v649
  %v778 = vsel %vm522, %v394, %v650
  %v779 = vsel %vm523, %v395, %v651
  %v780 = vsel %vm524, %v396, %v652
  %v781 = vsel %vm525, %v397, %v653
  %v782 = vsel %vm526, %v398, %v654
  %v783 = vsel %vm527, %v399, %v655
  %v784 = vsel %vm528, %v400, %v656
  %v785 = vsel %vm529, %v401, %v657
  %v786 = vsel %vm530, %v402, %v658
  %v787 = vsel %vm531, %v403, %v659
  %v788 = vsel %vm532, %v404, %v660
  %v789 = vsel %vm533, %v405, %v661
  %v790 = vsel %vm534, %v406, %v662
  %v791 = vsel %vm535, %v407, %v663
  %v792 = vsel %vm536, %v408, %v664
  %v793 = vsel %vm537, %v409, %v665
  %v794 = vsel %vm538, %v410, %v666
  %v795 = vsel %vm539, %v411, %v667
  %v796 = vsel %vm540, %v412, %v668
  %v797 = vsel %vm541, %v413, %v669
  %v798 = vsel %vm542, %v414, %v670
  %v799 = vsel %vm543, %v415, %v671
  %v800 = vpack.c.bf16 %v673, %v672
  %v801 = vpack.c.bf16 %v675, %v674
  %v802 = vpack.c.bf16 %v677, %v676
  %v803 = vpack.c.bf16 %v679, %v678
  %v804 = vpack.c.bf16 %v681, %v680
  %v805 = vpack.c.bf16 %v683, %v682
  %v806 = vpack.c.bf16 %v685, %v684
  %v807 = vpack.c.bf16 %v687, %v686
  %v808 = vpack.c.bf16 %v689, %v688
  %v809 = vpack.c.bf16 %v691, %v690
  %v810 = vpack.c.bf16 %v693, %v692
  %v811 = vpack.c.bf16 %v695, %v694
  %v812 = vpack.c.bf16 %v697, %v696
  %v813 = vpack.c.bf16 %v699, %v698
  %v814 = vpack.c.bf16 %v701, %v700
  %v815 = vpack.c.bf16 %v703, %v702
  %v816 = vpack.c.bf16 %v705, %v704
  %v817 = vpack.c.bf16 %v707, %v706
  %v818 = vpack.c.bf16 %v709, %v708
  %v819 = vpack.c.bf16 %v711, %v710
  %v820 = vpack.c.bf16 %v713, %v712
  %v821 = vpack.c.bf16 %v715, %v714
  %v822 = vpack.c.bf16 %v717, %v716
  %v823 = vpack.c.bf16 %v719, %v718
  %v824 = vpack.c.bf16 %v721, %v720
  %v825 = vpack.c.bf16 %v723, %v722
  %v826 = vpack.c.bf16 %v725, %v724
  %v827 = vpack.c.bf16 %v727, %v726
  %v828 = vpack.c.bf16 %v729, %v728
  %v829 = vpack.c.bf16 %v731, %v730
  %v830 = vpack.c.bf16 %v733, %v732
  %v831 = vpack.c.bf16 %v735, %v734
  %v832 = vpack.c.bf16 %v737, %v736
  %v833 = vpack.c.bf16 %v739, %v738
  %v834 = vpack.c.bf16 %v741, %v740
  %v835 = vpack.c.bf16 %v743, %v742
  %v836 = vpack.c.bf16 %v745, %v744
  %v837 = vpack.c.bf16 %v747, %v746
  %v838 = vpack.c.bf16 %v749, %v748
  %v839 = vpack.c.bf16 %v751, %v750
  %v840 = vpack.c.bf16 %v753, %v752
  %v841 = vpack.c.bf16 %v755, %v754
  %v842 = vpack.c.bf16 %v757, %v756
  %v843 = vpack.c.bf16 %v759, %v758
  %v844 = vpack.c.bf16 %v761, %v760
  %v845 = vpack.c.bf16 %v763, %v762
  %v846 = vpack.c.bf16 %v765, %v764
  %v847 = vpack.c.bf16 %v767, %v766
  %v848 = vpack.c.bf16 %v769, %v768
  %v849 = vpack.c.bf16 %v771, %v770
  %v850 = vpack.c.bf16 %v773, %v772
  %v851 = vpack.c.bf16 %v775, %v774
  %v852 = vpack.c.bf16 %v777, %v776
  %v853 = vpack.c.bf16 %v779, %v778
  %v854 = vpack.c.bf16 %v781, %v780
  %v855 = vpack.c.bf16 %v783, %v782
  %v856 = vpack.c.bf16 %v785, %v784
  %v857 = vpack.c.bf16 %v787, %v786
  %v858 = vpack.c.bf16 %v789, %v788
  %v859 = vpack.c.bf16 %v791, %v790
  %v860 = vpack.c.bf16 %v793, %v792
  %v861 = vpack.c.bf16 %v795, %v794
  %v862 = vpack.c.bf16 %v797, %v796
  %v863 = vpack.c.bf16 %v799, %v798
  %v864 = vld [vmem:[%s3] sm:$0xf]
  %v865 = vld [vmem:[%s3 + $0x4] sm:$0xf]
  %v866 = vld [vmem:[%s3 + $0x8] sm:$0xf]
  %v867 = vld [vmem:[%s3 + $0xc] sm:$0xf]
  %v872 = vunpack.c.l.b16 %v864
  %v873 = vunpack.c.l.b16 %v865
  %v874 = vunpack.c.l.b16 %v866
  %v875 = vunpack.c.l.b16 %v867
  %v876 = vpack.c.b16 %v873, %v872
  %v877 = vpack.c.b16 %v875, %v874
  %vm880 = vcmask 261120
  %v882 = vsel %vm880, %v800, 0
  %v885 = vsel %vm880, %v801, 0
  %v888 = vsel %vm880, %v802, 0
  %v891 = vsel %vm880, %v803, 0
  %v894 = vsel %vm880, %v804, 0
  %v897 = vsel %vm880, %v805, 0
  %v900 = vsel %vm880, %v806, 0
  %v903 = vsel %vm880, %v807, 0
  %v906 = vsel %vm880, %v808, 0
  %v909 = vsel %vm880, %v809, 0
  %v912 = vsel %vm880, %v810, 0
  %v915 = vsel %vm880, %v811, 0
  %v918 = vsel %vm880, %v812, 0
  %v921 = vsel %vm880, %v813, 0
  %v924 = vsel %vm880, %v814, 0
  %v927 = vsel %vm880, %v815, 0
  %v930 = vsel %vm880, %v816, 0
  %v933 = vsel %vm880, %v817, 0
  %v936 = vsel %vm880, %v818, 0
  %v939 = vsel %vm880, %v819, 0
  %v942 = vsel %vm880, %v820, 0
  %v945 = vsel %vm880, %v821, 0
  %v948 = vsel %vm880, %v822, 0
  %v951 = vsel %vm880, %v823, 0
  %v954 = vsel %vm880, %v824, 0
  %v957 = vsel %vm880, %v825, 0
  %v960 = vsel %vm880, %v826, 0
  %v963 = vsel %vm880, %v827, 0
  %v966 = vsel %vm880, %v828, 0
  %v969 = vsel %vm880, %v829, 0
  %v972 = vsel %vm880, %v830, 0
  %v975 = vsel %vm880, %v831, 0
  %v978 = vsel %vm880, %v832, 0
  %v981 = vsel %vm880, %v833, 0
  %v984 = vsel %vm880, %v834, 0
  %v987 = vsel %vm880, %v835, 0
  %v990 = vsel %vm880, %v836, 0
  %v993 = vsel %vm880, %v837, 0
  %v996 = vsel %vm880, %v838, 0
  %v999 = vsel %vm880, %v839, 0
  %v1002 = vsel %vm880, %v840, 0
  %v1005 = vsel %vm880, %v841, 0
  %v1008 = vsel %vm880, %v842, 0
  %v1011 = vsel %vm880, %v843, 0
  %v1014 = vsel %vm880, %v844, 0
  %v1017 = vsel %vm880, %v845, 0
  %v1020 = vsel %vm880, %v846, 0
  %v1023 = vsel %vm880, %v847, 0
  %v1026 = vsel %vm880, %v848, 0
  %v1029 = vsel %vm880, %v849, 0
  %v1032 = vsel %vm880, %v850, 0
  %v1035 = vsel %vm880, %v851, 0
  %v1038 = vsel %vm880, %v852, 0
  %v1041 = vsel %vm880, %v853, 0
  %v1044 = vsel %vm880, %v854, 0
  %v1047 = vsel %vm880, %v855, 0
  %v1050 = vsel %vm880, %v856, 0
  %v1053 = vsel %vm880, %v857, 0
  %v1056 = vsel %vm880, %v858, 0
  %v1059 = vsel %vm880, %v859, 0
  %v1062 = vsel %vm880, %v860, 0
  %v1065 = vsel %vm880, %v861, 0
  %v1068 = vsel %vm880, %v862, 0
  %v1071 = vsel %vm880, %v863, 0
  %1073 = vmatprep.subr.bf16.mxu0 0
  %1074 = vmatpush1.bf16.msra.mxu0 %v876
  %1075 = vmatprep.subr.bf16.mxu0 0
  %1076 = vmatpush1.bf16.msra.mxu0 %v877
  %1077 = vmatprep.subr.bf16.mxu0 0
  %1078 = vmatpush1.bf16.msra.mxu0 0
  %1079 = vmatprep.subr.bf16.mxu0 0
  %1080 = vmatpush1.bf16.msra.mxu0 0
  %1081 = vmatprep.subr.bf16.mxu0 0
  %1082 = vmatpush1.bf16.msra.mxu0 0
  %1083 = vmatprep.subr.bf16.mxu0 0
  %1084 = vmatpush1.bf16.msra.mxu0 0
  %1085 = vmatprep.subr.bf16.mxu0 0
  %1086 = vmatpush1.bf16.msra.mxu0 0
  %1087 = vmatprep.subr.bf16.mxu0 0
  %1088 = vmatpush1.bf16.msra.mxu0 0
  %1089 = vmatprep.subr.bf16.mxu0 0
  %1090 = vmatpush1.bf16.msra.mxu0 0
  %1091 = vmatprep.subr.bf16.mxu0 0
  %1092 = vmatpush1.bf16.msra.mxu0 0
  %1093 = vmatprep.subr.bf16.mxu0 0
  %1094 = vmatpush1.bf16.msra.mxu0 0
  %1095 = vmatprep.subr.bf16.mxu0 0
  %1096 = vmatpush1.bf16.msra.mxu0 0
  %1097 = vmatprep.subr.bf16.mxu0 0
  %1098 = vmatpush1.bf16.msra.mxu0 0
  %1099 = vmatprep.subr.bf16.mxu0 0
  %1100 = vmatpush1.bf16.msra.mxu0 0
  %1101 = vmatprep.subr.bf16.mxu0 0
  %1102 = vmatpush1.bf16.msra.mxu0 0
  %1103 = vmatprep.subr.bf16.mxu0 0
  %1104 = vmatpush1.bf16.msra.mxu0 0
  %1105 = vmatprep.mubr.bf16.mxu0 0
  %1106 = vmatmul.mubr.bf16.gmra.mrb[0].mxu0 %v882
  %v1107 = vpop.f32.mrb[0].mxu0
  %v1108 = vadd.f32 0.0, %v1107
  %v1109 = vpop.f32.mrb[0].mxu0
  %v1110 = vpop.f32.mrb[0].mxu0
  %v1111 = vadd.f32 0.0, %v1110
  %v1112 = vpop.f32.mrb[0].mxu0
  %1113 = vmatprep.mubr.bf16.mxu0 0
  %1114 = vmatmul.mubr.bf16.gmra.mrb[0].mxu0 %v885
  %v1115 = vpop.f32.mrb[0].mxu0
  %v1116 = vadd.f32 0.0, %v1115
  %v1117 = vpop.f32.mrb[0].mxu0
  %v1118 = vpop.f32.mrb[0].mxu0
  %v1119 = vadd.f32 0.0, %v1118
  %v1120 = vpop.f32.mrb[0].mxu0
  %1121 = vmatprep.mubr.bf16.mxu0 0
  %1122 = vmatmul.mubr.bf16.gmra.mrb[0].mxu0 %v888
  %v1123 = vpop.f32.mrb[0].mxu0
  %v1124 = vadd.f32 0.0, %v1123
  %v1125 = vpop.f32.mrb[0].mxu0
  %v1126 = vpop.f32.mrb[0].mxu0
  %v1127 = vadd.f32 0.0, %v1126
  %v1128 = vpop.f32.mrb[0].mxu0
  %1129 = vmatprep.mubr.bf16.mxu0 0
  %1130 = vmatmul.mubr.bf16.gmra.mrb[0].mxu0 %v891
  %v1131 = vpop.f32.mrb[0].mxu0
  %v1132 = vadd.f32 0.0, %v1131
  %v1133 = vpop.f32.mrb[0].mxu0
  %v1134 = vpop.f32.mrb[0].mxu0
  %v1135 = vadd.f32 0.0, %v1134
  %v1136 = vpop.f32.mrb[0].mxu0
  %1137 = vmatprep.mubr.bf16.mxu0 0
  %1138 = vmatmul.mubr.bf16.gmra.mrb[0].mxu0 %v894
  %v1139 = vpop.f32.mrb[0].mxu0
  %v1140 = vadd.f32 0.0, %v1139
  %v1141 = vpop.f32.mrb[0].mxu0
  %v1142 = vpop.f32.mrb[0].mxu0
  %v1143 = vadd.f32 0.0, %v1142
  %v1144 = vpop.f32.mrb[0].mxu0
  %1145 = vmatprep.mubr.bf16.mxu0 0
  %1146 = vmatmul.mubr.bf16.gmra.mrb[0].mxu0 %v897
  %v1147 = vpop.f32.mrb[0].mxu0
  %v1148 = vadd.f32 0.0, %v1147
  %v1149 = vpop.f32.mrb[0].mxu0
  %v1150 = vpop.f32.mrb[0].mxu0
  %v1151 = vadd.f32 0.0, %v1150
  %v1152 = vpop.f32.mrb[0].mxu0
  %1153 = vmatprep.mubr.bf16.mxu0 0
  %1154 = vmatmul.mubr.bf16.gmra.mrb[0].mxu0 %v900
  %v1155 = vpop.f32.mrb[0].mxu0
  %v1156 = vadd.f32 0.0, %v1155
  %v1157 = vpop.f32.mrb[0].mxu0
  %v1158 = vpop.f32.mrb[0].mxu0
  %v1159 = vadd.f32 0.0, %v1158
  %v1160 = vpop.f32.mrb[0].mxu0
  %1161 = vmatprep.mubr.bf16.mxu0 0
  %1162 = vmatmul.mubr.bf16.gmra.mrb[0].mxu0 %v903
  %v1163 = vpop.f32.mrb[0].mxu0
  %v1164 = vadd.f32 0.0, %v1163
  %v1165 = vpop.f32.mrb[0].mxu0
  %v1166 = vpop.f32.mrb[0].mxu0
  %v1167 = vadd.f32 0.0, %v1166
  %v1168 = vpop.f32.mrb[0].mxu0
  %1169 = vmatprep.mubr.bf16.mxu0 0
  %1170 = vmatmul.mubr.bf16.gmra.mrb[0].mxu0 %v906
  %v1171 = vpop.f32.mrb[0].mxu0
  %v1172 = vadd.f32 0.0, %v1171
  %v1173 = vpop.f32.mrb[0].mxu0
  %v1174 = vpop.f32.mrb[0].mxu0
  %v1175 = vadd.f32 0.0, %v1174
  %v1176 = vpop.f32.mrb[0].mxu0
  %1177 = vmatprep.mubr.bf16.mxu0 0
  %1178 = vmatmul.mubr.bf16.gmra.mrb[0].mxu0 %v909
  %v1179 = vpop.f32.mrb[0].mxu0
  %v1180 = vadd.f32 0.0, %v1179
  %v1181 = vpop.f32.mrb[0].mxu0
  %v1182 = vpop.f32.mrb[0].mxu0
  %v1183 = vadd.f32 0.0, %v1182
  %v1184 = vpop.f32.mrb[0].mxu0
  %1185 = vmatprep.mubr.bf16.mxu0 0
  %1186 = vmatmul.mubr.bf16.gmra.mrb[0].mxu0 %v912
  %v1187 = vpop.f32.mrb[0].mxu0
  %v1188 = vadd.f32 0.0, %v1187
  %v1189 = vpop.f32.mrb[0].mxu0
  %v1190 = vpop.f32.mrb[0].mxu0
  %v1191 = vadd.f32 0.0, %v1190
  %v1192 = vpop.f32.mrb[0].mxu0
  %1193 = vmatprep.mubr.bf16.mxu0 0
  %1194 = vmatmul.mubr.bf16.gmra.mrb[0].mxu0 %v915
  %v1195 = vpop.f32.mrb[0].mxu0
  %v1196 = vadd.f32 0.0, %v1195
  %v1197 = vpop.f32.mrb[0].mxu0
  %v1198 = vpop.f32.mrb[0].mxu0
  %v1199 = vadd.f32 0.0, %v1198
  %v1200 = vpop.f32.mrb[0].mxu0
  %1201 = vmatprep.mubr.bf16.mxu0 0
  %1202 = vmatmul.mubr.bf16.gmra.mrb[0].mxu0 %v918
  %v1203 = vpop.f32.mrb[0].mxu0
  %v1204 = vadd.f32 0.0, %v1203
  %v1205 = vpop.f32.mrb[0].mxu0
  %v1206 = vpop.f32.mrb[0].mxu0
  %v1207 = vadd.f32 0.0, %v1206
  %v1208 = vpop.f32.mrb[0].mxu0
  %1209 = vmatprep.mubr.bf16.mxu0 0
  %1210 = vmatmul.mubr.bf16.gmra.mrb[0].mxu0 %v921
  %v1211 = vpop.f32.mrb[0].mxu0
  %v1212 = vadd.f32 0.0, %v1211
  %v1213 = vpop.f32.mrb[0].mxu0
  %v1214 = vpop.f32.mrb[0].mxu0
  %v1215 = vadd.f32 0.0, %v1214
  %v1216 = vpop.f32.mrb[0].mxu0
  %1217 = vmatprep.mubr.bf16.mxu0 0
  %1218 = vmatmul.mubr.bf16.gmra.mrb[0].mxu0 %v924
  %v1219 = vpop.f32.mrb[0].mxu0
  %v1220 = vadd.f32 0.0, %v1219
  %v1221 = vpop.f32.mrb[0].mxu0
  %v1222 = vpop.f32.mrb[0].mxu0
  %v1223 = vadd.f32 0.0, %v1222
  %v1224 = vpop.f32.mrb[0].mxu0
  %1225 = vmatprep.mubr.bf16.mxu0 0
  %1226 = vmatmul.mubr.bf16.gmra.mrb[0].mxu0 %v927
  %v1227 = vpop.f32.mrb[0].mxu0
  %v1228 = vadd.f32 0.0, %v1227
  %v1229 = vpop.f32.mrb[0].mxu0
  %v1230 = vpop.f32.mrb[0].mxu0
  %v1231 = vadd.f32 0.0, %v1230
  %v1232 = vpop.f32.mrb[0].mxu0
  %1233 = vmatprep.mubr.bf16.mxu0 0
  %1234 = vmatmul.mubr.bf16.gmra.mrb[0].mxu0 %v930
  %v1235 = vpop.f32.mrb[0].mxu0
  %v1236 = vadd.f32 0.0, %v1235
  %v1237 = vpop.f32.mrb[0].mxu0
  %v1238 = vpop.f32.mrb[0].mxu0
  %v1239 = vadd.f32 0.0, %v1238
  %v1240 = vpop.f32.mrb[0].mxu0
  %1241 = vmatprep.mubr.bf16.mxu0 0
  %1242 = vmatmul.mubr.bf16.gmra.mrb[0].mxu0 %v933
  %v1243 = vpop.f32.mrb[0].mxu0
  %v1244 = vadd.f32 0.0, %v1243
  %v1245 = vpop.f32.mrb[0].mxu0
  %v1246 = vpop.f32.mrb[0].mxu0
  %v1247 = vadd.f32 0.0, %v1246
  %v1248 = vpop.f32.mrb[0].mxu0
  %1249 = vmatprep.mubr.bf16.mxu0 0
  %1250 = vmatmul.mubr.bf16.gmra.mrb[0].mxu0 %v936
  %v1251 = vpop.f32.mrb[0].mxu0
  %v1252 = vadd.f32 0.0, %v1251
  %v1253 = vpop.f32.mrb[0].mxu0
  %v1254 = vpop.f32.mrb[0].mxu0
  %v1255 = vadd.f32 0.0, %v1254
  %v1256 = vpop.f32.mrb[0].mxu0
  %1257 = vmatprep.mubr.bf16.mxu0 0
  %1258 = vmatmul.mubr.bf16.gmra.mrb[0].mxu0 %v939
  %v1259 = vpop.f32.mrb[0].mxu0
  %v1260 = vadd.f32 0.0, %v1259
  %v1261 = vpop.f32.mrb[0].mxu0
  %v1262 = vpop.f32.mrb[0].mxu0
  %v1263 = vadd.f32 0.0, %v1262
  %v1264 = vpop.f32.mrb[0].mxu0
  %1265 = vmatprep.mubr.bf16.mxu0 0
  %1266 = vmatmul.mubr.bf16.gmra.mrb[0].mxu0 %v942
  %v1267 = vpop.f32.mrb[0].mxu0
  %v1268 = vadd.f32 0.0, %v1267
  %v1269 = vpop.f32.mrb[0].mxu0
  %v1270 = vpop.f32.mrb[0].mxu0
  %v1271 = vadd.f32 0.0, %v1270
  %v1272 = vpop.f32.mrb[0].mxu0
  %1273 = vmatprep.mubr.bf16.mxu0 0
  %1274 = vmatmul.mubr.bf16.gmra.mrb[0].mxu0 %v945
  %v1275 = vpop.f32.mrb[0].mxu0
  %v1276 = vadd.f32 0.0, %v1275
  %v1277 = vpop.f32.mrb[0].mxu0
  %v1278 = vpop.f32.mrb[0].mxu0
  %v1279 = vadd.f32 0.0, %v1278
  %v1280 = vpop.f32.mrb[0].mxu0
  %1281 = vmatprep.mubr.bf16.mxu0 0
  %1282 = vmatmul.mubr.bf16.gmra.mrb[0].mxu0 %v948
  %v1283 = vpop.f32.mrb[0].mxu0
  %v1284 = vadd.f32 0.0, %v1283
  %v1285 = vpop.f32.mrb[0].mxu0
  %v1286 = vpop.f32.mrb[0].mxu0
  %v1287 = vadd.f32 0.0, %v1286
  %v1288 = vpop.f32.mrb[0].mxu0
  %1289 = vmatprep.mubr.bf16.mxu0 0
  %1290 = vmatmul.mubr.bf16.gmra.mrb[0].mxu0 %v951
  %v1291 = vpop.f32.mrb[0].mxu0
  %v1292 = vadd.f32 0.0, %v1291
  %v1293 = vpop.f32.mrb[0].mxu0
  %v1294 = vpop.f32.mrb[0].mxu0
  %v1295 = vadd.f32 0.0, %v1294
  %v1296 = vpop.f32.mrb[0].mxu0
  %1297 = vmatprep.mubr.bf16.mxu0 0
  %1298 = vmatmul.mubr.bf16.gmra.mrb[0].mxu0 %v954
  %v1299 = vpop.f32.mrb[0].mxu0
  %v1300 = vadd.f32 0.0, %v1299
  %v1301 = vpop.f32.mrb[0].mxu0
  %v1302 = vpop.f32.mrb[0].mxu0
  %v1303 = vadd.f32 0.0, %v1302
  %v1304 = vpop.f32.mrb[0].mxu0
  %1305 = vmatprep.mubr.bf16.mxu0 0
  %1306 = vmatmul.mubr.bf16.gmra.mrb[0].mxu0 %v957
  %v1307 = vpop.f32.mrb[0].mxu0
  %v1308 = vadd.f32 0.0, %v1307
  %v1309 = vpop.f32.mrb[0].mxu0
  %v1310 = vpop.f32.mrb[0].mxu0
  %v1311 = vadd.f32 0.0, %v1310
  %v1312 = vpop.f32.mrb[0].mxu0
  %1313 = vmatprep.mubr.bf16.mxu0 0
  %1314 = vmatmul.mubr.bf16.gmra.mrb[0].mxu0 %v960
  %v1315 = vpop.f32.mrb[0].mxu0
  %v1316 = vadd.f32 0.0, %v1315
  %v1317 = vpop.f32.mrb[0].mxu0
  %v1318 = vpop.f32.mrb[0].mxu0
  %v1319 = vadd.f32 0.0, %v1318
  %v1320 = vpop.f32.mrb[0].mxu0
  %1321 = vmatprep.mubr.bf16.mxu0 0
  %1322 = vmatmul.mubr.bf16.gmra.mrb[0].mxu0 %v963
  %v1323 = vpop.f32.mrb[0].mxu0
  %v1324 = vadd.f32 0.0, %v1323
  %v1325 = vpop.f32.mrb[0].mxu0
  %v1326 = vpop.f32.mrb[0].mxu0
  %v1327 = vadd.f32 0.0, %v1326
  %v1328 = vpop.f32.mrb[0].mxu0
  %1329 = vmatprep.mubr.bf16.mxu0 0
  %1330 = vmatmul.mubr.bf16.gmra.mrb[0].mxu0 %v966
  %v1331 = vpop.f32.mrb[0].mxu0
  %v1332 = vadd.f32 0.0, %v1331
  %v1333 = vpop.f32.mrb[0].mxu0
  %v1334 = vpop.f32.mrb[0].mxu0
  %v1335 = vadd.f32 0.0, %v1334
  %v1336 = vpop.f32.mrb[0].mxu0
  %1337 = vmatprep.mubr.bf16.mxu0 0
  %1338 = vmatmul.mubr.bf16.gmra.mrb[0].mxu0 %v969
  %v1339 = vpop.f32.mrb[0].mxu0
  %v1340 = vadd.f32 0.0, %v1339
  %v1341 = vpop.f32.mrb[0].mxu0
  %v1342 = vpop.f32.mrb[0].mxu0
  %v1343 = vadd.f32 0.0, %v1342
  %v1344 = vpop.f32.mrb[0].mxu0
  %1345 = vmatprep.mubr.bf16.mxu0 0
  %1346 = vmatmul.mubr.bf16.gmra.mrb[0].mxu0 %v972
  %v1347 = vpop.f32.mrb[0].mxu0
  %v1348 = vadd.f32 0.0, %v1347
  %v1349 = vpop.f32.mrb[0].mxu0
  %v1350 = vpop.f32.mrb[0].mxu0
  %v1351 = vadd.f32 0.0, %v1350
  %v1352 = vpop.f32.mrb[0].mxu0
  %1353 = vmatprep.mubr.bf16.mxu0 0
  %1354 = vmatmul.mubr.bf16.gmra.mrb[0].mxu0 %v975
  %v1355 = vpop.f32.mrb[0].mxu0
  %v1356 = vadd.f32 0.0, %v1355
  %v1357 = vpop.f32.mrb[0].mxu0
  %v1358 = vpop.f32.mrb[0].mxu0
  %v1359 = vadd.f32 0.0, %v1358
  %v1360 = vpop.f32.mrb[0].mxu0
  %1361 = vmatprep.mubr.bf16.mxu0 0
  %1362 = vmatmul.mubr.bf16.gmra.mrb[0].mxu0 %v978
  %v1363 = vpop.f32.mrb[0].mxu0
  %v1364 = vadd.f32 0.0, %v1363
  %v1365 = vpop.f32.mrb[0].mxu0
  %v1366 = vpop.f32.mrb[0].mxu0
  %v1367 = vadd.f32 0.0, %v1366
  %v1368 = vpop.f32.mrb[0].mxu0
  %1369 = vmatprep.mubr.bf16.mxu0 0
  %1370 = vmatmul.mubr.bf16.gmra.mrb[0].mxu0 %v981
  %v1371 = vpop.f32.mrb[0].mxu0
  %v1372 = vadd.f32 0.0, %v1371
  %v1373 = vpop.f32.mrb[0].mxu0
  %v1374 = vpop.f32.mrb[0].mxu0
  %v1375 = vadd.f32 0.0, %v1374
  %v1376 = vpop.f32.mrb[0].mxu0
  %1377 = vmatprep.mubr.bf16.mxu0 0
  %1378 = vmatmul.mubr.bf16.gmra.mrb[0].mxu0 %v984
  %v1379 = vpop.f32.mrb[0].mxu0
  %v1380 = vadd.f32 0.0, %v1379
  %v1381 = vpop.f32.mrb[0].mxu0
  %v1382 = vpop.f32.mrb[0].mxu0
  %v1383 = vadd.f32 0.0, %v1382
  %v1384 = vpop.f32.mrb[0].mxu0
  %1385 = vmatprep.mubr.bf16.mxu0 0
  %1386 = vmatmul.mubr.bf16.gmra.mrb[0].mxu0 %v987
  %v1387 = vpop.f32.mrb[0].mxu0
  %v1388 = vadd.f32 0.0, %v1387
  %v1389 = vpop.f32.mrb[0].mxu0
  %v1390 = vpop.f32.mrb[0].mxu0
  %v1391 = vadd.f32 0.0, %v1390
  %v1392 = vpop.f32.mrb[0].mxu0
  %1393 = vmatprep.mubr.bf16.mxu0 0
  %1394 = vmatmul.mubr.bf16.gmra.mrb[0].mxu0 %v990
  %v1395 = vpop.f32.mrb[0].mxu0
  %v1396 = vadd.f32 0.0, %v1395
  %v1397 = vpop.f32.mrb[0].mxu0
  %v1398 = vpop.f32.mrb[0].mxu0
  %v1399 = vadd.f32 0.0, %v1398
  %v1400 = vpop.f32.mrb[0].mxu0
  %1401 = vmatprep.mubr.bf16.mxu0 0
  %1402 = vmatmul.mubr.bf16.gmra.mrb[0].mxu0 %v993
  %v1403 = vpop.f32.mrb[0].mxu0
  %v1404 = vadd.f32 0.0, %v1403
  %v1405 = vpop.f32.mrb[0].mxu0
  %v1406 = vpop.f32.mrb[0].mxu0
  %v1407 = vadd.f32 0.0, %v1406
  %v1408 = vpop.f32.mrb[0].mxu0
  %1409 = vmatprep.mubr.bf16.mxu0 0
  %1410 = vmatmul.mubr.bf16.gmra.mrb[0].mxu0 %v996
  %v1411 = vpop.f32.mrb[0].mxu0
  %v1412 = vadd.f32 0.0, %v1411
  %v1413 = vpop.f32.mrb[0].mxu0
  %v1414 = vpop.f32.mrb[0].mxu0
  %v1415 = vadd.f32 0.0, %v1414
  %v1416 = vpop.f32.mrb[0].mxu0
  %1417 = vmatprep.mubr.bf16.mxu0 0
  %1418 = vmatmul.mubr.bf16.gmra.mrb[0].mxu0 %v999
  %v1419 = vpop.f32.mrb[0].mxu0
  %v1420 = vadd.f32 0.0, %v1419
  %v1421 = vpop.f32.mrb[0].mxu0
  %v1422 = vpop.f32.mrb[0].mxu0
  %v1423 = vadd.f32 0.0, %v1422
  %v1424 = vpop.f32.mrb[0].mxu0
  %1425 = vmatprep.mubr.bf16.mxu0 0
  %1426 = vmatmul.mubr.bf16.gmra.mrb[0].mxu0 %v1002
  %v1427 = vpop.f32.mrb[0].mxu0
  %v1428 = vadd.f32 0.0, %v1427
  %v1429 = vpop.f32.mrb[0].mxu0
  %v1430 = vpop.f32.mrb[0].mxu0
  %v1431 = vadd.f32 0.0, %v1430
  %v1432 = vpop.f32.mrb[0].mxu0
  %1433 = vmatprep.mubr.bf16.mxu0 0
  %1434 = vmatmul.mubr.bf16.gmra.mrb[0].mxu0 %v1005
  %v1435 = vpop.f32.mrb[0].mxu0
  %v1436 = vadd.f32 0.0, %v1435
  %v1437 = vpop.f32.mrb[0].mxu0
  %v1438 = vpop.f32.mrb[0].mxu0
  %v1439 = vadd.f32 0.0, %v1438
  %v1440 = vpop.f32.mrb[0].mxu0
  %1441 = vmatprep.mubr.bf16.mxu0 0
  %1442 = vmatmul.mubr.bf16.gmra.mrb[0].mxu0 %v1008
  %v1443 = vpop.f32.mrb[0].mxu0
  %v1444 = vadd.f32 0.0, %v1443
  %v1445 = vpop.f32.mrb[0].mxu0
  %v1446 = vpop.f32.mrb[0].mxu0
  %v1447 = vadd.f32 0.0, %v1446
  %v1448 = vpop.f32.mrb[0].mxu0
  %1449 = vmatprep.mubr.bf16.mxu0 0
  %1450 = vmatmul.mubr.bf16.gmra.mrb[0].mxu0 %v1011
  %v1451 = vpop.f32.mrb[0].mxu0
  %v1452 = vadd.f32 0.0, %v1451
  %v1453 = vpop.f32.mrb[0].mxu0
  %v1454 = vpop.f32.mrb[0].mxu0
  %v1455 = vadd.f32 0.0, %v1454
  %v1456 = vpop.f32.mrb[0].mxu0
  %1457 = vmatprep.mubr.bf16.mxu0 0
  %1458 = vmatmul.mubr.bf16.gmra.mrb[0].mxu0 %v1014
  %v1459 = vpop.f32.mrb[0].mxu0
  %v1460 = vadd.f32 0.0, %v1459
  %v1461 = vpop.f32.mrb[0].mxu0
  %v1462 = vpop.f32.mrb[0].mxu0
  %v1463 = vadd.f32 0.0, %v1462
  %v1464 = vpop.f32.mrb[0].mxu0
  %1465 = vmatprep.mubr.bf16.mxu0 0
  %1466 = vmatmul.mubr.bf16.gmra.mrb[0].mxu0 %v1017
  %v1467 = vpop.f32.mrb[0].mxu0
  %v1468 = vadd.f32 0.0, %v1467
  %v1469 = vpop.f32.mrb[0].mxu0
  %v1470 = vpop.f32.mrb[0].mxu0
  %v1471 = vadd.f32 0.0, %v1470
  %v1472 = vpop.f32.mrb[0].mxu0
  %1473 = vmatprep.mubr.bf16.mxu0 0
  %1474 = vmatmul.mubr.bf16.gmra.mrb[0].mxu0 %v1020
  %v1475 = vpop.f32.mrb[0].mxu0
  %v1476 = vadd.f32 0.0, %v1475
  %v1477 = vpop.f32.mrb[0].mxu0
  %v1478 = vpop.f32.mrb[0].mxu0
  %v1479 = vadd.f32 0.0, %v1478
  %v1480 = vpop.f32.mrb[0].mxu0
  %1481 = vmatprep.mubr.bf16.mxu0 0
  %1482 = vmatmul.mubr.bf16.gmra.mrb[0].mxu0 %v1023
  %v1483 = vpop.f32.mrb[0].mxu0
  %v1484 = vadd.f32 0.0, %v1483
  %v1485 = vpop.f32.mrb[0].mxu0
  %v1486 = vpop.f32.mrb[0].mxu0
  %v1487 = vadd.f32 0.0, %v1486
  %v1488 = vpop.f32.mrb[0].mxu0
  %1489 = vmatprep.mubr.bf16.mxu0 0
  %1490 = vmatmul.mubr.bf16.gmra.mrb[0].mxu0 %v1026
  %v1491 = vpop.f32.mrb[0].mxu0
  %v1492 = vadd.f32 0.0, %v1491
  %v1493 = vpop.f32.mrb[0].mxu0
  %v1494 = vpop.f32.mrb[0].mxu0
  %v1495 = vadd.f32 0.0, %v1494
  %v1496 = vpop.f32.mrb[0].mxu0
  %1497 = vmatprep.mubr.bf16.mxu0 0
  %1498 = vmatmul.mubr.bf16.gmra.mrb[0].mxu0 %v1029
  %v1499 = vpop.f32.mrb[0].mxu0
  %v1500 = vadd.f32 0.0, %v1499
  %v1501 = vpop.f32.mrb[0].mxu0
  %v1502 = vpop.f32.mrb[0].mxu0
  %v1503 = vadd.f32 0.0, %v1502
  %v1504 = vpop.f32.mrb[0].mxu0
  %1505 = vmatprep.mubr.bf16.mxu0 0
  %1506 = vmatmul.mubr.bf16.gmra.mrb[0].mxu0 %v1032
  %v1507 = vpop.f32.mrb[0].mxu0
  %v1508 = vadd.f32 0.0, %v1507
  %v1509 = vpop.f32.mrb[0].mxu0
  %v1510 = vpop.f32.mrb[0].mxu0
  %v1511 = vadd.f32 0.0, %v1510
  %v1512 = vpop.f32.mrb[0].mxu0
  %1513 = vmatprep.mubr.bf16.mxu0 0
  %1514 = vmatmul.mubr.bf16.gmra.mrb[0].mxu0 %v1035
  %v1515 = vpop.f32.mrb[0].mxu0
  %v1516 = vadd.f32 0.0, %v1515
  %v1517 = vpop.f32.mrb[0].mxu0
  %v1518 = vpop.f32.mrb[0].mxu0
  %v1519 = vadd.f32 0.0, %v1518
  %v1520 = vpop.f32.mrb[0].mxu0
  %1521 = vmatprep.mubr.bf16.mxu0 0
  %1522 = vmatmul.mubr.bf16.gmra.mrb[0].mxu0 %v1038
  %v1523 = vpop.f32.mrb[0].mxu0
  %v1524 = vadd.f32 0.0, %v1523
  %v1525 = vpop.f32.mrb[0].mxu0
  %v1526 = vpop.f32.mrb[0].mxu0
  %v1527 = vadd.f32 0.0, %v1526
  %v1528 = vpop.f32.mrb[0].mxu0
  %1529 = vmatprep.mubr.bf16.mxu0 0
  %1530 = vmatmul.mubr.bf16.gmra.mrb[0].mxu0 %v1041
  %v1531 = vpop.f32.mrb[0].mxu0
  %v1532 = vadd.f32 0.0, %v1531
  %v1533 = vpop.f32.mrb[0].mxu0
  %v1534 = vpop.f32.mrb[0].mxu0
  %v1535 = vadd.f32 0.0, %v1534
  %v1536 = vpop.f32.mrb[0].mxu0
  %1537 = vmatprep.mubr.bf16.mxu0 0
  %1538 = vmatmul.mubr.bf16.gmra.mrb[0].mxu0 %v1044
  %v1539 = vpop.f32.mrb[0].mxu0
  %v1540 = vadd.f32 0.0, %v1539
  %v1541 = vpop.f32.mrb[0].mxu0
  %v1542 = vpop.f32.mrb[0].mxu0
  %v1543 = vadd.f32 0.0, %v1542
  %v1544 = vpop.f32.mrb[0].mxu0
  %1545 = vmatprep.mubr.bf16.mxu0 0
  %1546 = vmatmul.mubr.bf16.gmra.mrb[0].mxu0 %v1047
  %v1547 = vpop.f32.mrb[0].mxu0
  %v1548 = vadd.f32 0.0, %v1547
  %v1549 = vpop.f32.mrb[0].mxu0
  %v1550 = vpop.f32.mrb[0].mxu0
  %v1551 = vadd.f32 0.0, %v1550
  %v1552 = vpop.f32.mrb[0].mxu0
  %1553 = vmatprep.mubr.bf16.mxu0 0
  %1554 = vmatmul.mubr.bf16.gmra.mrb[0].mxu0 %v1050
  %v1555 = vpop.f32.mrb[0].mxu0
  %v1556 = vadd.f32 0.0, %v1555
  %v1557 = vpop.f32.mrb[0].mxu0
  %v1558 = vpop.f32.mrb[0].mxu0
  %v1559 = vadd.f32 0.0, %v1558
  %v1560 = vpop.f32.mrb[0].mxu0
  %1561 = vmatprep.mubr.bf16.mxu0 0
  %1562 = vmatmul.mubr.bf16.gmra.mrb[0].mxu0 %v1053
  %v1563 = vpop.f32.mrb[0].mxu0
  %v1564 = vadd.f32 0.0, %v1563
  %v1565 = vpop.f32.mrb[0].mxu0
  %v1566 = vpop.f32.mrb[0].mxu0
  %v1567 = vadd.f32 0.0, %v1566
  %v1568 = vpop.f32.mrb[0].mxu0
  %1569 = vmatprep.mubr.bf16.mxu0 0
  %1570 = vmatmul.mubr.bf16.gmra.mrb[0].mxu0 %v1056
  %v1571 = vpop.f32.mrb[0].mxu0
  %v1572 = vadd.f32 0.0, %v1571
  %v1573 = vpop.f32.mrb[0].mxu0
  %v1574 = vpop.f32.mrb[0].mxu0
  %v1575 = vadd.f32 0.0, %v1574
  %v1576 = vpop.f32.mrb[0].mxu0
  %1577 = vmatprep.mubr.bf16.mxu0 0
  %1578 = vmatmul.mubr.bf16.gmra.mrb[0].mxu0 %v1059
  %v1579 = vpop.f32.mrb[0].mxu0
  %v1580 = vadd.f32 0.0, %v1579
  %v1581 = vpop.f32.mrb[0].mxu0
  %v1582 = vpop.f32.mrb[0].mxu0
  %v1583 = vadd.f32 0.0, %v1582
  %v1584 = vpop.f32.mrb[0].mxu0
  %1585 = vmatprep.mubr.bf16.mxu0 0
  %1586 = vmatmul.mubr.bf16.gmra.mrb[0].mxu0 %v1062
  %v1587 = vpop.f32.mrb[0].mxu0
  %v1588 = vadd.f32 0.0, %v1587
  %v1589 = vpop.f32.mrb[0].mxu0
  %v1590 = vpop.f32.mrb[0].mxu0
  %v1591 = vadd.f32 0.0, %v1590
  %v1592 = vpop.f32.mrb[0].mxu0
  %1593 = vmatprep.mubr.bf16.mxu0 0
  %1594 = vmatmul.mubr.bf16.gmra.mrb[0].mxu0 %v1065
  %v1595 = vpop.f32.mrb[0].mxu0
  %v1596 = vadd.f32 0.0, %v1595
  %v1597 = vpop.f32.mrb[0].mxu0
  %v1598 = vpop.f32.mrb[0].mxu0
  %v1599 = vadd.f32 0.0, %v1598
  %v1600 = vpop.f32.mrb[0].mxu0
  %1601 = vmatprep.mubr.bf16.mxu0 0
  %1602 = vmatmul.mubr.bf16.gmra.mrb[0].mxu0 %v1068
  %v1603 = vpop.f32.mrb[0].mxu0
  %v1604 = vadd.f32 0.0, %v1603
  %v1605 = vpop.f32.mrb[0].mxu0
  %v1606 = vpop.f32.mrb[0].mxu0
  %v1607 = vadd.f32 0.0, %v1606
  %v1608 = vpop.f32.mrb[0].mxu0
  %1609 = vmatprep.mubr.bf16.mxu0 0
  %1610 = vmatmul.mubr.bf16.gmra.mrb[0].mxu0 %v1071
  %v1611 = vpop.f32.mrb[0].mxu0
  %v1612 = vadd.f32 0.0, %v1611
  %v1613 = vpop.f32.mrb[0].mxu0
  %v1614 = vpop.f32.mrb[0].mxu0
  %v1615 = vadd.f32 0.0, %v1614
  %v1616 = vpop.f32.mrb[0].mxu0
  %1617 = vdwg.mxu0
  %1618 = vst [vmem:[%s4] sm:$0xff] %v1108
  %1619 = vst [vmem:[%s4 + $0x8] sm:$0xff] %v1111
  %1620 = vst [vmem:[%s4 + $0x10] sm:$0xff] %v1116
  %1621 = vst [vmem:[%s4 + $0x18] sm:$0xff] %v1119
  %1622 = vst [vmem:[%s4 + $0x20] sm:$0xff] %v1124
  %1623 = vst [vmem:[%s4 + $0x28] sm:$0xff] %v1127
  %1624 = vst [vmem:[%s4 + $0x30] sm:$0xff] %v1132
  %1625 = vst [vmem:[%s4 + $0x38] sm:$0xff] %v1135
  %1626 = vst [vmem:[%s4 + $0x40] sm:$0xff] %v1140
  %1627 = vst [vmem:[%s4 + $0x48] sm:$0xff] %v1143
  %1628 = vst [vmem:[%s4 + $0x50] sm:$0xff] %v1148
  %1629 = vst [vmem:[%s4 + $0x58] sm:$0xff] %v1151
  %1630 = vst [vmem:[%s4 + $0x60] sm:$0xff] %v1156
  %1631 = vst [vmem:[%s4 + $0x68] sm:$0xff] %v1159
  %1632 = vst [vmem:[%s4 + $0x70] sm:$0xff] %v1164
  %1633 = vst [vmem:[%s4 + $0x78] sm:$0xff] %v1167
  %1634 = vst [vmem:[%s4 + $0x80] sm:$0xff] %v1172
  %1635 = vst [vmem:[%s4 + $0x88] sm:$0xff] %v1175
  %1636 = vst [vmem:[%s4 + $0x90] sm:$0xff] %v1180
  %1637 = vst [vmem:[%s4 + $0x98] sm:$0xff] %v1183
  %1638 = vst [vmem:[%s4 + $0xa0] sm:$0xff] %v1188
  %1639 = vst [vmem:[%s4 + $0xa8] sm:$0xff] %v1191
  %1640 = vst [vmem:[%s4 + $0xb0] sm:$0xff] %v1196
  %1641 = vst [vmem:[%s4 + $0xb8] sm:$0xff] %v1199
  %1642 = vst [vmem:[%s4 + $0xc0] sm:$0xff] %v1204
  %1643 = vst [vmem:[%s4 + $0xc8] sm:$0xff] %v1207
  %1644 = vst [vmem:[%s4 + $0xd0] sm:$0xff] %v1212
  %1645 = vst [vmem:[%s4 + $0xd8] sm:$0xff] %v1215
  %1646 = vst [vmem:[%s4 + $0xe0] sm:$0xff] %v1220
  %1647 = vst [vmem:[%s4 + $0xe8] sm:$0xff] %v1223
  %1648 = vst [vmem:[%s4 + $0xf0] sm:$0xff] %v1228
  %1649 = vst [vmem:[%s4 + $0xf8] sm:$0xff] %v1231
  %1650 = vst [vmem:[%s4 + $0x100] sm:$0xff] %v1236
  %1651 = vst [vmem:[%s4 + $0x108] sm:$0xff] %v1239
  %1652 = vst [vmem:[%s4 + $0x110] sm:$0xff] %v1244
  %1653 = vst [vmem:[%s4 + $0x118] sm:$0xff] %v1247
  %1654 = vst [vmem:[%s4 + $0x120] sm:$0xff] %v1252
  %1655 = vst [vmem:[%s4 + $0x128] sm:$0xff] %v1255
  %1656 = vst [vmem:[%s4 + $0x130] sm:$0xff] %v1260
  %1657 = vst [vmem:[%s4 + $0x138] sm:$0xff] %v1263
  %1658 = vst [vmem:[%s4 + $0x140] sm:$0xff] %v1268
  %1659 = vst [vmem:[%s4 + $0x148] sm:$0xff] %v1271
  %1660 = vst [vmem:[%s4 + $0x150] sm:$0xff] %v1276
  %1661 = vst [vmem:[%s4 + $0x158] sm:$0xff] %v1279
  %1662 = vst [vmem:[%s4 + $0x160] sm:$0xff] %v1284
  %1663 = vst [vmem:[%s4 + $0x168] sm:$0xff] %v1287
  %1664 = vst [vmem:[%s4 + $0x170] sm:$0xff] %v1292
  %1665 = vst [vmem:[%s4 + $0x178] sm:$0xff] %v1295
  %1666 = vst [vmem:[%s4 + $0x180] sm:$0xff] %v1300
  %1667 = vst [vmem:[%s4 + $0x188] sm:$0xff] %v1303
  %1668 = vst [vmem:[%s4 + $0x190] sm:$0xff] %v1308
  %1669 = vst [vmem:[%s4 + $0x198] sm:$0xff] %v1311
  %1670 = vst [vmem:[%s4 + $0x1a0] sm:$0xff] %v1316
  %1671 = vst [vmem:[%s4 + $0x1a8] sm:$0xff] %v1319
  %1672 = vst [vmem:[%s4 + $0x1b0] sm:$0xff] %v1324
  %1673 = vst [vmem:[%s4 + $0x1b8] sm:$0xff] %v1327
  %1674 = vst [vmem:[%s4 + $0x1c0] sm:$0xff] %v1332
  %1675 = vst [vmem:[%s4 + $0x1c8] sm:$0xff] %v1335
  %1676 = vst [vmem:[%s4 + $0x1d0] sm:$0xff] %v1340
  %1677 = vst [vmem:[%s4 + $0x1d8] sm:$0xff] %v1343
  %1678 = vst [vmem:[%s4 + $0x1e0] sm:$0xff] %v1348
  %1679 = vst [vmem:[%s4 + $0x1e8] sm:$0xff] %v1351
  %1680 = vst [vmem:[%s4 + $0x1f0] sm:$0xff] %v1356
  %1681 = vst [vmem:[%s4 + $0x1f8] sm:$0xff] %v1359
  %1682 = vst [vmem:[%s4 + $0x200] sm:$0xff] %v1364
  %1683 = vst [vmem:[%s4 + $0x208] sm:$0xff] %v1367
  %1684 = vst [vmem:[%s4 + $0x210] sm:$0xff] %v1372
  %1685 = vst [vmem:[%s4 + $0x218] sm:$0xff] %v1375
  %1686 = vst [vmem:[%s4 + $0x220] sm:$0xff] %v1380
  %1687 = vst [vmem:[%s4 + $0x228] sm:$0xff] %v1383
  %1688 = vst [vmem:[%s4 + $0x230] sm:$0xff] %v1388
  %1689 = vst [vmem:[%s4 + $0x238] sm:$0xff] %v1391
  %1690 = vst [vmem:[%s4 + $0x240] sm:$0xff] %v1396
  %1691 = vst [vmem:[%s4 + $0x248] sm:$0xff] %v1399
  %1692 = vst [vmem:[%s4 + $0x250] sm:$0xff] %v1404
  %1693 = vst [vmem:[%s4 + $0x258] sm:$0xff] %v1407
  %1694 = vst [vmem:[%s4 + $0x260] sm:$0xff] %v1412
  %1695 = vst [vmem:[%s4 + $0x268] sm:$0xff] %v1415
  %1696 = vst [vmem:[%s4 + $0x270] sm:$0xff] %v1420
  %1697 = vst [vmem:[%s4 + $0x278] sm:$0xff] %v1423
  %1698 = vst [vmem:[%s4 + $0x280] sm:$0xff] %v1428
  %1699 = vst [vmem:[%s4 + $0x288] sm:$0xff] %v1431
  %1700 = vst [vmem:[%s4 + $0x290] sm:$0xff] %v1436
  %1701 = vst [vmem:[%s4 + $0x298] sm:$0xff] %v1439
  %1702 = vst [vmem:[%s4 + $0x2a0] sm:$0xff] %v1444
  %1703 = vst [vmem:[%s4 + $0x2a8] sm:$0xff] %v1447
  %1704 = vst [vmem:[%s4 + $0x2b0] sm:$0xff] %v1452
  %1705 = vst [vmem:[%s4 + $0x2b8] sm:$0xff] %v1455
  %1706 = vst [vmem:[%s4 + $0x2c0] sm:$0xff] %v1460
  %1707 = vst [vmem:[%s4 + $0x2c8] sm:$0xff] %v1463
  %1708 = vst [vmem:[%s4 + $0x2d0] sm:$0xff] %v1468
  %1709 = vst [vmem:[%s4 + $0x2d8] sm:$0xff] %v1471
  %1710 = vst [vmem:[%s4 + $0x2e0] sm:$0xff] %v1476
  %1711 = vst [vmem:[%s4 + $0x2e8] sm:$0xff] %v1479
  %1712 = vst [vmem:[%s4 + $0x2f0] sm:$0xff] %v1484
  %1713 = vst [vmem:[%s4 + $0x2f8] sm:$0xff] %v1487
  %1714 = vst [vmem:[%s4 + $0x300] sm:$0xff] %v1492
  %1715 = vst [vmem:[%s4 + $0x308] sm:$0xff] %v1495
  %1716 = vst [vmem:[%s4 + $0x310] sm:$0xff] %v1500
  %1717 = vst [vmem:[%s4 + $0x318] sm:$0xff] %v1503
  %1718 = vst [vmem:[%s4 + $0x320] sm:$0xff] %v1508
  %1719 = vst [vmem:[%s4 + $0x328] sm:$0xff] %v1511
  %1720 = vst [vmem:[%s4 + $0x330] sm:$0xff] %v1516
  %1721 = vst [vmem:[%s4 + $0x338] sm:$0xff] %v1519
  %1722 = vst [vmem:[%s4 + $0x340] sm:$0xff] %v1524
  %1723 = vst [vmem:[%s4 + $0x348] sm:$0xff] %v1527
  %1724 = vst [vmem:[%s4 + $0x350] sm:$0xff] %v1532
  %1725 = vst [vmem:[%s4 + $0x358] sm:$0xff] %v1535
  %1726 = vst [vmem:[%s4 + $0x360] sm:$0xff] %v1540
  %1727 = vst [vmem:[%s4 + $0x368] sm:$0xff] %v1543
  %1728 = vst [vmem:[%s4 + $0x370] sm:$0xff] %v1548
  %1729 = vst [vmem:[%s4 + $0x378] sm:$0xff] %v1551
  %1730 = vst [vmem:[%s4 + $0x380] sm:$0xff] %v1556
  %1731 = vst [vmem:[%s4 + $0x388] sm:$0xff] %v1559
  %1732 = vst [vmem:[%s4 + $0x390] sm:$0xff] %v1564
  %1733 = vst [vmem:[%s4 + $0x398] sm:$0xff] %v1567
  %1734 = vst [vmem:[%s4 + $0x3a0] sm:$0xff] %v1572
  %1735 = vst [vmem:[%s4 + $0x3a8] sm:$0xff] %v1575
  %1736 = vst [vmem:[%s4 + $0x3b0] sm:$0xff] %v1580
  %1737 = vst [vmem:[%s4 + $0x3b8] sm:$0xff] %v1583
  %1738 = vst [vmem:[%s4 + $0x3c0] sm:$0xff] %v1588
  %1739 = vst [vmem:[%s4 + $0x3c8] sm:$0xff] %v1591
  %1740 = vst [vmem:[%s4 + $0x3d0] sm:$0xff] %v1596
  %1741 = vst [vmem:[%s4 + $0x3d8] sm:$0xff] %v1599
  %1742 = vst [vmem:[%s4 + $0x3e0] sm:$0xff] %v1604
  %1743 = vst [vmem:[%s4 + $0x3e8] sm:$0xff] %v1607
  %1744 = vst [vmem:[%s4 + $0x3f0] sm:$0xff] %v1612
  %1745 = vst [vmem:[%s4 + $0x3f8] sm:$0xff] %v1615
  // Predicated region
  $region18: #{decoder_forward.7} parent=0 // pred_check
    _
  $region19: #{decoder_forward.7} parent=0 // pred_check_branch
    %1747 = sbr.rel (0) target = $region21
  $region20: #{decoder_forward.7} parent=0 // pred_region
    _
  $region21: #{decoder_forward.7} parent=0 // pred_fallthru
    _
  // Predicated region
  $region22: #{decoder_forward.7} parent=0 // pred_check
    _
  $region23: #{decoder_forward.7} parent=0 // pred_check_branch
    %1749 = sbr.rel (0) target = $region25
  $region24: #{decoder_forward.7} parent=0 // pred_region
    _
  $region25: #{decoder_forward.7} parent=0 // pred_fallthru
    _

</llo_original>
